<compile_context>
chip_gen: v7x
topology: tpu7x:2x2x1
jax: 0.10.0
libtpu: 0.0.40
codegen_flags: <defaults>
</compile_context>

<pallas_src>
import jax
import jax.numpy as jnp
from jax.experimental import pallas as pl
from jax.experimental.pallas import tpu as pltpu


# ----------------------------------------------------------------------------
# Fused LeNet kernel: one batch block (Bt images) per grid step.
# Activation layout everywhere: (rows, Bt, cols) with cols lane-dense.
# ----------------------------------------------------------------------------
def _lenet_kernel(x_ref,
                  w1e_ref, w1o_ref, b1_ref,
                  w2e_ref, w2o_ref, b2_ref,
                  l1w_ref, l1b_ref, l2w_ref, l2b_ref, l3w_ref, l3b_ref,
                  out_ref):
    f32 = jnp.float32
    bf16 = jnp.bfloat16
    bt = x_ref.shape[1]                       # batch block size (multiple of 16)

    # ---- conv1 (5x5 VALID) + 2x2 max-pool ------------------------------------
    # x block: (32, Bt, 96) = (H, B, W*Cin).  For each of the 5 kh taps we take
    # one contiguous row band (28 rows), fold batch into M, and matmul against
    # even/odd pool-folded Toeplitz weights (96 -> 84 output lanes each).
    acc_e = jnp.zeros((28 * bt, 84), f32)
    acc_o = jnp.zeros((28 * bt, 84), f32)
    for kh in range(5):
        band = x_ref[kh:kh + 28].reshape(28 * bt, 96)          # bf16, M = 28*Bt
        acc_e = acc_e + jnp.dot(band, w1e_ref[kh], preferred_element_type=f32)
        acc_o = acc_o + jnp.dot(band, w1o_ref[kh], preferred_element_type=f32)
    # H-pool: pair up even/odd conv rows via a leading-dim reshape, take max of
    # the four (h-even/odd x w-even/odd) candidates, then add the tiled bias.
    ce = acc_e.reshape(14, 2, bt, 84)
    co = acc_o.reshape(14, 2, bt, 84)
    p1 = jnp.maximum(jnp.maximum(ce[:, 0], ce[:, 1]),
                     jnp.maximum(co[:, 0], co[:, 1])) + b1_ref[...]
    p1 = p1.astype(bf16)                                        # (14, Bt, 84)

    # ---- conv2 (5x5 VALID) + 2x2 max-pool -------------------------------------
    acc2_e = jnp.zeros((10 * bt, 80), f32)
    acc2_o = jnp.zeros((10 * bt, 80), f32)
    for kh in range(5):
        band = p1[kh:kh + 10].reshape(10 * bt, 84)              # M = 10*Bt
        acc2_e = acc2_e + jnp.dot(band, w2e_ref[kh], preferred_element_type=f32)
        acc2_o = acc2_o + jnp.dot(band, w2o_ref[kh], preferred_element_type=f32)
    ce2 = acc2_e.reshape(5, 2, bt, 80)
    co2 = acc2_o.reshape(5, 2, bt, 80)
    p2 = jnp.maximum(jnp.maximum(ce2[:, 0], ce2[:, 1]),
                     jnp.maximum(co2[:, 0], co2[:, 1])) + b2_ref[...]
    p2 = p2.astype(bf16)                                        # (5, Bt, 80)

    # ---- FC stack (M = Bt for every layer) ------------------------------------
    # l1 contracts the flattened (5, 80) features row-block by row-block; its
    # weight was pre-split/permuted offline to match PyTorch's CHW Flatten.
    y1 = jnp.zeros((bt, 120), f32)
    for h in range(5):
        y1 = y1 + jnp.dot(p2[h], l1w_ref[h], preferred_element_type=f32)
    y1 = jnp.maximum(y1 + l1b_ref[...], 0.0).astype(bf16)
    y2 = jnp.maximum(jnp.dot(y1, l2w_ref[...], preferred_element_type=f32)
                     + l2b_ref[...], 0.0).astype(bf16)
    y3 = jnp.dot(y2, l3w_ref[...], preferred_element_type=f32) + l3b_ref[...]
    out_ref[...] = y3                                           # (Bt, 128) lane-dense


# ----------------------------------------------------------------------------
# Wrapper
# ----------------------------------------------------------------------------
def _round_up(a, b):
    return (a + b - 1) // b * b


def _const_spec(arr):
    shape = arr.shape
    zeros = (0,) * len(shape)
    return pl.BlockSpec(shape, lambda i, _z=zeros: _z)


def lenet_forward(x_nchw, kp, bt_max=64):
    n, c, h, w = x_nchw.shape
    assert (c, h, w) == (3, 32, 32), (c, h, w)

    # Batch block size: multiple of 16 (keeps in-kernel reshapes layout no-ops),
    # capped at bt_max.  Pad the batch up to a multiple of it.
    bt = min(bt_max, _round_up(n, 16))
    n_pad = _round_up(n, bt)

    # NCHW -> (H, N, W*C): H outermost so batch folds into the matmul M dim.
    x3 = jnp.transpose(x_nchw, (2, 0, 3, 1)).reshape(32, n, 96).astype(jnp.float32)
    if n_pad != n:
        x3 = jnp.pad(x3, ((0, 0), (0, n_pad - n), (0, 0)))
    x3 = x3.astype(jnp.bfloat16)

    # Advisory cost estimate (Toeplitz flops per image).
    macs_per_img = (10 * 28 * 96 * 84 + 10 * 10 * 84 * 80
                    + 5 * 80 * 120 + 120 * 84 + 84 * 128)
    weight_bytes = sum(int(v.size) * v.dtype.itemsize for v in kp.values())
    bytes_accessed = int(x3.size) * 2 + weight_bytes + n_pad * 128 * 4

    out = pl.pallas_call(
        _lenet_kernel,
        grid=(n_pad // bt,),
        out_shape=jax.ShapeDtypeStruct((n_pad, 128), jnp.float32),
        in_specs=[
            pl.BlockSpec((32, bt, 96), lambda i: (0, i, 0)),     # input block
            _const_spec(kp["w1e"]), _const_spec(kp["w1o"]), _const_spec(kp["b1"]),
            _const_spec(kp["w2e"]), _const_spec(kp["w2o"]), _const_spec(kp["b2"]),
            _const_spec(kp["l1w"]), _const_spec(kp["l1b"]),
            _const_spec(kp["l2w"]), _const_spec(kp["l2b"]),
            _const_spec(kp["l3w"]), _const_spec(kp["l3b"]),
        ],
        out_specs=pl.BlockSpec((bt, 128), lambda i: (i, 0)),
        compiler_params=pltpu.CompilerParams(
            dimension_semantics=("parallel",)),
        cost_estimate=pl.CostEstimate(flops=2 * macs_per_img * n_pad,
                                      transcendentals=0,
                                      bytes_accessed=bytes_accessed),
    )(x3, kp["w1e"], kp["w1o"], kp["b1"],
      kp["w2e"], kp["w2o"], kp["b2"],
      kp["l1w"], kp["l1b"], kp["l2w"], kp["l2b"], kp["l3w"], kp["l3b"])
    return out[:n, :10]


# ----------------------------------------------------------------------------
# Offline parameter preparation (one-time, numerically exact rearrangements;
# only the final cast to bf16 loses precision).
# ----------------------------------------------------------------------------
def prepare_params(p):
    f32, bf16 = jnp.float32, jnp.bfloat16
    c1 = p["c1_w"].astype(f32)                      # (5, 5, 3, 6)  (kh, kw, ci, co)
    c2 = p["c2_w"].astype(f32)                      # (5, 5, 6, 16)

    # Block-Toeplitz conv weights: W[kh, w*Cin+ci, ow*Cout+co] = w[kh, w-ow, ci, co]
    w1t = jnp.zeros((5, 96, 168), f32)
    blk1 = c1.reshape(5, 15, 6)
    for ow in range(28):
        w1t = w1t.at[:, 3 * ow:3 * ow + 15, 6 * ow:6 * ow + 6].set(blk1)
    w2t = jnp.zeros((5, 84, 160), f32)
    blk2 = c2.reshape(5, 30, 16)
    for ow in range(10):
        w2t = w2t.at[:, 6 * ow:6 * ow + 30, 16 * ow:16 * ow + 16].set(blk2)

    # Fold the W-direction of the 2x2 max-pool into the weights: keep only the
    # even / odd output-column copies (exact column selection, no extra matmul).
    cols1 = jnp.arange(14 * 6)
    pw1, co1 = cols1 // 6, cols1 % 6
    w1e = w1t[:, :, (2 * pw1) * 6 + co1].astype(bf16)        # (5, 96, 84)
    w1o = w1t[:, :, (2 * pw1 + 1) * 6 + co1].astype(bf16)
    cols2 = jnp.arange(5 * 16)
    pw2, co2 = cols2 // 16, cols2 % 16
    w2e = w2t[:, :, (2 * pw2) * 16 + co2].astype(bf16)       # (5, 84, 80)
    w2o = w2t[:, :, (2 * pw2 + 1) * 16 + co2].astype(bf16)

    b1 = jnp.tile(p["c1_b"].astype(f32), 14).reshape(1, 84)
    b2 = jnp.tile(p["c2_b"].astype(f32), 5).reshape(1, 80)

    # l1: split by pooled row h and permute so kernel order (h, w, c) matches
    # PyTorch's CHW Flatten order (c*25 + h*5 + w).
    hh = jnp.arange(5)[:, None, None]
    ww = jnp.arange(5)[None, :, None]
    cc = jnp.arange(16)[None, None, :]
    idx = (cc * 25 + hh * 5 + ww).reshape(5, 80)             # [h, w*16+c] -> flat idx
    l1w = p["l1_w"].astype(f32)[idx].astype(bf16)            # (5, 80, 120)

    # l3 padded to 128 output lanes (zero columns) for a lane-dense final store.
    l3w = jnp.zeros((84, 128), f32).at[:, :10].set(p["l3_w"].astype(f32)).astype(bf16)
    l3b = jnp.zeros((1, 128), f32).at[0, :10].set(p["l3_b"].astype(f32))

    return {
        "w1e": w1e, "w1o": w1o, "b1": b1,
        "w2e": w2e, "w2o": w2o, "b2": b2,
        "l1w": l1w, "l1b": p["l1_b"].astype(f32).reshape(1, 120),
        "l2w": p["l2_w"].astype(bf16), "l2b": p["l2_b"].astype(f32).reshape(1, 84),
        "l3w": l3w, "l3b": l3b,
    }


# ----------------------------------------------------------------------------
# Parameters + pure-JAX reference (for the correctness check)
# ----------------------------------------------------------------------------
def init_params(key):
    def uni(k, shape, fan_in):
        bound = 1.0 / jnp.sqrt(jnp.float32(fan_in))
        return jax.random.uniform(k, shape, jnp.float32, -bound, bound)

    ks = jax.random.split(key, 10)
    return {
        "c1_w": uni(ks[0], (5, 5, 3, 6), 5 * 5 * 3),
        "c1_b": uni(ks[1], (6,), 5 * 5 * 3),
        "c2_w": uni(ks[2], (5, 5, 6, 16), 5 * 5 * 6),
        "c2_b": uni(ks[3], (16,), 5 * 5 * 6),
        "l1_w": uni(ks[4], (400, 120), 400),
        "l1_b": uni(ks[5], (120,), 400),
        "l2_w": uni(ks[6], (120, 84), 120),
        "l2_b": uni(ks[7], (84,), 120),
        "l3_w": uni(ks[8], (84, 10), 84),
        "l3_b": uni(ks[9], (10,), 84),
    }


def _reference_forward(x_nchw, p):
    hi = jax.lax.Precision.HIGHEST

    def conv(x, w, b):
        n, h, wd, cin = x.shape
        kh, kw, _, cout = w.shape
        oh, ow = h - kh + 1, wd - kw + 1
        cols = [x[:, a:a + oh, c:c + ow, :] for a in range(kh) for c in range(kw)]
        patches = jnp.concatenate(cols, axis=-1).reshape(n * oh * ow, kh * kw * cin)
        out = jnp.dot(patches, w.reshape(kh * kw * cin, cout), precision=hi) + b
        return out.reshape(n, oh, ow, cout)

    def pool(x):
        return jnp.maximum(jnp.maximum(x[:, 0::2, 0::2, :], x[:, 0::2, 1::2, :]),
                           jnp.maximum(x[:, 1::2, 0::2, :], x[:, 1::2, 1::2, :]))

    x = jnp.transpose(x_nchw, (0, 2, 3, 1))
    x = pool(conv(x, p["c1_w"], p["c1_b"]))
    x = pool(conv(x, p["c2_w"], p["c2_b"]))
    x = jnp.transpose(x, (0, 3, 1, 2)).reshape(x.shape[0], -1)   # CHW flatten
    x = jnp.maximum(jnp.dot(x, p["l1_w"], precision=hi) + p["l1_b"], 0.0)
    x = jnp.maximum(jnp.dot(x, p["l2_w"], precision=hi) + p["l2_b"], 0.0)
    return jnp.dot(x, p["l3_w"], precision=hi) + p["l3_b"]


if __name__ == "__main__":
    key = jax.random.PRNGKey(0)
    k_param, k_x = jax.random.split(key)
    params = init_params(k_param)
    kparams = prepare_params(params)              # one-time, offline
    # LeNet requires 32x32x3 inputs (16*5*5 = 400 features after pool2).
    x = jax.random.normal(k_x, (2, 3, 32, 32), jnp.float32)

    out = jax.block_until_ready(jax.jit(lenet_forward)(x, kparams))
    assert out.shape == (2, 10), out.shape

    ref = jax.block_until_ready(jax.jit(_reference_forward)(x, params))
    max_err = float(jnp.max(jnp.abs(out - ref)))
    # bf16 weights/activations with f32 accumulation: observed error is a few 1e-3.
    assert max_err < 3e-2, f"mismatch vs reference: {max_err}"
    print("KERNEL_OK")
</pallas_src>

<mosaic_0001>
module attributes {stable_mosaic.version = 11 : i64} {
  func.func @_lenet_kernel(%arg0: i32, %arg1: memref<32x16x96xbf16, #tpu.memory_space<vmem>>, %arg2: memref<5x96x84xbf16, #tpu.memory_space<vmem>>, %arg3: memref<5x96x84xbf16, #tpu.memory_space<vmem>>, %arg4: memref<1x84xf32, #tpu.memory_space<vmem>>, %arg5: memref<5x84x80xbf16, #tpu.memory_space<vmem>>, %arg6: memref<5x84x80xbf16, #tpu.memory_space<vmem>>, %arg7: memref<1x80xf32, #tpu.memory_space<vmem>>, %arg8: memref<5x80x120xbf16, #tpu.memory_space<vmem>>, %arg9: memref<1x120xf32, #tpu.memory_space<vmem>>, %arg10: memref<120x84xbf16, #tpu.memory_space<vmem>>, %arg11: memref<1x84xf32, #tpu.memory_space<vmem>>, %arg12: memref<84x128xbf16, #tpu.memory_space<vmem>>, %arg13: memref<1x128xf32, #tpu.memory_space<vmem>>, %arg14: memref<16x128xf32, #tpu.memory_space<vmem>>) attributes {dimension_semantics = [#tpu.dimension_semantics<parallel>], iteration_bounds = array<i64: 1>, scalar_prefetch = 0 : i64, scratch_operands = 0 : i64, tpu.core_type = #tpu.core_type<tc>, window_params = [{transform_indices = @transform_0, window_bounds = array<i64: 32, 16, 96>}, {pipeline_mode = #tpu.pipeline_mode<synchronous>, transform_indices = @transform_1, window_bounds = array<i64: 5, 96, 84>}, {pipeline_mode = #tpu.pipeline_mode<synchronous>, transform_indices = @transform_2, window_bounds = array<i64: 5, 96, 84>}, {pipeline_mode = #tpu.pipeline_mode<synchronous>, transform_indices = @transform_3, window_bounds = array<i64: 1, 84>}, {pipeline_mode = #tpu.pipeline_mode<synchronous>, transform_indices = @transform_4, window_bounds = array<i64: 5, 84, 80>}, {pipeline_mode = #tpu.pipeline_mode<synchronous>, transform_indices = @transform_5, window_bounds = array<i64: 5, 84, 80>}, {pipeline_mode = #tpu.pipeline_mode<synchronous>, transform_indices = @transform_6, window_bounds = array<i64: 1, 80>}, {pipeline_mode = #tpu.pipeline_mode<synchronous>, transform_indices = @transform_7, window_bounds = array<i64: 5, 80, 120>}, {pipeline_mode = #tpu.pipeline_mode<synchronous>, transform_indices = @transform_8, window_bounds = array<i64: 1, 120>}, {pipeline_mode = #tpu.pipeline_mode<synchronous>, transform_indices = @transform_9, window_bounds = array<i64: 120, 84>}, {pipeline_mode = #tpu.pipeline_mode<synchronous>, transform_indices = @transform_10, window_bounds = array<i64: 1, 84>}, {pipeline_mode = #tpu.pipeline_mode<synchronous>, transform_indices = @transform_11, window_bounds = array<i64: 84, 128>}, {pipeline_mode = #tpu.pipeline_mode<synchronous>, transform_indices = @transform_12, window_bounds = array<i64: 1, 128>}, {transform_indices = @transform_13, window_bounds = array<i64: 16, 128>}]} {
    %cst = arith.constant 0.000000e+00 : f32
    %0 = vector.broadcast %cst : f32 to vector<448x84xf32>
    %cst_0 = arith.constant 0.000000e+00 : f32
    %1 = vector.broadcast %cst_0 : f32 to vector<448x84xf32>
    %c0 = arith.constant 0 : index
    %c0_1 = arith.constant 0 : index
    %c0_2 = arith.constant 0 : index
    %2 = vector.load %arg1[%c0, %c0_1, %c0_2] : memref<32x16x96xbf16, #tpu.memory_space<vmem>>, vector<28x16x96xbf16>
    %3 = vector.shape_cast %2 : vector<28x16x96xbf16> to vector<448x96xbf16>
    %c0_3 = arith.constant 0 : index
    %c0_4 = arith.constant 0 : index
    %c0_5 = arith.constant 0 : index
    %4 = vector.load %arg2[%c0_3, %c0_4, %c0_5] : memref<5x96x84xbf16, #tpu.memory_space<vmem>>, vector<1x96x84xbf16>
    %5 = vector.shape_cast %4 : vector<1x96x84xbf16> to vector<96x84xbf16>
    %cst_6 = arith.constant dense<0.000000e+00> : vector<448x84xf32>
    %6 = tpu.matmul %3, %5, %cst_6 {dimension_numbers = #tpu.dot_dimension_numbers<[1], [0], [0], [1], [0, 0, 1, 1], [], []>} : vector<448x96xbf16>, vector<96x84xbf16>, vector<448x84xf32> -> vector<448x84xf32>
    %7 = arith.addf %0, %6 : vector<448x84xf32>
    %c0_7 = arith.constant 0 : index
    %c0_8 = arith.constant 0 : index
    %c0_9 = arith.constant 0 : index
    %8 = vector.load %arg3[%c0_7, %c0_8, %c0_9] : memref<5x96x84xbf16, #tpu.memory_space<vmem>>, vector<1x96x84xbf16>
    %9 = vector.shape_cast %8 : vector<1x96x84xbf16> to vector<96x84xbf16>
    %cst_10 = arith.constant dense<0.000000e+00> : vector<448x84xf32>
    %10 = tpu.matmul %3, %9, %cst_10 {dimension_numbers = #tpu.dot_dimension_numbers<[1], [0], [0], [1], [0, 0, 1, 1], [], []>} : vector<448x96xbf16>, vector<96x84xbf16>, vector<448x84xf32> -> vector<448x84xf32>
    %11 = arith.addf %1, %10 : vector<448x84xf32>
    %c1 = arith.constant 1 : index
    %c0_11 = arith.constant 0 : index
    %c0_12 = arith.constant 0 : index
    %12 = vector.load %arg1[%c1, %c0_11, %c0_12] : memref<32x16x96xbf16, #tpu.memory_space<vmem>>, vector<28x16x96xbf16>
    %13 = vector.shape_cast %12 : vector<28x16x96xbf16> to vector<448x96xbf16>
    %c1_13 = arith.constant 1 : index
    %c0_14 = arith.constant 0 : index
    %c0_15 = arith.constant 0 : index
    %14 = vector.load %arg2[%c1_13, %c0_14, %c0_15] : memref<5x96x84xbf16, #tpu.memory_space<vmem>>, vector<1x96x84xbf16>
    %15 = vector.shape_cast %14 : vector<1x96x84xbf16> to vector<96x84xbf16>
    %cst_16 = arith.constant dense<0.000000e+00> : vector<448x84xf32>
    %16 = tpu.matmul %13, %15, %cst_16 {dimension_numbers = #tpu.dot_dimension_numbers<[1], [0], [0], [1], [0, 0, 1, 1], [], []>} : vector<448x96xbf16>, vector<96x84xbf16>, vector<448x84xf32> -> vector<448x84xf32>
    %17 = arith.addf %7, %16 : vector<448x84xf32>
    %c1_17 = arith.constant 1 : index
    %c0_18 = arith.constant 0 : index
    %c0_19 = arith.constant 0 : index
    %18 = vector.load %arg3[%c1_17, %c0_18, %c0_19] : memref<5x96x84xbf16, #tpu.memory_space<vmem>>, vector<1x96x84xbf16>
    %19 = vector.shape_cast %18 : vector<1x96x84xbf16> to vector<96x84xbf16>
    %cst_20 = arith.constant dense<0.000000e+00> : vector<448x84xf32>
    %20 = tpu.matmul %13, %19, %cst_20 {dimension_numbers = #tpu.dot_dimension_numbers<[1], [0], [0], [1], [0, 0, 1, 1], [], []>} : vector<448x96xbf16>, vector<96x84xbf16>, vector<448x84xf32> -> vector<448x84xf32>
    %21 = arith.addf %11, %20 : vector<448x84xf32>
    %c2 = arith.constant 2 : index
    %c0_21 = arith.constant 0 : index
    %c0_22 = arith.constant 0 : index
    %22 = vector.load %arg1[%c2, %c0_21, %c0_22] : memref<32x16x96xbf16, #tpu.memory_space<vmem>>, vector<28x16x96xbf16>
    %23 = vector.shape_cast %22 : vector<28x16x96xbf16> to vector<448x96xbf16>
    %c2_23 = arith.constant 2 : index
    %c0_24 = arith.constant 0 : index
    %c0_25 = arith.constant 0 : index
    %24 = vector.load %arg2[%c2_23, %c0_24, %c0_25] : memref<5x96x84xbf16, #tpu.memory_space<vmem>>, vector<1x96x84xbf16>
    %25 = vector.shape_cast %24 : vector<1x96x84xbf16> to vector<96x84xbf16>
    %cst_26 = arith.constant dense<0.000000e+00> : vector<448x84xf32>
    %26 = tpu.matmul %23, %25, %cst_26 {dimension_numbers = #tpu.dot_dimension_numbers<[1], [0], [0], [1], [0, 0, 1, 1], [], []>} : vector<448x96xbf16>, vector<96x84xbf16>, vector<448x84xf32> -> vector<448x84xf32>
    %27 = arith.addf %17, %26 : vector<448x84xf32>
    %c2_27 = arith.constant 2 : index
    %c0_28 = arith.constant 0 : index
    %c0_29 = arith.constant 0 : index
    %28 = vector.load %arg3[%c2_27, %c0_28, %c0_29] : memref<5x96x84xbf16, #tpu.memory_space<vmem>>, vector<1x96x84xbf16>
    %29 = vector.shape_cast %28 : vector<1x96x84xbf16> to vector<96x84xbf16>
    %cst_30 = arith.constant dense<0.000000e+00> : vector<448x84xf32>
    %30 = tpu.matmul %23, %29, %cst_30 {dimension_numbers = #tpu.dot_dimension_numbers<[1], [0], [0], [1], [0, 0, 1, 1], [], []>} : vector<448x96xbf16>, vector<96x84xbf16>, vector<448x84xf32> -> vector<448x84xf32>
    %31 = arith.addf %21, %30 : vector<448x84xf32>
    %c3 = arith.constant 3 : index
    %c0_31 = arith.constant 0 : index
    %c0_32 = arith.constant 0 : index
    %32 = vector.load %arg1[%c3, %c0_31, %c0_32] : memref<32x16x96xbf16, #tpu.memory_space<vmem>>, vector<28x16x96xbf16>
    %33 = vector.shape_cast %32 : vector<28x16x96xbf16> to vector<448x96xbf16>
    %c3_33 = arith.constant 3 : index
    %c0_34 = arith.constant 0 : index
    %c0_35 = arith.constant 0 : index
    %34 = vector.load %arg2[%c3_33, %c0_34, %c0_35] : memref<5x96x84xbf16, #tpu.memory_space<vmem>>, vector<1x96x84xbf16>
    %35 = vector.shape_cast %34 : vector<1x96x84xbf16> to vector<96x84xbf16>
    %cst_36 = arith.constant dense<0.000000e+00> : vector<448x84xf32>
    %36 = tpu.matmul %33, %35, %cst_36 {dimension_numbers = #tpu.dot_dimension_numbers<[1], [0], [0], [1], [0, 0, 1, 1], [], []>} : vector<448x96xbf16>, vector<96x84xbf16>, vector<448x84xf32> -> vector<448x84xf32>
    %37 = arith.addf %27, %36 : vector<448x84xf32>
    %c3_37 = arith.constant 3 : index
    %c0_38 = arith.constant 0 : index
    %c0_39 = arith.constant 0 : index
    %38 = vector.load %arg3[%c3_37, %c0_38, %c0_39] : memref<5x96x84xbf16, #tpu.memory_space<vmem>>, vector<1x96x84xbf16>
    %39 = vector.shape_cast %38 : vector<1x96x84xbf16> to vector<96x84xbf16>
    %cst_40 = arith.constant dense<0.000000e+00> : vector<448x84xf32>
    %40 = tpu.matmul %33, %39, %cst_40 {dimension_numbers = #tpu.dot_dimension_numbers<[1], [0], [0], [1], [0, 0, 1, 1], [], []>} : vector<448x96xbf16>, vector<96x84xbf16>, vector<448x84xf32> -> vector<448x84xf32>
    %41 = arith.addf %31, %40 : vector<448x84xf32>
    %c4 = arith.constant 4 : index
    %c0_41 = arith.constant 0 : index
    %c0_42 = arith.constant 0 : index
    %42 = vector.load %arg1[%c4, %c0_41, %c0_42] : memref<32x16x96xbf16, #tpu.memory_space<vmem>>, vector<28x16x96xbf16>
    %43 = vector.shape_cast %42 : vector<28x16x96xbf16> to vector<448x96xbf16>
    %c4_43 = arith.constant 4 : index
    %c0_44 = arith.constant 0 : index
    %c0_45 = arith.constant 0 : index
    %44 = vector.load %arg2[%c4_43, %c0_44, %c0_45] : memref<5x96x84xbf16, #tpu.memory_space<vmem>>, vector<1x96x84xbf16>
    %45 = vector.shape_cast %44 : vector<1x96x84xbf16> to vector<96x84xbf16>
    %cst_46 = arith.constant dense<0.000000e+00> : vector<448x84xf32>
    %46 = tpu.matmul %43, %45, %cst_46 {dimension_numbers = #tpu.dot_dimension_numbers<[1], [0], [0], [1], [0, 0, 1, 1], [], []>} : vector<448x96xbf16>, vector<96x84xbf16>, vector<448x84xf32> -> vector<448x84xf32>
    %47 = arith.addf %37, %46 : vector<448x84xf32>
    %c4_47 = arith.constant 4 : index
    %c0_48 = arith.constant 0 : index
    %c0_49 = arith.constant 0 : index
    %48 = vector.load %arg3[%c4_47, %c0_48, %c0_49] : memref<5x96x84xbf16, #tpu.memory_space<vmem>>, vector<1x96x84xbf16>
    %49 = vector.shape_cast %48 : vector<1x96x84xbf16> to vector<96x84xbf16>
    %cst_50 = arith.constant dense<0.000000e+00> : vector<448x84xf32>
    %50 = tpu.matmul %43, %49, %cst_50 {dimension_numbers = #tpu.dot_dimension_numbers<[1], [0], [0], [1], [0, 0, 1, 1], [], []>} : vector<448x96xbf16>, vector<96x84xbf16>, vector<448x84xf32> -> vector<448x84xf32>
    %51 = arith.addf %41, %50 : vector<448x84xf32>
    %52 = vector.shape_cast %47 : vector<448x84xf32> to vector<14x2x16x84xf32>
    %53 = vector.shape_cast %51 : vector<448x84xf32> to vector<14x2x16x84xf32>
    %54 = vector.extract_strided_slice %52 {offsets = [0, 0, 0, 0], sizes = [14, 1, 16, 84], strides = [1, 1, 1, 1]} : vector<14x2x16x84xf32> to vector<14x1x16x84xf32>
    %55 = vector.shape_cast %54 : vector<14x1x16x84xf32> to vector<14x16x84xf32>
    %56 = vector.extract_strided_slice %52 {offsets = [0, 1, 0, 0], sizes = [14, 1, 16, 84], strides = [1, 1, 1, 1]} : vector<14x2x16x84xf32> to vector<14x1x16x84xf32>
    %57 = vector.shape_cast %56 : vector<14x1x16x84xf32> to vector<14x16x84xf32>
    %58 = arith.maximumf %55, %57 : vector<14x16x84xf32>
    %59 = vector.extract_strided_slice %53 {offsets = [0, 0, 0, 0], sizes = [14, 1, 16, 84], strides = [1, 1, 1, 1]} : vector<14x2x16x84xf32> to vector<14x1x16x84xf32>
    %60 = vector.shape_cast %59 : vector<14x1x16x84xf32> to vector<14x16x84xf32>
    %61 = vector.extract_strided_slice %53 {offsets = [0, 1, 0, 0], sizes = [14, 1, 16, 84], strides = [1, 1, 1, 1]} : vector<14x2x16x84xf32> to vector<14x1x16x84xf32>
    %62 = vector.shape_cast %61 : vector<14x1x16x84xf32> to vector<14x16x84xf32>
    %63 = arith.maximumf %60, %62 : vector<14x16x84xf32>
    %64 = arith.maximumf %58, %63 : vector<14x16x84xf32>
    %c0_51 = arith.constant 0 : index
    %c0_52 = arith.constant 0 : index
    %65 = vector.load %arg4[%c0_51, %c0_52] : memref<1x84xf32, #tpu.memory_space<vmem>>, vector<1x84xf32>
    %66 = vector.shape_cast %65 : vector<1x84xf32> to vector<1x1x84xf32>
    %67 = vector.broadcast %66 : vector<1x1x84xf32> to vector<14x16x84xf32>
    %68 = arith.addf %64, %67 : vector<14x16x84xf32>
    %69 = arith.truncf %68 : vector<14x16x84xf32> to vector<14x16x84xbf16>
    %cst_53 = arith.constant 0.000000e+00 : f32
    %70 = vector.broadcast %cst_53 : f32 to vector<160x80xf32>
    %cst_54 = arith.constant 0.000000e+00 : f32
    %71 = vector.broadcast %cst_54 : f32 to vector<160x80xf32>
    %72 = vector.extract_strided_slice %69 {offsets = [0, 0, 0], sizes = [10, 16, 84], strides = [1, 1, 1]} : vector<14x16x84xbf16> to vector<10x16x84xbf16>
    %73 = vector.shape_cast %72 : vector<10x16x84xbf16> to vector<160x84xbf16>
    %c0_55 = arith.constant 0 : index
    %c0_56 = arith.constant 0 : index
    %c0_57 = arith.constant 0 : index
    %74 = vector.load %arg5[%c0_55, %c0_56, %c0_57] : memref<5x84x80xbf16, #tpu.memory_space<vmem>>, vector<1x84x80xbf16>
    %75 = vector.shape_cast %74 : vector<1x84x80xbf16> to vector<84x80xbf16>
    %cst_58 = arith.constant dense<0.000000e+00> : vector<160x80xf32>
    %76 = tpu.matmul %73, %75, %cst_58 {dimension_numbers = #tpu.dot_dimension_numbers<[1], [0], [0], [1], [0, 0, 1, 1], [], []>} : vector<160x84xbf16>, vector<84x80xbf16>, vector<160x80xf32> -> vector<160x80xf32>
    %77 = arith.addf %70, %76 : vector<160x80xf32>
    %c0_59 = arith.constant 0 : index
    %c0_60 = arith.constant 0 : index
    %c0_61 = arith.constant 0 : index
    %78 = vector.load %arg6[%c0_59, %c0_60, %c0_61] : memref<5x84x80xbf16, #tpu.memory_space<vmem>>, vector<1x84x80xbf16>
    %79 = vector.shape_cast %78 : vector<1x84x80xbf16> to vector<84x80xbf16>
    %cst_62 = arith.constant dense<0.000000e+00> : vector<160x80xf32>
    %80 = tpu.matmul %73, %79, %cst_62 {dimension_numbers = #tpu.dot_dimension_numbers<[1], [0], [0], [1], [0, 0, 1, 1], [], []>} : vector<160x84xbf16>, vector<84x80xbf16>, vector<160x80xf32> -> vector<160x80xf32>
    %81 = arith.addf %71, %80 : vector<160x80xf32>
    %82 = vector.extract_strided_slice %69 {offsets = [1, 0, 0], sizes = [10, 16, 84], strides = [1, 1, 1]} : vector<14x16x84xbf16> to vector<10x16x84xbf16>
    %83 = vector.shape_cast %82 : vector<10x16x84xbf16> to vector<160x84xbf16>
    %c1_63 = arith.constant 1 : index
    %c0_64 = arith.constant 0 : index
    %c0_65 = arith.constant 0 : index
    %84 = vector.load %arg5[%c1_63, %c0_64, %c0_65] : memref<5x84x80xbf16, #tpu.memory_space<vmem>>, vector<1x84x80xbf16>
    %85 = vector.shape_cast %84 : vector<1x84x80xbf16> to vector<84x80xbf16>
    %cst_66 = arith.constant dense<0.000000e+00> : vector<160x80xf32>
    %86 = tpu.matmul %83, %85, %cst_66 {dimension_numbers = #tpu.dot_dimension_numbers<[1], [0], [0], [1], [0, 0, 1, 1], [], []>} : vector<160x84xbf16>, vector<84x80xbf16>, vector<160x80xf32> -> vector<160x80xf32>
    %87 = arith.addf %77, %86 : vector<160x80xf32>
    %c1_67 = arith.constant 1 : index
    %c0_68 = arith.constant 0 : index
    %c0_69 = arith.constant 0 : index
    %88 = vector.load %arg6[%c1_67, %c0_68, %c0_69] : memref<5x84x80xbf16, #tpu.memory_space<vmem>>, vector<1x84x80xbf16>
    %89 = vector.shape_cast %88 : vector<1x84x80xbf16> to vector<84x80xbf16>
    %cst_70 = arith.constant dense<0.000000e+00> : vector<160x80xf32>
    %90 = tpu.matmul %83, %89, %cst_70 {dimension_numbers = #tpu.dot_dimension_numbers<[1], [0], [0], [1], [0, 0, 1, 1], [], []>} : vector<160x84xbf16>, vector<84x80xbf16>, vector<160x80xf32> -> vector<160x80xf32>
    %91 = arith.addf %81, %90 : vector<160x80xf32>
    %92 = vector.extract_strided_slice %69 {offsets = [2, 0, 0], sizes = [10, 16, 84], strides = [1, 1, 1]} : vector<14x16x84xbf16> to vector<10x16x84xbf16>
    %93 = vector.shape_cast %92 : vector<10x16x84xbf16> to vector<160x84xbf16>
    %c2_71 = arith.constant 2 : index
    %c0_72 = arith.constant 0 : index
    %c0_73 = arith.constant 0 : index
    %94 = vector.load %arg5[%c2_71, %c0_72, %c0_73] : memref<5x84x80xbf16, #tpu.memory_space<vmem>>, vector<1x84x80xbf16>
    %95 = vector.shape_cast %94 : vector<1x84x80xbf16> to vector<84x80xbf16>
    %cst_74 = arith.constant dense<0.000000e+00> : vector<160x80xf32>
    %96 = tpu.matmul %93, %95, %cst_74 {dimension_numbers = #tpu.dot_dimension_numbers<[1], [0], [0], [1], [0, 0, 1, 1], [], []>} : vector<160x84xbf16>, vector<84x80xbf16>, vector<160x80xf32> -> vector<160x80xf32>
    %97 = arith.addf %87, %96 : vector<160x80xf32>
    %c2_75 = arith.constant 2 : index
    %c0_76 = arith.constant 0 : index
    %c0_77 = arith.constant 0 : index
    %98 = vector.load %arg6[%c2_75, %c0_76, %c0_77] : memref<5x84x80xbf16, #tpu.memory_space<vmem>>, vector<1x84x80xbf16>
    %99 = vector.shape_cast %98 : vector<1x84x80xbf16> to vector<84x80xbf16>
    %cst_78 = arith.constant dense<0.000000e+00> : vector<160x80xf32>
    %100 = tpu.matmul %93, %99, %cst_78 {dimension_numbers = #tpu.dot_dimension_numbers<[1], [0], [0], [1], [0, 0, 1, 1], [], []>} : vector<160x84xbf16>, vector<84x80xbf16>, vector<160x80xf32> -> vector<160x80xf32>
    %101 = arith.addf %91, %100 : vector<160x80xf32>
    %102 = vector.extract_strided_slice %69 {offsets = [3, 0, 0], sizes = [10, 16, 84], strides = [1, 1, 1]} : vector<14x16x84xbf16> to vector<10x16x84xbf16>
    %103 = vector.shape_cast %102 : vector<10x16x84xbf16> to vector<160x84xbf16>
    %c3_79 = arith.constant 3 : index
    %c0_80 = arith.constant 0 : index
    %c0_81 = arith.constant 0 : index
    %104 = vector.load %arg5[%c3_79, %c0_80, %c0_81] : memref<5x84x80xbf16, #tpu.memory_space<vmem>>, vector<1x84x80xbf16>
    %105 = vector.shape_cast %104 : vector<1x84x80xbf16> to vector<84x80xbf16>
    %cst_82 = arith.constant dense<0.000000e+00> : vector<160x80xf32>
    %106 = tpu.matmul %103, %105, %cst_82 {dimension_numbers = #tpu.dot_dimension_numbers<[1], [0], [0], [1], [0, 0, 1, 1], [], []>} : vector<160x84xbf16>, vector<84x80xbf16>, vector<160x80xf32> -> vector<160x80xf32>
    %107 = arith.addf %97, %106 : vector<160x80xf32>
    %c3_83 = arith.constant 3 : index
    %c0_84 = arith.constant 0 : index
    %c0_85 = arith.constant 0 : index
    %108 = vector.load %arg6[%c3_83, %c0_84, %c0_85] : memref<5x84x80xbf16, #tpu.memory_space<vmem>>, vector<1x84x80xbf16>
    %109 = vector.shape_cast %108 : vector<1x84x80xbf16> to vector<84x80xbf16>
    %cst_86 = arith.constant dense<0.000000e+00> : vector<160x80xf32>
    %110 = tpu.matmul %103, %109, %cst_86 {dimension_numbers = #tpu.dot_dimension_numbers<[1], [0], [0], [1], [0, 0, 1, 1], [], []>} : vector<160x84xbf16>, vector<84x80xbf16>, vector<160x80xf32> -> vector<160x80xf32>
    %111 = arith.addf %101, %110 : vector<160x80xf32>
    %112 = vector.extract_strided_slice %69 {offsets = [4, 0, 0], sizes = [10, 16, 84], strides = [1, 1, 1]} : vector<14x16x84xbf16> to vector<10x16x84xbf16>
    %113 = vector.shape_cast %112 : vector<10x16x84xbf16> to vector<160x84xbf16>
    %c4_87 = arith.constant 4 : index
    %c0_88 = arith.constant 0 : index
    %c0_89 = arith.constant 0 : index
    %114 = vector.load %arg5[%c4_87, %c0_88, %c0_89] : memref<5x84x80xbf16, #tpu.memory_space<vmem>>, vector<1x84x80xbf16>
    %115 = vector.shape_cast %114 : vector<1x84x80xbf16> to vector<84x80xbf16>
    %cst_90 = arith.constant dense<0.000000e+00> : vector<160x80xf32>
    %116 = tpu.matmul %113, %115, %cst_90 {dimension_numbers = #tpu.dot_dimension_numbers<[1], [0], [0], [1], [0, 0, 1, 1], [], []>} : vector<160x84xbf16>, vector<84x80xbf16>, vector<160x80xf32> -> vector<160x80xf32>
    %117 = arith.addf %107, %116 : vector<160x80xf32>
    %c4_91 = arith.constant 4 : index
    %c0_92 = arith.constant 0 : index
    %c0_93 = arith.constant 0 : index
    %118 = vector.load %arg6[%c4_91, %c0_92, %c0_93] : memref<5x84x80xbf16, #tpu.memory_space<vmem>>, vector<1x84x80xbf16>
    %119 = vector.shape_cast %118 : vector<1x84x80xbf16> to vector<84x80xbf16>
    %cst_94 = arith.constant dense<0.000000e+00> : vector<160x80xf32>
    %120 = tpu.matmul %113, %119, %cst_94 {dimension_numbers = #tpu.dot_dimension_numbers<[1], [0], [0], [1], [0, 0, 1, 1], [], []>} : vector<160x84xbf16>, vector<84x80xbf16>, vector<160x80xf32> -> vector<160x80xf32>
    %121 = arith.addf %111, %120 : vector<160x80xf32>
    %122 = vector.shape_cast %117 : vector<160x80xf32> to vector<5x2x16x80xf32>
    %123 = vector.shape_cast %121 : vector<160x80xf32> to vector<5x2x16x80xf32>
    %124 = vector.extract_strided_slice %122 {offsets = [0, 0, 0, 0], sizes = [5, 1, 16, 80], strides = [1, 1, 1, 1]} : vector<5x2x16x80xf32> to vector<5x1x16x80xf32>
    %125 = vector.shape_cast %124 : vector<5x1x16x80xf32> to vector<5x16x80xf32>
    %126 = vector.extract_strided_slice %122 {offsets = [0, 1, 0, 0], sizes = [5, 1, 16, 80], strides = [1, 1, 1, 1]} : vector<5x2x16x80xf32> to vector<5x1x16x80xf32>
    %127 = vector.shape_cast %126 : vector<5x1x16x80xf32> to vector<5x16x80xf32>
    %128 = arith.maximumf %125, %127 : vector<5x16x80xf32>
    %129 = vector.extract_strided_slice %123 {offsets = [0, 0, 0, 0], sizes = [5, 1, 16, 80], strides = [1, 1, 1, 1]} : vector<5x2x16x80xf32> to vector<5x1x16x80xf32>
    %130 = vector.shape_cast %129 : vector<5x1x16x80xf32> to vector<5x16x80xf32>
    %131 = vector.extract_strided_slice %123 {offsets = [0, 1, 0, 0], sizes = [5, 1, 16, 80], strides = [1, 1, 1, 1]} : vector<5x2x16x80xf32> to vector<5x1x16x80xf32>
    %132 = vector.shape_cast %131 : vector<5x1x16x80xf32> to vector<5x16x80xf32>
    %133 = arith.maximumf %130, %132 : vector<5x16x80xf32>
    %134 = arith.maximumf %128, %133 : vector<5x16x80xf32>
    %c0_95 = arith.constant 0 : index
    %c0_96 = arith.constant 0 : index
    %135 = vector.load %arg7[%c0_95, %c0_96] : memref<1x80xf32, #tpu.memory_space<vmem>>, vector<1x80xf32>
    %136 = vector.shape_cast %135 : vector<1x80xf32> to vector<1x1x80xf32>
    %137 = vector.broadcast %136 : vector<1x1x80xf32> to vector<5x16x80xf32>
    %138 = arith.addf %134, %137 : vector<5x16x80xf32>
    %139 = arith.truncf %138 : vector<5x16x80xf32> to vector<5x16x80xbf16>
    %cst_97 = arith.constant 0.000000e+00 : f32
    %140 = vector.broadcast %cst_97 : f32 to vector<16x120xf32>
    %141 = vector.extract_strided_slice %139 {offsets = [0, 0, 0], sizes = [1, 16, 80], strides = [1, 1, 1]} : vector<5x16x80xbf16> to vector<1x16x80xbf16>
    %142 = vector.shape_cast %141 : vector<1x16x80xbf16> to vector<16x80xbf16>
    %c0_98 = arith.constant 0 : index
    %c0_99 = arith.constant 0 : index
    %c0_100 = arith.constant 0 : index
    %143 = vector.load %arg8[%c0_98, %c0_99, %c0_100] : memref<5x80x120xbf16, #tpu.memory_space<vmem>>, vector<1x80x120xbf16>
    %144 = vector.shape_cast %143 : vector<1x80x120xbf16> to vector<80x120xbf16>
    %cst_101 = arith.constant dense<0.000000e+00> : vector<16x120xf32>
    %145 = tpu.matmul %142, %144, %cst_101 {dimension_numbers = #tpu.dot_dimension_numbers<[1], [0], [0], [1], [0, 0, 1, 1], [], []>} : vector<16x80xbf16>, vector<80x120xbf16>, vector<16x120xf32> -> vector<16x120xf32>
    %146 = arith.addf %140, %145 : vector<16x120xf32>
    %147 = vector.extract_strided_slice %139 {offsets = [1, 0, 0], sizes = [1, 16, 80], strides = [1, 1, 1]} : vector<5x16x80xbf16> to vector<1x16x80xbf16>
    %148 = vector.shape_cast %147 : vector<1x16x80xbf16> to vector<16x80xbf16>
    %c1_102 = arith.constant 1 : index
    %c0_103 = arith.constant 0 : index
    %c0_104 = arith.constant 0 : index
    %149 = vector.load %arg8[%c1_102, %c0_103, %c0_104] : memref<5x80x120xbf16, #tpu.memory_space<vmem>>, vector<1x80x120xbf16>
    %150 = vector.shape_cast %149 : vector<1x80x120xbf16> to vector<80x120xbf16>
    %cst_105 = arith.constant dense<0.000000e+00> : vector<16x120xf32>
    %151 = tpu.matmul %148, %150, %cst_105 {dimension_numbers = #tpu.dot_dimension_numbers<[1], [0], [0], [1], [0, 0, 1, 1], [], []>} : vector<16x80xbf16>, vector<80x120xbf16>, vector<16x120xf32> -> vector<16x120xf32>
    %152 = arith.addf %146, %151 : vector<16x120xf32>
    %153 = vector.extract_strided_slice %139 {offsets = [2, 0, 0], sizes = [1, 16, 80], strides = [1, 1, 1]} : vector<5x16x80xbf16> to vector<1x16x80xbf16>
    %154 = vector.shape_cast %153 : vector<1x16x80xbf16> to vector<16x80xbf16>
    %c2_106 = arith.constant 2 : index
    %c0_107 = arith.constant 0 : index
    %c0_108 = arith.constant 0 : index
    %155 = vector.load %arg8[%c2_106, %c0_107, %c0_108] : memref<5x80x120xbf16, #tpu.memory_space<vmem>>, vector<1x80x120xbf16>
    %156 = vector.shape_cast %155 : vector<1x80x120xbf16> to vector<80x120xbf16>
    %cst_109 = arith.constant dense<0.000000e+00> : vector<16x120xf32>
    %157 = tpu.matmul %154, %156, %cst_109 {dimension_numbers = #tpu.dot_dimension_numbers<[1], [0], [0], [1], [0, 0, 1, 1], [], []>} : vector<16x80xbf16>, vector<80x120xbf16>, vector<16x120xf32> -> vector<16x120xf32>
    %158 = arith.addf %152, %157 : vector<16x120xf32>
    %159 = vector.extract_strided_slice %139 {offsets = [3, 0, 0], sizes = [1, 16, 80], strides = [1, 1, 1]} : vector<5x16x80xbf16> to vector<1x16x80xbf16>
    %160 = vector.shape_cast %159 : vector<1x16x80xbf16> to vector<16x80xbf16>
    %c3_110 = arith.constant 3 : index
    %c0_111 = arith.constant 0 : index
    %c0_112 = arith.constant 0 : index
    %161 = vector.load %arg8[%c3_110, %c0_111, %c0_112] : memref<5x80x120xbf16, #tpu.memory_space<vmem>>, vector<1x80x120xbf16>
    %162 = vector.shape_cast %161 : vector<1x80x120xbf16> to vector<80x120xbf16>
    %cst_113 = arith.constant dense<0.000000e+00> : vector<16x120xf32>
    %163 = tpu.matmul %160, %162, %cst_113 {dimension_numbers = #tpu.dot_dimension_numbers<[1], [0], [0], [1], [0, 0, 1, 1], [], []>} : vector<16x80xbf16>, vector<80x120xbf16>, vector<16x120xf32> -> vector<16x120xf32>
    %164 = arith.addf %158, %163 : vector<16x120xf32>
    %165 = vector.extract_strided_slice %139 {offsets = [4, 0, 0], sizes = [1, 16, 80], strides = [1, 1, 1]} : vector<5x16x80xbf16> to vector<1x16x80xbf16>
    %166 = vector.shape_cast %165 : vector<1x16x80xbf16> to vector<16x80xbf16>
    %c4_114 = arith.constant 4 : index
    %c0_115 = arith.constant 0 : index
    %c0_116 = arith.constant 0 : index
    %167 = vector.load %arg8[%c4_114, %c0_115, %c0_116] : memref<5x80x120xbf16, #tpu.memory_space<vmem>>, vector<1x80x120xbf16>
    %168 = vector.shape_cast %167 : vector<1x80x120xbf16> to vector<80x120xbf16>
    %cst_117 = arith.constant dense<0.000000e+00> : vector<16x120xf32>
    %169 = tpu.matmul %166, %168, %cst_117 {dimension_numbers = #tpu.dot_dimension_numbers<[1], [0], [0], [1], [0, 0, 1, 1], [], []>} : vector<16x80xbf16>, vector<80x120xbf16>, vector<16x120xf32> -> vector<16x120xf32>
    %170 = arith.addf %164, %169 : vector<16x120xf32>
    %c0_118 = arith.constant 0 : index
    %c0_119 = arith.constant 0 : index
    %171 = vector.load %arg9[%c0_118, %c0_119] : memref<1x120xf32, #tpu.memory_space<vmem>>, vector<1x120xf32>
    %172 = vector.broadcast %171 : vector<1x120xf32> to vector<16x120xf32>
    %173 = arith.addf %170, %172 : vector<16x120xf32>
    %cst_120 = arith.constant 0.000000e+00 : f32
    %174 = vector.broadcast %cst_120 : f32 to vector<16x120xf32>
    %175 = arith.maximumf %173, %174 : vector<16x120xf32>
    %176 = arith.truncf %175 : vector<16x120xf32> to vector<16x120xbf16>
    %c0_121 = arith.constant 0 : index
    %c0_122 = arith.constant 0 : index
    %177 = vector.load %arg10[%c0_121, %c0_122] : memref<120x84xbf16, #tpu.memory_space<vmem>>, vector<120x84xbf16>
    %cst_123 = arith.constant dense<0.000000e+00> : vector<16x84xf32>
    %178 = tpu.matmul %176, %177, %cst_123 {dimension_numbers = #tpu.dot_dimension_numbers<[1], [0], [0], [1], [0, 0, 1, 1], [], []>} : vector<16x120xbf16>, vector<120x84xbf16>, vector<16x84xf32> -> vector<16x84xf32>
    %c0_124 = arith.constant 0 : index
    %c0_125 = arith.constant 0 : index
    %179 = vector.load %arg11[%c0_124, %c0_125] : memref<1x84xf32, #tpu.memory_space<vmem>>, vector<1x84xf32>
    %180 = vector.broadcast %179 : vector<1x84xf32> to vector<16x84xf32>
    %181 = arith.addf %178, %180 : vector<16x84xf32>
    %cst_126 = arith.constant 0.000000e+00 : f32
    %182 = vector.broadcast %cst_126 : f32 to vector<16x84xf32>
    %183 = arith.maximumf %181, %182 : vector<16x84xf32>
    %184 = arith.truncf %183 : vector<16x84xf32> to vector<16x84xbf16>
    %c0_127 = arith.constant 0 : index
    %c0_128 = arith.constant 0 : index
    %185 = vector.load %arg12[%c0_127, %c0_128] : memref<84x128xbf16, #tpu.memory_space<vmem>>, vector<84x128xbf16>
    %cst_129 = arith.constant dense<0.000000e+00> : vector<16x128xf32>
    %186 = tpu.matmul %184, %185, %cst_129 {dimension_numbers = #tpu.dot_dimension_numbers<[1], [0], [0], [1], [0, 0, 1, 1], [], []>} : vector<16x84xbf16>, vector<84x128xbf16>, vector<16x128xf32> -> vector<16x128xf32>
    %c0_130 = arith.constant 0 : index
    %c0_131 = arith.constant 0 : index
    %187 = vector.load %arg13[%c0_130, %c0_131] : memref<1x128xf32, #tpu.memory_space<vmem>>, vector<1x128xf32>
    %188 = vector.broadcast %187 : vector<1x128xf32> to vector<16x128xf32>
    %189 = arith.addf %186, %188 : vector<16x128xf32>
    %c0_132 = arith.constant 0 : index
    %c0_133 = arith.constant 0 : index
    %190 = vector.load %arg14[%c0_132, %c0_133] : memref<16x128xf32, #tpu.memory_space<vmem>>, vector<16x128xf32>
    tpu.vector_store %arg14[%c0_132, %c0_133], %189 {strides = array<i32>} : memref<16x128xf32, #tpu.memory_space<vmem>>, vector<16x128xf32>,
    return
  }
  func.func @transform_0(%arg0: i32) -> (i32, i32, i32) {
    %c0_i32 = arith.constant 0 : i32
    %c0_i32_0 = arith.constant 0 : i32
    %c0_i32_1 = arith.constant 0 : i32
    return %c0_i32, %arg0, %c0_i32_0 : i32, i32, i32
  }
  func.func @transform_1(%arg0: i32) -> (i32, i32, i32) {
    %c0_i32 = arith.constant 0 : i32
    %c0_i32_0 = arith.constant 0 : i32
    %c0_i32_1 = arith.constant 0 : i32
    %c0_i32_2 = arith.constant 0 : i32
    return %c0_i32, %c0_i32_0, %c0_i32_1 : i32, i32, i32
  }
  func.func @transform_2(%arg0: i32) -> (i32, i32, i32) {
    %c0_i32 = arith.constant 0 : i32
    %c0_i32_0 = arith.constant 0 : i32
    %c0_i32_1 = arith.constant 0 : i32
    %c0_i32_2 = arith.constant 0 : i32
    return %c0_i32, %c0_i32_0, %c0_i32_1 : i32, i32, i32
  }
  func.func @transform_3(%arg0: i32) -> (i32, i32) {
    %c0_i32 = arith.constant 0 : i32
    %c0_i32_0 = arith.constant 0 : i32
    %c0_i32_1 = arith.constant 0 : i32
    return %c0_i32, %c0_i32_0 : i32, i32
  }
  func.func @transform_4(%arg0: i32) -> (i32, i32, i32) {
    %c0_i32 = arith.constant 0 : i32
    %c0_i32_0 = arith.constant 0 : i32
    %c0_i32_1 = arith.constant 0 : i32
    %c0_i32_2 = arith.constant 0 : i32
    return %c0_i32, %c0_i32_0, %c0_i32_1 : i32, i32, i32
  }
  func.func @transform_5(%arg0: i32) -> (i32, i32, i32) {
    %c0_i32 = arith.constant 0 : i32
    %c0_i32_0 = arith.constant 0 : i32
    %c0_i32_1 = arith.constant 0 : i32
    %c0_i32_2 = arith.constant 0 : i32
    return %c0_i32, %c0_i32_0, %c0_i32_1 : i32, i32, i32
  }
  func.func @transform_6(%arg0: i32) -> (i32, i32) {
    %c0_i32 = arith.constant 0 : i32
    %c0_i32_0 = arith.constant 0 : i32
    %c0_i32_1 = arith.constant 0 : i32
    return %c0_i32, %c0_i32_0 : i32, i32
  }
  func.func @transform_7(%arg0: i32) -> (i32, i32, i32) {
    %c0_i32 = arith.constant 0 : i32
    %c0_i32_0 = arith.constant 0 : i32
    %c0_i32_1 = arith.constant 0 : i32
    %c0_i32_2 = arith.constant 0 : i32
    return %c0_i32, %c0_i32_0, %c0_i32_1 : i32, i32, i32
  }
  func.func @transform_8(%arg0: i32) -> (i32, i32) {
    %c0_i32 = arith.constant 0 : i32
    %c0_i32_0 = arith.constant 0 : i32
    %c0_i32_1 = arith.constant 0 : i32
    return %c0_i32, %c0_i32_0 : i32, i32
  }
  func.func @transform_9(%arg0: i32) -> (i32, i32) {
    %c0_i32 = arith.constant 0 : i32
    %c0_i32_0 = arith.constant 0 : i32
    %c0_i32_1 = arith.constant 0 : i32
    return %c0_i32, %c0_i32_0 : i32, i32
  }
  func.func @transform_10(%arg0: i32) -> (i32, i32) {
    %c0_i32 = arith.constant 0 : i32
    %c0_i32_0 = arith.constant 0 : i32
    %c0_i32_1 = arith.constant 0 : i32
    return %c0_i32, %c0_i32_0 : i32, i32
  }
  func.func @transform_11(%arg0: i32) -> (i32, i32) {
    %c0_i32 = arith.constant 0 : i32
    %c0_i32_0 = arith.constant 0 : i32
    %c0_i32_1 = arith.constant 0 : i32
    return %c0_i32, %c0_i32_0 : i32, i32
  }
  func.func @transform_12(%arg0: i32) -> (i32, i32) {
    %c0_i32 = arith.constant 0 : i32
    %c0_i32_0 = arith.constant 0 : i32
    %c0_i32_1 = arith.constant 0 : i32
    return %c0_i32, %c0_i32_0 : i32, i32
  }
  func.func @transform_13(%arg0: i32) -> (i32, i32) {
    %c0_i32 = arith.constant 0 : i32
    %c0_i32_0 = arith.constant 0 : i32
    return %arg0, %c0_i32 : i32, i32
  }
}

</mosaic_0001>

<llo_original>
// kernel: lenet_forward.1
$region0: #{lenet_forward.1}
  #allocation0 [shape = 'u32[]', space=smem, size = 0x4, offset = 0x4, fixed_abs, tag = 'smem constant byte address 0x4 - core index']
  #allocation1 [shape = 'u32[144,128]{1,0:T(1,128)}', space=vmem, size = 0x12000, scoped, tag = 'internal scratch']
  %s0 = inlined_call_operand.vmem [shape: bf16[32,16,96], index: 0, kind: input, shape index: {}]
  %s1 = inlined_call_operand.vmem [shape: bf16[5,96,84], index: 1, kind: input, shape index: {}]
  %s2 = inlined_call_operand.vmem [shape: bf16[5,96,84], index: 2, kind: input, shape index: {}]
  %s3 = inlined_call_operand.vmem [shape: f32[1,84], index: 3, kind: input, shape index: {}]
  %s4 = inlined_call_operand.vmem [shape: bf16[5,84,80], index: 4, kind: input, shape index: {}]
  %s5 = inlined_call_operand.vmem [shape: bf16[5,84,80], index: 5, kind: input, shape index: {}]
  %s6 = inlined_call_operand.vmem [shape: f32[1,80], index: 6, kind: input, shape index: {}]
  %s7 = inlined_call_operand.vmem [shape: bf16[5,80,120], index: 7, kind: input, shape index: {}]
  %s8 = inlined_call_operand.vmem [shape: f32[1,120], index: 8, kind: input, shape index: {}]
  %s9 = inlined_call_operand.vmem [shape: bf16[120,84], index: 9, kind: input, shape index: {}]
  %s10 = inlined_call_operand.vmem [shape: f32[1,84], index: 10, kind: input, shape index: {}]
  %s11 = inlined_call_operand.vmem [shape: bf16[84,128], index: 11, kind: input, shape index: {}]
  %s12 = inlined_call_operand.vmem [shape: f32[1,128], index: 12, kind: input, shape index: {}]
  %s13 = inlined_call_operand.vmem [shape: f32[16,128], index: 13, kind: output, shape index: {}]
  %s14 = sld [smem:[#allocation0]]
  $region62: #{lenet_forward.1} parent=0
    _
  %s16 = ssub.s32 1, %s14
  %s17 = scalar_select 0, %s16, %s14
  // Predicated region
  $region2: #{lenet_forward.1} parent=0 // pred_check
    _
  $region3: #{lenet_forward.1} parent=0 // pred_check_branch
    %19 = sbr.rel (0) target = $region5
  $region4: #{lenet_forward.1} parent=0 // pred_region
    _
  $region5: #{lenet_forward.1} parent=0 // pred_fallthru
    _
  // Predicated region
  $region6: #{lenet_forward.1} parent=0 // pred_check
    _
  $region7: #{lenet_forward.1} parent=0 // pred_check_branch
    %21 = sbr.rel (0) target = $region9
  $region8: #{lenet_forward.1} parent=0 // pred_region
    _
  $region9: #{lenet_forward.1} parent=0 // pred_fallthru
    _
  // Predicated region
  $region10: #{lenet_forward.1} parent=0 // pred_check
    _
  $region11: #{lenet_forward.1} parent=0 // pred_check_branch
    %23 = sbr.rel (0) target = $region13
  $region12: #{lenet_forward.1} parent=0 // pred_region
    _
  $region13: #{lenet_forward.1} parent=0 // pred_fallthru
    _
  // Predicated region
  $region14: #{lenet_forward.1} parent=0 // pred_check
    _
  $region15: #{lenet_forward.1} parent=0 // pred_check_branch
    %25 = sbr.rel (0) target = $region17
  $region16: #{lenet_forward.1} parent=0 // pred_region
    _
  $region17: #{lenet_forward.1} parent=0 // pred_fallthru
    _
  // Predicated region
  $region18: #{lenet_forward.1} parent=0 // pred_check
    _
  $region19: #{lenet_forward.1} parent=0 // pred_check_branch
    %27 = sbr.rel (0) target = $region21
  $region20: #{lenet_forward.1} parent=0 // pred_region
    _
  $region21: #{lenet_forward.1} parent=0 // pred_fallthru
    _
  // Predicated region
  $region22: #{lenet_forward.1} parent=0 // pred_check
    _
  $region23: #{lenet_forward.1} parent=0 // pred_check_branch
    %29 = sbr.rel (0) target = $region25
  $region24: #{lenet_forward.1} parent=0 // pred_region
    _
  $region25: #{lenet_forward.1} parent=0 // pred_fallthru
    _
  // Predicated region
  $region26: #{lenet_forward.1} parent=0 // pred_check
    _
  $region27: #{lenet_forward.1} parent=0 // pred_check_branch
    %31 = sbr.rel (0) target = $region29
  $region28: #{lenet_forward.1} parent=0 // pred_region
    _
  $region29: #{lenet_forward.1} parent=0 // pred_fallthru
    _
  // Predicated region
  $region30: #{lenet_forward.1} parent=0 // pred_check
    _
  $region31: #{lenet_forward.1} parent=0 // pred_check_branch
    %33 = sbr.rel (0) target = $region33
  $region32: #{lenet_forward.1} parent=0 // pred_region
    _
  $region33: #{lenet_forward.1} parent=0 // pred_fallthru
    _
  // Predicated region
  $region34: #{lenet_forward.1} parent=0 // pred_check
    _
  $region35: #{lenet_forward.1} parent=0 // pred_check_branch
    %35 = sbr.rel (0) target = $region37
  $region36: #{lenet_forward.1} parent=0 // pred_region
    _
  $region37: #{lenet_forward.1} parent=0 // pred_fallthru
    _
  // Predicated region
  $region38: #{lenet_forward.1} parent=0 // pred_check
    _
  $region39: #{lenet_forward.1} parent=0 // pred_check_branch
    %37 = sbr.rel (0) target = $region41
  $region40: #{lenet_forward.1} parent=0 // pred_region
    _
  $region41: #{lenet_forward.1} parent=0 // pred_fallthru
    _
  // Predicated region
  $region42: #{lenet_forward.1} parent=0 // pred_check
    _
  $region43: #{lenet_forward.1} parent=0 // pred_check_branch
    %39 = sbr.rel (0) target = $region45
  $region44: #{lenet_forward.1} parent=0 // pred_region
    _
  $region45: #{lenet_forward.1} parent=0 // pred_fallthru
    _
  // Predicated region
  $region46: #{lenet_forward.1} parent=0 // pred_check
    _
  $region47: #{lenet_forward.1} parent=0 // pred_check_branch
    %41 = sbr.rel (0) target = $region49
  $region48: #{lenet_forward.1} parent=0 // pred_region
    _
  $region49: #{lenet_forward.1} parent=0 // pred_fallthru
    _
  // Predicated region
  $region50: #{lenet_forward.1} parent=0 // pred_check
    _
  $region51: #{lenet_forward.1} parent=0 // pred_check_branch
    %43 = sbr.rel (0) target = $region53
  $region52: #{lenet_forward.1} parent=0 // pred_region
    _
  $region53: #{lenet_forward.1} parent=0 // pred_fallthru
    _
  %v45 = vld [vmem:[%s0] sm:$0xf]
  %v46 = vld [vmem:[%s0 + $0x4] sm:$0xf]
  %v47 = vld [vmem:[%s0 + $0x8] sm:$0xf]
  %v48 = vld [vmem:[%s0 + $0xc] sm:$0xf]
  %v49 = vld [vmem:[%s0 + $0x10] sm:$0xf]
  %v50 = vld [vmem:[%s0 + $0x14] sm:$0xf]
  %v51 = vld [vmem:[%s0 + $0x18] sm:$0xf]
  %v52 = vld [vmem:[%s0 + $0x1c] sm:$0xf]
  %v53 = vld [vmem:[%s0 + $0x20] sm:$0xf]
  %v54 = vld [vmem:[%s0 + $0x24] sm:$0xf]
  %v55 = vld [vmem:[%s0 + $0x28] sm:$0xf]
  %v56 = vld [vmem:[%s0 + $0x2c] sm:$0xf]
  %v57 = vld [vmem:[%s0 + $0x30] sm:$0xf]
  %v58 = vld [vmem:[%s0 + $0x34] sm:$0xf]
  %v59 = vld [vmem:[%s0 + $0x38] sm:$0xf]
  %v60 = vld [vmem:[%s0 + $0x3c] sm:$0xf]
  %v61 = vld [vmem:[%s0 + $0x40] sm:$0xf]
  %v62 = vld [vmem:[%s0 + $0x44] sm:$0xf]
  %v63 = vld [vmem:[%s0 + $0x48] sm:$0xf]
  %v64 = vld [vmem:[%s0 + $0x4c] sm:$0xf]
  %v65 = vld [vmem:[%s0 + $0x50] sm:$0xf]
  %v66 = vld [vmem:[%s0 + $0x54] sm:$0xf]
  %v67 = vld [vmem:[%s0 + $0x58] sm:$0xf]
  %v68 = vld [vmem:[%s0 + $0x5c] sm:$0xf]
  %v69 = vld [vmem:[%s0 + $0x60] sm:$0xf]
  %v70 = vld [vmem:[%s0 + $0x64] sm:$0xf]
  %v71 = vld [vmem:[%s0 + $0x68] sm:$0xf]
  %v72 = vld [vmem:[%s0 + $0x6c] sm:$0xf]
  %v73 = vld [vmem:[%s0 + $0x70] sm:$0xf]
  %v74 = vld [vmem:[%s0 + $0x74] sm:$0xf]
  %v75 = vld [vmem:[%s0 + $0x78] sm:$0xf]
  %v76 = vld [vmem:[%s0 + $0x7c] sm:$0xf]
  %v77 = vld [vmem:[%s0 + $0x80] sm:$0xf]
  %v78 = vld [vmem:[%s0 + $0x84] sm:$0xf]
  %v79 = vld [vmem:[%s0 + $0x88] sm:$0xf]
  %v80 = vld [vmem:[%s0 + $0x8c] sm:$0xf]
  %v81 = vld [vmem:[%s0 + $0x90] sm:$0xf]
  %v82 = vld [vmem:[%s0 + $0x94] sm:$0xf]
  %v83 = vld [vmem:[%s0 + $0x98] sm:$0xf]
  %v84 = vld [vmem:[%s0 + $0x9c] sm:$0xf]
  %v85 = vld [vmem:[%s0 + $0xa0] sm:$0xf]
  %v86 = vld [vmem:[%s0 + $0xa4] sm:$0xf]
  %v87 = vld [vmem:[%s0 + $0xa8] sm:$0xf]
  %v88 = vld [vmem:[%s0 + $0xac] sm:$0xf]
  %v89 = vld [vmem:[%s0 + $0xb0] sm:$0xf]
  %v90 = vld [vmem:[%s0 + $0xb4] sm:$0xf]
  %v91 = vld [vmem:[%s0 + $0xb8] sm:$0xf]
  %v92 = vld [vmem:[%s0 + $0xbc] sm:$0xf]
  %v93 = vld [vmem:[%s0 + $0xc0] sm:$0xf]
  %v94 = vld [vmem:[%s0 + $0xc4] sm:$0xf]
  %v95 = vld [vmem:[%s0 + $0xc8] sm:$0xf]
  %v96 = vld [vmem:[%s0 + $0xcc] sm:$0xf]
  %v97 = vld [vmem:[%s0 + $0xd0] sm:$0xf]
  %v98 = vld [vmem:[%s0 + $0xd4] sm:$0xf]
  %v99 = vld [vmem:[%s0 + $0xd8] sm:$0xf]
  %v100 = vld [vmem:[%s0 + $0xdc] sm:$0xf]
  %v101 = vld [vmem:[%s1] sm:$0xf]
  %v102 = vld [vmem:[%s1 + $0x4] sm:$0xf]
  %v103 = vld [vmem:[%s1 + $0x8] sm:$0xf]
  %v104 = vld [vmem:[%s1 + $0xc] sm:$0xf]
  %v105 = vld [vmem:[%s1 + $0x10] sm:$0xf]
  %v106 = vld [vmem:[%s1 + $0x14] sm:$0xf]
  %v107 = vld [vmem:[%s1 + $0x18] sm:$0xf]
  %v108 = vld [vmem:[%s1 + $0x1c] sm:$0xf]
  %v109 = vld [vmem:[%s1 + $0x20] sm:$0xf]
  %v110 = vld [vmem:[%s1 + $0x24] sm:$0xf]
  %v111 = vld [vmem:[%s1 + $0x28] sm:$0xf]
  %v112 = vld [vmem:[%s1 + $0x2c] sm:$0xf]
  %v113 = vld [vmem:[%s2] sm:$0xf]
  %v114 = vld [vmem:[%s2 + $0x4] sm:$0xf]
  %v115 = vld [vmem:[%s2 + $0x8] sm:$0xf]
  %v116 = vld [vmem:[%s2 + $0xc] sm:$0xf]
  %v117 = vld [vmem:[%s2 + $0x10] sm:$0xf]
  %v118 = vld [vmem:[%s2 + $0x14] sm:$0xf]
  %v119 = vld [vmem:[%s2 + $0x18] sm:$0xf]
  %v120 = vld [vmem:[%s2 + $0x1c] sm:$0xf]
  %v121 = vld [vmem:[%s2 + $0x20] sm:$0xf]
  %v122 = vld [vmem:[%s2 + $0x24] sm:$0xf]
  %v123 = vld [vmem:[%s2 + $0x28] sm:$0xf]
  %v124 = vld [vmem:[%s2 + $0x2c] sm:$0xf]
  %s125 = scalar_lea.vmem %s0, 8
  %v126 = vld [vmem:[%s125] sm:$0xf]
  %v127 = vld [vmem:[%s125 + $0x4] sm:$0xf]
  %v128 = vld [vmem:[%s125 + $0x8] sm:$0xf]
  %v129 = vld [vmem:[%s125 + $0xc] sm:$0xf]
  %v130 = vld [vmem:[%s125 + $0x10] sm:$0xf]
  %v131 = vld [vmem:[%s125 + $0x14] sm:$0xf]
  %v132 = vld [vmem:[%s125 + $0x18] sm:$0xf]
  %v133 = vld [vmem:[%s125 + $0x1c] sm:$0xf]
  %v134 = vld [vmem:[%s125 + $0x20] sm:$0xf]
  %v135 = vld [vmem:[%s125 + $0x24] sm:$0xf]
  %v136 = vld [vmem:[%s125 + $0x28] sm:$0xf]
  %v137 = vld [vmem:[%s125 + $0x2c] sm:$0xf]
  %v138 = vld [vmem:[%s125 + $0x30] sm:$0xf]
  %v139 = vld [vmem:[%s125 + $0x34] sm:$0xf]
  %v140 = vld [vmem:[%s125 + $0x38] sm:$0xf]
  %v141 = vld [vmem:[%s125 + $0x3c] sm:$0xf]
  %v142 = vld [vmem:[%s125 + $0x40] sm:$0xf]
  %v143 = vld [vmem:[%s125 + $0x44] sm:$0xf]
  %v144 = vld [vmem:[%s125 + $0x48] sm:$0xf]
  %v145 = vld [vmem:[%s125 + $0x4c] sm:$0xf]
  %v146 = vld [vmem:[%s125 + $0x50] sm:$0xf]
  %v147 = vld [vmem:[%s125 + $0x54] sm:$0xf]
  %v148 = vld [vmem:[%s125 + $0x58] sm:$0xf]
  %v149 = vld [vmem:[%s125 + $0x5c] sm:$0xf]
  %v150 = vld [vmem:[%s125 + $0x60] sm:$0xf]
  %v151 = vld [vmem:[%s125 + $0x64] sm:$0xf]
  %v152 = vld [vmem:[%s125 + $0x68] sm:$0xf]
  %v153 = vld [vmem:[%s125 + $0x6c] sm:$0xf]
  %v154 = vld [vmem:[%s125 + $0x70] sm:$0xf]
  %v155 = vld [vmem:[%s125 + $0x74] sm:$0xf]
  %v156 = vld [vmem:[%s125 + $0x78] sm:$0xf]
  %v157 = vld [vmem:[%s125 + $0x7c] sm:$0xf]
  %v158 = vld [vmem:[%s125 + $0x80] sm:$0xf]
  %v159 = vld [vmem:[%s125 + $0x84] sm:$0xf]
  %v160 = vld [vmem:[%s125 + $0x88] sm:$0xf]
  %v161 = vld [vmem:[%s125 + $0x8c] sm:$0xf]
  %v162 = vld [vmem:[%s125 + $0x90] sm:$0xf]
  %v163 = vld [vmem:[%s125 + $0x94] sm:$0xf]
  %v164 = vld [vmem:[%s125 + $0x98] sm:$0xf]
  %v165 = vld [vmem:[%s125 + $0x9c] sm:$0xf]
  %v166 = vld [vmem:[%s125 + $0xa0] sm:$0xf]
  %v167 = vld [vmem:[%s125 + $0xa4] sm:$0xf]
  %v168 = vld [vmem:[%s125 + $0xa8] sm:$0xf]
  %v169 = vld [vmem:[%s125 + $0xac] sm:$0xf]
  %v170 = vld [vmem:[%s125 + $0xb0] sm:$0xf]
  %v171 = vld [vmem:[%s125 + $0xb4] sm:$0xf]
  %v172 = vld [vmem:[%s125 + $0xb8] sm:$0xf]
  %v173 = vld [vmem:[%s125 + $0xbc] sm:$0xf]
  %v174 = vld [vmem:[%s125 + $0xc0] sm:$0xf]
  %v175 = vld [vmem:[%s125 + $0xc4] sm:$0xf]
  %v176 = vld [vmem:[%s125 + $0xc8] sm:$0xf]
  %v177 = vld [vmem:[%s125 + $0xcc] sm:$0xf]
  %v178 = vld [vmem:[%s125 + $0xd0] sm:$0xf]
  %v179 = vld [vmem:[%s125 + $0xd4] sm:$0xf]
  %v180 = vld [vmem:[%s125 + $0xd8] sm:$0xf]
  %v181 = vld [vmem:[%s125 + $0xdc] sm:$0xf]
  %s182 = scalar_lea.vmem %s1, 48
  %v183 = vld [vmem:[%s182] sm:$0xf]
  %v184 = vld [vmem:[%s182 + $0x4] sm:$0xf]
  %v185 = vld [vmem:[%s182 + $0x8] sm:$0xf]
  %v186 = vld [vmem:[%s182 + $0xc] sm:$0xf]
  %v187 = vld [vmem:[%s182 + $0x10] sm:$0xf]
  %v188 = vld [vmem:[%s182 + $0x14] sm:$0xf]
  %v189 = vld [vmem:[%s182 + $0x18] sm:$0xf]
  %v190 = vld [vmem:[%s182 + $0x1c] sm:$0xf]
  %v191 = vld [vmem:[%s182 + $0x20] sm:$0xf]
  %v192 = vld [vmem:[%s182 + $0x24] sm:$0xf]
  %v193 = vld [vmem:[%s182 + $0x28] sm:$0xf]
  %v194 = vld [vmem:[%s182 + $0x2c] sm:$0xf]
  %v251 = vunpack.c.l.b16 %v126
  %v252 = vunpack.c.l.b16 %v127
  %v253 = vunpack.c.l.b16 %v128
  %v254 = vunpack.c.l.b16 %v129
  %v255 = vunpack.c.l.b16 %v130
  %v256 = vunpack.c.l.b16 %v131
  %v257 = vunpack.c.l.b16 %v132
  %v258 = vunpack.c.l.b16 %v133
  %v259 = vunpack.c.l.b16 %v134
  %v260 = vunpack.c.l.b16 %v135
  %v261 = vunpack.c.l.b16 %v136
  %v262 = vunpack.c.l.b16 %v137
  %v263 = vunpack.c.l.b16 %v138
  %v264 = vunpack.c.l.b16 %v139
  %v265 = vunpack.c.l.b16 %v140
  %v266 = vunpack.c.l.b16 %v141
  %v267 = vunpack.c.l.b16 %v142
  %v268 = vunpack.c.l.b16 %v143
  %v269 = vunpack.c.l.b16 %v144
  %v270 = vunpack.c.l.b16 %v145
  %v271 = vunpack.c.l.b16 %v146
  %v272 = vunpack.c.l.b16 %v147
  %v273 = vunpack.c.l.b16 %v148
  %v274 = vunpack.c.l.b16 %v149
  %v275 = vunpack.c.l.b16 %v150
  %v276 = vunpack.c.l.b16 %v151
  %v277 = vunpack.c.l.b16 %v152
  %v278 = vunpack.c.l.b16 %v153
  %v279 = vunpack.c.l.b16 %v154
  %v280 = vunpack.c.l.b16 %v155
  %v281 = vunpack.c.l.b16 %v156
  %v282 = vunpack.c.l.b16 %v157
  %v283 = vunpack.c.l.b16 %v158
  %v284 = vunpack.c.l.b16 %v159
  %v285 = vunpack.c.l.b16 %v160
  %v286 = vunpack.c.l.b16 %v161
  %v287 = vunpack.c.l.b16 %v162
  %v288 = vunpack.c.l.b16 %v163
  %v289 = vunpack.c.l.b16 %v164
  %v290 = vunpack.c.l.b16 %v165
  %v291 = vunpack.c.l.b16 %v166
  %v292 = vunpack.c.l.b16 %v167
  %v293 = vunpack.c.l.b16 %v168
  %v294 = vunpack.c.l.b16 %v169
  %v295 = vunpack.c.l.b16 %v170
  %v296 = vunpack.c.l.b16 %v171
  %v297 = vunpack.c.l.b16 %v172
  %v298 = vunpack.c.l.b16 %v173
  %v299 = vunpack.c.l.b16 %v174
  %v300 = vunpack.c.l.b16 %v175
  %v301 = vunpack.c.l.b16 %v176
  %v302 = vunpack.c.l.b16 %v177
  %v303 = vunpack.c.l.b16 %v178
  %v304 = vunpack.c.l.b16 %v179
  %v305 = vunpack.c.l.b16 %v180
  %v306 = vunpack.c.l.b16 %v181
  %v307 = vpack.c.b16 %v252, %v251
  %v308 = vpack.c.b16 %v254, %v253
  %v309 = vpack.c.b16 %v256, %v255
  %v310 = vpack.c.b16 %v258, %v257
  %v311 = vpack.c.b16 %v260, %v259
  %v312 = vpack.c.b16 %v262, %v261
  %v313 = vpack.c.b16 %v264, %v263
  %v314 = vpack.c.b16 %v266, %v265
  %v315 = vpack.c.b16 %v268, %v267
  %v316 = vpack.c.b16 %v270, %v269
  %v317 = vpack.c.b16 %v272, %v271
  %v318 = vpack.c.b16 %v274, %v273
  %v319 = vpack.c.b16 %v276, %v275
  %v320 = vpack.c.b16 %v278, %v277
  %v321 = vpack.c.b16 %v280, %v279
  %v322 = vpack.c.b16 %v282, %v281
  %v323 = vpack.c.b16 %v284, %v283
  %v324 = vpack.c.b16 %v286, %v285
  %v325 = vpack.c.b16 %v288, %v287
  %v326 = vpack.c.b16 %v290, %v289
  %v327 = vpack.c.b16 %v292, %v291
  %v328 = vpack.c.b16 %v294, %v293
  %v329 = vpack.c.b16 %v296, %v295
  %v330 = vpack.c.b16 %v298, %v297
  %v331 = vpack.c.b16 %v300, %v299
  %v332 = vpack.c.b16 %v302, %v301
  %v333 = vpack.c.b16 %v304, %v303
  %v334 = vpack.c.b16 %v306, %v305
  %v347 = vunpack.c.l.b16 %v183
  %v348 = vunpack.c.l.b16 %v184
  %v349 = vunpack.c.l.b16 %v185
  %v350 = vunpack.c.l.b16 %v186
  %v351 = vunpack.c.l.b16 %v187
  %v352 = vunpack.c.l.b16 %v188
  %v353 = vunpack.c.l.b16 %v189
  %v354 = vunpack.c.l.b16 %v190
  %v355 = vunpack.c.l.b16 %v191
  %v356 = vunpack.c.l.b16 %v192
  %v357 = vunpack.c.l.b16 %v193
  %v358 = vunpack.c.l.b16 %v194
  %v359 = vpack.c.b16 %v348, %v347
  %v360 = vpack.c.b16 %v350, %v349
  %v361 = vpack.c.b16 %v352, %v351
  %v362 = vpack.c.b16 %v354, %v353
  %v363 = vpack.c.b16 %v356, %v355
  %v364 = vpack.c.b16 %v358, %v357
  %vm371 = vcmask 785408
  %v373 = vsel %vm371, %v307, 0
  %v376 = vsel %vm371, %v308, 0
  %v379 = vsel %vm371, %v309, 0
  %v382 = vsel %vm371, %v310, 0
  %v385 = vsel %vm371, %v311, 0
  %v388 = vsel %vm371, %v312, 0
  %v391 = vsel %vm371, %v313, 0
  %v394 = vsel %vm371, %v314, 0
  %v397 = vsel %vm371, %v315, 0
  %v400 = vsel %vm371, %v316, 0
  %v403 = vsel %vm371, %v317, 0
  %v406 = vsel %vm371, %v318, 0
  %v409 = vsel %vm371, %v319, 0
  %v412 = vsel %vm371, %v320, 0
  %v415 = vsel %vm371, %v321, 0
  %v418 = vsel %vm371, %v322, 0
  %v421 = vsel %vm371, %v323, 0
  %v424 = vsel %vm371, %v324, 0
  %v427 = vsel %vm371, %v325, 0
  %v430 = vsel %vm371, %v326, 0
  %v433 = vsel %vm371, %v327, 0
  %v436 = vsel %vm371, %v328, 0
  %v439 = vsel %vm371, %v329, 0
  %v442 = vsel %vm371, %v330, 0
  %v445 = vsel %vm371, %v331, 0
  %v448 = vsel %vm371, %v332, 0
  %v451 = vsel %vm371, %v333, 0
  %v454 = vsel %vm371, %v334, 0
  %456 = vmatprep.subr.bf16.mxu0 0
  %457 = vmatpush1.bf16.msra.mxu0 %v359
  %458 = vmatprep.subr.bf16.mxu0 0
  %459 = vmatpush1.bf16.msra.mxu0 %v360
  %460 = vmatprep.subr.bf16.mxu0 0
  %461 = vmatpush1.bf16.msra.mxu0 %v361
  %462 = vmatprep.subr.bf16.mxu0 0
  %463 = vmatpush1.bf16.msra.mxu0 %v362
  %464 = vmatprep.subr.bf16.mxu0 0
  %465 = vmatpush1.bf16.msra.mxu0 %v363
  %466 = vmatprep.subr.bf16.mxu0 0
  %467 = vmatpush1.bf16.msra.mxu0 %v364
  %468 = vmatprep.subr.bf16.mxu0 0
  %469 = vmatpush1.bf16.msra.mxu0 0
  %470 = vmatprep.subr.bf16.mxu0 0
  %471 = vmatpush1.bf16.msra.mxu0 0
  %472 = vmatprep.subr.bf16.mxu0 0
  %473 = vmatpush1.bf16.msra.mxu0 0
  %474 = vmatprep.subr.bf16.mxu0 0
  %475 = vmatpush1.bf16.msra.mxu0 0
  %476 = vmatprep.subr.bf16.mxu0 0
  %477 = vmatpush1.bf16.msra.mxu0 0
  %478 = vmatprep.subr.bf16.mxu0 0
  %479 = vmatpush1.bf16.msra.mxu0 0
  %480 = vmatprep.subr.bf16.mxu0 0
  %481 = vmatpush1.bf16.msra.mxu0 0
  %482 = vmatprep.subr.bf16.mxu0 0
  %483 = vmatpush1.bf16.msra.mxu0 0
  %484 = vmatprep.subr.bf16.mxu0 0
  %485 = vmatpush1.bf16.msra.mxu0 0
  %486 = vmatprep.subr.bf16.mxu0 0
  %487 = vmatpush1.bf16.msra.mxu0 0
  %488 = vmatprep.mubr.bf16.mxu0 0
  %489 = vmatmul.mubr.bf16.gmra.mrb[0].mxu0 %v373
  %v490 = vpop.f32.mrb[0].mxu0
  %v491 = vadd.f32 0.0, %v490
  %v492 = vpop.f32.mrb[0].mxu0
  %v493 = vpop.f32.mrb[0].mxu0
  %v494 = vadd.f32 0.0, %v493
  %v495 = vpop.f32.mrb[0].mxu0
  %496 = vmatprep.mubr.bf16.mxu0 0
  %497 = vmatmul.mubr.bf16.gmra.mrb[0].mxu0 %v376
  %v498 = vpop.f32.mrb[0].mxu0
  %v499 = vadd.f32 0.0, %v498
  %v500 = vpop.f32.mrb[0].mxu0
  %v501 = vpop.f32.mrb[0].mxu0
  %v502 = vadd.f32 0.0, %v501
  %v503 = vpop.f32.mrb[0].mxu0
  %504 = vmatprep.mubr.bf16.mxu0 0
  %505 = vmatmul.mubr.bf16.gmra.mrb[0].mxu0 %v379
  %v506 = vpop.f32.mrb[0].mxu0
  %v507 = vadd.f32 0.0, %v506
  %v508 = vpop.f32.mrb[0].mxu0
  %v509 = vpop.f32.mrb[0].mxu0
  %v510 = vadd.f32 0.0, %v509
  %v511 = vpop.f32.mrb[0].mxu0
  %512 = vmatprep.mubr.bf16.mxu0 0
  %513 = vmatmul.mubr.bf16.gmra.mrb[0].mxu0 %v382
  %v514 = vpop.f32.mrb[0].mxu0
  %v515 = vadd.f32 0.0, %v514
  %v516 = vpop.f32.mrb[0].mxu0
  %v517 = vpop.f32.mrb[0].mxu0
  %v518 = vadd.f32 0.0, %v517
  %v519 = vpop.f32.mrb[0].mxu0
  %520 = vmatprep.mubr.bf16.mxu0 0
  %521 = vmatmul.mubr.bf16.gmra.mrb[0].mxu0 %v385
  %v522 = vpop.f32.mrb[0].mxu0
  %v523 = vadd.f32 0.0, %v522
  %v524 = vpop.f32.mrb[0].mxu0
  %v525 = vpop.f32.mrb[0].mxu0
  %v526 = vadd.f32 0.0, %v525
  %v527 = vpop.f32.mrb[0].mxu0
  %528 = vmatprep.mubr.bf16.mxu0 0
  %529 = vmatmul.mubr.bf16.gmra.mrb[0].mxu0 %v388
  %v530 = vpop.f32.mrb[0].mxu0
  %v531 = vadd.f32 0.0, %v530
  %v532 = vpop.f32.mrb[0].mxu0
  %v533 = vpop.f32.mrb[0].mxu0
  %v534 = vadd.f32 0.0, %v533
  %v535 = vpop.f32.mrb[0].mxu0
  %536 = vmatprep.mubr.bf16.mxu0 0
  %537 = vmatmul.mubr.bf16.gmra.mrb[0].mxu0 %v391
  %v538 = vpop.f32.mrb[0].mxu0
  %v539 = vadd.f32 0.0, %v538
  %v540 = vpop.f32.mrb[0].mxu0
  %v541 = vpop.f32.mrb[0].mxu0
  %v542 = vadd.f32 0.0, %v541
  %v543 = vpop.f32.mrb[0].mxu0
  %544 = vmatprep.mubr.bf16.mxu0 0
  %545 = vmatmul.mubr.bf16.gmra.mrb[0].mxu0 %v394
  %v546 = vpop.f32.mrb[0].mxu0
  %v547 = vadd.f32 0.0, %v546
  %v548 = vpop.f32.mrb[0].mxu0
  %v549 = vpop.f32.mrb[0].mxu0
  %v550 = vadd.f32 0.0, %v549
  %v551 = vpop.f32.mrb[0].mxu0
  %552 = vmatprep.mubr.bf16.mxu0 0
  %553 = vmatmul.mubr.bf16.gmra.mrb[0].mxu0 %v397
  %v554 = vpop.f32.mrb[0].mxu0
  %v555 = vadd.f32 0.0, %v554
  %v556 = vpop.f32.mrb[0].mxu0
  %v557 = vpop.f32.mrb[0].mxu0
  %v558 = vadd.f32 0.0, %v557
  %v559 = vpop.f32.mrb[0].mxu0
  %560 = vmatprep.mubr.bf16.mxu0 0
  %561 = vmatmul.mubr.bf16.gmra.mrb[0].mxu0 %v400
  %v562 = vpop.f32.mrb[0].mxu0
  %v563 = vadd.f32 0.0, %v562
  %v564 = vpop.f32.mrb[0].mxu0
  %v565 = vpop.f32.mrb[0].mxu0
  %v566 = vadd.f32 0.0, %v565
  %v567 = vpop.f32.mrb[0].mxu0
  %568 = vmatprep.mubr.bf16.mxu0 0
  %569 = vmatmul.mubr.bf16.gmra.mrb[0].mxu0 %v403
  %v570 = vpop.f32.mrb[0].mxu0
  %v571 = vadd.f32 0.0, %v570
  %v572 = vpop.f32.mrb[0].mxu0
  %v573 = vpop.f32.mrb[0].mxu0
  %v574 = vadd.f32 0.0, %v573
  %v575 = vpop.f32.mrb[0].mxu0
  %576 = vmatprep.mubr.bf16.mxu0 0
  %577 = vmatmul.mubr.bf16.gmra.mrb[0].mxu0 %v406
  %v578 = vpop.f32.mrb[0].mxu0
  %v579 = vadd.f32 0.0, %v578
  %v580 = vpop.f32.mrb[0].mxu0
  %v581 = vpop.f32.mrb[0].mxu0
  %v582 = vadd.f32 0.0, %v581
  %v583 = vpop.f32.mrb[0].mxu0
  %584 = vmatprep.mubr.bf16.mxu0 0
  %585 = vmatmul.mubr.bf16.gmra.mrb[0].mxu0 %v409
  %v586 = vpop.f32.mrb[0].mxu0
  %v587 = vadd.f32 0.0, %v586
  %v588 = vpop.f32.mrb[0].mxu0
  %v589 = vpop.f32.mrb[0].mxu0
  %v590 = vadd.f32 0.0, %v589
  %v591 = vpop.f32.mrb[0].mxu0
  %592 = vmatprep.mubr.bf16.mxu0 0
  %593 = vmatmul.mubr.bf16.gmra.mrb[0].mxu0 %v412
  %v594 = vpop.f32.mrb[0].mxu0
  %v595 = vadd.f32 0.0, %v594
  %v596 = vpop.f32.mrb[0].mxu0
  %v597 = vpop.f32.mrb[0].mxu0
  %v598 = vadd.f32 0.0, %v597
  %v599 = vpop.f32.mrb[0].mxu0
  %600 = vmatprep.mubr.bf16.mxu0 0
  %601 = vmatmul.mubr.bf16.gmra.mrb[0].mxu0 %v415
  %v602 = vpop.f32.mrb[0].mxu0
  %v603 = vadd.f32 0.0, %v602
  %v604 = vpop.f32.mrb[0].mxu0
  %v605 = vpop.f32.mrb[0].mxu0
  %v606 = vadd.f32 0.0, %v605
  %v607 = vpop.f32.mrb[0].mxu0
  %608 = vmatprep.mubr.bf16.mxu0 0
  %609 = vmatmul.mubr.bf16.gmra.mrb[0].mxu0 %v418
  %v610 = vpop.f32.mrb[0].mxu0
  %v611 = vadd.f32 0.0, %v610
  %v612 = vpop.f32.mrb[0].mxu0
  %v613 = vpop.f32.mrb[0].mxu0
  %v614 = vadd.f32 0.0, %v613
  %v615 = vpop.f32.mrb[0].mxu0
  %616 = vmatprep.mubr.bf16.mxu0 0
  %617 = vmatmul.mubr.bf16.gmra.mrb[0].mxu0 %v421
  %v618 = vpop.f32.mrb[0].mxu0
  %v619 = vadd.f32 0.0, %v618
  %v620 = vpop.f32.mrb[0].mxu0
  %v621 = vpop.f32.mrb[0].mxu0
  %v622 = vadd.f32 0.0, %v621
  %v623 = vpop.f32.mrb[0].mxu0
  %624 = vmatprep.mubr.bf16.mxu0 0
  %625 = vmatmul.mubr.bf16.gmra.mrb[0].mxu0 %v424
  %v626 = vpop.f32.mrb[0].mxu0
  %v627 = vadd.f32 0.0, %v626
  %v628 = vpop.f32.mrb[0].mxu0
  %v629 = vpop.f32.mrb[0].mxu0
  %v630 = vadd.f32 0.0, %v629
  %v631 = vpop.f32.mrb[0].mxu0
  %632 = vmatprep.mubr.bf16.mxu0 0
  %633 = vmatmul.mubr.bf16.gmra.mrb[0].mxu0 %v427
  %v634 = vpop.f32.mrb[0].mxu0
  %v635 = vadd.f32 0.0, %v634
  %v636 = vpop.f32.mrb[0].mxu0
  %v637 = vpop.f32.mrb[0].mxu0
  %v638 = vadd.f32 0.0, %v637
  %v639 = vpop.f32.mrb[0].mxu0
  %640 = vmatprep.mubr.bf16.mxu0 0
  %641 = vmatmul.mubr.bf16.gmra.mrb[0].mxu0 %v430
  %v642 = vpop.f32.mrb[0].mxu0
  %v643 = vadd.f32 0.0, %v642
  %v644 = vpop.f32.mrb[0].mxu0
  %v645 = vpop.f32.mrb[0].mxu0
  %v646 = vadd.f32 0.0, %v645
  %v647 = vpop.f32.mrb[0].mxu0
  %648 = vmatprep.mubr.bf16.mxu0 0
  %649 = vmatmul.mubr.bf16.gmra.mrb[0].mxu0 %v433
  %v650 = vpop.f32.mrb[0].mxu0
  %v651 = vadd.f32 0.0, %v650
  %v652 = vpop.f32.mrb[0].mxu0
  %v653 = vpop.f32.mrb[0].mxu0
  %v654 = vadd.f32 0.0, %v653
  %v655 = vpop.f32.mrb[0].mxu0
  %656 = vmatprep.mubr.bf16.mxu0 0
  %657 = vmatmul.mubr.bf16.gmra.mrb[0].mxu0 %v436
  %v658 = vpop.f32.mrb[0].mxu0
  %v659 = vadd.f32 0.0, %v658
  %v660 = vpop.f32.mrb[0].mxu0
  %v661 = vpop.f32.mrb[0].mxu0
  %v662 = vadd.f32 0.0, %v661
  %v663 = vpop.f32.mrb[0].mxu0
  %664 = vmatprep.mubr.bf16.mxu0 0
  %665 = vmatmul.mubr.bf16.gmra.mrb[0].mxu0 %v439
  %v666 = vpop.f32.mrb[0].mxu0
  %v667 = vadd.f32 0.0, %v666
  %v668 = vpop.f32.mrb[0].mxu0
  %v669 = vpop.f32.mrb[0].mxu0
  %v670 = vadd.f32 0.0, %v669
  %v671 = vpop.f32.mrb[0].mxu0
  %672 = vmatprep.mubr.bf16.mxu0 0
  %673 = vmatmul.mubr.bf16.gmra.mrb[0].mxu0 %v442
  %v674 = vpop.f32.mrb[0].mxu0
  %v675 = vadd.f32 0.0, %v674
  %v676 = vpop.f32.mrb[0].mxu0
  %v677 = vpop.f32.mrb[0].mxu0
  %v678 = vadd.f32 0.0, %v677
  %v679 = vpop.f32.mrb[0].mxu0
  %680 = vmatprep.mubr.bf16.mxu0 0
  %681 = vmatmul.mubr.bf16.gmra.mrb[0].mxu0 %v445
  %v682 = vpop.f32.mrb[0].mxu0
  %v683 = vadd.f32 0.0, %v682
  %v684 = vpop.f32.mrb[0].mxu0
  %v685 = vpop.f32.mrb[0].mxu0
  %v686 = vadd.f32 0.0, %v685
  %v687 = vpop.f32.mrb[0].mxu0
  %688 = vmatprep.mubr.bf16.mxu0 0
  %689 = vmatmul.mubr.bf16.gmra.mrb[0].mxu0 %v448
  %v690 = vpop.f32.mrb[0].mxu0
  %v691 = vadd.f32 0.0, %v690
  %v692 = vpop.f32.mrb[0].mxu0
  %v693 = vpop.f32.mrb[0].mxu0
  %v694 = vadd.f32 0.0, %v693
  %v695 = vpop.f32.mrb[0].mxu0
  %696 = vmatprep.mubr.bf16.mxu0 0
  %697 = vmatmul.mubr.bf16.gmra.mrb[0].mxu0 %v451
  %v698 = vpop.f32.mrb[0].mxu0
  %v699 = vadd.f32 0.0, %v698
  %v700 = vpop.f32.mrb[0].mxu0
  %v701 = vpop.f32.mrb[0].mxu0
  %v702 = vadd.f32 0.0, %v701
  %v703 = vpop.f32.mrb[0].mxu0
  %704 = vmatprep.mubr.bf16.mxu0 0
  %705 = vmatmul.mubr.bf16.gmra.mrb[0].mxu0 %v454
  %v706 = vpop.f32.mrb[0].mxu0
  %v707 = vadd.f32 0.0, %v706
  %v708 = vpop.f32.mrb[0].mxu0
  %v709 = vpop.f32.mrb[0].mxu0
  %v710 = vadd.f32 0.0, %v709
  %v711 = vpop.f32.mrb[0].mxu0
  %712 = vdwg.mxu0
  %v769 = vunpack.c.l.b16 %v45
  %v770 = vunpack.c.l.b16 %v46
  %v771 = vunpack.c.l.b16 %v47
  %v772 = vunpack.c.l.b16 %v48
  %v773 = vunpack.c.l.b16 %v49
  %v774 = vunpack.c.l.b16 %v50
  %v775 = vunpack.c.l.b16 %v51
  %v776 = vunpack.c.l.b16 %v52
  %v777 = vunpack.c.l.b16 %v53
  %v778 = vunpack.c.l.b16 %v54
  %v779 = vunpack.c.l.b16 %v55
  %v780 = vunpack.c.l.b16 %v56
  %v781 = vunpack.c.l.b16 %v57
  %v782 = vunpack.c.l.b16 %v58
  %v783 = vunpack.c.l.b16 %v59
  %v784 = vunpack.c.l.b16 %v60
  %v785 = vunpack.c.l.b16 %v61
  %v786 = vunpack.c.l.b16 %v62
  %v787 = vunpack.c.l.b16 %v63
  %v788 = vunpack.c.l.b16 %v64
  %v789 = vunpack.c.l.b16 %v65
  %v790 = vunpack.c.l.b16 %v66
  %v791 = vunpack.c.l.b16 %v67
  %v792 = vunpack.c.l.b16 %v68
  %v793 = vunpack.c.l.b16 %v69
  %v794 = vunpack.c.l.b16 %v70
  %v795 = vunpack.c.l.b16 %v71
  %v796 = vunpack.c.l.b16 %v72
  %v797 = vunpack.c.l.b16 %v73
  %v798 = vunpack.c.l.b16 %v74
  %v799 = vunpack.c.l.b16 %v75
  %v800 = vunpack.c.l.b16 %v76
  %v801 = vunpack.c.l.b16 %v77
  %v802 = vunpack.c.l.b16 %v78
  %v803 = vunpack.c.l.b16 %v79
  %v804 = vunpack.c.l.b16 %v80
  %v805 = vunpack.c.l.b16 %v81
  %v806 = vunpack.c.l.b16 %v82
  %v807 = vunpack.c.l.b16 %v83
  %v808 = vunpack.c.l.b16 %v84
  %v809 = vunpack.c.l.b16 %v85
  %v810 = vunpack.c.l.b16 %v86
  %v811 = vunpack.c.l.b16 %v87
  %v812 = vunpack.c.l.b16 %v88
  %v813 = vunpack.c.l.b16 %v89
  %v814 = vunpack.c.l.b16 %v90
  %v815 = vunpack.c.l.b16 %v91
  %v816 = vunpack.c.l.b16 %v92
  %v817 = vunpack.c.l.b16 %v93
  %v818 = vunpack.c.l.b16 %v94
  %v819 = vunpack.c.l.b16 %v95
  %v820 = vunpack.c.l.b16 %v96
  %v821 = vunpack.c.l.b16 %v97
  %v822 = vunpack.c.l.b16 %v98
  %v823 = vunpack.c.l.b16 %v99
  %v824 = vunpack.c.l.b16 %v100
  %v825 = vpack.c.b16 %v770, %v769
  %v826 = vpack.c.b16 %v772, %v771
  %v827 = vpack.c.b16 %v774, %v773
  %v828 = vpack.c.b16 %v776, %v775
  %v829 = vpack.c.b16 %v778, %v777
  %v830 = vpack.c.b16 %v780, %v779
  %v831 = vpack.c.b16 %v782, %v781
  %v832 = vpack.c.b16 %v784, %v783
  %v833 = vpack.c.b16 %v786, %v785
  %v834 = vpack.c.b16 %v788, %v787
  %v835 = vpack.c.b16 %v790, %v789
  %v836 = vpack.c.b16 %v792, %v791
  %v837 = vpack.c.b16 %v794, %v793
  %v838 = vpack.c.b16 %v796, %v795
  %v839 = vpack.c.b16 %v798, %v797
  %v840 = vpack.c.b16 %v800, %v799
  %v841 = vpack.c.b16 %v802, %v801
  %v842 = vpack.c.b16 %v804, %v803
  %v843 = vpack.c.b16 %v806, %v805
  %v844 = vpack.c.b16 %v808, %v807
  %v845 = vpack.c.b16 %v810, %v809
  %v846 = vpack.c.b16 %v812, %v811
  %v847 = vpack.c.b16 %v814, %v813
  %v848 = vpack.c.b16 %v816, %v815
  %v849 = vpack.c.b16 %v818, %v817
  %v850 = vpack.c.b16 %v820, %v819
  %v851 = vpack.c.b16 %v822, %v821
  %v852 = vpack.c.b16 %v824, %v823
  %v865 = vunpack.c.l.b16 %v101
  %v866 = vunpack.c.l.b16 %v102
  %v867 = vunpack.c.l.b16 %v103
  %v868 = vunpack.c.l.b16 %v104
  %v869 = vunpack.c.l.b16 %v105
  %v870 = vunpack.c.l.b16 %v106
  %v871 = vunpack.c.l.b16 %v107
  %v872 = vunpack.c.l.b16 %v108
  %v873 = vunpack.c.l.b16 %v109
  %v874 = vunpack.c.l.b16 %v110
  %v875 = vunpack.c.l.b16 %v111
  %v876 = vunpack.c.l.b16 %v112
  %v877 = vpack.c.b16 %v866, %v865
  %v878 = vpack.c.b16 %v868, %v867
  %v879 = vpack.c.b16 %v870, %v869
  %v880 = vpack.c.b16 %v872, %v871
  %v881 = vpack.c.b16 %v874, %v873
  %v882 = vpack.c.b16 %v876, %v875
  %v890 = vsel %vm371, %v825, 0
  %v893 = vsel %vm371, %v826, 0
  %v896 = vsel %vm371, %v827, 0
  %v899 = vsel %vm371, %v828, 0
  %v902 = vsel %vm371, %v829, 0
  %v905 = vsel %vm371, %v830, 0
  %v908 = vsel %vm371, %v831, 0
  %v911 = vsel %vm371, %v832, 0
  %v914 = vsel %vm371, %v833, 0
  %v917 = vsel %vm371, %v834, 0
  %v920 = vsel %vm371, %v835, 0
  %v923 = vsel %vm371, %v836, 0
  %v926 = vsel %vm371, %v837, 0
  %v929 = vsel %vm371, %v838, 0
  %v932 = vsel %vm371, %v839, 0
  %v935 = vsel %vm371, %v840, 0
  %v938 = vsel %vm371, %v841, 0
  %v941 = vsel %vm371, %v842, 0
  %v944 = vsel %vm371, %v843, 0
  %v947 = vsel %vm371, %v844, 0
  %v950 = vsel %vm371, %v845, 0
  %v953 = vsel %vm371, %v846, 0
  %v956 = vsel %vm371, %v847, 0
  %v959 = vsel %vm371, %v848, 0
  %v962 = vsel %vm371, %v849, 0
  %v965 = vsel %vm371, %v850, 0
  %v968 = vsel %vm371, %v851, 0
  %v971 = vsel %vm371, %v852, 0
  %973 = vmatprep.subr.bf16.mxu0 0
  %974 = vmatpush1.bf16.msra.mxu0 %v877
  %975 = vmatprep.subr.bf16.mxu0 0
  %976 = vmatpush1.bf16.msra.mxu0 %v878
  %977 = vmatprep.subr.bf16.mxu0 0
  %978 = vmatpush1.bf16.msra.mxu0 %v879
  %979 = vmatprep.subr.bf16.mxu0 0
  %980 = vmatpush1.bf16.msra.mxu0 %v880
  %981 = vmatprep.subr.bf16.mxu0 0
  %982 = vmatpush1.bf16.msra.mxu0 %v881
  %983 = vmatprep.subr.bf16.mxu0 0
  %984 = vmatpush1.bf16.msra.mxu0 %v882
  %985 = vmatprep.subr.bf16.mxu0 0
  %986 = vmatpush1.bf16.msra.mxu0 0
  %987 = vmatprep.subr.bf16.mxu0 0
  %988 = vmatpush1.bf16.msra.mxu0 0
  %989 = vmatprep.subr.bf16.mxu0 0
  %990 = vmatpush1.bf16.msra.mxu0 0
  %991 = vmatprep.subr.bf16.mxu0 0
  %992 = vmatpush1.bf16.msra.mxu0 0
  %993 = vmatprep.subr.bf16.mxu0 0
  %994 = vmatpush1.bf16.msra.mxu0 0
  %995 = vmatprep.subr.bf16.mxu0 0
  %996 = vmatpush1.bf16.msra.mxu0 0
  %997 = vmatprep.subr.bf16.mxu0 0
  %998 = vmatpush1.bf16.msra.mxu0 0
  %999 = vmatprep.subr.bf16.mxu0 0
  %1000 = vmatpush1.bf16.msra.mxu0 0
  %1001 = vmatprep.subr.bf16.mxu0 0
  %1002 = vmatpush1.bf16.msra.mxu0 0
  %1003 = vmatprep.subr.bf16.mxu0 0
  %1004 = vmatpush1.bf16.msra.mxu0 0
  %1005 = vmatprep.mubr.bf16.mxu0 0
  %1006 = vmatmul.mubr.bf16.gmra.mrb[0].mxu0 %v890
  %v1007 = vpop.f32.mrb[0].mxu0
  %v1008 = vadd.f32 %v491, %v1007
  %v1009 = vpop.f32.mrb[0].mxu0
  %v1010 = vpop.f32.mrb[0].mxu0
  %v1011 = vadd.f32 %v494, %v1010
  %v1012 = vpop.f32.mrb[0].mxu0
  %1013 = vmatprep.mubr.bf16.mxu0 0
  %1014 = vmatmul.mubr.bf16.gmra.mrb[0].mxu0 %v893
  %v1015 = vpop.f32.mrb[0].mxu0
  %v1016 = vadd.f32 %v499, %v1015
  %v1017 = vpop.f32.mrb[0].mxu0
  %v1018 = vpop.f32.mrb[0].mxu0
  %v1019 = vadd.f32 %v502, %v1018
  %v1020 = vpop.f32.mrb[0].mxu0
  %1021 = vmatprep.mubr.bf16.mxu0 0
  %1022 = vmatmul.mubr.bf16.gmra.mrb[0].mxu0 %v896
  %v1023 = vpop.f32.mrb[0].mxu0
  %v1024 = vadd.f32 %v507, %v1023
  %v1025 = vpop.f32.mrb[0].mxu0
  %v1026 = vpop.f32.mrb[0].mxu0
  %v1027 = vadd.f32 %v510, %v1026
  %v1028 = vpop.f32.mrb[0].mxu0
  %1029 = vmatprep.mubr.bf16.mxu0 0
  %1030 = vmatmul.mubr.bf16.gmra.mrb[0].mxu0 %v899
  %v1031 = vpop.f32.mrb[0].mxu0
  %v1032 = vadd.f32 %v515, %v1031
  %v1033 = vpop.f32.mrb[0].mxu0
  %v1034 = vpop.f32.mrb[0].mxu0
  %v1035 = vadd.f32 %v518, %v1034
  %v1036 = vpop.f32.mrb[0].mxu0
  %1037 = vmatprep.mubr.bf16.mxu0 0
  %1038 = vmatmul.mubr.bf16.gmra.mrb[0].mxu0 %v902
  %v1039 = vpop.f32.mrb[0].mxu0
  %v1040 = vadd.f32 %v523, %v1039
  %v1041 = vpop.f32.mrb[0].mxu0
  %v1042 = vpop.f32.mrb[0].mxu0
  %v1043 = vadd.f32 %v526, %v1042
  %v1044 = vpop.f32.mrb[0].mxu0
  %1045 = vmatprep.mubr.bf16.mxu0 0
  %1046 = vmatmul.mubr.bf16.gmra.mrb[0].mxu0 %v905
  %v1047 = vpop.f32.mrb[0].mxu0
  %v1048 = vadd.f32 %v531, %v1047
  %v1049 = vpop.f32.mrb[0].mxu0
  %v1050 = vpop.f32.mrb[0].mxu0
  %v1051 = vadd.f32 %v534, %v1050
  %v1052 = vpop.f32.mrb[0].mxu0
  %1053 = vmatprep.mubr.bf16.mxu0 0
  %1054 = vmatmul.mubr.bf16.gmra.mrb[0].mxu0 %v908
  %v1055 = vpop.f32.mrb[0].mxu0
  %v1056 = vadd.f32 %v539, %v1055
  %v1057 = vpop.f32.mrb[0].mxu0
  %v1058 = vpop.f32.mrb[0].mxu0
  %v1059 = vadd.f32 %v542, %v1058
  %v1060 = vpop.f32.mrb[0].mxu0
  %1061 = vmatprep.mubr.bf16.mxu0 0
  %1062 = vmatmul.mubr.bf16.gmra.mrb[0].mxu0 %v911
  %v1063 = vpop.f32.mrb[0].mxu0
  %v1064 = vadd.f32 %v547, %v1063
  %v1065 = vpop.f32.mrb[0].mxu0
  %v1066 = vpop.f32.mrb[0].mxu0
  %v1067 = vadd.f32 %v550, %v1066
  %v1068 = vpop.f32.mrb[0].mxu0
  %1069 = vmatprep.mubr.bf16.mxu0 0
  %1070 = vmatmul.mubr.bf16.gmra.mrb[0].mxu0 %v914
  %v1071 = vpop.f32.mrb[0].mxu0
  %v1072 = vadd.f32 %v555, %v1071
  %v1073 = vpop.f32.mrb[0].mxu0
  %v1074 = vpop.f32.mrb[0].mxu0
  %v1075 = vadd.f32 %v558, %v1074
  %v1076 = vpop.f32.mrb[0].mxu0
  %1077 = vmatprep.mubr.bf16.mxu0 0
  %1078 = vmatmul.mubr.bf16.gmra.mrb[0].mxu0 %v917
  %v1079 = vpop.f32.mrb[0].mxu0
  %v1080 = vadd.f32 %v563, %v1079
  %v1081 = vpop.f32.mrb[0].mxu0
  %v1082 = vpop.f32.mrb[0].mxu0
  %v1083 = vadd.f32 %v566, %v1082
  %v1084 = vpop.f32.mrb[0].mxu0
  %1085 = vmatprep.mubr.bf16.mxu0 0
  %1086 = vmatmul.mubr.bf16.gmra.mrb[0].mxu0 %v920
  %v1087 = vpop.f32.mrb[0].mxu0
  %v1088 = vadd.f32 %v571, %v1087
  %v1089 = vpop.f32.mrb[0].mxu0
  %v1090 = vpop.f32.mrb[0].mxu0
  %v1091 = vadd.f32 %v574, %v1090
  %v1092 = vpop.f32.mrb[0].mxu0
  %1093 = vmatprep.mubr.bf16.mxu0 0
  %1094 = vmatmul.mubr.bf16.gmra.mrb[0].mxu0 %v923
  %v1095 = vpop.f32.mrb[0].mxu0
  %v1096 = vadd.f32 %v579, %v1095
  %v1097 = vpop.f32.mrb[0].mxu0
  %v1098 = vpop.f32.mrb[0].mxu0
  %v1099 = vadd.f32 %v582, %v1098
  %v1100 = vpop.f32.mrb[0].mxu0
  %1101 = vmatprep.mubr.bf16.mxu0 0
  %1102 = vmatmul.mubr.bf16.gmra.mrb[0].mxu0 %v926
  %v1103 = vpop.f32.mrb[0].mxu0
  %v1104 = vadd.f32 %v587, %v1103
  %v1105 = vpop.f32.mrb[0].mxu0
  %v1106 = vpop.f32.mrb[0].mxu0
  %v1107 = vadd.f32 %v590, %v1106
  %v1108 = vpop.f32.mrb[0].mxu0
  %1109 = vmatprep.mubr.bf16.mxu0 0
  %1110 = vmatmul.mubr.bf16.gmra.mrb[0].mxu0 %v929
  %v1111 = vpop.f32.mrb[0].mxu0
  %v1112 = vadd.f32 %v595, %v1111
  %v1113 = vpop.f32.mrb[0].mxu0
  %v1114 = vpop.f32.mrb[0].mxu0
  %v1115 = vadd.f32 %v598, %v1114
  %v1116 = vpop.f32.mrb[0].mxu0
  %1117 = vmatprep.mubr.bf16.mxu0 0
  %1118 = vmatmul.mubr.bf16.gmra.mrb[0].mxu0 %v932
  %v1119 = vpop.f32.mrb[0].mxu0
  %v1120 = vadd.f32 %v603, %v1119
  %v1121 = vpop.f32.mrb[0].mxu0
  %v1122 = vpop.f32.mrb[0].mxu0
  %v1123 = vadd.f32 %v606, %v1122
  %v1124 = vpop.f32.mrb[0].mxu0
  %1125 = vmatprep.mubr.bf16.mxu0 0
  %1126 = vmatmul.mubr.bf16.gmra.mrb[0].mxu0 %v935
  %v1127 = vpop.f32.mrb[0].mxu0
  %v1128 = vadd.f32 %v611, %v1127
  %v1129 = vpop.f32.mrb[0].mxu0
  %v1130 = vpop.f32.mrb[0].mxu0
  %v1131 = vadd.f32 %v614, %v1130
  %v1132 = vpop.f32.mrb[0].mxu0
  %1133 = vmatprep.mubr.bf16.mxu0 0
  %1134 = vmatmul.mubr.bf16.gmra.mrb[0].mxu0 %v938
  %v1135 = vpop.f32.mrb[0].mxu0
  %v1136 = vadd.f32 %v619, %v1135
  %v1137 = vpop.f32.mrb[0].mxu0
  %v1138 = vpop.f32.mrb[0].mxu0
  %v1139 = vadd.f32 %v622, %v1138
  %v1140 = vpop.f32.mrb[0].mxu0
  %1141 = vmatprep.mubr.bf16.mxu0 0
  %1142 = vmatmul.mubr.bf16.gmra.mrb[0].mxu0 %v941
  %v1143 = vpop.f32.mrb[0].mxu0
  %v1144 = vadd.f32 %v627, %v1143
  %v1145 = vpop.f32.mrb[0].mxu0
  %v1146 = vpop.f32.mrb[0].mxu0
  %v1147 = vadd.f32 %v630, %v1146
  %v1148 = vpop.f32.mrb[0].mxu0
  %1149 = vmatprep.mubr.bf16.mxu0 0
  %1150 = vmatmul.mubr.bf16.gmra.mrb[0].mxu0 %v944
  %v1151 = vpop.f32.mrb[0].mxu0
  %v1152 = vadd.f32 %v635, %v1151
  %v1153 = vpop.f32.mrb[0].mxu0
  %v1154 = vpop.f32.mrb[0].mxu0
  %v1155 = vadd.f32 %v638, %v1154
  %v1156 = vpop.f32.mrb[0].mxu0
  %1157 = vmatprep.mubr.bf16.mxu0 0
  %1158 = vmatmul.mubr.bf16.gmra.mrb[0].mxu0 %v947
  %v1159 = vpop.f32.mrb[0].mxu0
  %v1160 = vadd.f32 %v643, %v1159
  %v1161 = vpop.f32.mrb[0].mxu0
  %v1162 = vpop.f32.mrb[0].mxu0
  %v1163 = vadd.f32 %v646, %v1162
  %v1164 = vpop.f32.mrb[0].mxu0
  %1165 = vmatprep.mubr.bf16.mxu0 0
  %1166 = vmatmul.mubr.bf16.gmra.mrb[0].mxu0 %v950
  %v1167 = vpop.f32.mrb[0].mxu0
  %v1168 = vadd.f32 %v651, %v1167
  %v1169 = vpop.f32.mrb[0].mxu0
  %v1170 = vpop.f32.mrb[0].mxu0
  %v1171 = vadd.f32 %v654, %v1170
  %v1172 = vpop.f32.mrb[0].mxu0
  %1173 = vmatprep.mubr.bf16.mxu0 0
  %1174 = vmatmul.mubr.bf16.gmra.mrb[0].mxu0 %v953
  %v1175 = vpop.f32.mrb[0].mxu0
  %v1176 = vadd.f32 %v659, %v1175
  %v1177 = vpop.f32.mrb[0].mxu0
  %v1178 = vpop.f32.mrb[0].mxu0
  %v1179 = vadd.f32 %v662, %v1178
  %v1180 = vpop.f32.mrb[0].mxu0
  %1181 = vmatprep.mubr.bf16.mxu0 0
  %1182 = vmatmul.mubr.bf16.gmra.mrb[0].mxu0 %v956
  %v1183 = vpop.f32.mrb[0].mxu0
  %v1184 = vadd.f32 %v667, %v1183
  %v1185 = vpop.f32.mrb[0].mxu0
  %v1186 = vpop.f32.mrb[0].mxu0
  %v1187 = vadd.f32 %v670, %v1186
  %v1188 = vpop.f32.mrb[0].mxu0
  %1189 = vmatprep.mubr.bf16.mxu0 0
  %1190 = vmatmul.mubr.bf16.gmra.mrb[0].mxu0 %v959
  %v1191 = vpop.f32.mrb[0].mxu0
  %v1192 = vadd.f32 %v675, %v1191
  %v1193 = vpop.f32.mrb[0].mxu0
  %v1194 = vpop.f32.mrb[0].mxu0
  %v1195 = vadd.f32 %v678, %v1194
  %v1196 = vpop.f32.mrb[0].mxu0
  %1197 = vmatprep.mubr.bf16.mxu0 0
  %1198 = vmatmul.mubr.bf16.gmra.mrb[0].mxu0 %v962
  %v1199 = vpop.f32.mrb[0].mxu0
  %v1200 = vadd.f32 %v683, %v1199
  %v1201 = vpop.f32.mrb[0].mxu0
  %v1202 = vpop.f32.mrb[0].mxu0
  %v1203 = vadd.f32 %v686, %v1202
  %v1204 = vpop.f32.mrb[0].mxu0
  %1205 = vmatprep.mubr.bf16.mxu0 0
  %1206 = vmatmul.mubr.bf16.gmra.mrb[0].mxu0 %v965
  %v1207 = vpop.f32.mrb[0].mxu0
  %v1208 = vadd.f32 %v691, %v1207
  %v1209 = vpop.f32.mrb[0].mxu0
  %v1210 = vpop.f32.mrb[0].mxu0
  %v1211 = vadd.f32 %v694, %v1210
  %v1212 = vpop.f32.mrb[0].mxu0
  %1213 = vmatprep.mubr.bf16.mxu0 0
  %1214 = vmatmul.mubr.bf16.gmra.mrb[0].mxu0 %v968
  %v1215 = vpop.f32.mrb[0].mxu0
  %v1216 = vadd.f32 %v699, %v1215
  %v1217 = vpop.f32.mrb[0].mxu0
  %v1218 = vpop.f32.mrb[0].mxu0
  %v1219 = vadd.f32 %v702, %v1218
  %v1220 = vpop.f32.mrb[0].mxu0
  %1221 = vmatprep.mubr.bf16.mxu0 0
  %1222 = vmatmul.mubr.bf16.gmra.mrb[0].mxu0 %v971
  %v1223 = vpop.f32.mrb[0].mxu0
  %v1224 = vadd.f32 %v707, %v1223
  %v1225 = vpop.f32.mrb[0].mxu0
  %v1226 = vpop.f32.mrb[0].mxu0
  %v1227 = vadd.f32 %v710, %v1226
  %v1228 = vpop.f32.mrb[0].mxu0
  %1229 = vdwg.mxu0
  %s1230 = scalar_lea.vmem %s2, 48
  %v1231 = vld [vmem:[%s1230] sm:$0xf]
  %v1232 = vld [vmem:[%s1230 + $0x4] sm:$0xf]
  %v1233 = vld [vmem:[%s1230 + $0x8] sm:$0xf]
  %v1234 = vld [vmem:[%s1230 + $0xc] sm:$0xf]
  %v1235 = vld [vmem:[%s1230 + $0x10] sm:$0xf]
  %v1236 = vld [vmem:[%s1230 + $0x14] sm:$0xf]
  %v1237 = vld [vmem:[%s1230 + $0x18] sm:$0xf]
  %v1238 = vld [vmem:[%s1230 + $0x1c] sm:$0xf]
  %v1239 = vld [vmem:[%s1230 + $0x20] sm:$0xf]
  %v1240 = vld [vmem:[%s1230 + $0x24] sm:$0xf]
  %v1241 = vld [vmem:[%s1230 + $0x28] sm:$0xf]
  %v1242 = vld [vmem:[%s1230 + $0x2c] sm:$0xf]
  %v1255 = vunpack.c.l.b16 %v1231
  %v1256 = vunpack.c.l.b16 %v1232
  %v1257 = vunpack.c.l.b16 %v1233
  %v1258 = vunpack.c.l.b16 %v1234
  %v1259 = vunpack.c.l.b16 %v1235
  %v1260 = vunpack.c.l.b16 %v1236
  %v1261 = vunpack.c.l.b16 %v1237
  %v1262 = vunpack.c.l.b16 %v1238
  %v1263 = vunpack.c.l.b16 %v1239
  %v1264 = vunpack.c.l.b16 %v1240
  %v1265 = vunpack.c.l.b16 %v1241
  %v1266 = vunpack.c.l.b16 %v1242
  %v1267 = vpack.c.b16 %v1256, %v1255
  %v1268 = vpack.c.b16 %v1258, %v1257
  %v1269 = vpack.c.b16 %v1260, %v1259
  %v1270 = vpack.c.b16 %v1262, %v1261
  %v1271 = vpack.c.b16 %v1264, %v1263
  %v1272 = vpack.c.b16 %v1266, %v1265
  %1279 = vmatprep.subr.bf16.mxu0 0
  %1280 = vmatpush1.bf16.msra.mxu0 %v1267
  %1281 = vmatprep.subr.bf16.mxu0 0
  %1282 = vmatpush1.bf16.msra.mxu0 %v1268
  %1283 = vmatprep.subr.bf16.mxu0 0
  %1284 = vmatpush1.bf16.msra.mxu0 %v1269
  %1285 = vmatprep.subr.bf16.mxu0 0
  %1286 = vmatpush1.bf16.msra.mxu0 %v1270
  %1287 = vmatprep.subr.bf16.mxu0 0
  %1288 = vmatpush1.bf16.msra.mxu0 %v1271
  %1289 = vmatprep.subr.bf16.mxu0 0
  %1290 = vmatpush1.bf16.msra.mxu0 %v1272
  %1291 = vmatprep.subr.bf16.mxu0 0
  %1292 = vmatpush1.bf16.msra.mxu0 0
  %1293 = vmatprep.subr.bf16.mxu0 0
  %1294 = vmatpush1.bf16.msra.mxu0 0
  %1295 = vmatprep.subr.bf16.mxu0 0
  %1296 = vmatpush1.bf16.msra.mxu0 0
  %1297 = vmatprep.subr.bf16.mxu0 0
  %1298 = vmatpush1.bf16.msra.mxu0 0
  %1299 = vmatprep.subr.bf16.mxu0 0
  %1300 = vmatpush1.bf16.msra.mxu0 0
  %1301 = vmatprep.subr.bf16.mxu0 0
  %1302 = vmatpush1.bf16.msra.mxu0 0
  %1303 = vmatprep.subr.bf16.mxu0 0
  %1304 = vmatpush1.bf16.msra.mxu0 0
  %1305 = vmatprep.subr.bf16.mxu0 0
  %1306 = vmatpush1.bf16.msra.mxu0 0
  %1307 = vmatprep.subr.bf16.mxu0 0
  %1308 = vmatpush1.bf16.msra.mxu0 0
  %1309 = vmatprep.subr.bf16.mxu0 0
  %1310 = vmatpush1.bf16.msra.mxu0 0
  %1311 = vmatprep.mubr.bf16.mxu0 0
  %1312 = vmatmul.mubr.bf16.gmra.mrb[0].mxu0 %v373
  %v1313 = vpop.f32.mrb[0].mxu0
  %v1314 = vadd.f32 0.0, %v1313
  %v1315 = vpop.f32.mrb[0].mxu0
  %v1316 = vpop.f32.mrb[0].mxu0
  %v1317 = vadd.f32 0.0, %v1316
  %v1318 = vpop.f32.mrb[0].mxu0
  %1319 = vmatprep.mubr.bf16.mxu0 0
  %1320 = vmatmul.mubr.bf16.gmra.mrb[0].mxu0 %v376
  %v1321 = vpop.f32.mrb[0].mxu0
  %v1322 = vadd.f32 0.0, %v1321
  %v1323 = vpop.f32.mrb[0].mxu0
  %v1324 = vpop.f32.mrb[0].mxu0
  %v1325 = vadd.f32 0.0, %v1324
  %v1326 = vpop.f32.mrb[0].mxu0
  %1327 = vmatprep.mubr.bf16.mxu0 0
  %1328 = vmatmul.mubr.bf16.gmra.mrb[0].mxu0 %v379
  %v1329 = vpop.f32.mrb[0].mxu0
  %v1330 = vadd.f32 0.0, %v1329
  %v1331 = vpop.f32.mrb[0].mxu0
  %v1332 = vpop.f32.mrb[0].mxu0
  %v1333 = vadd.f32 0.0, %v1332
  %v1334 = vpop.f32.mrb[0].mxu0
  %1335 = vmatprep.mubr.bf16.mxu0 0
  %1336 = vmatmul.mubr.bf16.gmra.mrb[0].mxu0 %v382
  %v1337 = vpop.f32.mrb[0].mxu0
  %v1338 = vadd.f32 0.0, %v1337
  %v1339 = vpop.f32.mrb[0].mxu0
  %v1340 = vpop.f32.mrb[0].mxu0
  %v1341 = vadd.f32 0.0, %v1340
  %v1342 = vpop.f32.mrb[0].mxu0
  %1343 = vmatprep.mubr.bf16.mxu0 0
  %1344 = vmatmul.mubr.bf16.gmra.mrb[0].mxu0 %v385
  %v1345 = vpop.f32.mrb[0].mxu0
  %v1346 = vadd.f32 0.0, %v1345
  %v1347 = vpop.f32.mrb[0].mxu0
  %v1348 = vpop.f32.mrb[0].mxu0
  %v1349 = vadd.f32 0.0, %v1348
  %v1350 = vpop.f32.mrb[0].mxu0
  %1351 = vmatprep.mubr.bf16.mxu0 0
  %1352 = vmatmul.mubr.bf16.gmra.mrb[0].mxu0 %v388
  %v1353 = vpop.f32.mrb[0].mxu0
  %v1354 = vadd.f32 0.0, %v1353
  %v1355 = vpop.f32.mrb[0].mxu0
  %v1356 = vpop.f32.mrb[0].mxu0
  %v1357 = vadd.f32 0.0, %v1356
  %v1358 = vpop.f32.mrb[0].mxu0
  %1359 = vmatprep.mubr.bf16.mxu0 0
  %1360 = vmatmul.mubr.bf16.gmra.mrb[0].mxu0 %v391
  %v1361 = vpop.f32.mrb[0].mxu0
  %v1362 = vadd.f32 0.0, %v1361
  %v1363 = vpop.f32.mrb[0].mxu0
  %v1364 = vpop.f32.mrb[0].mxu0
  %v1365 = vadd.f32 0.0, %v1364
  %v1366 = vpop.f32.mrb[0].mxu0
  %1367 = vmatprep.mubr.bf16.mxu0 0
  %1368 = vmatmul.mubr.bf16.gmra.mrb[0].mxu0 %v394
  %v1369 = vpop.f32.mrb[0].mxu0
  %v1370 = vadd.f32 0.0, %v1369
  %v1371 = vpop.f32.mrb[0].mxu0
  %v1372 = vpop.f32.mrb[0].mxu0
  %v1373 = vadd.f32 0.0, %v1372
  %v1374 = vpop.f32.mrb[0].mxu0
  %1375 = vmatprep.mubr.bf16.mxu0 0
  %1376 = vmatmul.mubr.bf16.gmra.mrb[0].mxu0 %v397
  %v1377 = vpop.f32.mrb[0].mxu0
  %v1378 = vadd.f32 0.0, %v1377
  %v1379 = vpop.f32.mrb[0].mxu0
  %v1380 = vpop.f32.mrb[0].mxu0
  %v1381 = vadd.f32 0.0, %v1380
  %v1382 = vpop.f32.mrb[0].mxu0
  %1383 = vmatprep.mubr.bf16.mxu0 0
  %1384 = vmatmul.mubr.bf16.gmra.mrb[0].mxu0 %v400
  %v1385 = vpop.f32.mrb[0].mxu0
  %v1386 = vadd.f32 0.0, %v1385
  %v1387 = vpop.f32.mrb[0].mxu0
  %v1388 = vpop.f32.mrb[0].mxu0
  %v1389 = vadd.f32 0.0, %v1388
  %v1390 = vpop.f32.mrb[0].mxu0
  %1391 = vmatprep.mubr.bf16.mxu0 0
  %1392 = vmatmul.mubr.bf16.gmra.mrb[0].mxu0 %v403
  %v1393 = vpop.f32.mrb[0].mxu0
  %v1394 = vadd.f32 0.0, %v1393
  %v1395 = vpop.f32.mrb[0].mxu0
  %v1396 = vpop.f32.mrb[0].mxu0
  %v1397 = vadd.f32 0.0, %v1396
  %v1398 = vpop.f32.mrb[0].mxu0
  %1399 = vmatprep.mubr.bf16.mxu0 0
  %1400 = vmatmul.mubr.bf16.gmra.mrb[0].mxu0 %v406
  %v1401 = vpop.f32.mrb[0].mxu0
  %v1402 = vadd.f32 0.0, %v1401
  %v1403 = vpop.f32.mrb[0].mxu0
  %v1404 = vpop.f32.mrb[0].mxu0
  %v1405 = vadd.f32 0.0, %v1404
  %v1406 = vpop.f32.mrb[0].mxu0
  %1407 = vmatprep.mubr.bf16.mxu0 0
  %1408 = vmatmul.mubr.bf16.gmra.mrb[0].mxu0 %v409
  %v1409 = vpop.f32.mrb[0].mxu0
  %v1410 = vadd.f32 0.0, %v1409
  %v1411 = vpop.f32.mrb[0].mxu0
  %v1412 = vpop.f32.mrb[0].mxu0
  %v1413 = vadd.f32 0.0, %v1412
  %v1414 = vpop.f32.mrb[0].mxu0
  %1415 = vmatprep.mubr.bf16.mxu0 0
  %1416 = vmatmul.mubr.bf16.gmra.mrb[0].mxu0 %v412
  %v1417 = vpop.f32.mrb[0].mxu0
  %v1418 = vadd.f32 0.0, %v1417
  %v1419 = vpop.f32.mrb[0].mxu0
  %v1420 = vpop.f32.mrb[0].mxu0
  %v1421 = vadd.f32 0.0, %v1420
  %v1422 = vpop.f32.mrb[0].mxu0
  %1423 = vmatprep.mubr.bf16.mxu0 0
  %1424 = vmatmul.mubr.bf16.gmra.mrb[0].mxu0 %v415
  %v1425 = vpop.f32.mrb[0].mxu0
  %v1426 = vadd.f32 0.0, %v1425
  %v1427 = vpop.f32.mrb[0].mxu0
  %v1428 = vpop.f32.mrb[0].mxu0
  %v1429 = vadd.f32 0.0, %v1428
  %v1430 = vpop.f32.mrb[0].mxu0
  %1431 = vmatprep.mubr.bf16.mxu0 0
  %1432 = vmatmul.mubr.bf16.gmra.mrb[0].mxu0 %v418
  %v1433 = vpop.f32.mrb[0].mxu0
  %v1434 = vadd.f32 0.0, %v1433
  %v1435 = vpop.f32.mrb[0].mxu0
  %v1436 = vpop.f32.mrb[0].mxu0
  %v1437 = vadd.f32 0.0, %v1436
  %v1438 = vpop.f32.mrb[0].mxu0
  %1439 = vmatprep.mubr.bf16.mxu0 0
  %1440 = vmatmul.mubr.bf16.gmra.mrb[0].mxu0 %v421
  %v1441 = vpop.f32.mrb[0].mxu0
  %v1442 = vadd.f32 0.0, %v1441
  %v1443 = vpop.f32.mrb[0].mxu0
  %v1444 = vpop.f32.mrb[0].mxu0
  %v1445 = vadd.f32 0.0, %v1444
  %v1446 = vpop.f32.mrb[0].mxu0
  %1447 = vmatprep.mubr.bf16.mxu0 0
  %1448 = vmatmul.mubr.bf16.gmra.mrb[0].mxu0 %v424
  %v1449 = vpop.f32.mrb[0].mxu0
  %v1450 = vadd.f32 0.0, %v1449
  %v1451 = vpop.f32.mrb[0].mxu0
  %v1452 = vpop.f32.mrb[0].mxu0
  %v1453 = vadd.f32 0.0, %v1452
  %v1454 = vpop.f32.mrb[0].mxu0
  %1455 = vmatprep.mubr.bf16.mxu0 0
  %1456 = vmatmul.mubr.bf16.gmra.mrb[0].mxu0 %v427
  %v1457 = vpop.f32.mrb[0].mxu0
  %v1458 = vadd.f32 0.0, %v1457
  %v1459 = vpop.f32.mrb[0].mxu0
  %v1460 = vpop.f32.mrb[0].mxu0
  %v1461 = vadd.f32 0.0, %v1460
  %v1462 = vpop.f32.mrb[0].mxu0
  %1463 = vmatprep.mubr.bf16.mxu0 0
  %1464 = vmatmul.mubr.bf16.gmra.mrb[0].mxu0 %v430
  %v1465 = vpop.f32.mrb[0].mxu0
  %v1466 = vadd.f32 0.0, %v1465
  %v1467 = vpop.f32.mrb[0].mxu0
  %v1468 = vpop.f32.mrb[0].mxu0
  %v1469 = vadd.f32 0.0, %v1468
  %v1470 = vpop.f32.mrb[0].mxu0
  %1471 = vmatprep.mubr.bf16.mxu0 0
  %1472 = vmatmul.mubr.bf16.gmra.mrb[0].mxu0 %v433
  %v1473 = vpop.f32.mrb[0].mxu0
  %v1474 = vadd.f32 0.0, %v1473
  %v1475 = vpop.f32.mrb[0].mxu0
  %v1476 = vpop.f32.mrb[0].mxu0
  %v1477 = vadd.f32 0.0, %v1476
  %v1478 = vpop.f32.mrb[0].mxu0
  %1479 = vmatprep.mubr.bf16.mxu0 0
  %1480 = vmatmul.mubr.bf16.gmra.mrb[0].mxu0 %v436
  %v1481 = vpop.f32.mrb[0].mxu0
  %v1482 = vadd.f32 0.0, %v1481
  %v1483 = vpop.f32.mrb[0].mxu0
  %v1484 = vpop.f32.mrb[0].mxu0
  %v1485 = vadd.f32 0.0, %v1484
  %v1486 = vpop.f32.mrb[0].mxu0
  %1487 = vmatprep.mubr.bf16.mxu0 0
  %1488 = vmatmul.mubr.bf16.gmra.mrb[0].mxu0 %v439
  %v1489 = vpop.f32.mrb[0].mxu0
  %v1490 = vadd.f32 0.0, %v1489
  %v1491 = vpop.f32.mrb[0].mxu0
  %v1492 = vpop.f32.mrb[0].mxu0
  %v1493 = vadd.f32 0.0, %v1492
  %v1494 = vpop.f32.mrb[0].mxu0
  %1495 = vmatprep.mubr.bf16.mxu0 0
  %1496 = vmatmul.mubr.bf16.gmra.mrb[0].mxu0 %v442
  %v1497 = vpop.f32.mrb[0].mxu0
  %v1498 = vadd.f32 0.0, %v1497
  %v1499 = vpop.f32.mrb[0].mxu0
  %v1500 = vpop.f32.mrb[0].mxu0
  %v1501 = vadd.f32 0.0, %v1500
  %v1502 = vpop.f32.mrb[0].mxu0
  %1503 = vmatprep.mubr.bf16.mxu0 0
  %1504 = vmatmul.mubr.bf16.gmra.mrb[0].mxu0 %v445
  %v1505 = vpop.f32.mrb[0].mxu0
  %v1506 = vadd.f32 0.0, %v1505
  %v1507 = vpop.f32.mrb[0].mxu0
  %v1508 = vpop.f32.mrb[0].mxu0
  %v1509 = vadd.f32 0.0, %v1508
  %v1510 = vpop.f32.mrb[0].mxu0
  %1511 = vmatprep.mubr.bf16.mxu0 0
  %1512 = vmatmul.mubr.bf16.gmra.mrb[0].mxu0 %v448
  %v1513 = vpop.f32.mrb[0].mxu0
  %v1514 = vadd.f32 0.0, %v1513
  %v1515 = vpop.f32.mrb[0].mxu0
  %v1516 = vpop.f32.mrb[0].mxu0
  %v1517 = vadd.f32 0.0, %v1516
  %v1518 = vpop.f32.mrb[0].mxu0
  %1519 = vmatprep.mubr.bf16.mxu0 0
  %1520 = vmatmul.mubr.bf16.gmra.mrb[0].mxu0 %v451
  %v1521 = vpop.f32.mrb[0].mxu0
  %v1522 = vadd.f32 0.0, %v1521
  %v1523 = vpop.f32.mrb[0].mxu0
  %v1524 = vpop.f32.mrb[0].mxu0
  %v1525 = vadd.f32 0.0, %v1524
  %v1526 = vpop.f32.mrb[0].mxu0
  %1527 = vmatprep.mubr.bf16.mxu0 0
  %1528 = vmatmul.mubr.bf16.gmra.mrb[0].mxu0 %v454
  %v1529 = vpop.f32.mrb[0].mxu0
  %v1530 = vadd.f32 0.0, %v1529
  %v1531 = vpop.f32.mrb[0].mxu0
  %v1532 = vpop.f32.mrb[0].mxu0
  %v1533 = vadd.f32 0.0, %v1532
  %v1534 = vpop.f32.mrb[0].mxu0
  %1535 = vdwg.mxu0
  %v1548 = vunpack.c.l.b16 %v113
  %v1549 = vunpack.c.l.b16 %v114
  %v1550 = vunpack.c.l.b16 %v115
  %v1551 = vunpack.c.l.b16 %v116
  %v1552 = vunpack.c.l.b16 %v117
  %v1553 = vunpack.c.l.b16 %v118
  %v1554 = vunpack.c.l.b16 %v119
  %v1555 = vunpack.c.l.b16 %v120
  %v1556 = vunpack.c.l.b16 %v121
  %v1557 = vunpack.c.l.b16 %v122
  %v1558 = vunpack.c.l.b16 %v123
  %v1559 = vunpack.c.l.b16 %v124
  %v1560 = vpack.c.b16 %v1549, %v1548
  %v1561 = vpack.c.b16 %v1551, %v1550
  %v1562 = vpack.c.b16 %v1553, %v1552
  %v1563 = vpack.c.b16 %v1555, %v1554
  %v1564 = vpack.c.b16 %v1557, %v1556
  %v1565 = vpack.c.b16 %v1559, %v1558
  %1572 = vmatprep.subr.bf16.mxu0 0
  %1573 = vmatpush1.bf16.msra.mxu0 %v1560
  %1574 = vmatprep.subr.bf16.mxu0 0
  %1575 = vmatpush1.bf16.msra.mxu0 %v1561
  %1576 = vmatprep.subr.bf16.mxu0 0
  %1577 = vmatpush1.bf16.msra.mxu0 %v1562
  %1578 = vmatprep.subr.bf16.mxu0 0
  %1579 = vmatpush1.bf16.msra.mxu0 %v1563
  %1580 = vmatprep.subr.bf16.mxu0 0
  %1581 = vmatpush1.bf16.msra.mxu0 %v1564
  %1582 = vmatprep.subr.bf16.mxu0 0
  %1583 = vmatpush1.bf16.msra.mxu0 %v1565
  %1584 = vmatprep.subr.bf16.mxu0 0
  %1585 = vmatpush1.bf16.msra.mxu0 0
  %1586 = vmatprep.subr.bf16.mxu0 0
  %1587 = vmatpush1.bf16.msra.mxu0 0
  %1588 = vmatprep.subr.bf16.mxu0 0
  %1589 = vmatpush1.bf16.msra.mxu0 0
  %1590 = vmatprep.subr.bf16.mxu0 0
  %1591 = vmatpush1.bf16.msra.mxu0 0
  %1592 = vmatprep.subr.bf16.mxu0 0
  %1593 = vmatpush1.bf16.msra.mxu0 0
  %1594 = vmatprep.subr.bf16.mxu0 0
  %1595 = vmatpush1.bf16.msra.mxu0 0
  %1596 = vmatprep.subr.bf16.mxu0 0
  %1597 = vmatpush1.bf16.msra.mxu0 0
  %1598 = vmatprep.subr.bf16.mxu0 0
  %1599 = vmatpush1.bf16.msra.mxu0 0
  %1600 = vmatprep.subr.bf16.mxu0 0
  %1601 = vmatpush1.bf16.msra.mxu0 0
  %1602 = vmatprep.subr.bf16.mxu0 0
  %1603 = vmatpush1.bf16.msra.mxu0 0
  %1604 = vmatprep.mubr.bf16.mxu0 0
  %1605 = vmatmul.mubr.bf16.gmra.mrb[0].mxu0 %v890
  %v1606 = vpop.f32.mrb[0].mxu0
  %v1607 = vadd.f32 %v1314, %v1606
  %v1608 = vpop.f32.mrb[0].mxu0
  %v1609 = vpop.f32.mrb[0].mxu0
  %v1610 = vadd.f32 %v1317, %v1609
  %v1611 = vpop.f32.mrb[0].mxu0
  %1612 = vmatprep.mubr.bf16.mxu0 0
  %1613 = vmatmul.mubr.bf16.gmra.mrb[0].mxu0 %v893
  %v1614 = vpop.f32.mrb[0].mxu0
  %v1615 = vadd.f32 %v1322, %v1614
  %v1616 = vpop.f32.mrb[0].mxu0
  %v1617 = vpop.f32.mrb[0].mxu0
  %v1618 = vadd.f32 %v1325, %v1617
  %v1619 = vpop.f32.mrb[0].mxu0
  %1620 = vmatprep.mubr.bf16.mxu0 0
  %1621 = vmatmul.mubr.bf16.gmra.mrb[0].mxu0 %v896
  %v1622 = vpop.f32.mrb[0].mxu0
  %v1623 = vadd.f32 %v1330, %v1622
  %v1624 = vpop.f32.mrb[0].mxu0
  %v1625 = vpop.f32.mrb[0].mxu0
  %v1626 = vadd.f32 %v1333, %v1625
  %v1627 = vpop.f32.mrb[0].mxu0
  %1628 = vmatprep.mubr.bf16.mxu0 0
  %1629 = vmatmul.mubr.bf16.gmra.mrb[0].mxu0 %v899
  %v1630 = vpop.f32.mrb[0].mxu0
  %v1631 = vadd.f32 %v1338, %v1630
  %v1632 = vpop.f32.mrb[0].mxu0
  %v1633 = vpop.f32.mrb[0].mxu0
  %v1634 = vadd.f32 %v1341, %v1633
  %v1635 = vpop.f32.mrb[0].mxu0
  %1636 = vmatprep.mubr.bf16.mxu0 0
  %1637 = vmatmul.mubr.bf16.gmra.mrb[0].mxu0 %v902
  %v1638 = vpop.f32.mrb[0].mxu0
  %v1639 = vadd.f32 %v1346, %v1638
  %v1640 = vpop.f32.mrb[0].mxu0
  %v1641 = vpop.f32.mrb[0].mxu0
  %v1642 = vadd.f32 %v1349, %v1641
  %v1643 = vpop.f32.mrb[0].mxu0
  %1644 = vmatprep.mubr.bf16.mxu0 0
  %1645 = vmatmul.mubr.bf16.gmra.mrb[0].mxu0 %v905
  %v1646 = vpop.f32.mrb[0].mxu0
  %v1647 = vadd.f32 %v1354, %v1646
  %v1648 = vpop.f32.mrb[0].mxu0
  %v1649 = vpop.f32.mrb[0].mxu0
  %v1650 = vadd.f32 %v1357, %v1649
  %v1651 = vpop.f32.mrb[0].mxu0
  %1652 = vmatprep.mubr.bf16.mxu0 0
  %1653 = vmatmul.mubr.bf16.gmra.mrb[0].mxu0 %v908
  %v1654 = vpop.f32.mrb[0].mxu0
  %v1655 = vadd.f32 %v1362, %v1654
  %v1656 = vpop.f32.mrb[0].mxu0
  %v1657 = vpop.f32.mrb[0].mxu0
  %v1658 = vadd.f32 %v1365, %v1657
  %v1659 = vpop.f32.mrb[0].mxu0
  %1660 = vmatprep.mubr.bf16.mxu0 0
  %1661 = vmatmul.mubr.bf16.gmra.mrb[0].mxu0 %v911
  %v1662 = vpop.f32.mrb[0].mxu0
  %v1663 = vadd.f32 %v1370, %v1662
  %v1664 = vpop.f32.mrb[0].mxu0
  %v1665 = vpop.f32.mrb[0].mxu0
  %v1666 = vadd.f32 %v1373, %v1665
  %v1667 = vpop.f32.mrb[0].mxu0
  %1668 = vmatprep.mubr.bf16.mxu0 0
  %1669 = vmatmul.mubr.bf16.gmra.mrb[0].mxu0 %v914
  %v1670 = vpop.f32.mrb[0].mxu0
  %v1671 = vadd.f32 %v1378, %v1670
  %v1672 = vpop.f32.mrb[0].mxu0
  %v1673 = vpop.f32.mrb[0].mxu0
  %v1674 = vadd.f32 %v1381, %v1673
  %v1675 = vpop.f32.mrb[0].mxu0
  %1676 = vmatprep.mubr.bf16.mxu0 0
  %1677 = vmatmul.mubr.bf16.gmra.mrb[0].mxu0 %v917
  %v1678 = vpop.f32.mrb[0].mxu0
  %v1679 = vadd.f32 %v1386, %v1678
  %v1680 = vpop.f32.mrb[0].mxu0
  %v1681 = vpop.f32.mrb[0].mxu0
  %v1682 = vadd.f32 %v1389, %v1681
  %v1683 = vpop.f32.mrb[0].mxu0
  %1684 = vmatprep.mubr.bf16.mxu0 0
  %1685 = vmatmul.mubr.bf16.gmra.mrb[0].mxu0 %v920
  %v1686 = vpop.f32.mrb[0].mxu0
  %v1687 = vadd.f32 %v1394, %v1686
  %v1688 = vpop.f32.mrb[0].mxu0
  %v1689 = vpop.f32.mrb[0].mxu0
  %v1690 = vadd.f32 %v1397, %v1689
  %v1691 = vpop.f32.mrb[0].mxu0
  %1692 = vmatprep.mubr.bf16.mxu0 0
  %1693 = vmatmul.mubr.bf16.gmra.mrb[0].mxu0 %v923
  %v1694 = vpop.f32.mrb[0].mxu0
  %v1695 = vadd.f32 %v1402, %v1694
  %v1696 = vpop.f32.mrb[0].mxu0
  %v1697 = vpop.f32.mrb[0].mxu0
  %v1698 = vadd.f32 %v1405, %v1697
  %v1699 = vpop.f32.mrb[0].mxu0
  %1700 = vmatprep.mubr.bf16.mxu0 0
  %1701 = vmatmul.mubr.bf16.gmra.mrb[0].mxu0 %v926
  %v1702 = vpop.f32.mrb[0].mxu0
  %v1703 = vadd.f32 %v1410, %v1702
  %v1704 = vpop.f32.mrb[0].mxu0
  %v1705 = vpop.f32.mrb[0].mxu0
  %v1706 = vadd.f32 %v1413, %v1705
  %v1707 = vpop.f32.mrb[0].mxu0
  %1708 = vmatprep.mubr.bf16.mxu0 0
  %1709 = vmatmul.mubr.bf16.gmra.mrb[0].mxu0 %v929
  %v1710 = vpop.f32.mrb[0].mxu0
  %v1711 = vadd.f32 %v1418, %v1710
  %v1712 = vpop.f32.mrb[0].mxu0
  %v1713 = vpop.f32.mrb[0].mxu0
  %v1714 = vadd.f32 %v1421, %v1713
  %v1715 = vpop.f32.mrb[0].mxu0
  %1716 = vmatprep.mubr.bf16.mxu0 0
  %1717 = vmatmul.mubr.bf16.gmra.mrb[0].mxu0 %v932
  %v1718 = vpop.f32.mrb[0].mxu0
  %v1719 = vadd.f32 %v1426, %v1718
  %v1720 = vpop.f32.mrb[0].mxu0
  %v1721 = vpop.f32.mrb[0].mxu0
  %v1722 = vadd.f32 %v1429, %v1721
  %v1723 = vpop.f32.mrb[0].mxu0
  %1724 = vmatprep.mubr.bf16.mxu0 0
  %1725 = vmatmul.mubr.bf16.gmra.mrb[0].mxu0 %v935
  %v1726 = vpop.f32.mrb[0].mxu0
  %v1727 = vadd.f32 %v1434, %v1726
  %v1728 = vpop.f32.mrb[0].mxu0
  %v1729 = vpop.f32.mrb[0].mxu0
  %v1730 = vadd.f32 %v1437, %v1729
  %v1731 = vpop.f32.mrb[0].mxu0
  %1732 = vmatprep.mubr.bf16.mxu0 0
  %1733 = vmatmul.mubr.bf16.gmra.mrb[0].mxu0 %v938
  %v1734 = vpop.f32.mrb[0].mxu0
  %v1735 = vadd.f32 %v1442, %v1734
  %v1736 = vpop.f32.mrb[0].mxu0
  %v1737 = vpop.f32.mrb[0].mxu0
  %v1738 = vadd.f32 %v1445, %v1737
  %v1739 = vpop.f32.mrb[0].mxu0
  %1740 = vmatprep.mubr.bf16.mxu0 0
  %1741 = vmatmul.mubr.bf16.gmra.mrb[0].mxu0 %v941
  %v1742 = vpop.f32.mrb[0].mxu0
  %v1743 = vadd.f32 %v1450, %v1742
  %v1744 = vpop.f32.mrb[0].mxu0
  %v1745 = vpop.f32.mrb[0].mxu0
  %v1746 = vadd.f32 %v1453, %v1745
  %v1747 = vpop.f32.mrb[0].mxu0
  %1748 = vmatprep.mubr.bf16.mxu0 0
  %1749 = vmatmul.mubr.bf16.gmra.mrb[0].mxu0 %v944
  %v1750 = vpop.f32.mrb[0].mxu0
  %v1751 = vadd.f32 %v1458, %v1750
  %v1752 = vpop.f32.mrb[0].mxu0
  %v1753 = vpop.f32.mrb[0].mxu0
  %v1754 = vadd.f32 %v1461, %v1753
  %v1755 = vpop.f32.mrb[0].mxu0
  %1756 = vmatprep.mubr.bf16.mxu0 0
  %1757 = vmatmul.mubr.bf16.gmra.mrb[0].mxu0 %v947
  %v1758 = vpop.f32.mrb[0].mxu0
  %v1759 = vadd.f32 %v1466, %v1758
  %v1760 = vpop.f32.mrb[0].mxu0
  %v1761 = vpop.f32.mrb[0].mxu0
  %v1762 = vadd.f32 %v1469, %v1761
  %v1763 = vpop.f32.mrb[0].mxu0
  %1764 = vmatprep.mubr.bf16.mxu0 0
  %1765 = vmatmul.mubr.bf16.gmra.mrb[0].mxu0 %v950
  %v1766 = vpop.f32.mrb[0].mxu0
  %v1767 = vadd.f32 %v1474, %v1766
  %v1768 = vpop.f32.mrb[0].mxu0
  %v1769 = vpop.f32.mrb[0].mxu0
  %v1770 = vadd.f32 %v1477, %v1769
  %v1771 = vpop.f32.mrb[0].mxu0
  %1772 = vmatprep.mubr.bf16.mxu0 0
  %1773 = vmatmul.mubr.bf16.gmra.mrb[0].mxu0 %v953
  %v1774 = vpop.f32.mrb[0].mxu0
  %v1775 = vadd.f32 %v1482, %v1774
  %v1776 = vpop.f32.mrb[0].mxu0
  %v1777 = vpop.f32.mrb[0].mxu0
  %v1778 = vadd.f32 %v1485, %v1777
  %v1779 = vpop.f32.mrb[0].mxu0
  %1780 = vmatprep.mubr.bf16.mxu0 0
  %1781 = vmatmul.mubr.bf16.gmra.mrb[0].mxu0 %v956
  %v1782 = vpop.f32.mrb[0].mxu0
  %v1783 = vadd.f32 %v1490, %v1782
  %v1784 = vpop.f32.mrb[0].mxu0
  %v1785 = vpop.f32.mrb[0].mxu0
  %v1786 = vadd.f32 %v1493, %v1785
  %v1787 = vpop.f32.mrb[0].mxu0
  %1788 = vmatprep.mubr.bf16.mxu0 0
  %1789 = vmatmul.mubr.bf16.gmra.mrb[0].mxu0 %v959
  %v1790 = vpop.f32.mrb[0].mxu0
  %v1791 = vadd.f32 %v1498, %v1790
  %v1792 = vpop.f32.mrb[0].mxu0
  %v1793 = vpop.f32.mrb[0].mxu0
  %v1794 = vadd.f32 %v1501, %v1793
  %v1795 = vpop.f32.mrb[0].mxu0
  %1796 = vmatprep.mubr.bf16.mxu0 0
  %1797 = vmatmul.mubr.bf16.gmra.mrb[0].mxu0 %v962
  %v1798 = vpop.f32.mrb[0].mxu0
  %v1799 = vadd.f32 %v1506, %v1798
  %v1800 = vpop.f32.mrb[0].mxu0
  %v1801 = vpop.f32.mrb[0].mxu0
  %v1802 = vadd.f32 %v1509, %v1801
  %v1803 = vpop.f32.mrb[0].mxu0
  %1804 = vmatprep.mubr.bf16.mxu0 0
  %1805 = vmatmul.mubr.bf16.gmra.mrb[0].mxu0 %v965
  %v1806 = vpop.f32.mrb[0].mxu0
  %v1807 = vadd.f32 %v1514, %v1806
  %v1808 = vpop.f32.mrb[0].mxu0
  %v1809 = vpop.f32.mrb[0].mxu0
  %v1810 = vadd.f32 %v1517, %v1809
  %v1811 = vpop.f32.mrb[0].mxu0
  %1812 = vmatprep.mubr.bf16.mxu0 0
  %1813 = vmatmul.mubr.bf16.gmra.mrb[0].mxu0 %v968
  %v1814 = vpop.f32.mrb[0].mxu0
  %v1815 = vadd.f32 %v1522, %v1814
  %v1816 = vpop.f32.mrb[0].mxu0
  %v1817 = vpop.f32.mrb[0].mxu0
  %v1818 = vadd.f32 %v1525, %v1817
  %v1819 = vpop.f32.mrb[0].mxu0
  %1820 = vmatprep.mubr.bf16.mxu0 0
  %1821 = vmatmul.mubr.bf16.gmra.mrb[0].mxu0 %v971
  %v1822 = vpop.f32.mrb[0].mxu0
  %v1823 = vadd.f32 %v1530, %v1822
  %v1824 = vpop.f32.mrb[0].mxu0
  %v1825 = vpop.f32.mrb[0].mxu0
  %v1826 = vadd.f32 %v1533, %v1825
  %v1827 = vpop.f32.mrb[0].mxu0
  %1828 = vdwg.mxu0
  %s1829 = scalar_lea.vmem %s0, 16
  %v1830 = vld [vmem:[%s1829] sm:$0xf]
  %v1831 = vld [vmem:[%s1829 + $0x4] sm:$0xf]
  %v1832 = vld [vmem:[%s1829 + $0x8] sm:$0xf]
  %v1833 = vld [vmem:[%s1829 + $0xc] sm:$0xf]
  %v1834 = vld [vmem:[%s1829 + $0x10] sm:$0xf]
  %v1835 = vld [vmem:[%s1829 + $0x14] sm:$0xf]
  %v1836 = vld [vmem:[%s1829 + $0x18] sm:$0xf]
  %v1837 = vld [vmem:[%s1829 + $0x1c] sm:$0xf]
  %v1838 = vld [vmem:[%s1829 + $0x20] sm:$0xf]
  %v1839 = vld [vmem:[%s1829 + $0x24] sm:$0xf]
  %v1840 = vld [vmem:[%s1829 + $0x28] sm:$0xf]
  %v1841 = vld [vmem:[%s1829 + $0x2c] sm:$0xf]
  %v1842 = vld [vmem:[%s1829 + $0x30] sm:$0xf]
  %v1843 = vld [vmem:[%s1829 + $0x34] sm:$0xf]
  %v1844 = vld [vmem:[%s1829 + $0x38] sm:$0xf]
  %v1845 = vld [vmem:[%s1829 + $0x3c] sm:$0xf]
  %v1846 = vld [vmem:[%s1829 + $0x40] sm:$0xf]
  %v1847 = vld [vmem:[%s1829 + $0x44] sm:$0xf]
  %v1848 = vld [vmem:[%s1829 + $0x48] sm:$0xf]
  %v1849 = vld [vmem:[%s1829 + $0x4c] sm:$0xf]
  %v1850 = vld [vmem:[%s1829 + $0x50] sm:$0xf]
  %v1851 = vld [vmem:[%s1829 + $0x54] sm:$0xf]
  %v1852 = vld [vmem:[%s1829 + $0x58] sm:$0xf]
  %v1853 = vld [vmem:[%s1829 + $0x5c] sm:$0xf]
  %v1854 = vld [vmem:[%s1829 + $0x60] sm:$0xf]
  %v1855 = vld [vmem:[%s1829 + $0x64] sm:$0xf]
  %v1856 = vld [vmem:[%s1829 + $0x68] sm:$0xf]
  %v1857 = vld [vmem:[%s1829 + $0x6c] sm:$0xf]
  %v1858 = vld [vmem:[%s1829 + $0x70] sm:$0xf]
  %v1859 = vld [vmem:[%s1829 + $0x74] sm:$0xf]
  %v1860 = vld [vmem:[%s1829 + $0x78] sm:$0xf]
  %v1861 = vld [vmem:[%s1829 + $0x7c] sm:$0xf]
  %v1862 = vld [vmem:[%s1829 + $0x80] sm:$0xf]
  %v1863 = vld [vmem:[%s1829 + $0x84] sm:$0xf]
  %v1864 = vld [vmem:[%s1829 + $0x88] sm:$0xf]
  %v1865 = vld [vmem:[%s1829 + $0x8c] sm:$0xf]
  %v1866 = vld [vmem:[%s1829 + $0x90] sm:$0xf]
  %v1867 = vld [vmem:[%s1829 + $0x94] sm:$0xf]
  %v1868 = vld [vmem:[%s1829 + $0x98] sm:$0xf]
  %v1869 = vld [vmem:[%s1829 + $0x9c] sm:$0xf]
  %v1870 = vld [vmem:[%s1829 + $0xa0] sm:$0xf]
  %v1871 = vld [vmem:[%s1829 + $0xa4] sm:$0xf]
  %v1872 = vld [vmem:[%s1829 + $0xa8] sm:$0xf]
  %v1873 = vld [vmem:[%s1829 + $0xac] sm:$0xf]
  %v1874 = vld [vmem:[%s1829 + $0xb0] sm:$0xf]
  %v1875 = vld [vmem:[%s1829 + $0xb4] sm:$0xf]
  %v1876 = vld [vmem:[%s1829 + $0xb8] sm:$0xf]
  %v1877 = vld [vmem:[%s1829 + $0xbc] sm:$0xf]
  %v1878 = vld [vmem:[%s1829 + $0xc0] sm:$0xf]
  %v1879 = vld [vmem:[%s1829 + $0xc4] sm:$0xf]
  %v1880 = vld [vmem:[%s1829 + $0xc8] sm:$0xf]
  %v1881 = vld [vmem:[%s1829 + $0xcc] sm:$0xf]
  %v1882 = vld [vmem:[%s1829 + $0xd0] sm:$0xf]
  %v1883 = vld [vmem:[%s1829 + $0xd4] sm:$0xf]
  %v1884 = vld [vmem:[%s1829 + $0xd8] sm:$0xf]
  %v1885 = vld [vmem:[%s1829 + $0xdc] sm:$0xf]
  %s1886 = scalar_lea.vmem %s1, 96
  %v1887 = vld [vmem:[%s1886] sm:$0xf]
  %v1888 = vld [vmem:[%s1886 + $0x4] sm:$0xf]
  %v1889 = vld [vmem:[%s1886 + $0x8] sm:$0xf]
  %v1890 = vld [vmem:[%s1886 + $0xc] sm:$0xf]
  %v1891 = vld [vmem:[%s1886 + $0x10] sm:$0xf]
  %v1892 = vld [vmem:[%s1886 + $0x14] sm:$0xf]
  %v1893 = vld [vmem:[%s1886 + $0x18] sm:$0xf]
  %v1894 = vld [vmem:[%s1886 + $0x1c] sm:$0xf]
  %v1895 = vld [vmem:[%s1886 + $0x20] sm:$0xf]
  %v1896 = vld [vmem:[%s1886 + $0x24] sm:$0xf]
  %v1897 = vld [vmem:[%s1886 + $0x28] sm:$0xf]
  %v1898 = vld [vmem:[%s1886 + $0x2c] sm:$0xf]
  %v1955 = vunpack.c.l.b16 %v1830
  %v1956 = vunpack.c.l.b16 %v1831
  %v1957 = vunpack.c.l.b16 %v1832
  %v1958 = vunpack.c.l.b16 %v1833
  %v1959 = vunpack.c.l.b16 %v1834
  %v1960 = vunpack.c.l.b16 %v1835
  %v1961 = vunpack.c.l.b16 %v1836
  %v1962 = vunpack.c.l.b16 %v1837
  %v1963 = vunpack.c.l.b16 %v1838
  %v1964 = vunpack.c.l.b16 %v1839
  %v1965 = vunpack.c.l.b16 %v1840
  %v1966 = vunpack.c.l.b16 %v1841
  %v1967 = vunpack.c.l.b16 %v1842
  %v1968 = vunpack.c.l.b16 %v1843
  %v1969 = vunpack.c.l.b16 %v1844
  %v1970 = vunpack.c.l.b16 %v1845
  %v1971 = vunpack.c.l.b16 %v1846
  %v1972 = vunpack.c.l.b16 %v1847
  %v1973 = vunpack.c.l.b16 %v1848
  %v1974 = vunpack.c.l.b16 %v1849
  %v1975 = vunpack.c.l.b16 %v1850
  %v1976 = vunpack.c.l.b16 %v1851
  %v1977 = vunpack.c.l.b16 %v1852
  %v1978 = vunpack.c.l.b16 %v1853
  %v1979 = vunpack.c.l.b16 %v1854
  %v1980 = vunpack.c.l.b16 %v1855
  %v1981 = vunpack.c.l.b16 %v1856
  %v1982 = vunpack.c.l.b16 %v1857
  %v1983 = vunpack.c.l.b16 %v1858
  %v1984 = vunpack.c.l.b16 %v1859
  %v1985 = vunpack.c.l.b16 %v1860
  %v1986 = vunpack.c.l.b16 %v1861
  %v1987 = vunpack.c.l.b16 %v1862
  %v1988 = vunpack.c.l.b16 %v1863
  %v1989 = vunpack.c.l.b16 %v1864
  %v1990 = vunpack.c.l.b16 %v1865
  %v1991 = vunpack.c.l.b16 %v1866
  %v1992 = vunpack.c.l.b16 %v1867
  %v1993 = vunpack.c.l.b16 %v1868
  %v1994 = vunpack.c.l.b16 %v1869
  %v1995 = vunpack.c.l.b16 %v1870
  %v1996 = vunpack.c.l.b16 %v1871
  %v1997 = vunpack.c.l.b16 %v1872
  %v1998 = vunpack.c.l.b16 %v1873
  %v1999 = vunpack.c.l.b16 %v1874
  %v2000 = vunpack.c.l.b16 %v1875
  %v2001 = vunpack.c.l.b16 %v1876
  %v2002 = vunpack.c.l.b16 %v1877
  %v2003 = vunpack.c.l.b16 %v1878
  %v2004 = vunpack.c.l.b16 %v1879
  %v2005 = vunpack.c.l.b16 %v1880
  %v2006 = vunpack.c.l.b16 %v1881
  %v2007 = vunpack.c.l.b16 %v1882
  %v2008 = vunpack.c.l.b16 %v1883
  %v2009 = vunpack.c.l.b16 %v1884
  %v2010 = vunpack.c.l.b16 %v1885
  %v2011 = vpack.c.b16 %v1956, %v1955
  %v2012 = vpack.c.b16 %v1958, %v1957
  %v2013 = vpack.c.b16 %v1960, %v1959
  %v2014 = vpack.c.b16 %v1962, %v1961
  %v2015 = vpack.c.b16 %v1964, %v1963
  %v2016 = vpack.c.b16 %v1966, %v1965
  %v2017 = vpack.c.b16 %v1968, %v1967
  %v2018 = vpack.c.b16 %v1970, %v1969
  %v2019 = vpack.c.b16 %v1972, %v1971
  %v2020 = vpack.c.b16 %v1974, %v1973
  %v2021 = vpack.c.b16 %v1976, %v1975
  %v2022 = vpack.c.b16 %v1978, %v1977
  %v2023 = vpack.c.b16 %v1980, %v1979
  %v2024 = vpack.c.b16 %v1982, %v1981
  %v2025 = vpack.c.b16 %v1984, %v1983
  %v2026 = vpack.c.b16 %v1986, %v1985
  %v2027 = vpack.c.b16 %v1988, %v1987
  %v2028 = vpack.c.b16 %v1990, %v1989
  %v2029 = vpack.c.b16 %v1992, %v1991
  %v2030 = vpack.c.b16 %v1994, %v1993
  %v2031 = vpack.c.b16 %v1996, %v1995
  %v2032 = vpack.c.b16 %v1998, %v1997
  %v2033 = vpack.c.b16 %v2000, %v1999
  %v2034 = vpack.c.b16 %v2002, %v2001
  %v2035 = vpack.c.b16 %v2004, %v2003
  %v2036 = vpack.c.b16 %v2006, %v2005
  %v2037 = vpack.c.b16 %v2008, %v2007
  %v2038 = vpack.c.b16 %v2010, %v2009
  %v2051 = vunpack.c.l.b16 %v1887
  %v2052 = vunpack.c.l.b16 %v1888
  %v2053 = vunpack.c.l.b16 %v1889
  %v2054 = vunpack.c.l.b16 %v1890
  %v2055 = vunpack.c.l.b16 %v1891
  %v2056 = vunpack.c.l.b16 %v1892
  %v2057 = vunpack.c.l.b16 %v1893
  %v2058 = vunpack.c.l.b16 %v1894
  %v2059 = vunpack.c.l.b16 %v1895
  %v2060 = vunpack.c.l.b16 %v1896
  %v2061 = vunpack.c.l.b16 %v1897
  %v2062 = vunpack.c.l.b16 %v1898
  %v2063 = vpack.c.b16 %v2052, %v2051
  %v2064 = vpack.c.b16 %v2054, %v2053
  %v2065 = vpack.c.b16 %v2056, %v2055
  %v2066 = vpack.c.b16 %v2058, %v2057
  %v2067 = vpack.c.b16 %v2060, %v2059
  %v2068 = vpack.c.b16 %v2062, %v2061
  %v2076 = vsel %vm371, %v2011, 0
  %v2079 = vsel %vm371, %v2012, 0
  %v2082 = vsel %vm371, %v2013, 0
  %v2085 = vsel %vm371, %v2014, 0
  %v2088 = vsel %vm371, %v2015, 0
  %v2091 = vsel %vm371, %v2016, 0
  %v2094 = vsel %vm371, %v2017, 0
  %v2097 = vsel %vm371, %v2018, 0
  %v2100 = vsel %vm371, %v2019, 0
  %v2103 = vsel %vm371, %v2020, 0
  %v2106 = vsel %vm371, %v2021, 0
  %v2109 = vsel %vm371, %v2022, 0
  %v2112 = vsel %vm371, %v2023, 0
  %v2115 = vsel %vm371, %v2024, 0
  %v2118 = vsel %vm371, %v2025, 0
  %v2121 = vsel %vm371, %v2026, 0
  %v2124 = vsel %vm371, %v2027, 0
  %v2127 = vsel %vm371, %v2028, 0
  %v2130 = vsel %vm371, %v2029, 0
  %v2133 = vsel %vm371, %v2030, 0
  %v2136 = vsel %vm371, %v2031, 0
  %v2139 = vsel %vm371, %v2032, 0
  %v2142 = vsel %vm371, %v2033, 0
  %v2145 = vsel %vm371, %v2034, 0
  %v2148 = vsel %vm371, %v2035, 0
  %v2151 = vsel %vm371, %v2036, 0
  %v2154 = vsel %vm371, %v2037, 0
  %v2157 = vsel %vm371, %v2038, 0
  %2159 = vmatprep.subr.bf16.mxu0 0
  %2160 = vmatpush1.bf16.msra.mxu0 %v2063
  %2161 = vmatprep.subr.bf16.mxu0 0
  %2162 = vmatpush1.bf16.msra.mxu0 %v2064
  %2163 = vmatprep.subr.bf16.mxu0 0
  %2164 = vmatpush1.bf16.msra.mxu0 %v2065
  %2165 = vmatprep.subr.bf16.mxu0 0
  %2166 = vmatpush1.bf16.msra.mxu0 %v2066
  %2167 = vmatprep.subr.bf16.mxu0 0
  %2168 = vmatpush1.bf16.msra.mxu0 %v2067
  %2169 = vmatprep.subr.bf16.mxu0 0
  %2170 = vmatpush1.bf16.msra.mxu0 %v2068
  %2171 = vmatprep.subr.bf16.mxu0 0
  %2172 = vmatpush1.bf16.msra.mxu0 0
  %2173 = vmatprep.subr.bf16.mxu0 0
  %2174 = vmatpush1.bf16.msra.mxu0 0
  %2175 = vmatprep.subr.bf16.mxu0 0
  %2176 = vmatpush1.bf16.msra.mxu0 0
  %2177 = vmatprep.subr.bf16.mxu0 0
  %2178 = vmatpush1.bf16.msra.mxu0 0
  %2179 = vmatprep.subr.bf16.mxu0 0
  %2180 = vmatpush1.bf16.msra.mxu0 0
  %2181 = vmatprep.subr.bf16.mxu0 0
  %2182 = vmatpush1.bf16.msra.mxu0 0
  %2183 = vmatprep.subr.bf16.mxu0 0
  %2184 = vmatpush1.bf16.msra.mxu0 0
  %2185 = vmatprep.subr.bf16.mxu0 0
  %2186 = vmatpush1.bf16.msra.mxu0 0
  %2187 = vmatprep.subr.bf16.mxu0 0
  %2188 = vmatpush1.bf16.msra.mxu0 0
  %2189 = vmatprep.subr.bf16.mxu0 0
  %2190 = vmatpush1.bf16.msra.mxu0 0
  %2191 = vmatprep.mubr.bf16.mxu0 0
  %2192 = vmatmul.mubr.bf16.gmra.mrb[0].mxu0 %v2076
  %v2193 = vpop.f32.mrb[0].mxu0
  %v2194 = vadd.f32 0.0, %v2193
  %v2195 = vpop.f32.mrb[0].mxu0
  %v2196 = vpop.f32.mrb[0].mxu0
  %v2197 = vadd.f32 0.0, %v2196
  %v2198 = vpop.f32.mrb[0].mxu0
  %2199 = vmatprep.mubr.bf16.mxu0 0
  %2200 = vmatmul.mubr.bf16.gmra.mrb[0].mxu0 %v2079
  %v2201 = vpop.f32.mrb[0].mxu0
  %v2202 = vadd.f32 0.0, %v2201
  %v2203 = vpop.f32.mrb[0].mxu0
  %v2204 = vpop.f32.mrb[0].mxu0
  %v2205 = vadd.f32 0.0, %v2204
  %v2206 = vpop.f32.mrb[0].mxu0
  %2207 = vmatprep.mubr.bf16.mxu0 0
  %2208 = vmatmul.mubr.bf16.gmra.mrb[0].mxu0 %v2082
  %v2209 = vpop.f32.mrb[0].mxu0
  %v2210 = vadd.f32 0.0, %v2209
  %v2211 = vpop.f32.mrb[0].mxu0
  %v2212 = vpop.f32.mrb[0].mxu0
  %v2213 = vadd.f32 0.0, %v2212
  %v2214 = vpop.f32.mrb[0].mxu0
  %2215 = vmatprep.mubr.bf16.mxu0 0
  %2216 = vmatmul.mubr.bf16.gmra.mrb[0].mxu0 %v2085
  %v2217 = vpop.f32.mrb[0].mxu0
  %v2218 = vadd.f32 0.0, %v2217
  %v2219 = vpop.f32.mrb[0].mxu0
  %v2220 = vpop.f32.mrb[0].mxu0
  %v2221 = vadd.f32 0.0, %v2220
  %v2222 = vpop.f32.mrb[0].mxu0
  %2223 = vmatprep.mubr.bf16.mxu0 0
  %2224 = vmatmul.mubr.bf16.gmra.mrb[0].mxu0 %v2088
  %v2225 = vpop.f32.mrb[0].mxu0
  %v2226 = vadd.f32 0.0, %v2225
  %v2227 = vpop.f32.mrb[0].mxu0
  %v2228 = vpop.f32.mrb[0].mxu0
  %v2229 = vadd.f32 0.0, %v2228
  %v2230 = vpop.f32.mrb[0].mxu0
  %2231 = vmatprep.mubr.bf16.mxu0 0
  %2232 = vmatmul.mubr.bf16.gmra.mrb[0].mxu0 %v2091
  %v2233 = vpop.f32.mrb[0].mxu0
  %v2234 = vadd.f32 0.0, %v2233
  %v2235 = vpop.f32.mrb[0].mxu0
  %v2236 = vpop.f32.mrb[0].mxu0
  %v2237 = vadd.f32 0.0, %v2236
  %v2238 = vpop.f32.mrb[0].mxu0
  %2239 = vmatprep.mubr.bf16.mxu0 0
  %2240 = vmatmul.mubr.bf16.gmra.mrb[0].mxu0 %v2094
  %v2241 = vpop.f32.mrb[0].mxu0
  %v2242 = vadd.f32 0.0, %v2241
  %v2243 = vpop.f32.mrb[0].mxu0
  %v2244 = vpop.f32.mrb[0].mxu0
  %v2245 = vadd.f32 0.0, %v2244
  %v2246 = vpop.f32.mrb[0].mxu0
  %2247 = vmatprep.mubr.bf16.mxu0 0
  %2248 = vmatmul.mubr.bf16.gmra.mrb[0].mxu0 %v2097
  %v2249 = vpop.f32.mrb[0].mxu0
  %v2250 = vadd.f32 0.0, %v2249
  %v2251 = vpop.f32.mrb[0].mxu0
  %v2252 = vpop.f32.mrb[0].mxu0
  %v2253 = vadd.f32 0.0, %v2252
  %v2254 = vpop.f32.mrb[0].mxu0
  %2255 = vmatprep.mubr.bf16.mxu0 0
  %2256 = vmatmul.mubr.bf16.gmra.mrb[0].mxu0 %v2100
  %v2257 = vpop.f32.mrb[0].mxu0
  %v2258 = vadd.f32 0.0, %v2257
  %v2259 = vpop.f32.mrb[0].mxu0
  %v2260 = vpop.f32.mrb[0].mxu0
  %v2261 = vadd.f32 0.0, %v2260
  %v2262 = vpop.f32.mrb[0].mxu0
  %2263 = vmatprep.mubr.bf16.mxu0 0
  %2264 = vmatmul.mubr.bf16.gmra.mrb[0].mxu0 %v2103
  %v2265 = vpop.f32.mrb[0].mxu0
  %v2266 = vadd.f32 0.0, %v2265
  %v2267 = vpop.f32.mrb[0].mxu0
  %v2268 = vpop.f32.mrb[0].mxu0
  %v2269 = vadd.f32 0.0, %v2268
  %v2270 = vpop.f32.mrb[0].mxu0
  %2271 = vmatprep.mubr.bf16.mxu0 0
  %2272 = vmatmul.mubr.bf16.gmra.mrb[0].mxu0 %v2106
  %v2273 = vpop.f32.mrb[0].mxu0
  %v2274 = vadd.f32 0.0, %v2273
  %v2275 = vpop.f32.mrb[0].mxu0
  %v2276 = vpop.f32.mrb[0].mxu0
  %v2277 = vadd.f32 0.0, %v2276
  %v2278 = vpop.f32.mrb[0].mxu0
  %2279 = vmatprep.mubr.bf16.mxu0 0
  %2280 = vmatmul.mubr.bf16.gmra.mrb[0].mxu0 %v2109
  %v2281 = vpop.f32.mrb[0].mxu0
  %v2282 = vadd.f32 0.0, %v2281
  %v2283 = vpop.f32.mrb[0].mxu0
  %v2284 = vpop.f32.mrb[0].mxu0
  %v2285 = vadd.f32 0.0, %v2284
  %v2286 = vpop.f32.mrb[0].mxu0
  %2287 = vmatprep.mubr.bf16.mxu0 0
  %2288 = vmatmul.mubr.bf16.gmra.mrb[0].mxu0 %v2112
  %v2289 = vpop.f32.mrb[0].mxu0
  %v2290 = vadd.f32 0.0, %v2289
  %v2291 = vpop.f32.mrb[0].mxu0
  %v2292 = vpop.f32.mrb[0].mxu0
  %v2293 = vadd.f32 0.0, %v2292
  %v2294 = vpop.f32.mrb[0].mxu0
  %2295 = vmatprep.mubr.bf16.mxu0 0
  %2296 = vmatmul.mubr.bf16.gmra.mrb[0].mxu0 %v2115
  %v2297 = vpop.f32.mrb[0].mxu0
  %v2298 = vadd.f32 0.0, %v2297
  %v2299 = vpop.f32.mrb[0].mxu0
  %v2300 = vpop.f32.mrb[0].mxu0
  %v2301 = vadd.f32 0.0, %v2300
  %v2302 = vpop.f32.mrb[0].mxu0
  %2303 = vmatprep.mubr.bf16.mxu0 0
  %2304 = vmatmul.mubr.bf16.gmra.mrb[0].mxu0 %v2118
  %v2305 = vpop.f32.mrb[0].mxu0
  %v2306 = vadd.f32 0.0, %v2305
  %v2307 = vpop.f32.mrb[0].mxu0
  %v2308 = vpop.f32.mrb[0].mxu0
  %v2309 = vadd.f32 0.0, %v2308
  %v2310 = vpop.f32.mrb[0].mxu0
  %2311 = vmatprep.mubr.bf16.mxu0 0
  %2312 = vmatmul.mubr.bf16.gmra.mrb[0].mxu0 %v2121
  %v2313 = vpop.f32.mrb[0].mxu0
  %v2314 = vadd.f32 0.0, %v2313
  %v2315 = vpop.f32.mrb[0].mxu0
  %v2316 = vpop.f32.mrb[0].mxu0
  %v2317 = vadd.f32 0.0, %v2316
  %v2318 = vpop.f32.mrb[0].mxu0
  %2319 = vmatprep.mubr.bf16.mxu0 0
  %2320 = vmatmul.mubr.bf16.gmra.mrb[0].mxu0 %v2124
  %v2321 = vpop.f32.mrb[0].mxu0
  %v2322 = vadd.f32 0.0, %v2321
  %v2323 = vpop.f32.mrb[0].mxu0
  %v2324 = vpop.f32.mrb[0].mxu0
  %v2325 = vadd.f32 0.0, %v2324
  %v2326 = vpop.f32.mrb[0].mxu0
  %2327 = vmatprep.mubr.bf16.mxu0 0
  %2328 = vmatmul.mubr.bf16.gmra.mrb[0].mxu0 %v2127
  %v2329 = vpop.f32.mrb[0].mxu0
  %v2330 = vadd.f32 0.0, %v2329
  %v2331 = vpop.f32.mrb[0].mxu0
  %v2332 = vpop.f32.mrb[0].mxu0
  %v2333 = vadd.f32 0.0, %v2332
  %v2334 = vpop.f32.mrb[0].mxu0
  %2335 = vmatprep.mubr.bf16.mxu0 0
  %2336 = vmatmul.mubr.bf16.gmra.mrb[0].mxu0 %v2130
  %v2337 = vpop.f32.mrb[0].mxu0
  %v2338 = vadd.f32 0.0, %v2337
  %v2339 = vpop.f32.mrb[0].mxu0
  %v2340 = vpop.f32.mrb[0].mxu0
  %v2341 = vadd.f32 0.0, %v2340
  %v2342 = vpop.f32.mrb[0].mxu0
  %2343 = vmatprep.mubr.bf16.mxu0 0
  %2344 = vmatmul.mubr.bf16.gmra.mrb[0].mxu0 %v2133
  %v2345 = vpop.f32.mrb[0].mxu0
  %v2346 = vadd.f32 0.0, %v2345
  %v2347 = vpop.f32.mrb[0].mxu0
  %v2348 = vpop.f32.mrb[0].mxu0
  %v2349 = vadd.f32 0.0, %v2348
  %v2350 = vpop.f32.mrb[0].mxu0
  %2351 = vmatprep.mubr.bf16.mxu0 0
  %2352 = vmatmul.mubr.bf16.gmra.mrb[0].mxu0 %v2136
  %v2353 = vpop.f32.mrb[0].mxu0
  %v2354 = vadd.f32 0.0, %v2353
  %v2355 = vpop.f32.mrb[0].mxu0
  %v2356 = vpop.f32.mrb[0].mxu0
  %v2357 = vadd.f32 0.0, %v2356
  %v2358 = vpop.f32.mrb[0].mxu0
  %2359 = vmatprep.mubr.bf16.mxu0 0
  %2360 = vmatmul.mubr.bf16.gmra.mrb[0].mxu0 %v2139
  %v2361 = vpop.f32.mrb[0].mxu0
  %v2362 = vadd.f32 0.0, %v2361
  %v2363 = vpop.f32.mrb[0].mxu0
  %v2364 = vpop.f32.mrb[0].mxu0
  %v2365 = vadd.f32 0.0, %v2364
  %v2366 = vpop.f32.mrb[0].mxu0
  %2367 = vmatprep.mubr.bf16.mxu0 0
  %2368 = vmatmul.mubr.bf16.gmra.mrb[0].mxu0 %v2142
  %v2369 = vpop.f32.mrb[0].mxu0
  %v2370 = vadd.f32 0.0, %v2369
  %v2371 = vpop.f32.mrb[0].mxu0
  %v2372 = vpop.f32.mrb[0].mxu0
  %v2373 = vadd.f32 0.0, %v2372
  %v2374 = vpop.f32.mrb[0].mxu0
  %2375 = vmatprep.mubr.bf16.mxu0 0
  %2376 = vmatmul.mubr.bf16.gmra.mrb[0].mxu0 %v2145
  %v2377 = vpop.f32.mrb[0].mxu0
  %v2378 = vadd.f32 0.0, %v2377
  %v2379 = vpop.f32.mrb[0].mxu0
  %v2380 = vpop.f32.mrb[0].mxu0
  %v2381 = vadd.f32 0.0, %v2380
  %v2382 = vpop.f32.mrb[0].mxu0
  %2383 = vmatprep.mubr.bf16.mxu0 0
  %2384 = vmatmul.mubr.bf16.gmra.mrb[0].mxu0 %v2148
  %v2385 = vpop.f32.mrb[0].mxu0
  %v2386 = vadd.f32 0.0, %v2385
  %v2387 = vpop.f32.mrb[0].mxu0
  %v2388 = vpop.f32.mrb[0].mxu0
  %v2389 = vadd.f32 0.0, %v2388
  %v2390 = vpop.f32.mrb[0].mxu0
  %2391 = vmatprep.mubr.bf16.mxu0 0
  %2392 = vmatmul.mubr.bf16.gmra.mrb[0].mxu0 %v2151
  %v2393 = vpop.f32.mrb[0].mxu0
  %v2394 = vadd.f32 0.0, %v2393
  %v2395 = vpop.f32.mrb[0].mxu0
  %v2396 = vpop.f32.mrb[0].mxu0
  %v2397 = vadd.f32 0.0, %v2396
  %v2398 = vpop.f32.mrb[0].mxu0
  %2399 = vmatprep.mubr.bf16.mxu0 0
  %2400 = vmatmul.mubr.bf16.gmra.mrb[0].mxu0 %v2154
  %v2401 = vpop.f32.mrb[0].mxu0
  %v2402 = vadd.f32 0.0, %v2401
  %v2403 = vpop.f32.mrb[0].mxu0
  %v2404 = vpop.f32.mrb[0].mxu0
  %v2405 = vadd.f32 0.0, %v2404
  %v2406 = vpop.f32.mrb[0].mxu0
  %2407 = vmatprep.mubr.bf16.mxu0 0
  %2408 = vmatmul.mubr.bf16.gmra.mrb[0].mxu0 %v2157
  %v2409 = vpop.f32.mrb[0].mxu0
  %v2410 = vadd.f32 0.0, %v2409
  %v2411 = vpop.f32.mrb[0].mxu0
  %v2412 = vpop.f32.mrb[0].mxu0
  %v2413 = vadd.f32 0.0, %v2412
  %v2414 = vpop.f32.mrb[0].mxu0
  %2415 = vdwg.mxu0
  %v2416 = vadd.f32 %v1008, %v2194
  %v2417 = vadd.f32 %v1011, %v2197
  %v2418 = vadd.f32 %v1016, %v2202
  %v2419 = vadd.f32 %v1019, %v2205
  %v2420 = vadd.f32 %v1024, %v2210
  %v2421 = vadd.f32 %v1027, %v2213
  %v2422 = vadd.f32 %v1032, %v2218
  %v2423 = vadd.f32 %v1035, %v2221
  %v2424 = vadd.f32 %v1040, %v2226
  %v2425 = vadd.f32 %v1043, %v2229
  %v2426 = vadd.f32 %v1048, %v2234
  %v2427 = vadd.f32 %v1051, %v2237
  %v2428 = vadd.f32 %v1056, %v2242
  %v2429 = vadd.f32 %v1059, %v2245
  %v2430 = vadd.f32 %v1064, %v2250
  %v2431 = vadd.f32 %v1067, %v2253
  %v2432 = vadd.f32 %v1072, %v2258
  %v2433 = vadd.f32 %v1075, %v2261
  %v2434 = vadd.f32 %v1080, %v2266
  %v2435 = vadd.f32 %v1083, %v2269
  %v2436 = vadd.f32 %v1088, %v2274
  %v2437 = vadd.f32 %v1091, %v2277
  %v2438 = vadd.f32 %v1096, %v2282
  %v2439 = vadd.f32 %v1099, %v2285
  %v2440 = vadd.f32 %v1104, %v2290
  %v2441 = vadd.f32 %v1107, %v2293
  %v2442 = vadd.f32 %v1112, %v2298
  %v2443 = vadd.f32 %v1115, %v2301
  %v2444 = vadd.f32 %v1120, %v2306
  %v2445 = vadd.f32 %v1123, %v2309
  %v2446 = vadd.f32 %v1128, %v2314
  %v2447 = vadd.f32 %v1131, %v2317
  %v2448 = vadd.f32 %v1136, %v2322
  %v2449 = vadd.f32 %v1139, %v2325
  %v2450 = vadd.f32 %v1144, %v2330
  %v2451 = vadd.f32 %v1147, %v2333
  %v2452 = vadd.f32 %v1152, %v2338
  %v2453 = vadd.f32 %v1155, %v2341
  %v2454 = vadd.f32 %v1160, %v2346
  %v2455 = vadd.f32 %v1163, %v2349
  %v2456 = vadd.f32 %v1168, %v2354
  %v2457 = vadd.f32 %v1171, %v2357
  %v2458 = vadd.f32 %v1176, %v2362
  %v2459 = vadd.f32 %v1179, %v2365
  %v2460 = vadd.f32 %v1184, %v2370
  %v2461 = vadd.f32 %v1187, %v2373
  %v2462 = vadd.f32 %v1192, %v2378
  %v2463 = vadd.f32 %v1195, %v2381
  %v2464 = vadd.f32 %v1200, %v2386
  %v2465 = vadd.f32 %v1203, %v2389
  %v2466 = vadd.f32 %v1208, %v2394
  %v2467 = vadd.f32 %v1211, %v2397
  %v2468 = vadd.f32 %v1216, %v2402
  %v2469 = vadd.f32 %v1219, %v2405
  %v2470 = vadd.f32 %v1224, %v2410
  %v2471 = vadd.f32 %v1227, %v2413
  %s2472 = scalar_lea.vmem %s2, 96
  %v2473 = vld [vmem:[%s2472] sm:$0xf]
  %v2474 = vld [vmem:[%s2472 + $0x4] sm:$0xf]
  %v2475 = vld [vmem:[%s2472 + $0x8] sm:$0xf]
  %v2476 = vld [vmem:[%s2472 + $0xc] sm:$0xf]
  %v2477 = vld [vmem:[%s2472 + $0x10] sm:$0xf]
  %v2478 = vld [vmem:[%s2472 + $0x14] sm:$0xf]
  %v2479 = vld [vmem:[%s2472 + $0x18] sm:$0xf]
  %v2480 = vld [vmem:[%s2472 + $0x1c] sm:$0xf]
  %v2481 = vld [vmem:[%s2472 + $0x20] sm:$0xf]
  %v2482 = vld [vmem:[%s2472 + $0x24] sm:$0xf]
  %v2483 = vld [vmem:[%s2472 + $0x28] sm:$0xf]
  %v2484 = vld [vmem:[%s2472 + $0x2c] sm:$0xf]
  %v2497 = vunpack.c.l.b16 %v2473
  %v2498 = vunpack.c.l.b16 %v2474
  %v2499 = vunpack.c.l.b16 %v2475
  %v2500 = vunpack.c.l.b16 %v2476
  %v2501 = vunpack.c.l.b16 %v2477
  %v2502 = vunpack.c.l.b16 %v2478
  %v2503 = vunpack.c.l.b16 %v2479
  %v2504 = vunpack.c.l.b16 %v2480
  %v2505 = vunpack.c.l.b16 %v2481
  %v2506 = vunpack.c.l.b16 %v2482
  %v2507 = vunpack.c.l.b16 %v2483
  %v2508 = vunpack.c.l.b16 %v2484
  %v2509 = vpack.c.b16 %v2498, %v2497
  %v2510 = vpack.c.b16 %v2500, %v2499
  %v2511 = vpack.c.b16 %v2502, %v2501
  %v2512 = vpack.c.b16 %v2504, %v2503
  %v2513 = vpack.c.b16 %v2506, %v2505
  %v2514 = vpack.c.b16 %v2508, %v2507
  %2521 = vmatprep.subr.bf16.mxu0 0
  %2522 = vmatpush1.bf16.msra.mxu0 %v2509
  %2523 = vmatprep.subr.bf16.mxu0 0
  %2524 = vmatpush1.bf16.msra.mxu0 %v2510
  %2525 = vmatprep.subr.bf16.mxu0 0
  %2526 = vmatpush1.bf16.msra.mxu0 %v2511
  %2527 = vmatprep.subr.bf16.mxu0 0
  %2528 = vmatpush1.bf16.msra.mxu0 %v2512
  %2529 = vmatprep.subr.bf16.mxu0 0
  %2530 = vmatpush1.bf16.msra.mxu0 %v2513
  %2531 = vmatprep.subr.bf16.mxu0 0
  %2532 = vmatpush1.bf16.msra.mxu0 %v2514
  %2533 = vmatprep.subr.bf16.mxu0 0
  %2534 = vmatpush1.bf16.msra.mxu0 0
  %2535 = vmatprep.subr.bf16.mxu0 0
  %2536 = vmatpush1.bf16.msra.mxu0 0
  %2537 = vmatprep.subr.bf16.mxu0 0
  %2538 = vmatpush1.bf16.msra.mxu0 0
  %2539 = vmatprep.subr.bf16.mxu0 0
  %2540 = vmatpush1.bf16.msra.mxu0 0
  %2541 = vmatprep.subr.bf16.mxu0 0
  %2542 = vmatpush1.bf16.msra.mxu0 0
  %2543 = vmatprep.subr.bf16.mxu0 0
  %2544 = vmatpush1.bf16.msra.mxu0 0
  %2545 = vmatprep.subr.bf16.mxu0 0
  %2546 = vmatpush1.bf16.msra.mxu0 0
  %2547 = vmatprep.subr.bf16.mxu0 0
  %2548 = vmatpush1.bf16.msra.mxu0 0
  %2549 = vmatprep.subr.bf16.mxu0 0
  %2550 = vmatpush1.bf16.msra.mxu0 0
  %2551 = vmatprep.subr.bf16.mxu0 0
  %2552 = vmatpush1.bf16.msra.mxu0 0
  %2553 = vmatprep.mubr.bf16.mxu0 0
  %2554 = vmatmul.mubr.bf16.gmra.mrb[0].mxu0 %v2076
  %v2555 = vpop.f32.mrb[0].mxu0
  %v2556 = vadd.f32 0.0, %v2555
  %v2557 = vpop.f32.mrb[0].mxu0
  %v2558 = vpop.f32.mrb[0].mxu0
  %v2559 = vadd.f32 0.0, %v2558
  %v2560 = vpop.f32.mrb[0].mxu0
  %2561 = vmatprep.mubr.bf16.mxu0 0
  %2562 = vmatmul.mubr.bf16.gmra.mrb[0].mxu0 %v2079
  %v2563 = vpop.f32.mrb[0].mxu0
  %v2564 = vadd.f32 0.0, %v2563
  %v2565 = vpop.f32.mrb[0].mxu0
  %v2566 = vpop.f32.mrb[0].mxu0
  %v2567 = vadd.f32 0.0, %v2566
  %v2568 = vpop.f32.mrb[0].mxu0
  %2569 = vmatprep.mubr.bf16.mxu0 0
  %2570 = vmatmul.mubr.bf16.gmra.mrb[0].mxu0 %v2082
  %v2571 = vpop.f32.mrb[0].mxu0
  %v2572 = vadd.f32 0.0, %v2571
  %v2573 = vpop.f32.mrb[0].mxu0
  %v2574 = vpop.f32.mrb[0].mxu0
  %v2575 = vadd.f32 0.0, %v2574
  %v2576 = vpop.f32.mrb[0].mxu0
  %2577 = vmatprep.mubr.bf16.mxu0 0
  %2578 = vmatmul.mubr.bf16.gmra.mrb[0].mxu0 %v2085
  %v2579 = vpop.f32.mrb[0].mxu0
  %v2580 = vadd.f32 0.0, %v2579
  %v2581 = vpop.f32.mrb[0].mxu0
  %v2582 = vpop.f32.mrb[0].mxu0
  %v2583 = vadd.f32 0.0, %v2582
  %v2584 = vpop.f32.mrb[0].mxu0
  %2585 = vmatprep.mubr.bf16.mxu0 0
  %2586 = vmatmul.mubr.bf16.gmra.mrb[0].mxu0 %v2088
  %v2587 = vpop.f32.mrb[0].mxu0
  %v2588 = vadd.f32 0.0, %v2587
  %v2589 = vpop.f32.mrb[0].mxu0
  %v2590 = vpop.f32.mrb[0].mxu0
  %v2591 = vadd.f32 0.0, %v2590
  %v2592 = vpop.f32.mrb[0].mxu0
  %2593 = vmatprep.mubr.bf16.mxu0 0
  %2594 = vmatmul.mubr.bf16.gmra.mrb[0].mxu0 %v2091
  %v2595 = vpop.f32.mrb[0].mxu0
  %v2596 = vadd.f32 0.0, %v2595
  %v2597 = vpop.f32.mrb[0].mxu0
  %v2598 = vpop.f32.mrb[0].mxu0
  %v2599 = vadd.f32 0.0, %v2598
  %v2600 = vpop.f32.mrb[0].mxu0
  %2601 = vmatprep.mubr.bf16.mxu0 0
  %2602 = vmatmul.mubr.bf16.gmra.mrb[0].mxu0 %v2094
  %v2603 = vpop.f32.mrb[0].mxu0
  %v2604 = vadd.f32 0.0, %v2603
  %v2605 = vpop.f32.mrb[0].mxu0
  %v2606 = vpop.f32.mrb[0].mxu0
  %v2607 = vadd.f32 0.0, %v2606
  %v2608 = vpop.f32.mrb[0].mxu0
  %2609 = vmatprep.mubr.bf16.mxu0 0
  %2610 = vmatmul.mubr.bf16.gmra.mrb[0].mxu0 %v2097
  %v2611 = vpop.f32.mrb[0].mxu0
  %v2612 = vadd.f32 0.0, %v2611
  %v2613 = vpop.f32.mrb[0].mxu0
  %v2614 = vpop.f32.mrb[0].mxu0
  %v2615 = vadd.f32 0.0, %v2614
  %v2616 = vpop.f32.mrb[0].mxu0
  %2617 = vmatprep.mubr.bf16.mxu0 0
  %2618 = vmatmul.mubr.bf16.gmra.mrb[0].mxu0 %v2100
  %v2619 = vpop.f32.mrb[0].mxu0
  %v2620 = vadd.f32 0.0, %v2619
  %v2621 = vpop.f32.mrb[0].mxu0
  %v2622 = vpop.f32.mrb[0].mxu0
  %v2623 = vadd.f32 0.0, %v2622
  %v2624 = vpop.f32.mrb[0].mxu0
  %2625 = vmatprep.mubr.bf16.mxu0 0
  %2626 = vmatmul.mubr.bf16.gmra.mrb[0].mxu0 %v2103
  %v2627 = vpop.f32.mrb[0].mxu0
  %v2628 = vadd.f32 0.0, %v2627
  %v2629 = vpop.f32.mrb[0].mxu0
  %v2630 = vpop.f32.mrb[0].mxu0
  %v2631 = vadd.f32 0.0, %v2630
  %v2632 = vpop.f32.mrb[0].mxu0
  %2633 = vmatprep.mubr.bf16.mxu0 0
  %2634 = vmatmul.mubr.bf16.gmra.mrb[0].mxu0 %v2106
  %v2635 = vpop.f32.mrb[0].mxu0
  %v2636 = vadd.f32 0.0, %v2635
  %v2637 = vpop.f32.mrb[0].mxu0
  %v2638 = vpop.f32.mrb[0].mxu0
  %v2639 = vadd.f32 0.0, %v2638
  %v2640 = vpop.f32.mrb[0].mxu0
  %2641 = vmatprep.mubr.bf16.mxu0 0
  %2642 = vmatmul.mubr.bf16.gmra.mrb[0].mxu0 %v2109
  %v2643 = vpop.f32.mrb[0].mxu0
  %v2644 = vadd.f32 0.0, %v2643
  %v2645 = vpop.f32.mrb[0].mxu0
  %v2646 = vpop.f32.mrb[0].mxu0
  %v2647 = vadd.f32 0.0, %v2646
  %v2648 = vpop.f32.mrb[0].mxu0
  %2649 = vmatprep.mubr.bf16.mxu0 0
  %2650 = vmatmul.mubr.bf16.gmra.mrb[0].mxu0 %v2112
  %v2651 = vpop.f32.mrb[0].mxu0
  %v2652 = vadd.f32 0.0, %v2651
  %v2653 = vpop.f32.mrb[0].mxu0
  %v2654 = vpop.f32.mrb[0].mxu0
  %v2655 = vadd.f32 0.0, %v2654
  %v2656 = vpop.f32.mrb[0].mxu0
  %2657 = vmatprep.mubr.bf16.mxu0 0
  %2658 = vmatmul.mubr.bf16.gmra.mrb[0].mxu0 %v2115
  %v2659 = vpop.f32.mrb[0].mxu0
  %v2660 = vadd.f32 0.0, %v2659
  %v2661 = vpop.f32.mrb[0].mxu0
  %v2662 = vpop.f32.mrb[0].mxu0
  %v2663 = vadd.f32 0.0, %v2662
  %v2664 = vpop.f32.mrb[0].mxu0
  %2665 = vmatprep.mubr.bf16.mxu0 0
  %2666 = vmatmul.mubr.bf16.gmra.mrb[0].mxu0 %v2118
  %v2667 = vpop.f32.mrb[0].mxu0
  %v2668 = vadd.f32 0.0, %v2667
  %v2669 = vpop.f32.mrb[0].mxu0
  %v2670 = vpop.f32.mrb[0].mxu0
  %v2671 = vadd.f32 0.0, %v2670
  %v2672 = vpop.f32.mrb[0].mxu0
  %2673 = vmatprep.mubr.bf16.mxu0 0
  %2674 = vmatmul.mubr.bf16.gmra.mrb[0].mxu0 %v2121
  %v2675 = vpop.f32.mrb[0].mxu0
  %v2676 = vadd.f32 0.0, %v2675
  %v2677 = vpop.f32.mrb[0].mxu0
  %v2678 = vpop.f32.mrb[0].mxu0
  %v2679 = vadd.f32 0.0, %v2678
  %v2680 = vpop.f32.mrb[0].mxu0
  %2681 = vmatprep.mubr.bf16.mxu0 0
  %2682 = vmatmul.mubr.bf16.gmra.mrb[0].mxu0 %v2124
  %v2683 = vpop.f32.mrb[0].mxu0
  %v2684 = vadd.f32 0.0, %v2683
  %v2685 = vpop.f32.mrb[0].mxu0
  %v2686 = vpop.f32.mrb[0].mxu0
  %v2687 = vadd.f32 0.0, %v2686
  %v2688 = vpop.f32.mrb[0].mxu0
  %2689 = vmatprep.mubr.bf16.mxu0 0
  %2690 = vmatmul.mubr.bf16.gmra.mrb[0].mxu0 %v2127
  %v2691 = vpop.f32.mrb[0].mxu0
  %v2692 = vadd.f32 0.0, %v2691
  %v2693 = vpop.f32.mrb[0].mxu0
  %v2694 = vpop.f32.mrb[0].mxu0
  %v2695 = vadd.f32 0.0, %v2694
  %v2696 = vpop.f32.mrb[0].mxu0
  %2697 = vmatprep.mubr.bf16.mxu0 0
  %2698 = vmatmul.mubr.bf16.gmra.mrb[0].mxu0 %v2130
  %v2699 = vpop.f32.mrb[0].mxu0
  %v2700 = vadd.f32 0.0, %v2699
  %v2701 = vpop.f32.mrb[0].mxu0
  %v2702 = vpop.f32.mrb[0].mxu0
  %v2703 = vadd.f32 0.0, %v2702
  %v2704 = vpop.f32.mrb[0].mxu0
  %2705 = vmatprep.mubr.bf16.mxu0 0
  %2706 = vmatmul.mubr.bf16.gmra.mrb[0].mxu0 %v2133
  %v2707 = vpop.f32.mrb[0].mxu0
  %v2708 = vadd.f32 0.0, %v2707
  %v2709 = vpop.f32.mrb[0].mxu0
  %v2710 = vpop.f32.mrb[0].mxu0
  %v2711 = vadd.f32 0.0, %v2710
  %v2712 = vpop.f32.mrb[0].mxu0
  %2713 = vmatprep.mubr.bf16.mxu0 0
  %2714 = vmatmul.mubr.bf16.gmra.mrb[0].mxu0 %v2136
  %v2715 = vpop.f32.mrb[0].mxu0
  %v2716 = vadd.f32 0.0, %v2715
  %v2717 = vpop.f32.mrb[0].mxu0
  %v2718 = vpop.f32.mrb[0].mxu0
  %v2719 = vadd.f32 0.0, %v2718
  %v2720 = vpop.f32.mrb[0].mxu0
  %2721 = vmatprep.mubr.bf16.mxu0 0
  %2722 = vmatmul.mubr.bf16.gmra.mrb[0].mxu0 %v2139
  %v2723 = vpop.f32.mrb[0].mxu0
  %v2724 = vadd.f32 0.0, %v2723
  %v2725 = vpop.f32.mrb[0].mxu0
  %v2726 = vpop.f32.mrb[0].mxu0
  %v2727 = vadd.f32 0.0, %v2726
  %v2728 = vpop.f32.mrb[0].mxu0
  %2729 = vmatprep.mubr.bf16.mxu0 0
  %2730 = vmatmul.mubr.bf16.gmra.mrb[0].mxu0 %v2142
  %v2731 = vpop.f32.mrb[0].mxu0
  %v2732 = vadd.f32 0.0, %v2731
  %v2733 = vpop.f32.mrb[0].mxu0
  %v2734 = vpop.f32.mrb[0].mxu0
  %v2735 = vadd.f32 0.0, %v2734
  %v2736 = vpop.f32.mrb[0].mxu0
  %2737 = vmatprep.mubr.bf16.mxu0 0
  %2738 = vmatmul.mubr.bf16.gmra.mrb[0].mxu0 %v2145
  %v2739 = vpop.f32.mrb[0].mxu0
  %v2740 = vadd.f32 0.0, %v2739
  %v2741 = vpop.f32.mrb[0].mxu0
  %v2742 = vpop.f32.mrb[0].mxu0
  %v2743 = vadd.f32 0.0, %v2742
  %v2744 = vpop.f32.mrb[0].mxu0
  %2745 = vmatprep.mubr.bf16.mxu0 0
  %2746 = vmatmul.mubr.bf16.gmra.mrb[0].mxu0 %v2148
  %v2747 = vpop.f32.mrb[0].mxu0
  %v2748 = vadd.f32 0.0, %v2747
  %v2749 = vpop.f32.mrb[0].mxu0
  %v2750 = vpop.f32.mrb[0].mxu0
  %v2751 = vadd.f32 0.0, %v2750
  %v2752 = vpop.f32.mrb[0].mxu0
  %2753 = vmatprep.mubr.bf16.mxu0 0
  %2754 = vmatmul.mubr.bf16.gmra.mrb[0].mxu0 %v2151
  %v2755 = vpop.f32.mrb[0].mxu0
  %v2756 = vadd.f32 0.0, %v2755
  %v2757 = vpop.f32.mrb[0].mxu0
  %v2758 = vpop.f32.mrb[0].mxu0
  %v2759 = vadd.f32 0.0, %v2758
  %v2760 = vpop.f32.mrb[0].mxu0
  %2761 = vmatprep.mubr.bf16.mxu0 0
  %2762 = vmatmul.mubr.bf16.gmra.mrb[0].mxu0 %v2154
  %v2763 = vpop.f32.mrb[0].mxu0
  %v2764 = vadd.f32 0.0, %v2763
  %v2765 = vpop.f32.mrb[0].mxu0
  %v2766 = vpop.f32.mrb[0].mxu0
  %v2767 = vadd.f32 0.0, %v2766
  %v2768 = vpop.f32.mrb[0].mxu0
  %2769 = vmatprep.mubr.bf16.mxu0 0
  %2770 = vmatmul.mubr.bf16.gmra.mrb[0].mxu0 %v2157
  %v2771 = vpop.f32.mrb[0].mxu0
  %v2772 = vadd.f32 0.0, %v2771
  %v2773 = vpop.f32.mrb[0].mxu0
  %v2774 = vpop.f32.mrb[0].mxu0
  %v2775 = vadd.f32 0.0, %v2774
  %v2776 = vpop.f32.mrb[0].mxu0
  %2777 = vdwg.mxu0
  %v2778 = vadd.f32 %v1607, %v2556
  %v2779 = vadd.f32 %v1610, %v2559
  %v2780 = vadd.f32 %v1615, %v2564
  %v2781 = vadd.f32 %v1618, %v2567
  %v2782 = vadd.f32 %v1623, %v2572
  %v2783 = vadd.f32 %v1626, %v2575
  %v2784 = vadd.f32 %v1631, %v2580
  %v2785 = vadd.f32 %v1634, %v2583
  %v2786 = vadd.f32 %v1639, %v2588
  %v2787 = vadd.f32 %v1642, %v2591
  %v2788 = vadd.f32 %v1647, %v2596
  %v2789 = vadd.f32 %v1650, %v2599
  %v2790 = vadd.f32 %v1655, %v2604
  %v2791 = vadd.f32 %v1658, %v2607
  %v2792 = vadd.f32 %v1663, %v2612
  %v2793 = vadd.f32 %v1666, %v2615
  %v2794 = vadd.f32 %v1671, %v2620
  %v2795 = vadd.f32 %v1674, %v2623
  %v2796 = vadd.f32 %v1679, %v2628
  %v2797 = vadd.f32 %v1682, %v2631
  %v2798 = vadd.f32 %v1687, %v2636
  %v2799 = vadd.f32 %v1690, %v2639
  %v2800 = vadd.f32 %v1695, %v2644
  %v2801 = vadd.f32 %v1698, %v2647
  %v2802 = vadd.f32 %v1703, %v2652
  %v2803 = vadd.f32 %v1706, %v2655
  %v2804 = vadd.f32 %v1711, %v2660
  %v2805 = vadd.f32 %v1714, %v2663
  %v2806 = vadd.f32 %v1719, %v2668
  %v2807 = vadd.f32 %v1722, %v2671
  %v2808 = vadd.f32 %v1727, %v2676
  %v2809 = vadd.f32 %v1730, %v2679
  %v2810 = vadd.f32 %v1735, %v2684
  %v2811 = vadd.f32 %v1738, %v2687
  %v2812 = vadd.f32 %v1743, %v2692
  %v2813 = vadd.f32 %v1746, %v2695
  %v2814 = vadd.f32 %v1751, %v2700
  %v2815 = vadd.f32 %v1754, %v2703
  %v2816 = vadd.f32 %v1759, %v2708
  %v2817 = vadd.f32 %v1762, %v2711
  %v2818 = vadd.f32 %v1767, %v2716
  %v2819 = vadd.f32 %v1770, %v2719
  %v2820 = vadd.f32 %v1775, %v2724
  %v2821 = vadd.f32 %v1778, %v2727
  %v2822 = vadd.f32 %v1783, %v2732
  %v2823 = vadd.f32 %v1786, %v2735
  %v2824 = vadd.f32 %v1791, %v2740
  %v2825 = vadd.f32 %v1794, %v2743
  %v2826 = vadd.f32 %v1799, %v2748
  %v2827 = vadd.f32 %v1802, %v2751
  %v2828 = vadd.f32 %v1807, %v2756
  %v2829 = vadd.f32 %v1810, %v2759
  %v2830 = vadd.f32 %v1815, %v2764
  %v2831 = vadd.f32 %v1818, %v2767
  %v2832 = vadd.f32 %v1823, %v2772
  %v2833 = vadd.f32 %v1826, %v2775
  %s2834 = scalar_lea.vmem %s0, 24
  %v2835 = vld [vmem:[%s2834] sm:$0xf]
  %v2836 = vld [vmem:[%s2834 + $0x4] sm:$0xf]
  %v2837 = vld [vmem:[%s2834 + $0x8] sm:$0xf]
  %v2838 = vld [vmem:[%s2834 + $0xc] sm:$0xf]
  %v2839 = vld [vmem:[%s2834 + $0x10] sm:$0xf]
  %v2840 = vld [vmem:[%s2834 + $0x14] sm:$0xf]
  %v2841 = vld [vmem:[%s2834 + $0x18] sm:$0xf]
  %v2842 = vld [vmem:[%s2834 + $0x1c] sm:$0xf]
  %v2843 = vld [vmem:[%s2834 + $0x20] sm:$0xf]
  %v2844 = vld [vmem:[%s2834 + $0x24] sm:$0xf]
  %v2845 = vld [vmem:[%s2834 + $0x28] sm:$0xf]
  %v2846 = vld [vmem:[%s2834 + $0x2c] sm:$0xf]
  %v2847 = vld [vmem:[%s2834 + $0x30] sm:$0xf]
  %v2848 = vld [vmem:[%s2834 + $0x34] sm:$0xf]
  %v2849 = vld [vmem:[%s2834 + $0x38] sm:$0xf]
  %v2850 = vld [vmem:[%s2834 + $0x3c] sm:$0xf]
  %v2851 = vld [vmem:[%s2834 + $0x40] sm:$0xf]
  %v2852 = vld [vmem:[%s2834 + $0x44] sm:$0xf]
  %v2853 = vld [vmem:[%s2834 + $0x48] sm:$0xf]
  %v2854 = vld [vmem:[%s2834 + $0x4c] sm:$0xf]
  %v2855 = vld [vmem:[%s2834 + $0x50] sm:$0xf]
  %v2856 = vld [vmem:[%s2834 + $0x54] sm:$0xf]
  %v2857 = vld [vmem:[%s2834 + $0x58] sm:$0xf]
  %v2858 = vld [vmem:[%s2834 + $0x5c] sm:$0xf]
  %v2859 = vld [vmem:[%s2834 + $0x60] sm:$0xf]
  %v2860 = vld [vmem:[%s2834 + $0x64] sm:$0xf]
  %v2861 = vld [vmem:[%s2834 + $0x68] sm:$0xf]
  %v2862 = vld [vmem:[%s2834 + $0x6c] sm:$0xf]
  %v2863 = vld [vmem:[%s2834 + $0x70] sm:$0xf]
  %v2864 = vld [vmem:[%s2834 + $0x74] sm:$0xf]
  %v2865 = vld [vmem:[%s2834 + $0x78] sm:$0xf]
  %v2866 = vld [vmem:[%s2834 + $0x7c] sm:$0xf]
  %v2867 = vld [vmem:[%s2834 + $0x80] sm:$0xf]
  %v2868 = vld [vmem:[%s2834 + $0x84] sm:$0xf]
  %v2869 = vld [vmem:[%s2834 + $0x88] sm:$0xf]
  %v2870 = vld [vmem:[%s2834 + $0x8c] sm:$0xf]
  %v2871 = vld [vmem:[%s2834 + $0x90] sm:$0xf]
  %v2872 = vld [vmem:[%s2834 + $0x94] sm:$0xf]
  %v2873 = vld [vmem:[%s2834 + $0x98] sm:$0xf]
  %v2874 = vld [vmem:[%s2834 + $0x9c] sm:$0xf]
  %v2875 = vld [vmem:[%s2834 + $0xa0] sm:$0xf]
  %v2876 = vld [vmem:[%s2834 + $0xa4] sm:$0xf]
  %v2877 = vld [vmem:[%s2834 + $0xa8] sm:$0xf]
  %v2878 = vld [vmem:[%s2834 + $0xac] sm:$0xf]
  %v2879 = vld [vmem:[%s2834 + $0xb0] sm:$0xf]
  %v2880 = vld [vmem:[%s2834 + $0xb4] sm:$0xf]
  %v2881 = vld [vmem:[%s2834 + $0xb8] sm:$0xf]
  %v2882 = vld [vmem:[%s2834 + $0xbc] sm:$0xf]
  %v2883 = vld [vmem:[%s2834 + $0xc0] sm:$0xf]
  %v2884 = vld [vmem:[%s2834 + $0xc4] sm:$0xf]
  %v2885 = vld [vmem:[%s2834 + $0xc8] sm:$0xf]
  %v2886 = vld [vmem:[%s2834 + $0xcc] sm:$0xf]
  %v2887 = vld [vmem:[%s2834 + $0xd0] sm:$0xf]
  %v2888 = vld [vmem:[%s2834 + $0xd4] sm:$0xf]
  %v2889 = vld [vmem:[%s2834 + $0xd8] sm:$0xf]
  %v2890 = vld [vmem:[%s2834 + $0xdc] sm:$0xf]
  %s2891 = scalar_lea.vmem %s1, 144
  %v2892 = vld [vmem:[%s2891] sm:$0xf]
  %v2893 = vld [vmem:[%s2891 + $0x4] sm:$0xf]
  %v2894 = vld [vmem:[%s2891 + $0x8] sm:$0xf]
  %v2895 = vld [vmem:[%s2891 + $0xc] sm:$0xf]
  %v2896 = vld [vmem:[%s2891 + $0x10] sm:$0xf]
  %v2897 = vld [vmem:[%s2891 + $0x14] sm:$0xf]
  %v2898 = vld [vmem:[%s2891 + $0x18] sm:$0xf]
  %v2899 = vld [vmem:[%s2891 + $0x1c] sm:$0xf]
  %v2900 = vld [vmem:[%s2891 + $0x20] sm:$0xf]
  %v2901 = vld [vmem:[%s2891 + $0x24] sm:$0xf]
  %v2902 = vld [vmem:[%s2891 + $0x28] sm:$0xf]
  %v2903 = vld [vmem:[%s2891 + $0x2c] sm:$0xf]
  %v2960 = vunpack.c.l.b16 %v2835
  %v2961 = vunpack.c.l.b16 %v2836
  %v2962 = vunpack.c.l.b16 %v2837
  %v2963 = vunpack.c.l.b16 %v2838
  %v2964 = vunpack.c.l.b16 %v2839
  %v2965 = vunpack.c.l.b16 %v2840
  %v2966 = vunpack.c.l.b16 %v2841
  %v2967 = vunpack.c.l.b16 %v2842
  %v2968 = vunpack.c.l.b16 %v2843
  %v2969 = vunpack.c.l.b16 %v2844
  %v2970 = vunpack.c.l.b16 %v2845
  %v2971 = vunpack.c.l.b16 %v2846
  %v2972 = vunpack.c.l.b16 %v2847
  %v2973 = vunpack.c.l.b16 %v2848
  %v2974 = vunpack.c.l.b16 %v2849
  %v2975 = vunpack.c.l.b16 %v2850
  %v2976 = vunpack.c.l.b16 %v2851
  %v2977 = vunpack.c.l.b16 %v2852
  %v2978 = vunpack.c.l.b16 %v2853
  %v2979 = vunpack.c.l.b16 %v2854
  %v2980 = vunpack.c.l.b16 %v2855
  %v2981 = vunpack.c.l.b16 %v2856
  %v2982 = vunpack.c.l.b16 %v2857
  %v2983 = vunpack.c.l.b16 %v2858
  %v2984 = vunpack.c.l.b16 %v2859
  %v2985 = vunpack.c.l.b16 %v2860
  %v2986 = vunpack.c.l.b16 %v2861
  %v2987 = vunpack.c.l.b16 %v2862
  %v2988 = vunpack.c.l.b16 %v2863
  %v2989 = vunpack.c.l.b16 %v2864
  %v2990 = vunpack.c.l.b16 %v2865
  %v2991 = vunpack.c.l.b16 %v2866
  %v2992 = vunpack.c.l.b16 %v2867
  %v2993 = vunpack.c.l.b16 %v2868
  %v2994 = vunpack.c.l.b16 %v2869
  %v2995 = vunpack.c.l.b16 %v2870
  %v2996 = vunpack.c.l.b16 %v2871
  %v2997 = vunpack.c.l.b16 %v2872
  %v2998 = vunpack.c.l.b16 %v2873
  %v2999 = vunpack.c.l.b16 %v2874
  %v3000 = vunpack.c.l.b16 %v2875
  %v3001 = vunpack.c.l.b16 %v2876
  %v3002 = vunpack.c.l.b16 %v2877
  %v3003 = vunpack.c.l.b16 %v2878
  %v3004 = vunpack.c.l.b16 %v2879
  %v3005 = vunpack.c.l.b16 %v2880
  %v3006 = vunpack.c.l.b16 %v2881
  %v3007 = vunpack.c.l.b16 %v2882
  %v3008 = vunpack.c.l.b16 %v2883
  %v3009 = vunpack.c.l.b16 %v2884
  %v3010 = vunpack.c.l.b16 %v2885
  %v3011 = vunpack.c.l.b16 %v2886
  %v3012 = vunpack.c.l.b16 %v2887
  %v3013 = vunpack.c.l.b16 %v2888
  %v3014 = vunpack.c.l.b16 %v2889
  %v3015 = vunpack.c.l.b16 %v2890
  %v3016 = vpack.c.b16 %v2961, %v2960
  %v3017 = vpack.c.b16 %v2963, %v2962
  %v3018 = vpack.c.b16 %v2965, %v2964
  %v3019 = vpack.c.b16 %v2967, %v2966
  %v3020 = vpack.c.b16 %v2969, %v2968
  %v3021 = vpack.c.b16 %v2971, %v2970
  %v3022 = vpack.c.b16 %v2973, %v2972
  %v3023 = vpack.c.b16 %v2975, %v2974
  %v3024 = vpack.c.b16 %v2977, %v2976
  %v3025 = vpack.c.b16 %v2979, %v2978
  %v3026 = vpack.c.b16 %v2981, %v2980
  %v3027 = vpack.c.b16 %v2983, %v2982
  %v3028 = vpack.c.b16 %v2985, %v2984
  %v3029 = vpack.c.b16 %v2987, %v2986
  %v3030 = vpack.c.b16 %v2989, %v2988
  %v3031 = vpack.c.b16 %v2991, %v2990
  %v3032 = vpack.c.b16 %v2993, %v2992
  %v3033 = vpack.c.b16 %v2995, %v2994
  %v3034 = vpack.c.b16 %v2997, %v2996
  %v3035 = vpack.c.b16 %v2999, %v2998
  %v3036 = vpack.c.b16 %v3001, %v3000
  %v3037 = vpack.c.b16 %v3003, %v3002
  %v3038 = vpack.c.b16 %v3005, %v3004
  %v3039 = vpack.c.b16 %v3007, %v3006
  %v3040 = vpack.c.b16 %v3009, %v3008
  %v3041 = vpack.c.b16 %v3011, %v3010
  %v3042 = vpack.c.b16 %v3013, %v3012
  %v3043 = vpack.c.b16 %v3015, %v3014
  %v3056 = vunpack.c.l.b16 %v2892
  %v3057 = vunpack.c.l.b16 %v2893
  %v3058 = vunpack.c.l.b16 %v2894
  %v3059 = vunpack.c.l.b16 %v2895
  %v3060 = vunpack.c.l.b16 %v2896
  %v3061 = vunpack.c.l.b16 %v2897
  %v3062 = vunpack.c.l.b16 %v2898
  %v3063 = vunpack.c.l.b16 %v2899
  %v3064 = vunpack.c.l.b16 %v2900
  %v3065 = vunpack.c.l.b16 %v2901
  %v3066 = vunpack.c.l.b16 %v2902
  %v3067 = vunpack.c.l.b16 %v2903
  %v3068 = vpack.c.b16 %v3057, %v3056
  %v3069 = vpack.c.b16 %v3059, %v3058
  %v3070 = vpack.c.b16 %v3061, %v3060
  %v3071 = vpack.c.b16 %v3063, %v3062
  %v3072 = vpack.c.b16 %v3065, %v3064
  %v3073 = vpack.c.b16 %v3067, %v3066
  %v3081 = vsel %vm371, %v3016, 0
  %v3084 = vsel %vm371, %v3017, 0
  %v3087 = vsel %vm371, %v3018, 0
  %v3090 = vsel %vm371, %v3019, 0
  %v3093 = vsel %vm371, %v3020, 0
  %v3096 = vsel %vm371, %v3021, 0
  %v3099 = vsel %vm371, %v3022, 0
  %v3102 = vsel %vm371, %v3023, 0
  %v3105 = vsel %vm371, %v3024, 0
  %v3108 = vsel %vm371, %v3025, 0
  %v3111 = vsel %vm371, %v3026, 0
  %v3114 = vsel %vm371, %v3027, 0
  %v3117 = vsel %vm371, %v3028, 0
  %v3120 = vsel %vm371, %v3029, 0
  %v3123 = vsel %vm371, %v3030, 0
  %v3126 = vsel %vm371, %v3031, 0
  %v3129 = vsel %vm371, %v3032, 0
  %v3132 = vsel %vm371, %v3033, 0
  %v3135 = vsel %vm371, %v3034, 0
  %v3138 = vsel %vm371, %v3035, 0
  %v3141 = vsel %vm371, %v3036, 0
  %v3144 = vsel %vm371, %v3037, 0
  %v3147 = vsel %vm371, %v3038, 0
  %v3150 = vsel %vm371, %v3039, 0
  %v3153 = vsel %vm371, %v3040, 0
  %v3156 = vsel %vm371, %v3041, 0
  %v3159 = vsel %vm371, %v3042, 0
  %v3162 = vsel %vm371, %v3043, 0
  %3164 = vmatprep.subr.bf16.mxu0 0
  %3165 = vmatpush1.bf16.msra.mxu0 %v3068
  %3166 = vmatprep.subr.bf16.mxu0 0
  %3167 = vmatpush1.bf16.msra.mxu0 %v3069
  %3168 = vmatprep.subr.bf16.mxu0 0
  %3169 = vmatpush1.bf16.msra.mxu0 %v3070
  %3170 = vmatprep.subr.bf16.mxu0 0
  %3171 = vmatpush1.bf16.msra.mxu0 %v3071
  %3172 = vmatprep.subr.bf16.mxu0 0
  %3173 = vmatpush1.bf16.msra.mxu0 %v3072
  %3174 = vmatprep.subr.bf16.mxu0 0
  %3175 = vmatpush1.bf16.msra.mxu0 %v3073
  %3176 = vmatprep.subr.bf16.mxu0 0
  %3177 = vmatpush1.bf16.msra.mxu0 0
  %3178 = vmatprep.subr.bf16.mxu0 0
  %3179 = vmatpush1.bf16.msra.mxu0 0
  %3180 = vmatprep.subr.bf16.mxu0 0
  %3181 = vmatpush1.bf16.msra.mxu0 0
  %3182 = vmatprep.subr.bf16.mxu0 0
  %3183 = vmatpush1.bf16.msra.mxu0 0
  %3184 = vmatprep.subr.bf16.mxu0 0
  %3185 = vmatpush1.bf16.msra.mxu0 0
  %3186 = vmatprep.subr.bf16.mxu0 0
  %3187 = vmatpush1.bf16.msra.mxu0 0
  %3188 = vmatprep.subr.bf16.mxu0 0
  %3189 = vmatpush1.bf16.msra.mxu0 0
  %3190 = vmatprep.subr.bf16.mxu0 0
  %3191 = vmatpush1.bf16.msra.mxu0 0
  %3192 = vmatprep.subr.bf16.mxu0 0
  %3193 = vmatpush1.bf16.msra.mxu0 0
  %3194 = vmatprep.subr.bf16.mxu0 0
  %3195 = vmatpush1.bf16.msra.mxu0 0
  %3196 = vmatprep.mubr.bf16.mxu0 0
  %3197 = vmatmul.mubr.bf16.gmra.mrb[0].mxu0 %v3081
  %v3198 = vpop.f32.mrb[0].mxu0
  %v3199 = vadd.f32 0.0, %v3198
  %v3200 = vpop.f32.mrb[0].mxu0
  %v3201 = vpop.f32.mrb[0].mxu0
  %v3202 = vadd.f32 0.0, %v3201
  %v3203 = vpop.f32.mrb[0].mxu0
  %3204 = vmatprep.mubr.bf16.mxu0 0
  %3205 = vmatmul.mubr.bf16.gmra.mrb[0].mxu0 %v3084
  %v3206 = vpop.f32.mrb[0].mxu0
  %v3207 = vadd.f32 0.0, %v3206
  %v3208 = vpop.f32.mrb[0].mxu0
  %v3209 = vpop.f32.mrb[0].mxu0
  %v3210 = vadd.f32 0.0, %v3209
  %v3211 = vpop.f32.mrb[0].mxu0
  %3212 = vmatprep.mubr.bf16.mxu0 0
  %3213 = vmatmul.mubr.bf16.gmra.mrb[0].mxu0 %v3087
  %v3214 = vpop.f32.mrb[0].mxu0
  %v3215 = vadd.f32 0.0, %v3214
  %v3216 = vpop.f32.mrb[0].mxu0
  %v3217 = vpop.f32.mrb[0].mxu0
  %v3218 = vadd.f32 0.0, %v3217
  %v3219 = vpop.f32.mrb[0].mxu0
  %3220 = vmatprep.mubr.bf16.mxu0 0
  %3221 = vmatmul.mubr.bf16.gmra.mrb[0].mxu0 %v3090
  %v3222 = vpop.f32.mrb[0].mxu0
  %v3223 = vadd.f32 0.0, %v3222
  %v3224 = vpop.f32.mrb[0].mxu0
  %v3225 = vpop.f32.mrb[0].mxu0
  %v3226 = vadd.f32 0.0, %v3225
  %v3227 = vpop.f32.mrb[0].mxu0
  %3228 = vmatprep.mubr.bf16.mxu0 0
  %3229 = vmatmul.mubr.bf16.gmra.mrb[0].mxu0 %v3093
  %v3230 = vpop.f32.mrb[0].mxu0
  %v3231 = vadd.f32 0.0, %v3230
  %v3232 = vpop.f32.mrb[0].mxu0
  %v3233 = vpop.f32.mrb[0].mxu0
  %v3234 = vadd.f32 0.0, %v3233
  %v3235 = vpop.f32.mrb[0].mxu0
  %3236 = vmatprep.mubr.bf16.mxu0 0
  %3237 = vmatmul.mubr.bf16.gmra.mrb[0].mxu0 %v3096
  %v3238 = vpop.f32.mrb[0].mxu0
  %v3239 = vadd.f32 0.0, %v3238
  %v3240 = vpop.f32.mrb[0].mxu0
  %v3241 = vpop.f32.mrb[0].mxu0
  %v3242 = vadd.f32 0.0, %v3241
  %v3243 = vpop.f32.mrb[0].mxu0
  %3244 = vmatprep.mubr.bf16.mxu0 0
  %3245 = vmatmul.mubr.bf16.gmra.mrb[0].mxu0 %v3099
  %v3246 = vpop.f32.mrb[0].mxu0
  %v3247 = vadd.f32 0.0, %v3246
  %v3248 = vpop.f32.mrb[0].mxu0
  %v3249 = vpop.f32.mrb[0].mxu0
  %v3250 = vadd.f32 0.0, %v3249
  %v3251 = vpop.f32.mrb[0].mxu0
  %3252 = vmatprep.mubr.bf16.mxu0 0
  %3253 = vmatmul.mubr.bf16.gmra.mrb[0].mxu0 %v3102
  %v3254 = vpop.f32.mrb[0].mxu0
  %v3255 = vadd.f32 0.0, %v3254
  %v3256 = vpop.f32.mrb[0].mxu0
  %v3257 = vpop.f32.mrb[0].mxu0
  %v3258 = vadd.f32 0.0, %v3257
  %v3259 = vpop.f32.mrb[0].mxu0
  %3260 = vmatprep.mubr.bf16.mxu0 0
  %3261 = vmatmul.mubr.bf16.gmra.mrb[0].mxu0 %v3105
  %v3262 = vpop.f32.mrb[0].mxu0
  %v3263 = vadd.f32 0.0, %v3262
  %v3264 = vpop.f32.mrb[0].mxu0
  %v3265 = vpop.f32.mrb[0].mxu0
  %v3266 = vadd.f32 0.0, %v3265
  %v3267 = vpop.f32.mrb[0].mxu0
  %3268 = vmatprep.mubr.bf16.mxu0 0
  %3269 = vmatmul.mubr.bf16.gmra.mrb[0].mxu0 %v3108
  %v3270 = vpop.f32.mrb[0].mxu0
  %v3271 = vadd.f32 0.0, %v3270
  %v3272 = vpop.f32.mrb[0].mxu0
  %v3273 = vpop.f32.mrb[0].mxu0
  %v3274 = vadd.f32 0.0, %v3273
  %v3275 = vpop.f32.mrb[0].mxu0
  %3276 = vmatprep.mubr.bf16.mxu0 0
  %3277 = vmatmul.mubr.bf16.gmra.mrb[0].mxu0 %v3111
  %v3278 = vpop.f32.mrb[0].mxu0
  %v3279 = vadd.f32 0.0, %v3278
  %v3280 = vpop.f32.mrb[0].mxu0
  %v3281 = vpop.f32.mrb[0].mxu0
  %v3282 = vadd.f32 0.0, %v3281
  %v3283 = vpop.f32.mrb[0].mxu0
  %3284 = vmatprep.mubr.bf16.mxu0 0
  %3285 = vmatmul.mubr.bf16.gmra.mrb[0].mxu0 %v3114
  %v3286 = vpop.f32.mrb[0].mxu0
  %v3287 = vadd.f32 0.0, %v3286
  %v3288 = vpop.f32.mrb[0].mxu0
  %v3289 = vpop.f32.mrb[0].mxu0
  %v3290 = vadd.f32 0.0, %v3289
  %v3291 = vpop.f32.mrb[0].mxu0
  %3292 = vmatprep.mubr.bf16.mxu0 0
  %3293 = vmatmul.mubr.bf16.gmra.mrb[0].mxu0 %v3117
  %v3294 = vpop.f32.mrb[0].mxu0
  %v3295 = vadd.f32 0.0, %v3294
  %v3296 = vpop.f32.mrb[0].mxu0
  %v3297 = vpop.f32.mrb[0].mxu0
  %v3298 = vadd.f32 0.0, %v3297
  %v3299 = vpop.f32.mrb[0].mxu0
  %3300 = vmatprep.mubr.bf16.mxu0 0
  %3301 = vmatmul.mubr.bf16.gmra.mrb[0].mxu0 %v3120
  %v3302 = vpop.f32.mrb[0].mxu0
  %v3303 = vadd.f32 0.0, %v3302
  %v3304 = vpop.f32.mrb[0].mxu0
  %v3305 = vpop.f32.mrb[0].mxu0
  %v3306 = vadd.f32 0.0, %v3305
  %v3307 = vpop.f32.mrb[0].mxu0
  %3308 = vmatprep.mubr.bf16.mxu0 0
  %3309 = vmatmul.mubr.bf16.gmra.mrb[0].mxu0 %v3123
  %v3310 = vpop.f32.mrb[0].mxu0
  %v3311 = vadd.f32 0.0, %v3310
  %v3312 = vpop.f32.mrb[0].mxu0
  %v3313 = vpop.f32.mrb[0].mxu0
  %v3314 = vadd.f32 0.0, %v3313
  %v3315 = vpop.f32.mrb[0].mxu0
  %3316 = vmatprep.mubr.bf16.mxu0 0
  %3317 = vmatmul.mubr.bf16.gmra.mrb[0].mxu0 %v3126
  %v3318 = vpop.f32.mrb[0].mxu0
  %v3319 = vadd.f32 0.0, %v3318
  %v3320 = vpop.f32.mrb[0].mxu0
  %v3321 = vpop.f32.mrb[0].mxu0
  %v3322 = vadd.f32 0.0, %v3321
  %v3323 = vpop.f32.mrb[0].mxu0
  %3324 = vmatprep.mubr.bf16.mxu0 0
  %3325 = vmatmul.mubr.bf16.gmra.mrb[0].mxu0 %v3129
  %v3326 = vpop.f32.mrb[0].mxu0
  %v3327 = vadd.f32 0.0, %v3326
  %v3328 = vpop.f32.mrb[0].mxu0
  %v3329 = vpop.f32.mrb[0].mxu0
  %v3330 = vadd.f32 0.0, %v3329
  %v3331 = vpop.f32.mrb[0].mxu0
  %3332 = vmatprep.mubr.bf16.mxu0 0
  %3333 = vmatmul.mubr.bf16.gmra.mrb[0].mxu0 %v3132
  %v3334 = vpop.f32.mrb[0].mxu0
  %v3335 = vadd.f32 0.0, %v3334
  %v3336 = vpop.f32.mrb[0].mxu0
  %v3337 = vpop.f32.mrb[0].mxu0
  %v3338 = vadd.f32 0.0, %v3337
  %v3339 = vpop.f32.mrb[0].mxu0
  %3340 = vmatprep.mubr.bf16.mxu0 0
  %3341 = vmatmul.mubr.bf16.gmra.mrb[0].mxu0 %v3135
  %v3342 = vpop.f32.mrb[0].mxu0
  %v3343 = vadd.f32 0.0, %v3342
  %v3344 = vpop.f32.mrb[0].mxu0
  %v3345 = vpop.f32.mrb[0].mxu0
  %v3346 = vadd.f32 0.0, %v3345
  %v3347 = vpop.f32.mrb[0].mxu0
  %3348 = vmatprep.mubr.bf16.mxu0 0
  %3349 = vmatmul.mubr.bf16.gmra.mrb[0].mxu0 %v3138
  %v3350 = vpop.f32.mrb[0].mxu0
  %v3351 = vadd.f32 0.0, %v3350
  %v3352 = vpop.f32.mrb[0].mxu0
  %v3353 = vpop.f32.mrb[0].mxu0
  %v3354 = vadd.f32 0.0, %v3353
  %v3355 = vpop.f32.mrb[0].mxu0
  %3356 = vmatprep.mubr.bf16.mxu0 0
  %3357 = vmatmul.mubr.bf16.gmra.mrb[0].mxu0 %v3141
  %v3358 = vpop.f32.mrb[0].mxu0
  %v3359 = vadd.f32 0.0, %v3358
  %v3360 = vpop.f32.mrb[0].mxu0
  %v3361 = vpop.f32.mrb[0].mxu0
  %v3362 = vadd.f32 0.0, %v3361
  %v3363 = vpop.f32.mrb[0].mxu0
  %3364 = vmatprep.mubr.bf16.mxu0 0
  %3365 = vmatmul.mubr.bf16.gmra.mrb[0].mxu0 %v3144
  %v3366 = vpop.f32.mrb[0].mxu0
  %v3367 = vadd.f32 0.0, %v3366
  %v3368 = vpop.f32.mrb[0].mxu0
  %v3369 = vpop.f32.mrb[0].mxu0
  %v3370 = vadd.f32 0.0, %v3369
  %v3371 = vpop.f32.mrb[0].mxu0
  %3372 = vmatprep.mubr.bf16.mxu0 0
  %3373 = vmatmul.mubr.bf16.gmra.mrb[0].mxu0 %v3147
  %v3374 = vpop.f32.mrb[0].mxu0
  %v3375 = vadd.f32 0.0, %v3374
  %v3376 = vpop.f32.mrb[0].mxu0
  %v3377 = vpop.f32.mrb[0].mxu0
  %v3378 = vadd.f32 0.0, %v3377
  %v3379 = vpop.f32.mrb[0].mxu0
  %3380 = vmatprep.mubr.bf16.mxu0 0
  %3381 = vmatmul.mubr.bf16.gmra.mrb[0].mxu0 %v3150
  %v3382 = vpop.f32.mrb[0].mxu0
  %v3383 = vadd.f32 0.0, %v3382
  %v3384 = vpop.f32.mrb[0].mxu0
  %v3385 = vpop.f32.mrb[0].mxu0
  %v3386 = vadd.f32 0.0, %v3385
  %v3387 = vpop.f32.mrb[0].mxu0
  %3388 = vmatprep.mubr.bf16.mxu0 0
  %3389 = vmatmul.mubr.bf16.gmra.mrb[0].mxu0 %v3153
  %v3390 = vpop.f32.mrb[0].mxu0
  %v3391 = vadd.f32 0.0, %v3390
  %v3392 = vpop.f32.mrb[0].mxu0
  %v3393 = vpop.f32.mrb[0].mxu0
  %v3394 = vadd.f32 0.0, %v3393
  %v3395 = vpop.f32.mrb[0].mxu0
  %3396 = vmatprep.mubr.bf16.mxu0 0
  %3397 = vmatmul.mubr.bf16.gmra.mrb[0].mxu0 %v3156
  %v3398 = vpop.f32.mrb[0].mxu0
  %v3399 = vadd.f32 0.0, %v3398
  %v3400 = vpop.f32.mrb[0].mxu0
  %v3401 = vpop.f32.mrb[0].mxu0
  %v3402 = vadd.f32 0.0, %v3401
  %v3403 = vpop.f32.mrb[0].mxu0
  %3404 = vmatprep.mubr.bf16.mxu0 0
  %3405 = vmatmul.mubr.bf16.gmra.mrb[0].mxu0 %v3159
  %v3406 = vpop.f32.mrb[0].mxu0
  %v3407 = vadd.f32 0.0, %v3406
  %v3408 = vpop.f32.mrb[0].mxu0
  %v3409 = vpop.f32.mrb[0].mxu0
  %v3410 = vadd.f32 0.0, %v3409
  %v3411 = vpop.f32.mrb[0].mxu0
  %3412 = vmatprep.mubr.bf16.mxu0 0
  %3413 = vmatmul.mubr.bf16.gmra.mrb[0].mxu0 %v3162
  %v3414 = vpop.f32.mrb[0].mxu0
  %v3415 = vadd.f32 0.0, %v3414
  %v3416 = vpop.f32.mrb[0].mxu0
  %v3417 = vpop.f32.mrb[0].mxu0
  %v3418 = vadd.f32 0.0, %v3417
  %v3419 = vpop.f32.mrb[0].mxu0
  %3420 = vdwg.mxu0
  %v3421 = vadd.f32 %v2416, %v3199
  %v3422 = vadd.f32 %v2417, %v3202
  %v3423 = vadd.f32 %v2418, %v3207
  %v3424 = vadd.f32 %v2419, %v3210
  %v3425 = vadd.f32 %v2420, %v3215
  %v3426 = vadd.f32 %v2421, %v3218
  %v3427 = vadd.f32 %v2422, %v3223
  %v3428 = vadd.f32 %v2423, %v3226
  %v3429 = vadd.f32 %v2424, %v3231
  %v3430 = vadd.f32 %v2425, %v3234
  %v3431 = vadd.f32 %v2426, %v3239
  %v3432 = vadd.f32 %v2427, %v3242
  %v3433 = vadd.f32 %v2428, %v3247
  %v3434 = vadd.f32 %v2429, %v3250
  %v3435 = vadd.f32 %v2430, %v3255
  %v3436 = vadd.f32 %v2431, %v3258
  %v3437 = vadd.f32 %v2432, %v3263
  %v3438 = vadd.f32 %v2433, %v3266
  %v3439 = vadd.f32 %v2434, %v3271
  %v3440 = vadd.f32 %v2435, %v3274
  %v3441 = vadd.f32 %v2436, %v3279
  %v3442 = vadd.f32 %v2437, %v3282
  %v3443 = vadd.f32 %v2438, %v3287
  %v3444 = vadd.f32 %v2439, %v3290
  %v3445 = vadd.f32 %v2440, %v3295
  %v3446 = vadd.f32 %v2441, %v3298
  %v3447 = vadd.f32 %v2442, %v3303
  %v3448 = vadd.f32 %v2443, %v3306
  %v3449 = vadd.f32 %v2444, %v3311
  %v3450 = vadd.f32 %v2445, %v3314
  %v3451 = vadd.f32 %v2446, %v3319
  %v3452 = vadd.f32 %v2447, %v3322
  %v3453 = vadd.f32 %v2448, %v3327
  %v3454 = vadd.f32 %v2449, %v3330
  %v3455 = vadd.f32 %v2450, %v3335
  %v3456 = vadd.f32 %v2451, %v3338
  %v3457 = vadd.f32 %v2452, %v3343
  %v3458 = vadd.f32 %v2453, %v3346
  %v3459 = vadd.f32 %v2454, %v3351
  %v3460 = vadd.f32 %v2455, %v3354
  %v3461 = vadd.f32 %v2456, %v3359
  %v3462 = vadd.f32 %v2457, %v3362
  %v3463 = vadd.f32 %v2458, %v3367
  %v3464 = vadd.f32 %v2459, %v3370
  %v3465 = vadd.f32 %v2460, %v3375
  %v3466 = vadd.f32 %v2461, %v3378
  %v3467 = vadd.f32 %v2462, %v3383
  %v3468 = vadd.f32 %v2463, %v3386
  %v3469 = vadd.f32 %v2464, %v3391
  %v3470 = vadd.f32 %v2465, %v3394
  %v3471 = vadd.f32 %v2466, %v3399
  %v3472 = vadd.f32 %v2467, %v3402
  %v3473 = vadd.f32 %v2468, %v3407
  %v3474 = vadd.f32 %v2469, %v3410
  %v3475 = vadd.f32 %v2470, %v3415
  %v3476 = vadd.f32 %v2471, %v3418
  %s3477 = scalar_lea.vmem %s2, 144
  %v3478 = vld [vmem:[%s3477] sm:$0xf]
  %v3479 = vld [vmem:[%s3477 + $0x4] sm:$0xf]
  %v3480 = vld [vmem:[%s3477 + $0x8] sm:$0xf]
  %v3481 = vld [vmem:[%s3477 + $0xc] sm:$0xf]
  %v3482 = vld [vmem:[%s3477 + $0x10] sm:$0xf]
  %v3483 = vld [vmem:[%s3477 + $0x14] sm:$0xf]
  %v3484 = vld [vmem:[%s3477 + $0x18] sm:$0xf]
  %v3485 = vld [vmem:[%s3477 + $0x1c] sm:$0xf]
  %v3486 = vld [vmem:[%s3477 + $0x20] sm:$0xf]
  %v3487 = vld [vmem:[%s3477 + $0x24] sm:$0xf]
  %v3488 = vld [vmem:[%s3477 + $0x28] sm:$0xf]
  %v3489 = vld [vmem:[%s3477 + $0x2c] sm:$0xf]
  %v3502 = vunpack.c.l.b16 %v3478
  %v3503 = vunpack.c.l.b16 %v3479
  %v3504 = vunpack.c.l.b16 %v3480
  %v3505 = vunpack.c.l.b16 %v3481
  %v3506 = vunpack.c.l.b16 %v3482
  %v3507 = vunpack.c.l.b16 %v3483
  %v3508 = vunpack.c.l.b16 %v3484
  %v3509 = vunpack.c.l.b16 %v3485
  %v3510 = vunpack.c.l.b16 %v3486
  %v3511 = vunpack.c.l.b16 %v3487
  %v3512 = vunpack.c.l.b16 %v3488
  %v3513 = vunpack.c.l.b16 %v3489
  %v3514 = vpack.c.b16 %v3503, %v3502
  %v3515 = vpack.c.b16 %v3505, %v3504
  %v3516 = vpack.c.b16 %v3507, %v3506
  %v3517 = vpack.c.b16 %v3509, %v3508
  %v3518 = vpack.c.b16 %v3511, %v3510
  %v3519 = vpack.c.b16 %v3513, %v3512
  %3526 = vmatprep.subr.bf16.mxu0 0
  %3527 = vmatpush1.bf16.msra.mxu0 %v3514
  %3528 = vmatprep.subr.bf16.mxu0 0
  %3529 = vmatpush1.bf16.msra.mxu0 %v3515
  %3530 = vmatprep.subr.bf16.mxu0 0
  %3531 = vmatpush1.bf16.msra.mxu0 %v3516
  %3532 = vmatprep.subr.bf16.mxu0 0
  %3533 = vmatpush1.bf16.msra.mxu0 %v3517
  %3534 = vmatprep.subr.bf16.mxu0 0
  %3535 = vmatpush1.bf16.msra.mxu0 %v3518
  %3536 = vmatprep.subr.bf16.mxu0 0
  %3537 = vmatpush1.bf16.msra.mxu0 %v3519
  %3538 = vmatprep.subr.bf16.mxu0 0
  %3539 = vmatpush1.bf16.msra.mxu0 0
  %3540 = vmatprep.subr.bf16.mxu0 0
  %3541 = vmatpush1.bf16.msra.mxu0 0
  %3542 = vmatprep.subr.bf16.mxu0 0
  %3543 = vmatpush1.bf16.msra.mxu0 0
  %3544 = vmatprep.subr.bf16.mxu0 0
  %3545 = vmatpush1.bf16.msra.mxu0 0
  %3546 = vmatprep.subr.bf16.mxu0 0
  %3547 = vmatpush1.bf16.msra.mxu0 0
  %3548 = vmatprep.subr.bf16.mxu0 0
  %3549 = vmatpush1.bf16.msra.mxu0 0
  %3550 = vmatprep.subr.bf16.mxu0 0
  %3551 = vmatpush1.bf16.msra.mxu0 0
  %3552 = vmatprep.subr.bf16.mxu0 0
  %3553 = vmatpush1.bf16.msra.mxu0 0
  %3554 = vmatprep.subr.bf16.mxu0 0
  %3555 = vmatpush1.bf16.msra.mxu0 0
  %3556 = vmatprep.subr.bf16.mxu0 0
  %3557 = vmatpush1.bf16.msra.mxu0 0
  %3558 = vmatprep.mubr.bf16.mxu0 0
  %3559 = vmatmul.mubr.bf16.gmra.mrb[0].mxu0 %v3081
  %v3560 = vpop.f32.mrb[0].mxu0
  %v3561 = vadd.f32 0.0, %v3560
  %v3562 = vpop.f32.mrb[0].mxu0
  %v3563 = vpop.f32.mrb[0].mxu0
  %v3564 = vadd.f32 0.0, %v3563
  %v3565 = vpop.f32.mrb[0].mxu0
  %3566 = vmatprep.mubr.bf16.mxu0 0
  %3567 = vmatmul.mubr.bf16.gmra.mrb[0].mxu0 %v3084
  %v3568 = vpop.f32.mrb[0].mxu0
  %v3569 = vadd.f32 0.0, %v3568
  %v3570 = vpop.f32.mrb[0].mxu0
  %v3571 = vpop.f32.mrb[0].mxu0
  %v3572 = vadd.f32 0.0, %v3571
  %v3573 = vpop.f32.mrb[0].mxu0
  %3574 = vmatprep.mubr.bf16.mxu0 0
  %3575 = vmatmul.mubr.bf16.gmra.mrb[0].mxu0 %v3087
  %v3576 = vpop.f32.mrb[0].mxu0
  %v3577 = vadd.f32 0.0, %v3576
  %v3578 = vpop.f32.mrb[0].mxu0
  %v3579 = vpop.f32.mrb[0].mxu0
  %v3580 = vadd.f32 0.0, %v3579
  %v3581 = vpop.f32.mrb[0].mxu0
  %3582 = vmatprep.mubr.bf16.mxu0 0
  %3583 = vmatmul.mubr.bf16.gmra.mrb[0].mxu0 %v3090
  %v3584 = vpop.f32.mrb[0].mxu0
  %v3585 = vadd.f32 0.0, %v3584
  %v3586 = vpop.f32.mrb[0].mxu0
  %v3587 = vpop.f32.mrb[0].mxu0
  %v3588 = vadd.f32 0.0, %v3587
  %v3589 = vpop.f32.mrb[0].mxu0
  %3590 = vmatprep.mubr.bf16.mxu0 0
  %3591 = vmatmul.mubr.bf16.gmra.mrb[0].mxu0 %v3093
  %v3592 = vpop.f32.mrb[0].mxu0
  %v3593 = vadd.f32 0.0, %v3592
  %v3594 = vpop.f32.mrb[0].mxu0
  %v3595 = vpop.f32.mrb[0].mxu0
  %v3596 = vadd.f32 0.0, %v3595
  %v3597 = vpop.f32.mrb[0].mxu0
  %3598 = vmatprep.mubr.bf16.mxu0 0
  %3599 = vmatmul.mubr.bf16.gmra.mrb[0].mxu0 %v3096
  %v3600 = vpop.f32.mrb[0].mxu0
  %v3601 = vadd.f32 0.0, %v3600
  %v3602 = vpop.f32.mrb[0].mxu0
  %v3603 = vpop.f32.mrb[0].mxu0
  %v3604 = vadd.f32 0.0, %v3603
  %v3605 = vpop.f32.mrb[0].mxu0
  %3606 = vmatprep.mubr.bf16.mxu0 0
  %3607 = vmatmul.mubr.bf16.gmra.mrb[0].mxu0 %v3099
  %v3608 = vpop.f32.mrb[0].mxu0
  %v3609 = vadd.f32 0.0, %v3608
  %v3610 = vpop.f32.mrb[0].mxu0
  %v3611 = vpop.f32.mrb[0].mxu0
  %v3612 = vadd.f32 0.0, %v3611
  %v3613 = vpop.f32.mrb[0].mxu0
  %3614 = vmatprep.mubr.bf16.mxu0 0
  %3615 = vmatmul.mubr.bf16.gmra.mrb[0].mxu0 %v3102
  %v3616 = vpop.f32.mrb[0].mxu0
  %v3617 = vadd.f32 0.0, %v3616
  %v3618 = vpop.f32.mrb[0].mxu0
  %v3619 = vpop.f32.mrb[0].mxu0
  %v3620 = vadd.f32 0.0, %v3619
  %v3621 = vpop.f32.mrb[0].mxu0
  %3622 = vmatprep.mubr.bf16.mxu0 0
  %3623 = vmatmul.mubr.bf16.gmra.mrb[0].mxu0 %v3105
  %v3624 = vpop.f32.mrb[0].mxu0
  %v3625 = vadd.f32 0.0, %v3624
  %v3626 = vpop.f32.mrb[0].mxu0
  %v3627 = vpop.f32.mrb[0].mxu0
  %v3628 = vadd.f32 0.0, %v3627
  %v3629 = vpop.f32.mrb[0].mxu0
  %3630 = vmatprep.mubr.bf16.mxu0 0
  %3631 = vmatmul.mubr.bf16.gmra.mrb[0].mxu0 %v3108
  %v3632 = vpop.f32.mrb[0].mxu0
  %v3633 = vadd.f32 0.0, %v3632
  %v3634 = vpop.f32.mrb[0].mxu0
  %v3635 = vpop.f32.mrb[0].mxu0
  %v3636 = vadd.f32 0.0, %v3635
  %v3637 = vpop.f32.mrb[0].mxu0
  %3638 = vmatprep.mubr.bf16.mxu0 0
  %3639 = vmatmul.mubr.bf16.gmra.mrb[0].mxu0 %v3111
  %v3640 = vpop.f32.mrb[0].mxu0
  %v3641 = vadd.f32 0.0, %v3640
  %v3642 = vpop.f32.mrb[0].mxu0
  %v3643 = vpop.f32.mrb[0].mxu0
  %v3644 = vadd.f32 0.0, %v3643
  %v3645 = vpop.f32.mrb[0].mxu0
  %3646 = vmatprep.mubr.bf16.mxu0 0
  %3647 = vmatmul.mubr.bf16.gmra.mrb[0].mxu0 %v3114
  %v3648 = vpop.f32.mrb[0].mxu0
  %v3649 = vadd.f32 0.0, %v3648
  %v3650 = vpop.f32.mrb[0].mxu0
  %v3651 = vpop.f32.mrb[0].mxu0
  %v3652 = vadd.f32 0.0, %v3651
  %v3653 = vpop.f32.mrb[0].mxu0
  %3654 = vmatprep.mubr.bf16.mxu0 0
  %3655 = vmatmul.mubr.bf16.gmra.mrb[0].mxu0 %v3117
  %v3656 = vpop.f32.mrb[0].mxu0
  %v3657 = vadd.f32 0.0, %v3656
  %v3658 = vpop.f32.mrb[0].mxu0
  %v3659 = vpop.f32.mrb[0].mxu0
  %v3660 = vadd.f32 0.0, %v3659
  %v3661 = vpop.f32.mrb[0].mxu0
  %3662 = vmatprep.mubr.bf16.mxu0 0
  %3663 = vmatmul.mubr.bf16.gmra.mrb[0].mxu0 %v3120
  %v3664 = vpop.f32.mrb[0].mxu0
  %v3665 = vadd.f32 0.0, %v3664
  %v3666 = vpop.f32.mrb[0].mxu0
  %v3667 = vpop.f32.mrb[0].mxu0
  %v3668 = vadd.f32 0.0, %v3667
  %v3669 = vpop.f32.mrb[0].mxu0
  %3670 = vmatprep.mubr.bf16.mxu0 0
  %3671 = vmatmul.mubr.bf16.gmra.mrb[0].mxu0 %v3123
  %v3672 = vpop.f32.mrb[0].mxu0
  %v3673 = vadd.f32 0.0, %v3672
  %v3674 = vpop.f32.mrb[0].mxu0
  %v3675 = vpop.f32.mrb[0].mxu0
  %v3676 = vadd.f32 0.0, %v3675
  %v3677 = vpop.f32.mrb[0].mxu0
  %3678 = vmatprep.mubr.bf16.mxu0 0
  %3679 = vmatmul.mubr.bf16.gmra.mrb[0].mxu0 %v3126
  %v3680 = vpop.f32.mrb[0].mxu0
  %v3681 = vadd.f32 0.0, %v3680
  %v3682 = vpop.f32.mrb[0].mxu0
  %v3683 = vpop.f32.mrb[0].mxu0
  %v3684 = vadd.f32 0.0, %v3683
  %v3685 = vpop.f32.mrb[0].mxu0
  %3686 = vmatprep.mubr.bf16.mxu0 0
  %3687 = vmatmul.mubr.bf16.gmra.mrb[0].mxu0 %v3129
  %v3688 = vpop.f32.mrb[0].mxu0
  %v3689 = vadd.f32 0.0, %v3688
  %v3690 = vpop.f32.mrb[0].mxu0
  %v3691 = vpop.f32.mrb[0].mxu0
  %v3692 = vadd.f32 0.0, %v3691
  %v3693 = vpop.f32.mrb[0].mxu0
  %3694 = vmatprep.mubr.bf16.mxu0 0
  %3695 = vmatmul.mubr.bf16.gmra.mrb[0].mxu0 %v3132
  %v3696 = vpop.f32.mrb[0].mxu0
  %v3697 = vadd.f32 0.0, %v3696
  %v3698 = vpop.f32.mrb[0].mxu0
  %v3699 = vpop.f32.mrb[0].mxu0
  %v3700 = vadd.f32 0.0, %v3699
  %v3701 = vpop.f32.mrb[0].mxu0
  %3702 = vmatprep.mubr.bf16.mxu0 0
  %3703 = vmatmul.mubr.bf16.gmra.mrb[0].mxu0 %v3135
  %v3704 = vpop.f32.mrb[0].mxu0
  %v3705 = vadd.f32 0.0, %v3704
  %v3706 = vpop.f32.mrb[0].mxu0
  %v3707 = vpop.f32.mrb[0].mxu0
  %v3708 = vadd.f32 0.0, %v3707
  %v3709 = vpop.f32.mrb[0].mxu0
  %3710 = vmatprep.mubr.bf16.mxu0 0
  %3711 = vmatmul.mubr.bf16.gmra.mrb[0].mxu0 %v3138
  %v3712 = vpop.f32.mrb[0].mxu0
  %v3713 = vadd.f32 0.0, %v3712
  %v3714 = vpop.f32.mrb[0].mxu0
  %v3715 = vpop.f32.mrb[0].mxu0
  %v3716 = vadd.f32 0.0, %v3715
  %v3717 = vpop.f32.mrb[0].mxu0
  %3718 = vmatprep.mubr.bf16.mxu0 0
  %3719 = vmatmul.mubr.bf16.gmra.mrb[0].mxu0 %v3141
  %v3720 = vpop.f32.mrb[0].mxu0
  %v3721 = vadd.f32 0.0, %v3720
  %v3722 = vpop.f32.mrb[0].mxu0
  %v3723 = vpop.f32.mrb[0].mxu0
  %v3724 = vadd.f32 0.0, %v3723
  %v3725 = vpop.f32.mrb[0].mxu0
  %3726 = vmatprep.mubr.bf16.mxu0 0
  %3727 = vmatmul.mubr.bf16.gmra.mrb[0].mxu0 %v3144
  %v3728 = vpop.f32.mrb[0].mxu0
  %v3729 = vadd.f32 0.0, %v3728
  %v3730 = vpop.f32.mrb[0].mxu0
  %v3731 = vpop.f32.mrb[0].mxu0
  %v3732 = vadd.f32 0.0, %v3731
  %v3733 = vpop.f32.mrb[0].mxu0
  %3734 = vmatprep.mubr.bf16.mxu0 0
  %3735 = vmatmul.mubr.bf16.gmra.mrb[0].mxu0 %v3147
  %v3736 = vpop.f32.mrb[0].mxu0
  %v3737 = vadd.f32 0.0, %v3736
  %v3738 = vpop.f32.mrb[0].mxu0
  %v3739 = vpop.f32.mrb[0].mxu0
  %v3740 = vadd.f32 0.0, %v3739
  %v3741 = vpop.f32.mrb[0].mxu0
  %3742 = vmatprep.mubr.bf16.mxu0 0
  %3743 = vmatmul.mubr.bf16.gmra.mrb[0].mxu0 %v3150
  %v3744 = vpop.f32.mrb[0].mxu0
  %v3745 = vadd.f32 0.0, %v3744
  %v3746 = vpop.f32.mrb[0].mxu0
  %v3747 = vpop.f32.mrb[0].mxu0
  %v3748 = vadd.f32 0.0, %v3747
  %v3749 = vpop.f32.mrb[0].mxu0
  %3750 = vmatprep.mubr.bf16.mxu0 0
  %3751 = vmatmul.mubr.bf16.gmra.mrb[0].mxu0 %v3153
  %v3752 = vpop.f32.mrb[0].mxu0
  %v3753 = vadd.f32 0.0, %v3752
  %v3754 = vpop.f32.mrb[0].mxu0
  %v3755 = vpop.f32.mrb[0].mxu0
  %v3756 = vadd.f32 0.0, %v3755
  %v3757 = vpop.f32.mrb[0].mxu0
  %3758 = vmatprep.mubr.bf16.mxu0 0
  %3759 = vmatmul.mubr.bf16.gmra.mrb[0].mxu0 %v3156
  %v3760 = vpop.f32.mrb[0].mxu0
  %v3761 = vadd.f32 0.0, %v3760
  %v3762 = vpop.f32.mrb[0].mxu0
  %v3763 = vpop.f32.mrb[0].mxu0
  %v3764 = vadd.f32 0.0, %v3763
  %v3765 = vpop.f32.mrb[0].mxu0
  %3766 = vmatprep.mubr.bf16.mxu0 0
  %3767 = vmatmul.mubr.bf16.gmra.mrb[0].mxu0 %v3159
  %v3768 = vpop.f32.mrb[0].mxu0
  %v3769 = vadd.f32 0.0, %v3768
  %v3770 = vpop.f32.mrb[0].mxu0
  %v3771 = vpop.f32.mrb[0].mxu0
  %v3772 = vadd.f32 0.0, %v3771
  %v3773 = vpop.f32.mrb[0].mxu0
  %3774 = vmatprep.mubr.bf16.mxu0 0
  %3775 = vmatmul.mubr.bf16.gmra.mrb[0].mxu0 %v3162
  %v3776 = vpop.f32.mrb[0].mxu0
  %v3777 = vadd.f32 0.0, %v3776
  %v3778 = vpop.f32.mrb[0].mxu0
  %v3779 = vpop.f32.mrb[0].mxu0
  %v3780 = vadd.f32 0.0, %v3779
  %v3781 = vpop.f32.mrb[0].mxu0
  %3782 = vdwg.mxu0
  %v3783 = vadd.f32 %v2778, %v3561
  %v3784 = vadd.f32 %v2779, %v3564
  %v3785 = vadd.f32 %v2780, %v3569
  %v3786 = vadd.f32 %v2781, %v3572
  %v3787 = vadd.f32 %v2782, %v3577
  %v3788 = vadd.f32 %v2783, %v3580
  %v3789 = vadd.f32 %v2784, %v3585
  %v3790 = vadd.f32 %v2785, %v3588
  %v3791 = vadd.f32 %v2786, %v3593
  %v3792 = vadd.f32 %v2787, %v3596
  %v3793 = vadd.f32 %v2788, %v3601
  %v3794 = vadd.f32 %v2789, %v3604
  %v3795 = vadd.f32 %v2790, %v3609
  %v3796 = vadd.f32 %v2791, %v3612
  %v3797 = vadd.f32 %v2792, %v3617
  %v3798 = vadd.f32 %v2793, %v3620
  %v3799 = vadd.f32 %v2794, %v3625
  %v3800 = vadd.f32 %v2795, %v3628
  %v3801 = vadd.f32 %v2796, %v3633
  %v3802 = vadd.f32 %v2797, %v3636
  %v3803 = vadd.f32 %v2798, %v3641
  %v3804 = vadd.f32 %v2799, %v3644
  %v3805 = vadd.f32 %v2800, %v3649
  %v3806 = vadd.f32 %v2801, %v3652
  %v3807 = vadd.f32 %v2802, %v3657
  %v3808 = vadd.f32 %v2803, %v3660
  %v3809 = vadd.f32 %v2804, %v3665
  %v3810 = vadd.f32 %v2805, %v3668
  %v3811 = vadd.f32 %v2806, %v3673
  %v3812 = vadd.f32 %v2807, %v3676
  %v3813 = vadd.f32 %v2808, %v3681
  %v3814 = vadd.f32 %v2809, %v3684
  %v3815 = vadd.f32 %v2810, %v3689
  %v3816 = vadd.f32 %v2811, %v3692
  %v3817 = vadd.f32 %v2812, %v3697
  %v3818 = vadd.f32 %v2813, %v3700
  %v3819 = vadd.f32 %v2814, %v3705
  %v3820 = vadd.f32 %v2815, %v3708
  %v3821 = vadd.f32 %v2816, %v3713
  %v3822 = vadd.f32 %v2817, %v3716
  %v3823 = vadd.f32 %v2818, %v3721
  %v3824 = vadd.f32 %v2819, %v3724
  %v3825 = vadd.f32 %v2820, %v3729
  %v3826 = vadd.f32 %v2821, %v3732
  %v3827 = vadd.f32 %v2822, %v3737
  %v3828 = vadd.f32 %v2823, %v3740
  %v3829 = vadd.f32 %v2824, %v3745
  %v3830 = vadd.f32 %v2825, %v3748
  %v3831 = vadd.f32 %v2826, %v3753
  %v3832 = vadd.f32 %v2827, %v3756
  %v3833 = vadd.f32 %v2828, %v3761
  %v3834 = vadd.f32 %v2829, %v3764
  %v3835 = vadd.f32 %v2830, %v3769
  %v3836 = vadd.f32 %v2831, %v3772
  %v3837 = vadd.f32 %v2832, %v3777
  %v3838 = vadd.f32 %v2833, %v3780
  %s3839 = scalar_lea.vmem %s0, 32
  %v3840 = vld [vmem:[%s3839] sm:$0xf]
  %v3841 = vld [vmem:[%s3839 + $0x4] sm:$0xf]
  %v3842 = vld [vmem:[%s3839 + $0x8] sm:$0xf]
  %v3843 = vld [vmem:[%s3839 + $0xc] sm:$0xf]
  %v3844 = vld [vmem:[%s3839 + $0x10] sm:$0xf]
  %v3845 = vld [vmem:[%s3839 + $0x14] sm:$0xf]
  %v3846 = vld [vmem:[%s3839 + $0x18] sm:$0xf]
  %v3847 = vld [vmem:[%s3839 + $0x1c] sm:$0xf]
  %v3848 = vld [vmem:[%s3839 + $0x20] sm:$0xf]
  %v3849 = vld [vmem:[%s3839 + $0x24] sm:$0xf]
  %v3850 = vld [vmem:[%s3839 + $0x28] sm:$0xf]
  %v3851 = vld [vmem:[%s3839 + $0x2c] sm:$0xf]
  %v3852 = vld [vmem:[%s3839 + $0x30] sm:$0xf]
  %v3853 = vld [vmem:[%s3839 + $0x34] sm:$0xf]
  %v3854 = vld [vmem:[%s3839 + $0x38] sm:$0xf]
  %v3855 = vld [vmem:[%s3839 + $0x3c] sm:$0xf]
  %v3856 = vld [vmem:[%s3839 + $0x40] sm:$0xf]
  %v3857 = vld [vmem:[%s3839 + $0x44] sm:$0xf]
  %v3858 = vld [vmem:[%s3839 + $0x48] sm:$0xf]
  %v3859 = vld [vmem:[%s3839 + $0x4c] sm:$0xf]
  %v3860 = vld [vmem:[%s3839 + $0x50] sm:$0xf]
  %v3861 = vld [vmem:[%s3839 + $0x54] sm:$0xf]
  %v3862 = vld [vmem:[%s3839 + $0x58] sm:$0xf]
  %v3863 = vld [vmem:[%s3839 + $0x5c] sm:$0xf]
  %v3864 = vld [vmem:[%s3839 + $0x60] sm:$0xf]
  %v3865 = vld [vmem:[%s3839 + $0x64] sm:$0xf]
  %v3866 = vld [vmem:[%s3839 + $0x68] sm:$0xf]
  %v3867 = vld [vmem:[%s3839 + $0x6c] sm:$0xf]
  %v3868 = vld [vmem:[%s3839 + $0x70] sm:$0xf]
  %v3869 = vld [vmem:[%s3839 + $0x74] sm:$0xf]
  %v3870 = vld [vmem:[%s3839 + $0x78] sm:$0xf]
  %v3871 = vld [vmem:[%s3839 + $0x7c] sm:$0xf]
  %v3872 = vld [vmem:[%s3839 + $0x80] sm:$0xf]
  %v3873 = vld [vmem:[%s3839 + $0x84] sm:$0xf]
  %v3874 = vld [vmem:[%s3839 + $0x88] sm:$0xf]
  %v3875 = vld [vmem:[%s3839 + $0x8c] sm:$0xf]
  %v3876 = vld [vmem:[%s3839 + $0x90] sm:$0xf]
  %v3877 = vld [vmem:[%s3839 + $0x94] sm:$0xf]
  %v3878 = vld [vmem:[%s3839 + $0x98] sm:$0xf]
  %v3879 = vld [vmem:[%s3839 + $0x9c] sm:$0xf]
  %v3880 = vld [vmem:[%s3839 + $0xa0] sm:$0xf]
  %v3881 = vld [vmem:[%s3839 + $0xa4] sm:$0xf]
  %v3882 = vld [vmem:[%s3839 + $0xa8] sm:$0xf]
  %v3883 = vld [vmem:[%s3839 + $0xac] sm:$0xf]
  %v3884 = vld [vmem:[%s3839 + $0xb0] sm:$0xf]
  %v3885 = vld [vmem:[%s3839 + $0xb4] sm:$0xf]
  %v3886 = vld [vmem:[%s3839 + $0xb8] sm:$0xf]
  %v3887 = vld [vmem:[%s3839 + $0xbc] sm:$0xf]
  %v3888 = vld [vmem:[%s3839 + $0xc0] sm:$0xf]
  %v3889 = vld [vmem:[%s3839 + $0xc4] sm:$0xf]
  %v3890 = vld [vmem:[%s3839 + $0xc8] sm:$0xf]
  %v3891 = vld [vmem:[%s3839 + $0xcc] sm:$0xf]
  %v3892 = vld [vmem:[%s3839 + $0xd0] sm:$0xf]
  %v3893 = vld [vmem:[%s3839 + $0xd4] sm:$0xf]
  %v3894 = vld [vmem:[%s3839 + $0xd8] sm:$0xf]
  %v3895 = vld [vmem:[%s3839 + $0xdc] sm:$0xf]
  %s3896 = scalar_lea.vmem %s1, 192
  %v3897 = vld [vmem:[%s3896] sm:$0xf]
  %v3898 = vld [vmem:[%s3896 + $0x4] sm:$0xf]
  %v3899 = vld [vmem:[%s3896 + $0x8] sm:$0xf]
  %v3900 = vld [vmem:[%s3896 + $0xc] sm:$0xf]
  %v3901 = vld [vmem:[%s3896 + $0x10] sm:$0xf]
  %v3902 = vld [vmem:[%s3896 + $0x14] sm:$0xf]
  %v3903 = vld [vmem:[%s3896 + $0x18] sm:$0xf]
  %v3904 = vld [vmem:[%s3896 + $0x1c] sm:$0xf]
  %v3905 = vld [vmem:[%s3896 + $0x20] sm:$0xf]
  %v3906 = vld [vmem:[%s3896 + $0x24] sm:$0xf]
  %v3907 = vld [vmem:[%s3896 + $0x28] sm:$0xf]
  %v3908 = vld [vmem:[%s3896 + $0x2c] sm:$0xf]
  %v3965 = vunpack.c.l.b16 %v3840
  %v3966 = vunpack.c.l.b16 %v3841
  %v3967 = vunpack.c.l.b16 %v3842
  %v3968 = vunpack.c.l.b16 %v3843
  %v3969 = vunpack.c.l.b16 %v3844
  %v3970 = vunpack.c.l.b16 %v3845
  %v3971 = vunpack.c.l.b16 %v3846
  %v3972 = vunpack.c.l.b16 %v3847
  %v3973 = vunpack.c.l.b16 %v3848
  %v3974 = vunpack.c.l.b16 %v3849
  %v3975 = vunpack.c.l.b16 %v3850
  %v3976 = vunpack.c.l.b16 %v3851
  %v3977 = vunpack.c.l.b16 %v3852
  %v3978 = vunpack.c.l.b16 %v3853
  %v3979 = vunpack.c.l.b16 %v3854
  %v3980 = vunpack.c.l.b16 %v3855
  %v3981 = vunpack.c.l.b16 %v3856
  %v3982 = vunpack.c.l.b16 %v3857
  %v3983 = vunpack.c.l.b16 %v3858
  %v3984 = vunpack.c.l.b16 %v3859
  %v3985 = vunpack.c.l.b16 %v3860
  %v3986 = vunpack.c.l.b16 %v3861
  %v3987 = vunpack.c.l.b16 %v3862
  %v3988 = vunpack.c.l.b16 %v3863
  %v3989 = vunpack.c.l.b16 %v3864
  %v3990 = vunpack.c.l.b16 %v3865
  %v3991 = vunpack.c.l.b16 %v3866
  %v3992 = vunpack.c.l.b16 %v3867
  %v3993 = vunpack.c.l.b16 %v3868
  %v3994 = vunpack.c.l.b16 %v3869
  %v3995 = vunpack.c.l.b16 %v3870
  %v3996 = vunpack.c.l.b16 %v3871
  %v3997 = vunpack.c.l.b16 %v3872
  %v3998 = vunpack.c.l.b16 %v3873
  %v3999 = vunpack.c.l.b16 %v3874
  %v4000 = vunpack.c.l.b16 %v3875
  %v4001 = vunpack.c.l.b16 %v3876
  %v4002 = vunpack.c.l.b16 %v3877
  %v4003 = vunpack.c.l.b16 %v3878
  %v4004 = vunpack.c.l.b16 %v3879
  %v4005 = vunpack.c.l.b16 %v3880
  %v4006 = vunpack.c.l.b16 %v3881
  %v4007 = vunpack.c.l.b16 %v3882
  %v4008 = vunpack.c.l.b16 %v3883
  %v4009 = vunpack.c.l.b16 %v3884
  %v4010 = vunpack.c.l.b16 %v3885
  %v4011 = vunpack.c.l.b16 %v3886
  %v4012 = vunpack.c.l.b16 %v3887
  %v4013 = vunpack.c.l.b16 %v3888
  %v4014 = vunpack.c.l.b16 %v3889
  %v4015 = vunpack.c.l.b16 %v3890
  %v4016 = vunpack.c.l.b16 %v3891
  %v4017 = vunpack.c.l.b16 %v3892
  %v4018 = vunpack.c.l.b16 %v3893
  %v4019 = vunpack.c.l.b16 %v3894
  %v4020 = vunpack.c.l.b16 %v3895
  %v4021 = vpack.c.b16 %v3966, %v3965
  %v4022 = vpack.c.b16 %v3968, %v3967
  %v4023 = vpack.c.b16 %v3970, %v3969
  %v4024 = vpack.c.b16 %v3972, %v3971
  %v4025 = vpack.c.b16 %v3974, %v3973
  %v4026 = vpack.c.b16 %v3976, %v3975
  %v4027 = vpack.c.b16 %v3978, %v3977
  %v4028 = vpack.c.b16 %v3980, %v3979
  %v4029 = vpack.c.b16 %v3982, %v3981
  %v4030 = vpack.c.b16 %v3984, %v3983
  %v4031 = vpack.c.b16 %v3986, %v3985
  %v4032 = vpack.c.b16 %v3988, %v3987
  %v4033 = vpack.c.b16 %v3990, %v3989
  %v4034 = vpack.c.b16 %v3992, %v3991
  %v4035 = vpack.c.b16 %v3994, %v3993
  %v4036 = vpack.c.b16 %v3996, %v3995
  %v4037 = vpack.c.b16 %v3998, %v3997
  %v4038 = vpack.c.b16 %v4000, %v3999
  %v4039 = vpack.c.b16 %v4002, %v4001
  %v4040 = vpack.c.b16 %v4004, %v4003
  %v4041 = vpack.c.b16 %v4006, %v4005
  %v4042 = vpack.c.b16 %v4008, %v4007
  %v4043 = vpack.c.b16 %v4010, %v4009
  %v4044 = vpack.c.b16 %v4012, %v4011
  %v4045 = vpack.c.b16 %v4014, %v4013
  %v4046 = vpack.c.b16 %v4016, %v4015
  %v4047 = vpack.c.b16 %v4018, %v4017
  %v4048 = vpack.c.b16 %v4020, %v4019
  %v4061 = vunpack.c.l.b16 %v3897
  %v4062 = vunpack.c.l.b16 %v3898
  %v4063 = vunpack.c.l.b16 %v3899
  %v4064 = vunpack.c.l.b16 %v3900
  %v4065 = vunpack.c.l.b16 %v3901
  %v4066 = vunpack.c.l.b16 %v3902
  %v4067 = vunpack.c.l.b16 %v3903
  %v4068 = vunpack.c.l.b16 %v3904
  %v4069 = vunpack.c.l.b16 %v3905
  %v4070 = vunpack.c.l.b16 %v3906
  %v4071 = vunpack.c.l.b16 %v3907
  %v4072 = vunpack.c.l.b16 %v3908
  %v4073 = vpack.c.b16 %v4062, %v4061
  %v4074 = vpack.c.b16 %v4064, %v4063
  %v4075 = vpack.c.b16 %v4066, %v4065
  %v4076 = vpack.c.b16 %v4068, %v4067
  %v4077 = vpack.c.b16 %v4070, %v4069
  %v4078 = vpack.c.b16 %v4072, %v4071
  %v4086 = vsel %vm371, %v4021, 0
  %v4089 = vsel %vm371, %v4022, 0
  %v4092 = vsel %vm371, %v4023, 0
  %v4095 = vsel %vm371, %v4024, 0
  %v4098 = vsel %vm371, %v4025, 0
  %v4101 = vsel %vm371, %v4026, 0
  %v4104 = vsel %vm371, %v4027, 0
  %v4107 = vsel %vm371, %v4028, 0
  %v4110 = vsel %vm371, %v4029, 0
  %v4113 = vsel %vm371, %v4030, 0
  %v4116 = vsel %vm371, %v4031, 0
  %v4119 = vsel %vm371, %v4032, 0
  %v4122 = vsel %vm371, %v4033, 0
  %v4125 = vsel %vm371, %v4034, 0
  %v4128 = vsel %vm371, %v4035, 0
  %v4131 = vsel %vm371, %v4036, 0
  %v4134 = vsel %vm371, %v4037, 0
  %v4137 = vsel %vm371, %v4038, 0
  %v4140 = vsel %vm371, %v4039, 0
  %v4143 = vsel %vm371, %v4040, 0
  %v4146 = vsel %vm371, %v4041, 0
  %v4149 = vsel %vm371, %v4042, 0
  %v4152 = vsel %vm371, %v4043, 0
  %v4155 = vsel %vm371, %v4044, 0
  %v4158 = vsel %vm371, %v4045, 0
  %v4161 = vsel %vm371, %v4046, 0
  %v4164 = vsel %vm371, %v4047, 0
  %v4167 = vsel %vm371, %v4048, 0
  %4169 = vmatprep.subr.bf16.mxu0 0
  %4170 = vmatpush1.bf16.msra.mxu0 %v4073
  %4171 = vmatprep.subr.bf16.mxu0 0
  %4172 = vmatpush1.bf16.msra.mxu0 %v4074
  %4173 = vmatprep.subr.bf16.mxu0 0
  %4174 = vmatpush1.bf16.msra.mxu0 %v4075
  %4175 = vmatprep.subr.bf16.mxu0 0
  %4176 = vmatpush1.bf16.msra.mxu0 %v4076
  %4177 = vmatprep.subr.bf16.mxu0 0
  %4178 = vmatpush1.bf16.msra.mxu0 %v4077
  %4179 = vmatprep.subr.bf16.mxu0 0
  %4180 = vmatpush1.bf16.msra.mxu0 %v4078
  %4181 = vmatprep.subr.bf16.mxu0 0
  %4182 = vmatpush1.bf16.msra.mxu0 0
  %4183 = vmatprep.subr.bf16.mxu0 0
  %4184 = vmatpush1.bf16.msra.mxu0 0
  %4185 = vmatprep.subr.bf16.mxu0 0
  %4186 = vmatpush1.bf16.msra.mxu0 0
  %4187 = vmatprep.subr.bf16.mxu0 0
  %4188 = vmatpush1.bf16.msra.mxu0 0
  %4189 = vmatprep.subr.bf16.mxu0 0
  %4190 = vmatpush1.bf16.msra.mxu0 0
  %4191 = vmatprep.subr.bf16.mxu0 0
  %4192 = vmatpush1.bf16.msra.mxu0 0
  %4193 = vmatprep.subr.bf16.mxu0 0
  %4194 = vmatpush1.bf16.msra.mxu0 0
  %4195 = vmatprep.subr.bf16.mxu0 0
  %4196 = vmatpush1.bf16.msra.mxu0 0
  %4197 = vmatprep.subr.bf16.mxu0 0
  %4198 = vmatpush1.bf16.msra.mxu0 0
  %4199 = vmatprep.subr.bf16.mxu0 0
  %4200 = vmatpush1.bf16.msra.mxu0 0
  %4201 = vmatprep.mubr.bf16.mxu0 0
  %4202 = vmatmul.mubr.bf16.gmra.mrb[0].mxu0 %v4086
  %v4203 = vpop.f32.mrb[0].mxu0
  %v4204 = vadd.f32 0.0, %v4203
  %v4205 = vpop.f32.mrb[0].mxu0
  %v4206 = vpop.f32.mrb[0].mxu0
  %v4207 = vadd.f32 0.0, %v4206
  %v4208 = vpop.f32.mrb[0].mxu0
  %4209 = vmatprep.mubr.bf16.mxu0 0
  %4210 = vmatmul.mubr.bf16.gmra.mrb[0].mxu0 %v4089
  %v4211 = vpop.f32.mrb[0].mxu0
  %v4212 = vadd.f32 0.0, %v4211
  %v4213 = vpop.f32.mrb[0].mxu0
  %v4214 = vpop.f32.mrb[0].mxu0
  %v4215 = vadd.f32 0.0, %v4214
  %v4216 = vpop.f32.mrb[0].mxu0
  %4217 = vmatprep.mubr.bf16.mxu0 0
  %4218 = vmatmul.mubr.bf16.gmra.mrb[0].mxu0 %v4092
  %v4219 = vpop.f32.mrb[0].mxu0
  %v4220 = vadd.f32 0.0, %v4219
  %v4221 = vpop.f32.mrb[0].mxu0
  %v4222 = vpop.f32.mrb[0].mxu0
  %v4223 = vadd.f32 0.0, %v4222
  %v4224 = vpop.f32.mrb[0].mxu0
  %4225 = vmatprep.mubr.bf16.mxu0 0
  %4226 = vmatmul.mubr.bf16.gmra.mrb[0].mxu0 %v4095
  %v4227 = vpop.f32.mrb[0].mxu0
  %v4228 = vadd.f32 0.0, %v4227
  %v4229 = vpop.f32.mrb[0].mxu0
  %v4230 = vpop.f32.mrb[0].mxu0
  %v4231 = vadd.f32 0.0, %v4230
  %v4232 = vpop.f32.mrb[0].mxu0
  %4233 = vmatprep.mubr.bf16.mxu0 0
  %4234 = vmatmul.mubr.bf16.gmra.mrb[0].mxu0 %v4098
  %v4235 = vpop.f32.mrb[0].mxu0
  %v4236 = vadd.f32 0.0, %v4235
  %v4237 = vpop.f32.mrb[0].mxu0
  %v4238 = vpop.f32.mrb[0].mxu0
  %v4239 = vadd.f32 0.0, %v4238
  %v4240 = vpop.f32.mrb[0].mxu0
  %4241 = vmatprep.mubr.bf16.mxu0 0
  %4242 = vmatmul.mubr.bf16.gmra.mrb[0].mxu0 %v4101
  %v4243 = vpop.f32.mrb[0].mxu0
  %v4244 = vadd.f32 0.0, %v4243
  %v4245 = vpop.f32.mrb[0].mxu0
  %v4246 = vpop.f32.mrb[0].mxu0
  %v4247 = vadd.f32 0.0, %v4246
  %v4248 = vpop.f32.mrb[0].mxu0
  %4249 = vmatprep.mubr.bf16.mxu0 0
  %4250 = vmatmul.mubr.bf16.gmra.mrb[0].mxu0 %v4104
  %v4251 = vpop.f32.mrb[0].mxu0
  %v4252 = vadd.f32 0.0, %v4251
  %v4253 = vpop.f32.mrb[0].mxu0
  %v4254 = vpop.f32.mrb[0].mxu0
  %v4255 = vadd.f32 0.0, %v4254
  %v4256 = vpop.f32.mrb[0].mxu0
  %4257 = vmatprep.mubr.bf16.mxu0 0
  %4258 = vmatmul.mubr.bf16.gmra.mrb[0].mxu0 %v4107
  %v4259 = vpop.f32.mrb[0].mxu0
  %v4260 = vadd.f32 0.0, %v4259
  %v4261 = vpop.f32.mrb[0].mxu0
  %v4262 = vpop.f32.mrb[0].mxu0
  %v4263 = vadd.f32 0.0, %v4262
  %v4264 = vpop.f32.mrb[0].mxu0
  %4265 = vmatprep.mubr.bf16.mxu0 0
  %4266 = vmatmul.mubr.bf16.gmra.mrb[0].mxu0 %v4110
  %v4267 = vpop.f32.mrb[0].mxu0
  %v4268 = vadd.f32 0.0, %v4267
  %v4269 = vpop.f32.mrb[0].mxu0
  %v4270 = vpop.f32.mrb[0].mxu0
  %v4271 = vadd.f32 0.0, %v4270
  %v4272 = vpop.f32.mrb[0].mxu0
  %4273 = vmatprep.mubr.bf16.mxu0 0
  %4274 = vmatmul.mubr.bf16.gmra.mrb[0].mxu0 %v4113
  %v4275 = vpop.f32.mrb[0].mxu0
  %v4276 = vadd.f32 0.0, %v4275
  %v4277 = vpop.f32.mrb[0].mxu0
  %v4278 = vpop.f32.mrb[0].mxu0
  %v4279 = vadd.f32 0.0, %v4278
  %v4280 = vpop.f32.mrb[0].mxu0
  %4281 = vmatprep.mubr.bf16.mxu0 0
  %4282 = vmatmul.mubr.bf16.gmra.mrb[0].mxu0 %v4116
  %v4283 = vpop.f32.mrb[0].mxu0
  %v4284 = vadd.f32 0.0, %v4283
  %v4285 = vpop.f32.mrb[0].mxu0
  %v4286 = vpop.f32.mrb[0].mxu0
  %v4287 = vadd.f32 0.0, %v4286
  %v4288 = vpop.f32.mrb[0].mxu0
  %4289 = vmatprep.mubr.bf16.mxu0 0
  %4290 = vmatmul.mubr.bf16.gmra.mrb[0].mxu0 %v4119
  %v4291 = vpop.f32.mrb[0].mxu0
  %v4292 = vadd.f32 0.0, %v4291
  %v4293 = vpop.f32.mrb[0].mxu0
  %v4294 = vpop.f32.mrb[0].mxu0
  %v4295 = vadd.f32 0.0, %v4294
  %v4296 = vpop.f32.mrb[0].mxu0
  %4297 = vmatprep.mubr.bf16.mxu0 0
  %4298 = vmatmul.mubr.bf16.gmra.mrb[0].mxu0 %v4122
  %v4299 = vpop.f32.mrb[0].mxu0
  %v4300 = vadd.f32 0.0, %v4299
  %v4301 = vpop.f32.mrb[0].mxu0
  %v4302 = vpop.f32.mrb[0].mxu0
  %v4303 = vadd.f32 0.0, %v4302
  %v4304 = vpop.f32.mrb[0].mxu0
  %4305 = vmatprep.mubr.bf16.mxu0 0
  %4306 = vmatmul.mubr.bf16.gmra.mrb[0].mxu0 %v4125
  %v4307 = vpop.f32.mrb[0].mxu0
  %v4308 = vadd.f32 0.0, %v4307
  %v4309 = vpop.f32.mrb[0].mxu0
  %v4310 = vpop.f32.mrb[0].mxu0
  %v4311 = vadd.f32 0.0, %v4310
  %v4312 = vpop.f32.mrb[0].mxu0
  %4313 = vmatprep.mubr.bf16.mxu0 0
  %4314 = vmatmul.mubr.bf16.gmra.mrb[0].mxu0 %v4128
  %v4315 = vpop.f32.mrb[0].mxu0
  %v4316 = vadd.f32 0.0, %v4315
  %v4317 = vpop.f32.mrb[0].mxu0
  %v4318 = vpop.f32.mrb[0].mxu0
  %v4319 = vadd.f32 0.0, %v4318
  %v4320 = vpop.f32.mrb[0].mxu0
  %4321 = vmatprep.mubr.bf16.mxu0 0
  %4322 = vmatmul.mubr.bf16.gmra.mrb[0].mxu0 %v4131
  %v4323 = vpop.f32.mrb[0].mxu0
  %v4324 = vadd.f32 0.0, %v4323
  %v4325 = vpop.f32.mrb[0].mxu0
  %v4326 = vpop.f32.mrb[0].mxu0
  %v4327 = vadd.f32 0.0, %v4326
  %v4328 = vpop.f32.mrb[0].mxu0
  %4329 = vmatprep.mubr.bf16.mxu0 0
  %4330 = vmatmul.mubr.bf16.gmra.mrb[0].mxu0 %v4134
  %v4331 = vpop.f32.mrb[0].mxu0
  %v4332 = vadd.f32 0.0, %v4331
  %v4333 = vpop.f32.mrb[0].mxu0
  %v4334 = vpop.f32.mrb[0].mxu0
  %v4335 = vadd.f32 0.0, %v4334
  %v4336 = vpop.f32.mrb[0].mxu0
  %4337 = vmatprep.mubr.bf16.mxu0 0
  %4338 = vmatmul.mubr.bf16.gmra.mrb[0].mxu0 %v4137
  %v4339 = vpop.f32.mrb[0].mxu0
  %v4340 = vadd.f32 0.0, %v4339
  %v4341 = vpop.f32.mrb[0].mxu0
  %v4342 = vpop.f32.mrb[0].mxu0
  %v4343 = vadd.f32 0.0, %v4342
  %v4344 = vpop.f32.mrb[0].mxu0
  %4345 = vmatprep.mubr.bf16.mxu0 0
  %4346 = vmatmul.mubr.bf16.gmra.mrb[0].mxu0 %v4140
  %v4347 = vpop.f32.mrb[0].mxu0
  %v4348 = vadd.f32 0.0, %v4347
  %v4349 = vpop.f32.mrb[0].mxu0
  %v4350 = vpop.f32.mrb[0].mxu0
  %v4351 = vadd.f32 0.0, %v4350
  %v4352 = vpop.f32.mrb[0].mxu0
  %4353 = vmatprep.mubr.bf16.mxu0 0
  %4354 = vmatmul.mubr.bf16.gmra.mrb[0].mxu0 %v4143
  %v4355 = vpop.f32.mrb[0].mxu0
  %v4356 = vadd.f32 0.0, %v4355
  %v4357 = vpop.f32.mrb[0].mxu0
  %v4358 = vpop.f32.mrb[0].mxu0
  %v4359 = vadd.f32 0.0, %v4358
  %v4360 = vpop.f32.mrb[0].mxu0
  %4361 = vmatprep.mubr.bf16.mxu0 0
  %4362 = vmatmul.mubr.bf16.gmra.mrb[0].mxu0 %v4146
  %v4363 = vpop.f32.mrb[0].mxu0
  %v4364 = vadd.f32 0.0, %v4363
  %v4365 = vpop.f32.mrb[0].mxu0
  %v4366 = vpop.f32.mrb[0].mxu0
  %v4367 = vadd.f32 0.0, %v4366
  %v4368 = vpop.f32.mrb[0].mxu0
  %4369 = vmatprep.mubr.bf16.mxu0 0
  %4370 = vmatmul.mubr.bf16.gmra.mrb[0].mxu0 %v4149
  %v4371 = vpop.f32.mrb[0].mxu0
  %v4372 = vadd.f32 0.0, %v4371
  %v4373 = vpop.f32.mrb[0].mxu0
  %v4374 = vpop.f32.mrb[0].mxu0
  %v4375 = vadd.f32 0.0, %v4374
  %v4376 = vpop.f32.mrb[0].mxu0
  %4377 = vmatprep.mubr.bf16.mxu0 0
  %4378 = vmatmul.mubr.bf16.gmra.mrb[0].mxu0 %v4152
  %v4379 = vpop.f32.mrb[0].mxu0
  %v4380 = vadd.f32 0.0, %v4379
  %v4381 = vpop.f32.mrb[0].mxu0
  %v4382 = vpop.f32.mrb[0].mxu0
  %v4383 = vadd.f32 0.0, %v4382
  %v4384 = vpop.f32.mrb[0].mxu0
  %4385 = vmatprep.mubr.bf16.mxu0 0
  %4386 = vmatmul.mubr.bf16.gmra.mrb[0].mxu0 %v4155
  %v4387 = vpop.f32.mrb[0].mxu0
  %v4388 = vadd.f32 0.0, %v4387
  %v4389 = vpop.f32.mrb[0].mxu0
  %v4390 = vpop.f32.mrb[0].mxu0
  %v4391 = vadd.f32 0.0, %v4390
  %v4392 = vpop.f32.mrb[0].mxu0
  %4393 = vmatprep.mubr.bf16.mxu0 0
  %4394 = vmatmul.mubr.bf16.gmra.mrb[0].mxu0 %v4158
  %v4395 = vpop.f32.mrb[0].mxu0
  %v4396 = vadd.f32 0.0, %v4395
  %v4397 = vpop.f32.mrb[0].mxu0
  %v4398 = vpop.f32.mrb[0].mxu0
  %v4399 = vadd.f32 0.0, %v4398
  %v4400 = vpop.f32.mrb[0].mxu0
  %4401 = vmatprep.mubr.bf16.mxu0 0
  %4402 = vmatmul.mubr.bf16.gmra.mrb[0].mxu0 %v4161
  %v4403 = vpop.f32.mrb[0].mxu0
  %v4404 = vadd.f32 0.0, %v4403
  %v4405 = vpop.f32.mrb[0].mxu0
  %v4406 = vpop.f32.mrb[0].mxu0
  %v4407 = vadd.f32 0.0, %v4406
  %v4408 = vpop.f32.mrb[0].mxu0
  %4409 = vmatprep.mubr.bf16.mxu0 0
  %4410 = vmatmul.mubr.bf16.gmra.mrb[0].mxu0 %v4164
  %v4411 = vpop.f32.mrb[0].mxu0
  %v4412 = vadd.f32 0.0, %v4411
  %v4413 = vpop.f32.mrb[0].mxu0
  %v4414 = vpop.f32.mrb[0].mxu0
  %v4415 = vadd.f32 0.0, %v4414
  %v4416 = vpop.f32.mrb[0].mxu0
  %4417 = vmatprep.mubr.bf16.mxu0 0
  %4418 = vmatmul.mubr.bf16.gmra.mrb[0].mxu0 %v4167
  %v4419 = vpop.f32.mrb[0].mxu0
  %v4420 = vadd.f32 0.0, %v4419
  %v4421 = vpop.f32.mrb[0].mxu0
  %v4422 = vpop.f32.mrb[0].mxu0
  %v4423 = vadd.f32 0.0, %v4422
  %v4424 = vpop.f32.mrb[0].mxu0
  %4425 = vdwg.mxu0
  %v4426 = vadd.f32 %v3421, %v4204
  %v4427 = vadd.f32 %v3422, %v4207
  %v4428 = vadd.f32 %v3423, %v4212
  %v4429 = vadd.f32 %v3424, %v4215
  %v4430 = vadd.f32 %v3425, %v4220
  %v4431 = vadd.f32 %v3426, %v4223
  %v4432 = vadd.f32 %v3427, %v4228
  %v4433 = vadd.f32 %v3428, %v4231
  %v4434 = vadd.f32 %v3429, %v4236
  %v4435 = vadd.f32 %v3430, %v4239
  %v4436 = vadd.f32 %v3431, %v4244
  %v4437 = vadd.f32 %v3432, %v4247
  %v4438 = vadd.f32 %v3433, %v4252
  %v4439 = vadd.f32 %v3434, %v4255
  %v4440 = vadd.f32 %v3435, %v4260
  %v4441 = vadd.f32 %v3436, %v4263
  %v4442 = vadd.f32 %v3437, %v4268
  %v4443 = vadd.f32 %v3438, %v4271
  %v4444 = vadd.f32 %v3439, %v4276
  %v4445 = vadd.f32 %v3440, %v4279
  %v4446 = vadd.f32 %v3441, %v4284
  %v4447 = vadd.f32 %v3442, %v4287
  %v4448 = vadd.f32 %v3443, %v4292
  %v4449 = vadd.f32 %v3444, %v4295
  %v4450 = vadd.f32 %v3445, %v4300
  %v4451 = vadd.f32 %v3446, %v4303
  %v4452 = vadd.f32 %v3447, %v4308
  %v4453 = vadd.f32 %v3448, %v4311
  %v4454 = vadd.f32 %v3449, %v4316
  %v4455 = vadd.f32 %v3450, %v4319
  %v4456 = vadd.f32 %v3451, %v4324
  %v4457 = vadd.f32 %v3452, %v4327
  %v4458 = vadd.f32 %v3453, %v4332
  %v4459 = vadd.f32 %v3454, %v4335
  %v4460 = vadd.f32 %v3455, %v4340
  %v4461 = vadd.f32 %v3456, %v4343
  %v4462 = vadd.f32 %v3457, %v4348
  %v4463 = vadd.f32 %v3458, %v4351
  %v4464 = vadd.f32 %v3459, %v4356
  %v4465 = vadd.f32 %v3460, %v4359
  %v4466 = vadd.f32 %v3461, %v4364
  %v4467 = vadd.f32 %v3462, %v4367
  %v4468 = vadd.f32 %v3463, %v4372
  %v4469 = vadd.f32 %v3464, %v4375
  %v4470 = vadd.f32 %v3465, %v4380
  %v4471 = vadd.f32 %v3466, %v4383
  %v4472 = vadd.f32 %v3467, %v4388
  %v4473 = vadd.f32 %v3468, %v4391
  %v4474 = vadd.f32 %v3469, %v4396
  %v4475 = vadd.f32 %v3470, %v4399
  %v4476 = vadd.f32 %v3471, %v4404
  %v4477 = vadd.f32 %v3472, %v4407
  %v4478 = vadd.f32 %v3473, %v4412
  %v4479 = vadd.f32 %v3474, %v4415
  %v4480 = vadd.f32 %v3475, %v4420
  %v4481 = vadd.f32 %v3476, %v4423
  %s4482 = scalar_lea.vmem %s2, 192
  %v4483 = vld [vmem:[%s4482] sm:$0xf]
  %v4484 = vld [vmem:[%s4482 + $0x4] sm:$0xf]
  %v4485 = vld [vmem:[%s4482 + $0x8] sm:$0xf]
  %v4486 = vld [vmem:[%s4482 + $0xc] sm:$0xf]
  %v4487 = vld [vmem:[%s4482 + $0x10] sm:$0xf]
  %v4488 = vld [vmem:[%s4482 + $0x14] sm:$0xf]
  %v4489 = vld [vmem:[%s4482 + $0x18] sm:$0xf]
  %v4490 = vld [vmem:[%s4482 + $0x1c] sm:$0xf]
  %v4491 = vld [vmem:[%s4482 + $0x20] sm:$0xf]
  %v4492 = vld [vmem:[%s4482 + $0x24] sm:$0xf]
  %v4493 = vld [vmem:[%s4482 + $0x28] sm:$0xf]
  %v4494 = vld [vmem:[%s4482 + $0x2c] sm:$0xf]
  %v4507 = vunpack.c.l.b16 %v4483
  %v4508 = vunpack.c.l.b16 %v4484
  %v4509 = vunpack.c.l.b16 %v4485
  %v4510 = vunpack.c.l.b16 %v4486
  %v4511 = vunpack.c.l.b16 %v4487
  %v4512 = vunpack.c.l.b16 %v4488
  %v4513 = vunpack.c.l.b16 %v4489
  %v4514 = vunpack.c.l.b16 %v4490
  %v4515 = vunpack.c.l.b16 %v4491
  %v4516 = vunpack.c.l.b16 %v4492
  %v4517 = vunpack.c.l.b16 %v4493
  %v4518 = vunpack.c.l.b16 %v4494
  %v4519 = vpack.c.b16 %v4508, %v4507
  %v4520 = vpack.c.b16 %v4510, %v4509
  %v4521 = vpack.c.b16 %v4512, %v4511
  %v4522 = vpack.c.b16 %v4514, %v4513
  %v4523 = vpack.c.b16 %v4516, %v4515
  %v4524 = vpack.c.b16 %v4518, %v4517
  %4531 = vmatprep.subr.bf16.mxu0 0
  %4532 = vmatpush1.bf16.msra.mxu0 %v4519
  %4533 = vmatprep.subr.bf16.mxu0 0
  %4534 = vmatpush1.bf16.msra.mxu0 %v4520
  %4535 = vmatprep.subr.bf16.mxu0 0
  %4536 = vmatpush1.bf16.msra.mxu0 %v4521
  %4537 = vmatprep.subr.bf16.mxu0 0
  %4538 = vmatpush1.bf16.msra.mxu0 %v4522
  %4539 = vmatprep.subr.bf16.mxu0 0
  %4540 = vmatpush1.bf16.msra.mxu0 %v4523
  %4541 = vmatprep.subr.bf16.mxu0 0
  %4542 = vmatpush1.bf16.msra.mxu0 %v4524
  %4543 = vmatprep.subr.bf16.mxu0 0
  %4544 = vmatpush1.bf16.msra.mxu0 0
  %4545 = vmatprep.subr.bf16.mxu0 0
  %4546 = vmatpush1.bf16.msra.mxu0 0
  %4547 = vmatprep.subr.bf16.mxu0 0
  %4548 = vmatpush1.bf16.msra.mxu0 0
  %4549 = vmatprep.subr.bf16.mxu0 0
  %4550 = vmatpush1.bf16.msra.mxu0 0
  %4551 = vmatprep.subr.bf16.mxu0 0
  %4552 = vmatpush1.bf16.msra.mxu0 0
  %4553 = vmatprep.subr.bf16.mxu0 0
  %4554 = vmatpush1.bf16.msra.mxu0 0
  %4555 = vmatprep.subr.bf16.mxu0 0
  %4556 = vmatpush1.bf16.msra.mxu0 0
  %4557 = vmatprep.subr.bf16.mxu0 0
  %4558 = vmatpush1.bf16.msra.mxu0 0
  %4559 = vmatprep.subr.bf16.mxu0 0
  %4560 = vmatpush1.bf16.msra.mxu0 0
  %4561 = vmatprep.subr.bf16.mxu0 0
  %4562 = vmatpush1.bf16.msra.mxu0 0
  %4563 = vmatprep.mubr.bf16.mxu0 0
  %4564 = vmatmul.mubr.bf16.gmra.mrb[0].mxu0 %v4086
  %v4565 = vpop.f32.mrb[0].mxu0
  %v4566 = vadd.f32 0.0, %v4565
  %v4567 = vpop.f32.mrb[0].mxu0
  %v4568 = vpop.f32.mrb[0].mxu0
  %v4569 = vadd.f32 0.0, %v4568
  %v4570 = vpop.f32.mrb[0].mxu0
  %4571 = vmatprep.mubr.bf16.mxu0 0
  %4572 = vmatmul.mubr.bf16.gmra.mrb[0].mxu0 %v4089
  %v4573 = vpop.f32.mrb[0].mxu0
  %v4574 = vadd.f32 0.0, %v4573
  %v4575 = vpop.f32.mrb[0].mxu0
  %v4576 = vpop.f32.mrb[0].mxu0
  %v4577 = vadd.f32 0.0, %v4576
  %v4578 = vpop.f32.mrb[0].mxu0
  %4579 = vmatprep.mubr.bf16.mxu0 0
  %4580 = vmatmul.mubr.bf16.gmra.mrb[0].mxu0 %v4092
  %v4581 = vpop.f32.mrb[0].mxu0
  %v4582 = vadd.f32 0.0, %v4581
  %v4583 = vpop.f32.mrb[0].mxu0
  %v4584 = vpop.f32.mrb[0].mxu0
  %v4585 = vadd.f32 0.0, %v4584
  %v4586 = vpop.f32.mrb[0].mxu0
  %4587 = vmatprep.mubr.bf16.mxu0 0
  %4588 = vmatmul.mubr.bf16.gmra.mrb[0].mxu0 %v4095
  %v4589 = vpop.f32.mrb[0].mxu0
  %v4590 = vadd.f32 0.0, %v4589
  %v4591 = vpop.f32.mrb[0].mxu0
  %v4592 = vpop.f32.mrb[0].mxu0
  %v4593 = vadd.f32 0.0, %v4592
  %v4594 = vpop.f32.mrb[0].mxu0
  %4595 = vmatprep.mubr.bf16.mxu0 0
  %4596 = vmatmul.mubr.bf16.gmra.mrb[0].mxu0 %v4098
  %v4597 = vpop.f32.mrb[0].mxu0
  %v4598 = vadd.f32 0.0, %v4597
  %v4599 = vpop.f32.mrb[0].mxu0
  %v4600 = vpop.f32.mrb[0].mxu0
  %v4601 = vadd.f32 0.0, %v4600
  %v4602 = vpop.f32.mrb[0].mxu0
  %4603 = vmatprep.mubr.bf16.mxu0 0
  %4604 = vmatmul.mubr.bf16.gmra.mrb[0].mxu0 %v4101
  %v4605 = vpop.f32.mrb[0].mxu0
  %v4606 = vadd.f32 0.0, %v4605
  %v4607 = vpop.f32.mrb[0].mxu0
  %v4608 = vpop.f32.mrb[0].mxu0
  %v4609 = vadd.f32 0.0, %v4608
  %v4610 = vpop.f32.mrb[0].mxu0
  %4611 = vmatprep.mubr.bf16.mxu0 0
  %4612 = vmatmul.mubr.bf16.gmra.mrb[0].mxu0 %v4104
  %v4613 = vpop.f32.mrb[0].mxu0
  %v4614 = vadd.f32 0.0, %v4613
  %v4615 = vpop.f32.mrb[0].mxu0
  %v4616 = vpop.f32.mrb[0].mxu0
  %v4617 = vadd.f32 0.0, %v4616
  %v4618 = vpop.f32.mrb[0].mxu0
  %4619 = vmatprep.mubr.bf16.mxu0 0
  %4620 = vmatmul.mubr.bf16.gmra.mrb[0].mxu0 %v4107
  %v4621 = vpop.f32.mrb[0].mxu0
  %v4622 = vadd.f32 0.0, %v4621
  %v4623 = vpop.f32.mrb[0].mxu0
  %v4624 = vpop.f32.mrb[0].mxu0
  %v4625 = vadd.f32 0.0, %v4624
  %v4626 = vpop.f32.mrb[0].mxu0
  %4627 = vmatprep.mubr.bf16.mxu0 0
  %4628 = vmatmul.mubr.bf16.gmra.mrb[0].mxu0 %v4110
  %v4629 = vpop.f32.mrb[0].mxu0
  %v4630 = vadd.f32 0.0, %v4629
  %v4631 = vpop.f32.mrb[0].mxu0
  %v4632 = vpop.f32.mrb[0].mxu0
  %v4633 = vadd.f32 0.0, %v4632
  %v4634 = vpop.f32.mrb[0].mxu0
  %4635 = vmatprep.mubr.bf16.mxu0 0
  %4636 = vmatmul.mubr.bf16.gmra.mrb[0].mxu0 %v4113
  %v4637 = vpop.f32.mrb[0].mxu0
  %v4638 = vadd.f32 0.0, %v4637
  %v4639 = vpop.f32.mrb[0].mxu0
  %v4640 = vpop.f32.mrb[0].mxu0
  %v4641 = vadd.f32 0.0, %v4640
  %v4642 = vpop.f32.mrb[0].mxu0
  %4643 = vmatprep.mubr.bf16.mxu0 0
  %4644 = vmatmul.mubr.bf16.gmra.mrb[0].mxu0 %v4116
  %v4645 = vpop.f32.mrb[0].mxu0
  %v4646 = vadd.f32 0.0, %v4645
  %v4647 = vpop.f32.mrb[0].mxu0
  %v4648 = vpop.f32.mrb[0].mxu0
  %v4649 = vadd.f32 0.0, %v4648
  %v4650 = vpop.f32.mrb[0].mxu0
  %4651 = vmatprep.mubr.bf16.mxu0 0
  %4652 = vmatmul.mubr.bf16.gmra.mrb[0].mxu0 %v4119
  %v4653 = vpop.f32.mrb[0].mxu0
  %v4654 = vadd.f32 0.0, %v4653
  %v4655 = vpop.f32.mrb[0].mxu0
  %v4656 = vpop.f32.mrb[0].mxu0
  %v4657 = vadd.f32 0.0, %v4656
  %v4658 = vpop.f32.mrb[0].mxu0
  %4659 = vmatprep.mubr.bf16.mxu0 0
  %4660 = vmatmul.mubr.bf16.gmra.mrb[0].mxu0 %v4122
  %v4661 = vpop.f32.mrb[0].mxu0
  %v4662 = vadd.f32 0.0, %v4661
  %v4663 = vpop.f32.mrb[0].mxu0
  %v4664 = vpop.f32.mrb[0].mxu0
  %v4665 = vadd.f32 0.0, %v4664
  %v4666 = vpop.f32.mrb[0].mxu0
  %4667 = vmatprep.mubr.bf16.mxu0 0
  %4668 = vmatmul.mubr.bf16.gmra.mrb[0].mxu0 %v4125
  %v4669 = vpop.f32.mrb[0].mxu0
  %v4670 = vadd.f32 0.0, %v4669
  %v4671 = vpop.f32.mrb[0].mxu0
  %v4672 = vpop.f32.mrb[0].mxu0
  %v4673 = vadd.f32 0.0, %v4672
  %v4674 = vpop.f32.mrb[0].mxu0
  %4675 = vmatprep.mubr.bf16.mxu0 0
  %4676 = vmatmul.mubr.bf16.gmra.mrb[0].mxu0 %v4128
  %v4677 = vpop.f32.mrb[0].mxu0
  %v4678 = vadd.f32 0.0, %v4677
  %v4679 = vpop.f32.mrb[0].mxu0
  %v4680 = vpop.f32.mrb[0].mxu0
  %v4681 = vadd.f32 0.0, %v4680
  %v4682 = vpop.f32.mrb[0].mxu0
  %4683 = vmatprep.mubr.bf16.mxu0 0
  %4684 = vmatmul.mubr.bf16.gmra.mrb[0].mxu0 %v4131
  %v4685 = vpop.f32.mrb[0].mxu0
  %v4686 = vadd.f32 0.0, %v4685
  %v4687 = vpop.f32.mrb[0].mxu0
  %v4688 = vpop.f32.mrb[0].mxu0
  %v4689 = vadd.f32 0.0, %v4688
  %v4690 = vpop.f32.mrb[0].mxu0
  %4691 = vmatprep.mubr.bf16.mxu0 0
  %4692 = vmatmul.mubr.bf16.gmra.mrb[0].mxu0 %v4134
  %v4693 = vpop.f32.mrb[0].mxu0
  %v4694 = vadd.f32 0.0, %v4693
  %v4695 = vpop.f32.mrb[0].mxu0
  %v4696 = vpop.f32.mrb[0].mxu0
  %v4697 = vadd.f32 0.0, %v4696
  %v4698 = vpop.f32.mrb[0].mxu0
  %4699 = vmatprep.mubr.bf16.mxu0 0
  %4700 = vmatmul.mubr.bf16.gmra.mrb[0].mxu0 %v4137
  %v4701 = vpop.f32.mrb[0].mxu0
  %v4702 = vadd.f32 0.0, %v4701
  %v4703 = vpop.f32.mrb[0].mxu0
  %v4704 = vpop.f32.mrb[0].mxu0
  %v4705 = vadd.f32 0.0, %v4704
  %v4706 = vpop.f32.mrb[0].mxu0
  %4707 = vmatprep.mubr.bf16.mxu0 0
  %4708 = vmatmul.mubr.bf16.gmra.mrb[0].mxu0 %v4140
  %v4709 = vpop.f32.mrb[0].mxu0
  %v4710 = vadd.f32 0.0, %v4709
  %v4711 = vpop.f32.mrb[0].mxu0
  %v4712 = vpop.f32.mrb[0].mxu0
  %v4713 = vadd.f32 0.0, %v4712
  %v4714 = vpop.f32.mrb[0].mxu0
  %4715 = vmatprep.mubr.bf16.mxu0 0
  %4716 = vmatmul.mubr.bf16.gmra.mrb[0].mxu0 %v4143
  %v4717 = vpop.f32.mrb[0].mxu0
  %v4718 = vadd.f32 0.0, %v4717
  %v4719 = vpop.f32.mrb[0].mxu0
  %v4720 = vpop.f32.mrb[0].mxu0
  %v4721 = vadd.f32 0.0, %v4720
  %v4722 = vpop.f32.mrb[0].mxu0
  %4723 = vmatprep.mubr.bf16.mxu0 0
  %4724 = vmatmul.mubr.bf16.gmra.mrb[0].mxu0 %v4146
  %v4725 = vpop.f32.mrb[0].mxu0
  %v4726 = vadd.f32 0.0, %v4725
  %v4727 = vpop.f32.mrb[0].mxu0
  %v4728 = vpop.f32.mrb[0].mxu0
  %v4729 = vadd.f32 0.0, %v4728
  %v4730 = vpop.f32.mrb[0].mxu0
  %4731 = vmatprep.mubr.bf16.mxu0 0
  %4732 = vmatmul.mubr.bf16.gmra.mrb[0].mxu0 %v4149
  %v4733 = vpop.f32.mrb[0].mxu0
  %v4734 = vadd.f32 0.0, %v4733
  %v4735 = vpop.f32.mrb[0].mxu0
  %v4736 = vpop.f32.mrb[0].mxu0
  %v4737 = vadd.f32 0.0, %v4736
  %v4738 = vpop.f32.mrb[0].mxu0
  %4739 = vmatprep.mubr.bf16.mxu0 0
  %4740 = vmatmul.mubr.bf16.gmra.mrb[0].mxu0 %v4152
  %v4741 = vpop.f32.mrb[0].mxu0
  %v4742 = vadd.f32 0.0, %v4741
  %v4743 = vpop.f32.mrb[0].mxu0
  %v4744 = vpop.f32.mrb[0].mxu0
  %v4745 = vadd.f32 0.0, %v4744
  %v4746 = vpop.f32.mrb[0].mxu0
  %4747 = vmatprep.mubr.bf16.mxu0 0
  %4748 = vmatmul.mubr.bf16.gmra.mrb[0].mxu0 %v4155
  %v4749 = vpop.f32.mrb[0].mxu0
  %v4750 = vadd.f32 0.0, %v4749
  %v4751 = vpop.f32.mrb[0].mxu0
  %v4752 = vpop.f32.mrb[0].mxu0
  %v4753 = vadd.f32 0.0, %v4752
  %v4754 = vpop.f32.mrb[0].mxu0
  %4755 = vmatprep.mubr.bf16.mxu0 0
  %4756 = vmatmul.mubr.bf16.gmra.mrb[0].mxu0 %v4158
  %v4757 = vpop.f32.mrb[0].mxu0
  %v4758 = vadd.f32 0.0, %v4757
  %v4759 = vpop.f32.mrb[0].mxu0
  %v4760 = vpop.f32.mrb[0].mxu0
  %v4761 = vadd.f32 0.0, %v4760
  %v4762 = vpop.f32.mrb[0].mxu0
  %4763 = vmatprep.mubr.bf16.mxu0 0
  %4764 = vmatmul.mubr.bf16.gmra.mrb[0].mxu0 %v4161
  %v4765 = vpop.f32.mrb[0].mxu0
  %v4766 = vadd.f32 0.0, %v4765
  %v4767 = vpop.f32.mrb[0].mxu0
  %v4768 = vpop.f32.mrb[0].mxu0
  %v4769 = vadd.f32 0.0, %v4768
  %v4770 = vpop.f32.mrb[0].mxu0
  %4771 = vmatprep.mubr.bf16.mxu0 0
  %4772 = vmatmul.mubr.bf16.gmra.mrb[0].mxu0 %v4164
  %v4773 = vpop.f32.mrb[0].mxu0
  %v4774 = vadd.f32 0.0, %v4773
  %v4775 = vpop.f32.mrb[0].mxu0
  %v4776 = vpop.f32.mrb[0].mxu0
  %v4777 = vadd.f32 0.0, %v4776
  %v4778 = vpop.f32.mrb[0].mxu0
  %4779 = vmatprep.mubr.bf16.mxu0 0
  %4780 = vmatmul.mubr.bf16.gmra.mrb[0].mxu0 %v4167
  %v4781 = vpop.f32.mrb[0].mxu0
  %v4782 = vadd.f32 0.0, %v4781
  %v4783 = vpop.f32.mrb[0].mxu0
  %v4784 = vpop.f32.mrb[0].mxu0
  %v4785 = vadd.f32 0.0, %v4784
  %v4786 = vpop.f32.mrb[0].mxu0
  %4787 = vdwg.mxu0
  %v4788 = vadd.f32 %v3783, %v4566
  %v4789 = vadd.f32 %v3784, %v4569
  %v4790 = vadd.f32 %v3785, %v4574
  %v4791 = vadd.f32 %v3786, %v4577
  %v4792 = vadd.f32 %v3787, %v4582
  %v4793 = vadd.f32 %v3788, %v4585
  %v4794 = vadd.f32 %v3789, %v4590
  %v4795 = vadd.f32 %v3790, %v4593
  %v4796 = vadd.f32 %v3791, %v4598
  %v4797 = vadd.f32 %v3792, %v4601
  %v4798 = vadd.f32 %v3793, %v4606
  %v4799 = vadd.f32 %v3794, %v4609
  %v4800 = vadd.f32 %v3795, %v4614
  %v4801 = vadd.f32 %v3796, %v4617
  %v4802 = vadd.f32 %v3797, %v4622
  %v4803 = vadd.f32 %v3798, %v4625
  %v4804 = vadd.f32 %v3799, %v4630
  %v4805 = vadd.f32 %v3800, %v4633
  %v4806 = vadd.f32 %v3801, %v4638
  %v4807 = vadd.f32 %v3802, %v4641
  %v4808 = vadd.f32 %v3803, %v4646
  %v4809 = vadd.f32 %v3804, %v4649
  %v4810 = vadd.f32 %v3805, %v4654
  %v4811 = vadd.f32 %v3806, %v4657
  %v4812 = vadd.f32 %v3807, %v4662
  %v4813 = vadd.f32 %v3808, %v4665
  %v4814 = vadd.f32 %v3809, %v4670
  %v4815 = vadd.f32 %v3810, %v4673
  %v4816 = vadd.f32 %v3811, %v4678
  %v4817 = vadd.f32 %v3812, %v4681
  %v4818 = vadd.f32 %v3813, %v4686
  %v4819 = vadd.f32 %v3814, %v4689
  %v4820 = vadd.f32 %v3815, %v4694
  %v4821 = vadd.f32 %v3816, %v4697
  %v4822 = vadd.f32 %v3817, %v4702
  %v4823 = vadd.f32 %v3818, %v4705
  %v4824 = vadd.f32 %v3819, %v4710
  %v4825 = vadd.f32 %v3820, %v4713
  %v4826 = vadd.f32 %v3821, %v4718
  %v4827 = vadd.f32 %v3822, %v4721
  %v4828 = vadd.f32 %v3823, %v4726
  %v4829 = vadd.f32 %v3824, %v4729
  %v4830 = vadd.f32 %v3825, %v4734
  %v4831 = vadd.f32 %v3826, %v4737
  %v4832 = vadd.f32 %v3827, %v4742
  %v4833 = vadd.f32 %v3828, %v4745
  %v4834 = vadd.f32 %v3829, %v4750
  %v4835 = vadd.f32 %v3830, %v4753
  %v4836 = vadd.f32 %v3831, %v4758
  %v4837 = vadd.f32 %v3832, %v4761
  %v4838 = vadd.f32 %v3833, %v4766
  %v4839 = vadd.f32 %v3834, %v4769
  %v4840 = vadd.f32 %v3835, %v4774
  %v4841 = vadd.f32 %v3836, %v4777
  %v4842 = vadd.f32 %v3837, %v4782
  %v4843 = vadd.f32 %v3838, %v4785
  %v4844 = vmax.f32 %v4426, %v4428
  %v4845 = vmax.f32 %v4427, %v4429
  %v4846 = vmax.f32 %v4430, %v4432
  %v4847 = vmax.f32 %v4431, %v4433
  %v4848 = vmax.f32 %v4434, %v4436
  %v4849 = vmax.f32 %v4435, %v4437
  %v4850 = vmax.f32 %v4438, %v4440
  %v4851 = vmax.f32 %v4439, %v4441
  %v4852 = vmax.f32 %v4442, %v4444
  %v4853 = vmax.f32 %v4443, %v4445
  %v4854 = vmax.f32 %v4446, %v4448
  %v4855 = vmax.f32 %v4447, %v4449
  %v4856 = vmax.f32 %v4450, %v4452
  %v4857 = vmax.f32 %v4451, %v4453
  %v4858 = vmax.f32 %v4454, %v4456
  %v4859 = vmax.f32 %v4455, %v4457
  %v4860 = vmax.f32 %v4458, %v4460
  %v4861 = vmax.f32 %v4459, %v4461
  %v4862 = vmax.f32 %v4462, %v4464
  %v4863 = vmax.f32 %v4463, %v4465
  %v4864 = vmax.f32 %v4466, %v4468
  %v4865 = vmax.f32 %v4467, %v4469
  %v4866 = vmax.f32 %v4470, %v4472
  %v4867 = vmax.f32 %v4471, %v4473
  %v4868 = vmax.f32 %v4474, %v4476
  %v4869 = vmax.f32 %v4475, %v4477
  %v4870 = vmax.f32 %v4478, %v4480
  %v4871 = vmax.f32 %v4479, %v4481
  %v4872 = vmax.f32 %v4788, %v4790
  %v4873 = vmax.f32 %v4789, %v4791
  %v4874 = vmax.f32 %v4792, %v4794
  %v4875 = vmax.f32 %v4793, %v4795
  %v4876 = vmax.f32 %v4796, %v4798
  %v4877 = vmax.f32 %v4797, %v4799
  %v4878 = vmax.f32 %v4800, %v4802
  %v4879 = vmax.f32 %v4801, %v4803
  %v4880 = vmax.f32 %v4804, %v4806
  %v4881 = vmax.f32 %v4805, %v4807
  %v4882 = vmax.f32 %v4808, %v4810
  %v4883 = vmax.f32 %v4809, %v4811
  %v4884 = vmax.f32 %v4812, %v4814
  %v4885 = vmax.f32 %v4813, %v4815
  %v4886 = vmax.f32 %v4816, %v4818
  %v4887 = vmax.f32 %v4817, %v4819
  %v4888 = vmax.f32 %v4820, %v4822
  %v4889 = vmax.f32 %v4821, %v4823
  %v4890 = vmax.f32 %v4824, %v4826
  %v4891 = vmax.f32 %v4825, %v4827
  %v4892 = vmax.f32 %v4828, %v4830
  %v4893 = vmax.f32 %v4829, %v4831
  %v4894 = vmax.f32 %v4832, %v4834
  %v4895 = vmax.f32 %v4833, %v4835
  %v4896 = vmax.f32 %v4836, %v4838
  %v4897 = vmax.f32 %v4837, %v4839
  %v4898 = vmax.f32 %v4840, %v4842
  %v4899 = vmax.f32 %v4841, %v4843
  %v4900 = vmax.f32 %v4844, %v4872
  %v4901 = vmax.f32 %v4845, %v4873
  %v4902 = vmax.f32 %v4846, %v4874
  %v4903 = vmax.f32 %v4847, %v4875
  %v4904 = vmax.f32 %v4848, %v4876
  %v4905 = vmax.f32 %v4849, %v4877
  %v4906 = vmax.f32 %v4850, %v4878
  %v4907 = vmax.f32 %v4851, %v4879
  %v4908 = vmax.f32 %v4852, %v4880
  %v4909 = vmax.f32 %v4853, %v4881
  %v4910 = vmax.f32 %v4854, %v4882
  %v4911 = vmax.f32 %v4855, %v4883
  %v4912 = vmax.f32 %v4856, %v4884
  %v4913 = vmax.f32 %v4857, %v4885
  %v4914 = vmax.f32 %v4858, %v4886
  %v4915 = vmax.f32 %v4859, %v4887
  %v4916 = vmax.f32 %v4860, %v4888
  %v4917 = vmax.f32 %v4861, %v4889
  %v4918 = vmax.f32 %v4862, %v4890
  %v4919 = vmax.f32 %v4863, %v4891
  %v4920 = vmax.f32 %v4864, %v4892
  %v4921 = vmax.f32 %v4865, %v4893
  %v4922 = vmax.f32 %v4866, %v4894
  %v4923 = vmax.f32 %v4867, %v4895
  %v4924 = vmax.f32 %v4868, %v4896
  %v4925 = vmax.f32 %v4869, %v4897
  %v4926 = vmax.f32 %v4870, %v4898
  %v4927 = vmax.f32 %v4871, %v4899
  %v4928 = vld [vmem:[%s3] sm:$0x1]
  %v4930 = vlaneseq
  %v4931 = vshrl.u32 %v4930, 7
  %v4932 = vsub.s32 0, %v4931
  %v4933 = vrot.slane %v4928, %v4932
  %v4935 = vadd.f32 %v4900, %v4933
  %v4936 = vadd.f32 %v4901, %v4933
  %v4937 = vadd.f32 %v4902, %v4933
  %v4938 = vadd.f32 %v4903, %v4933
  %v4939 = vadd.f32 %v4904, %v4933
  %v4940 = vadd.f32 %v4905, %v4933
  %v4941 = vadd.f32 %v4906, %v4933
  %v4942 = vadd.f32 %v4907, %v4933
  %v4943 = vadd.f32 %v4908, %v4933
  %v4944 = vadd.f32 %v4909, %v4933
  %v4945 = vadd.f32 %v4910, %v4933
  %v4946 = vadd.f32 %v4911, %v4933
  %v4947 = vadd.f32 %v4912, %v4933
  %v4948 = vadd.f32 %v4913, %v4933
  %v4949 = vadd.f32 %v4914, %v4933
  %v4950 = vadd.f32 %v4915, %v4933
  %v4951 = vadd.f32 %v4916, %v4933
  %v4952 = vadd.f32 %v4917, %v4933
  %v4953 = vadd.f32 %v4918, %v4933
  %v4954 = vadd.f32 %v4919, %v4933
  %v4955 = vadd.f32 %v4920, %v4933
  %v4956 = vadd.f32 %v4921, %v4933
  %v4957 = vadd.f32 %v4922, %v4933
  %v4958 = vadd.f32 %v4923, %v4933
  %v4959 = vadd.f32 %v4924, %v4933
  %v4960 = vadd.f32 %v4925, %v4933
  %v4961 = vadd.f32 %v4926, %v4933
  %v4962 = vadd.f32 %v4927, %v4933
  %v4963 = vpack.c.bf16 %v4936, %v4935
  %v4964 = vpack.c.bf16 %v4938, %v4937
  %v4965 = vpack.c.bf16 %v4940, %v4939
  %v4966 = vpack.c.bf16 %v4942, %v4941
  %v4967 = vpack.c.bf16 %v4944, %v4943
  %v4968 = vpack.c.bf16 %v4946, %v4945
  %v4969 = vpack.c.bf16 %v4948, %v4947
  %v4970 = vpack.c.bf16 %v4950, %v4949
  %v4971 = vpack.c.bf16 %v4952, %v4951
  %v4972 = vpack.c.bf16 %v4954, %v4953
  %v4973 = vpack.c.bf16 %v4956, %v4955
  %v4974 = vpack.c.bf16 %v4958, %v4957
  %v4975 = vpack.c.bf16 %v4960, %v4959
  %v4976 = vpack.c.bf16 %v4962, %v4961
  %v4977 = vld [vmem:[%s4] sm:$0xf]
  %v4978 = vld [vmem:[%s4 + $0x4] sm:$0xf]
  %v4979 = vld [vmem:[%s4 + $0x8] sm:$0xf]
  %v4980 = vld [vmem:[%s4 + $0xc] sm:$0xf]
  %v4981 = vld [vmem:[%s4 + $0x10] sm:$0xf]
  %v4982 = vld [vmem:[%s4 + $0x14] sm:$0xf]
  %v4983 = vld [vmem:[%s4 + $0x18] sm:$0xf]
  %v4984 = vld [vmem:[%s4 + $0x1c] sm:$0xf]
  %v4985 = vld [vmem:[%s4 + $0x20] sm:$0xf]
  %v4986 = vld [vmem:[%s4 + $0x24] sm:$0xf]
  %v4987 = vld [vmem:[%s4 + $0x28] sm:$0x3]
  %v4988 = vld [vmem:[%s5] sm:$0xf]
  %v4989 = vld [vmem:[%s5 + $0x4] sm:$0xf]
  %v4990 = vld [vmem:[%s5 + $0x8] sm:$0xf]
  %v4991 = vld [vmem:[%s5 + $0xc] sm:$0xf]
  %v4992 = vld [vmem:[%s5 + $0x10] sm:$0xf]
  %v4993 = vld [vmem:[%s5 + $0x14] sm:$0xf]
  %v4994 = vld [vmem:[%s5 + $0x18] sm:$0xf]
  %v4995 = vld [vmem:[%s5 + $0x1c] sm:$0xf]
  %v4996 = vld [vmem:[%s5 + $0x20] sm:$0xf]
  %v4997 = vld [vmem:[%s5 + $0x24] sm:$0xf]
  %v4998 = vld [vmem:[%s5 + $0x28] sm:$0x3]
  %s4999 = scalar_lea.vmem %s4, 44
  %v5000 = vld [vmem:[%s4999] sm:$0xf]
  %v5001 = vld [vmem:[%s4999 + $0x4] sm:$0xf]
  %v5002 = vld [vmem:[%s4999 + $0x8] sm:$0xf]
  %v5003 = vld [vmem:[%s4999 + $0xc] sm:$0xf]
  %v5004 = vld [vmem:[%s4999 + $0x10] sm:$0xf]
  %v5005 = vld [vmem:[%s4999 + $0x14] sm:$0xf]
  %v5006 = vld [vmem:[%s4999 + $0x18] sm:$0xf]
  %v5007 = vld [vmem:[%s4999 + $0x1c] sm:$0xf]
  %v5008 = vld [vmem:[%s4999 + $0x20] sm:$0xf]
  %v5009 = vld [vmem:[%s4999 + $0x24] sm:$0xf]
  %v5010 = vld [vmem:[%s4999 + $0x28] sm:$0x3]
  %v5022 = vunpack.c.l.b16 %v5000
  %v5023 = vunpack.c.l.b16 %v5001
  %v5024 = vunpack.c.l.b16 %v5002
  %v5025 = vunpack.c.l.b16 %v5003
  %v5026 = vunpack.c.l.b16 %v5004
  %v5027 = vunpack.c.l.b16 %v5005
  %v5028 = vunpack.c.l.b16 %v5006
  %v5029 = vunpack.c.l.b16 %v5007
  %v5030 = vunpack.c.l.b16 %v5008
  %v5031 = vunpack.c.l.b16 %v5009
  %v5032 = vunpack.c.l.b16 %v5010
  %v5033 = vpack.c.b16 %v5023, %v5022
  %v5034 = vpack.c.b16 %v5025, %v5024
  %v5035 = vpack.c.b16 %v5027, %v5026
  %v5036 = vpack.c.b16 %v5029, %v5028
  %v5037 = vpack.c.b16 %v5031, %v5030
  %v5038 = vpack.c.b16 %v5032, %v5032
  %vm5044 = vcmask 687104
  %v5046 = vsel %vm5044, %v4964, 0
  %v5049 = vsel %vm5044, %v4965, 0
  %v5052 = vsel %vm5044, %v4966, 0
  %v5055 = vsel %vm5044, %v4967, 0
  %v5058 = vsel %vm5044, %v4968, 0
  %v5061 = vsel %vm5044, %v4969, 0
  %v5064 = vsel %vm5044, %v4970, 0
  %v5067 = vsel %vm5044, %v4971, 0
  %v5070 = vsel %vm5044, %v4972, 0
  %v5073 = vsel %vm5044, %v4973, 0
  %vm5075 = vcmask 1041408
  %v5077 = vsel %vm5075, %v5038, 0
  %5079 = vmatprep.subr.bf16.mxu0 0
  %5080 = vmatpush1.bf16.msra.mxu0 %v5033
  %5081 = vmatprep.subr.bf16.mxu0 0
  %5082 = vmatpush1.bf16.msra.mxu0 %v5034
  %5083 = vmatprep.subr.bf16.mxu0 0
  %5084 = vmatpush1.bf16.msra.mxu0 %v5035
  %5085 = vmatprep.subr.bf16.mxu0 0
  %5086 = vmatpush1.bf16.msra.mxu0 %v5036
  %5087 = vmatprep.subr.bf16.mxu0 0
  %5088 = vmatpush1.bf16.msra.mxu0 %v5037
  %5089 = vmatprep.subr.bf16.mxu0 0
  %5090 = vmatpush1.bf16.msra.mxu0 %v5077
  %5091 = vmatprep.subr.bf16.mxu0 0
  %5092 = vmatpush1.bf16.msra.mxu0 0
  %5093 = vmatprep.subr.bf16.mxu0 0
  %5094 = vmatpush1.bf16.msra.mxu0 0
  %5095 = vmatprep.subr.bf16.mxu0 0
  %5096 = vmatpush1.bf16.msra.mxu0 0
  %5097 = vmatprep.subr.bf16.mxu0 0
  %5098 = vmatpush1.bf16.msra.mxu0 0
  %5099 = vmatprep.subr.bf16.mxu0 0
  %5100 = vmatpush1.bf16.msra.mxu0 0
  %5101 = vmatprep.subr.bf16.mxu0 0
  %5102 = vmatpush1.bf16.msra.mxu0 0
  %5103 = vmatprep.subr.bf16.mxu0 0
  %5104 = vmatpush1.bf16.msra.mxu0 0
  %5105 = vmatprep.subr.bf16.mxu0 0
  %5106 = vmatpush1.bf16.msra.mxu0 0
  %5107 = vmatprep.subr.bf16.mxu0 0
  %5108 = vmatpush1.bf16.msra.mxu0 0
  %5109 = vmatprep.subr.bf16.mxu0 0
  %5110 = vmatpush1.bf16.msra.mxu0 0
  %5111 = vmatprep.mubr.bf16.mxu0 0
  %5112 = vmatmul.mubr.bf16.gmra.mrb[0].mxu0 %v5046
  %v5113 = vpop.f32.mrb[0].mxu0
  %v5114 = vadd.f32 0.0, %v5113
  %v5115 = vpop.f32.mrb[0].mxu0
  %v5116 = vpop.f32.mrb[0].mxu0
  %v5117 = vadd.f32 0.0, %v5116
  %v5118 = vpop.f32.mrb[0].mxu0
  %5119 = vmatprep.mubr.bf16.mxu0 0
  %5120 = vmatmul.mubr.bf16.gmra.mrb[0].mxu0 %v5049
  %v5121 = vpop.f32.mrb[0].mxu0
  %v5122 = vadd.f32 0.0, %v5121
  %v5123 = vpop.f32.mrb[0].mxu0
  %v5124 = vpop.f32.mrb[0].mxu0
  %v5125 = vadd.f32 0.0, %v5124
  %v5126 = vpop.f32.mrb[0].mxu0
  %5127 = vmatprep.mubr.bf16.mxu0 0
  %5128 = vmatmul.mubr.bf16.gmra.mrb[0].mxu0 %v5052
  %v5129 = vpop.f32.mrb[0].mxu0
  %v5130 = vadd.f32 0.0, %v5129
  %v5131 = vpop.f32.mrb[0].mxu0
  %v5132 = vpop.f32.mrb[0].mxu0
  %v5133 = vadd.f32 0.0, %v5132
  %v5134 = vpop.f32.mrb[0].mxu0
  %5135 = vmatprep.mubr.bf16.mxu0 0
  %5136 = vmatmul.mubr.bf16.gmra.mrb[0].mxu0 %v5055
  %v5137 = vpop.f32.mrb[0].mxu0
  %v5138 = vadd.f32 0.0, %v5137
  %v5139 = vpop.f32.mrb[0].mxu0
  %v5140 = vpop.f32.mrb[0].mxu0
  %v5141 = vadd.f32 0.0, %v5140
  %v5142 = vpop.f32.mrb[0].mxu0
  %5143 = vmatprep.mubr.bf16.mxu0 0
  %5144 = vmatmul.mubr.bf16.gmra.mrb[0].mxu0 %v5058
  %v5145 = vpop.f32.mrb[0].mxu0
  %v5146 = vadd.f32 0.0, %v5145
  %v5147 = vpop.f32.mrb[0].mxu0
  %v5148 = vpop.f32.mrb[0].mxu0
  %v5149 = vadd.f32 0.0, %v5148
  %v5150 = vpop.f32.mrb[0].mxu0
  %5151 = vmatprep.mubr.bf16.mxu0 0
  %5152 = vmatmul.mubr.bf16.gmra.mrb[0].mxu0 %v5061
  %v5153 = vpop.f32.mrb[0].mxu0
  %v5154 = vadd.f32 0.0, %v5153
  %v5155 = vpop.f32.mrb[0].mxu0
  %v5156 = vpop.f32.mrb[0].mxu0
  %v5157 = vadd.f32 0.0, %v5156
  %v5158 = vpop.f32.mrb[0].mxu0
  %5159 = vmatprep.mubr.bf16.mxu0 0
  %5160 = vmatmul.mubr.bf16.gmra.mrb[0].mxu0 %v5064
  %v5161 = vpop.f32.mrb[0].mxu0
  %v5162 = vadd.f32 0.0, %v5161
  %v5163 = vpop.f32.mrb[0].mxu0
  %v5164 = vpop.f32.mrb[0].mxu0
  %v5165 = vadd.f32 0.0, %v5164
  %v5166 = vpop.f32.mrb[0].mxu0
  %5167 = vmatprep.mubr.bf16.mxu0 0
  %5168 = vmatmul.mubr.bf16.gmra.mrb[0].mxu0 %v5067
  %v5169 = vpop.f32.mrb[0].mxu0
  %v5170 = vadd.f32 0.0, %v5169
  %v5171 = vpop.f32.mrb[0].mxu0
  %v5172 = vpop.f32.mrb[0].mxu0
  %v5173 = vadd.f32 0.0, %v5172
  %v5174 = vpop.f32.mrb[0].mxu0
  %5175 = vmatprep.mubr.bf16.mxu0 0
  %5176 = vmatmul.mubr.bf16.gmra.mrb[0].mxu0 %v5070
  %v5177 = vpop.f32.mrb[0].mxu0
  %v5178 = vadd.f32 0.0, %v5177
  %v5179 = vpop.f32.mrb[0].mxu0
  %v5180 = vpop.f32.mrb[0].mxu0
  %v5181 = vadd.f32 0.0, %v5180
  %v5182 = vpop.f32.mrb[0].mxu0
  %5183 = vmatprep.mubr.bf16.mxu0 0
  %5184 = vmatmul.mubr.bf16.gmra.mrb[0].mxu0 %v5073
  %v5185 = vpop.f32.mrb[0].mxu0
  %v5186 = vadd.f32 0.0, %v5185
  %v5187 = vpop.f32.mrb[0].mxu0
  %v5188 = vpop.f32.mrb[0].mxu0
  %v5189 = vadd.f32 0.0, %v5188
  %v5190 = vpop.f32.mrb[0].mxu0
  %5191 = vdwg.mxu0
  %v5203 = vunpack.c.l.b16 %v4977
  %v5204 = vunpack.c.l.b16 %v4978
  %v5205 = vunpack.c.l.b16 %v4979
  %v5206 = vunpack.c.l.b16 %v4980
  %v5207 = vunpack.c.l.b16 %v4981
  %v5208 = vunpack.c.l.b16 %v4982
  %v5209 = vunpack.c.l.b16 %v4983
  %v5210 = vunpack.c.l.b16 %v4984
  %v5211 = vunpack.c.l.b16 %v4985
  %v5212 = vunpack.c.l.b16 %v4986
  %v5213 = vunpack.c.l.b16 %v4987
  %v5214 = vpack.c.b16 %v5204, %v5203
  %v5215 = vpack.c.b16 %v5206, %v5205
  %v5216 = vpack.c.b16 %v5208, %v5207
  %v5217 = vpack.c.b16 %v5210, %v5209
  %v5218 = vpack.c.b16 %v5212, %v5211
  %v5219 = vpack.c.b16 %v5213, %v5213
  %v5226 = vsel %vm5044, %v4963, 0
  %v5229 = vsel %vm5075, %v5219, 0
  %5231 = vmatprep.subr.bf16.mxu0 0
  %5232 = vmatpush1.bf16.msra.mxu0 %v5214
  %5233 = vmatprep.subr.bf16.mxu0 0
  %5234 = vmatpush1.bf16.msra.mxu0 %v5215
  %5235 = vmatprep.subr.bf16.mxu0 0
  %5236 = vmatpush1.bf16.msra.mxu0 %v5216
  %5237 = vmatprep.subr.bf16.mxu0 0
  %5238 = vmatpush1.bf16.msra.mxu0 %v5217
  %5239 = vmatprep.subr.bf16.mxu0 0
  %5240 = vmatpush1.bf16.msra.mxu0 %v5218
  %5241 = vmatprep.subr.bf16.mxu0 0
  %5242 = vmatpush1.bf16.msra.mxu0 %v5229
  %5243 = vmatprep.subr.bf16.mxu0 0
  %5244 = vmatpush1.bf16.msra.mxu0 0
  %5245 = vmatprep.subr.bf16.mxu0 0
  %5246 = vmatpush1.bf16.msra.mxu0 0
  %5247 = vmatprep.subr.bf16.mxu0 0
  %5248 = vmatpush1.bf16.msra.mxu0 0
  %5249 = vmatprep.subr.bf16.mxu0 0
  %5250 = vmatpush1.bf16.msra.mxu0 0
  %5251 = vmatprep.subr.bf16.mxu0 0
  %5252 = vmatpush1.bf16.msra.mxu0 0
  %5253 = vmatprep.subr.bf16.mxu0 0
  %5254 = vmatpush1.bf16.msra.mxu0 0
  %5255 = vmatprep.subr.bf16.mxu0 0
  %5256 = vmatpush1.bf16.msra.mxu0 0
  %5257 = vmatprep.subr.bf16.mxu0 0
  %5258 = vmatpush1.bf16.msra.mxu0 0
  %5259 = vmatprep.subr.bf16.mxu0 0
  %5260 = vmatpush1.bf16.msra.mxu0 0
  %5261 = vmatprep.subr.bf16.mxu0 0
  %5262 = vmatpush1.bf16.msra.mxu0 0
  %5263 = vmatprep.mubr.bf16.mxu0 0
  %5264 = vmatmul.mubr.bf16.gmra.mrb[0].mxu0 %v5226
  %v5265 = vpop.f32.mrb[0].mxu0
  %v5266 = vadd.f32 %v5114, %v5265
  %v5267 = vpop.f32.mrb[0].mxu0
  %v5268 = vpop.f32.mrb[0].mxu0
  %v5269 = vadd.f32 %v5117, %v5268
  %v5270 = vpop.f32.mrb[0].mxu0
  %5271 = vmatprep.mubr.bf16.mxu0 0
  %5272 = vmatmul.mubr.bf16.gmra.mrb[0].mxu0 %v5046
  %v5273 = vpop.f32.mrb[0].mxu0
  %v5274 = vadd.f32 %v5122, %v5273
  %v5275 = vpop.f32.mrb[0].mxu0
  %v5276 = vpop.f32.mrb[0].mxu0
  %v5277 = vadd.f32 %v5125, %v5276
  %v5278 = vpop.f32.mrb[0].mxu0
  %5279 = vmatprep.mubr.bf16.mxu0 0
  %5280 = vmatmul.mubr.bf16.gmra.mrb[0].mxu0 %v5049
  %v5281 = vpop.f32.mrb[0].mxu0
  %v5282 = vadd.f32 %v5130, %v5281
  %v5283 = vpop.f32.mrb[0].mxu0
  %v5284 = vpop.f32.mrb[0].mxu0
  %v5285 = vadd.f32 %v5133, %v5284
  %v5286 = vpop.f32.mrb[0].mxu0
  %5287 = vmatprep.mubr.bf16.mxu0 0
  %5288 = vmatmul.mubr.bf16.gmra.mrb[0].mxu0 %v5052
  %v5289 = vpop.f32.mrb[0].mxu0
  %v5290 = vadd.f32 %v5138, %v5289
  %v5291 = vpop.f32.mrb[0].mxu0
  %v5292 = vpop.f32.mrb[0].mxu0
  %v5293 = vadd.f32 %v5141, %v5292
  %v5294 = vpop.f32.mrb[0].mxu0
  %5295 = vmatprep.mubr.bf16.mxu0 0
  %5296 = vmatmul.mubr.bf16.gmra.mrb[0].mxu0 %v5055
  %v5297 = vpop.f32.mrb[0].mxu0
  %v5298 = vadd.f32 %v5146, %v5297
  %v5299 = vpop.f32.mrb[0].mxu0
  %v5300 = vpop.f32.mrb[0].mxu0
  %v5301 = vadd.f32 %v5149, %v5300
  %v5302 = vpop.f32.mrb[0].mxu0
  %5303 = vmatprep.mubr.bf16.mxu0 0
  %5304 = vmatmul.mubr.bf16.gmra.mrb[0].mxu0 %v5058
  %v5305 = vpop.f32.mrb[0].mxu0
  %v5306 = vadd.f32 %v5154, %v5305
  %v5307 = vpop.f32.mrb[0].mxu0
  %v5308 = vpop.f32.mrb[0].mxu0
  %v5309 = vadd.f32 %v5157, %v5308
  %v5310 = vpop.f32.mrb[0].mxu0
  %5311 = vmatprep.mubr.bf16.mxu0 0
  %5312 = vmatmul.mubr.bf16.gmra.mrb[0].mxu0 %v5061
  %v5313 = vpop.f32.mrb[0].mxu0
  %v5314 = vadd.f32 %v5162, %v5313
  %v5315 = vpop.f32.mrb[0].mxu0
  %v5316 = vpop.f32.mrb[0].mxu0
  %v5317 = vadd.f32 %v5165, %v5316
  %v5318 = vpop.f32.mrb[0].mxu0
  %5319 = vmatprep.mubr.bf16.mxu0 0
  %5320 = vmatmul.mubr.bf16.gmra.mrb[0].mxu0 %v5064
  %v5321 = vpop.f32.mrb[0].mxu0
  %v5322 = vadd.f32 %v5170, %v5321
  %v5323 = vpop.f32.mrb[0].mxu0
  %v5324 = vpop.f32.mrb[0].mxu0
  %v5325 = vadd.f32 %v5173, %v5324
  %v5326 = vpop.f32.mrb[0].mxu0
  %5327 = vmatprep.mubr.bf16.mxu0 0
  %5328 = vmatmul.mubr.bf16.gmra.mrb[0].mxu0 %v5067
  %v5329 = vpop.f32.mrb[0].mxu0
  %v5330 = vadd.f32 %v5178, %v5329
  %v5331 = vpop.f32.mrb[0].mxu0
  %v5332 = vpop.f32.mrb[0].mxu0
  %v5333 = vadd.f32 %v5181, %v5332
  %v5334 = vpop.f32.mrb[0].mxu0
  %5335 = vmatprep.mubr.bf16.mxu0 0
  %5336 = vmatmul.mubr.bf16.gmra.mrb[0].mxu0 %v5070
  %v5337 = vpop.f32.mrb[0].mxu0
  %v5338 = vadd.f32 %v5186, %v5337
  %v5339 = vpop.f32.mrb[0].mxu0
  %v5340 = vpop.f32.mrb[0].mxu0
  %v5341 = vadd.f32 %v5189, %v5340
  %v5342 = vpop.f32.mrb[0].mxu0
  %5343 = vdwg.mxu0
  %s5344 = scalar_lea.vmem %s5, 44
  %v5345 = vld [vmem:[%s5344] sm:$0xf]
  %v5346 = vld [vmem:[%s5344 + $0x4] sm:$0xf]
  %v5347 = vld [vmem:[%s5344 + $0x8] sm:$0xf]
  %v5348 = vld [vmem:[%s5344 + $0xc] sm:$0xf]
  %v5349 = vld [vmem:[%s5344 + $0x10] sm:$0xf]
  %v5350 = vld [vmem:[%s5344 + $0x14] sm:$0xf]
  %v5351 = vld [vmem:[%s5344 + $0x18] sm:$0xf]
  %v5352 = vld [vmem:[%s5344 + $0x1c] sm:$0xf]
  %v5353 = vld [vmem:[%s5344 + $0x20] sm:$0xf]
  %v5354 = vld [vmem:[%s5344 + $0x24] sm:$0xf]
  %v5355 = vld [vmem:[%s5344 + $0x28] sm:$0x3]
  %v5367 = vunpack.c.l.b16 %v5345
  %v5368 = vunpack.c.l.b16 %v5346
  %v5369 = vunpack.c.l.b16 %v5347
  %v5370 = vunpack.c.l.b16 %v5348
  %v5371 = vunpack.c.l.b16 %v5349
  %v5372 = vunpack.c.l.b16 %v5350
  %v5373 = vunpack.c.l.b16 %v5351
  %v5374 = vunpack.c.l.b16 %v5352
  %v5375 = vunpack.c.l.b16 %v5353
  %v5376 = vunpack.c.l.b16 %v5354
  %v5377 = vunpack.c.l.b16 %v5355
  %v5378 = vpack.c.b16 %v5368, %v5367
  %v5379 = vpack.c.b16 %v5370, %v5369
  %v5380 = vpack.c.b16 %v5372, %v5371
  %v5381 = vpack.c.b16 %v5374, %v5373
  %v5382 = vpack.c.b16 %v5376, %v5375
  %v5383 = vpack.c.b16 %v5377, %v5377
  %v5390 = vsel %vm5075, %v5383, 0
  %5392 = vmatprep.subr.bf16.mxu0 0
  %5393 = vmatpush1.bf16.msra.mxu0 %v5378
  %5394 = vmatprep.subr.bf16.mxu0 0
  %5395 = vmatpush1.bf16.msra.mxu0 %v5379
  %5396 = vmatprep.subr.bf16.mxu0 0
  %5397 = vmatpush1.bf16.msra.mxu0 %v5380
  %5398 = vmatprep.subr.bf16.mxu0 0
  %5399 = vmatpush1.bf16.msra.mxu0 %v5381
  %5400 = vmatprep.subr.bf16.mxu0 0
  %5401 = vmatpush1.bf16.msra.mxu0 %v5382
  %5402 = vmatprep.subr.bf16.mxu0 0
  %5403 = vmatpush1.bf16.msra.mxu0 %v5390
  %5404 = vmatprep.subr.bf16.mxu0 0
  %5405 = vmatpush1.bf16.msra.mxu0 0
  %5406 = vmatprep.subr.bf16.mxu0 0
  %5407 = vmatpush1.bf16.msra.mxu0 0
  %5408 = vmatprep.subr.bf16.mxu0 0
  %5409 = vmatpush1.bf16.msra.mxu0 0
  %5410 = vmatprep.subr.bf16.mxu0 0
  %5411 = vmatpush1.bf16.msra.mxu0 0
  %5412 = vmatprep.subr.bf16.mxu0 0
  %5413 = vmatpush1.bf16.msra.mxu0 0
  %5414 = vmatprep.subr.bf16.mxu0 0
  %5415 = vmatpush1.bf16.msra.mxu0 0
  %5416 = vmatprep.subr.bf16.mxu0 0
  %5417 = vmatpush1.bf16.msra.mxu0 0
  %5418 = vmatprep.subr.bf16.mxu0 0
  %5419 = vmatpush1.bf16.msra.mxu0 0
  %5420 = vmatprep.subr.bf16.mxu0 0
  %5421 = vmatpush1.bf16.msra.mxu0 0
  %5422 = vmatprep.subr.bf16.mxu0 0
  %5423 = vmatpush1.bf16.msra.mxu0 0
  %5424 = vmatprep.mubr.bf16.mxu0 0
  %5425 = vmatmul.mubr.bf16.gmra.mrb[0].mxu0 %v5046
  %v5426 = vpop.f32.mrb[0].mxu0
  %v5427 = vadd.f32 0.0, %v5426
  %v5428 = vpop.f32.mrb[0].mxu0
  %v5429 = vpop.f32.mrb[0].mxu0
  %v5430 = vadd.f32 0.0, %v5429
  %v5431 = vpop.f32.mrb[0].mxu0
  %5432 = vmatprep.mubr.bf16.mxu0 0
  %5433 = vmatmul.mubr.bf16.gmra.mrb[0].mxu0 %v5049
  %v5434 = vpop.f32.mrb[0].mxu0
  %v5435 = vadd.f32 0.0, %v5434
  %v5436 = vpop.f32.mrb[0].mxu0
  %v5437 = vpop.f32.mrb[0].mxu0
  %v5438 = vadd.f32 0.0, %v5437
  %v5439 = vpop.f32.mrb[0].mxu0
  %5440 = vmatprep.mubr.bf16.mxu0 0
  %5441 = vmatmul.mubr.bf16.gmra.mrb[0].mxu0 %v5052
  %v5442 = vpop.f32.mrb[0].mxu0
  %v5443 = vadd.f32 0.0, %v5442
  %v5444 = vpop.f32.mrb[0].mxu0
  %v5445 = vpop.f32.mrb[0].mxu0
  %v5446 = vadd.f32 0.0, %v5445
  %v5447 = vpop.f32.mrb[0].mxu0
  %5448 = vmatprep.mubr.bf16.mxu0 0
  %5449 = vmatmul.mubr.bf16.gmra.mrb[0].mxu0 %v5055
  %v5450 = vpop.f32.mrb[0].mxu0
  %v5451 = vadd.f32 0.0, %v5450
  %v5452 = vpop.f32.mrb[0].mxu0
  %v5453 = vpop.f32.mrb[0].mxu0
  %v5454 = vadd.f32 0.0, %v5453
  %v5455 = vpop.f32.mrb[0].mxu0
  %5456 = vmatprep.mubr.bf16.mxu0 0
  %5457 = vmatmul.mubr.bf16.gmra.mrb[0].mxu0 %v5058
  %v5458 = vpop.f32.mrb[0].mxu0
  %v5459 = vadd.f32 0.0, %v5458
  %v5460 = vpop.f32.mrb[0].mxu0
  %v5461 = vpop.f32.mrb[0].mxu0
  %v5462 = vadd.f32 0.0, %v5461
  %v5463 = vpop.f32.mrb[0].mxu0
  %5464 = vmatprep.mubr.bf16.mxu0 0
  %5465 = vmatmul.mubr.bf16.gmra.mrb[0].mxu0 %v5061
  %v5466 = vpop.f32.mrb[0].mxu0
  %v5467 = vadd.f32 0.0, %v5466
  %v5468 = vpop.f32.mrb[0].mxu0
  %v5469 = vpop.f32.mrb[0].mxu0
  %v5470 = vadd.f32 0.0, %v5469
  %v5471 = vpop.f32.mrb[0].mxu0
  %5472 = vmatprep.mubr.bf16.mxu0 0
  %5473 = vmatmul.mubr.bf16.gmra.mrb[0].mxu0 %v5064
  %v5474 = vpop.f32.mrb[0].mxu0
  %v5475 = vadd.f32 0.0, %v5474
  %v5476 = vpop.f32.mrb[0].mxu0
  %v5477 = vpop.f32.mrb[0].mxu0
  %v5478 = vadd.f32 0.0, %v5477
  %v5479 = vpop.f32.mrb[0].mxu0
  %5480 = vmatprep.mubr.bf16.mxu0 0
  %5481 = vmatmul.mubr.bf16.gmra.mrb[0].mxu0 %v5067
  %v5482 = vpop.f32.mrb[0].mxu0
  %v5483 = vadd.f32 0.0, %v5482
  %v5484 = vpop.f32.mrb[0].mxu0
  %v5485 = vpop.f32.mrb[0].mxu0
  %v5486 = vadd.f32 0.0, %v5485
  %v5487 = vpop.f32.mrb[0].mxu0
  %5488 = vmatprep.mubr.bf16.mxu0 0
  %5489 = vmatmul.mubr.bf16.gmra.mrb[0].mxu0 %v5070
  %v5490 = vpop.f32.mrb[0].mxu0
  %v5491 = vadd.f32 0.0, %v5490
  %v5492 = vpop.f32.mrb[0].mxu0
  %v5493 = vpop.f32.mrb[0].mxu0
  %v5494 = vadd.f32 0.0, %v5493
  %v5495 = vpop.f32.mrb[0].mxu0
  %5496 = vmatprep.mubr.bf16.mxu0 0
  %5497 = vmatmul.mubr.bf16.gmra.mrb[0].mxu0 %v5073
  %v5498 = vpop.f32.mrb[0].mxu0
  %v5499 = vadd.f32 0.0, %v5498
  %v5500 = vpop.f32.mrb[0].mxu0
  %v5501 = vpop.f32.mrb[0].mxu0
  %v5502 = vadd.f32 0.0, %v5501
  %v5503 = vpop.f32.mrb[0].mxu0
  %5504 = vdwg.mxu0
  %v5516 = vunpack.c.l.b16 %v4988
  %v5517 = vunpack.c.l.b16 %v4989
  %v5518 = vunpack.c.l.b16 %v4990
  %v5519 = vunpack.c.l.b16 %v4991
  %v5520 = vunpack.c.l.b16 %v4992
  %v5521 = vunpack.c.l.b16 %v4993
  %v5522 = vunpack.c.l.b16 %v4994
  %v5523 = vunpack.c.l.b16 %v4995
  %v5524 = vunpack.c.l.b16 %v4996
  %v5525 = vunpack.c.l.b16 %v4997
  %v5526 = vunpack.c.l.b16 %v4998
  %v5527 = vpack.c.b16 %v5517, %v5516
  %v5528 = vpack.c.b16 %v5519, %v5518
  %v5529 = vpack.c.b16 %v5521, %v5520
  %v5530 = vpack.c.b16 %v5523, %v5522
  %v5531 = vpack.c.b16 %v5525, %v5524
  %v5532 = vpack.c.b16 %v5526, %v5526
  %v5539 = vsel %vm5075, %v5532, 0
  %5541 = vmatprep.subr.bf16.mxu0 0
  %5542 = vmatpush1.bf16.msra.mxu0 %v5527
  %5543 = vmatprep.subr.bf16.mxu0 0
  %5544 = vmatpush1.bf16.msra.mxu0 %v5528
  %5545 = vmatprep.subr.bf16.mxu0 0
  %5546 = vmatpush1.bf16.msra.mxu0 %v5529
  %5547 = vmatprep.subr.bf16.mxu0 0
  %5548 = vmatpush1.bf16.msra.mxu0 %v5530
  %5549 = vmatprep.subr.bf16.mxu0 0
  %5550 = vmatpush1.bf16.msra.mxu0 %v5531
  %5551 = vmatprep.subr.bf16.mxu0 0
  %5552 = vmatpush1.bf16.msra.mxu0 %v5539
  %5553 = vmatprep.subr.bf16.mxu0 0
  %5554 = vmatpush1.bf16.msra.mxu0 0
  %5555 = vmatprep.subr.bf16.mxu0 0
  %5556 = vmatpush1.bf16.msra.mxu0 0
  %5557 = vmatprep.subr.bf16.mxu0 0
  %5558 = vmatpush1.bf16.msra.mxu0 0
  %5559 = vmatprep.subr.bf16.mxu0 0
  %5560 = vmatpush1.bf16.msra.mxu0 0
  %5561 = vmatprep.subr.bf16.mxu0 0
  %5562 = vmatpush1.bf16.msra.mxu0 0
  %5563 = vmatprep.subr.bf16.mxu0 0
  %5564 = vmatpush1.bf16.msra.mxu0 0
  %5565 = vmatprep.subr.bf16.mxu0 0
  %5566 = vmatpush1.bf16.msra.mxu0 0
  %5567 = vmatprep.subr.bf16.mxu0 0
  %5568 = vmatpush1.bf16.msra.mxu0 0
  %5569 = vmatprep.subr.bf16.mxu0 0
  %5570 = vmatpush1.bf16.msra.mxu0 0
  %5571 = vmatprep.subr.bf16.mxu0 0
  %5572 = vmatpush1.bf16.msra.mxu0 0
  %5573 = vmatprep.mubr.bf16.mxu0 0
  %5574 = vmatmul.mubr.bf16.gmra.mrb[0].mxu0 %v5226
  %v5575 = vpop.f32.mrb[0].mxu0
  %v5576 = vadd.f32 %v5427, %v5575
  %v5577 = vpop.f32.mrb[0].mxu0
  %v5578 = vpop.f32.mrb[0].mxu0
  %v5579 = vadd.f32 %v5430, %v5578
  %v5580 = vpop.f32.mrb[0].mxu0
  %5581 = vmatprep.mubr.bf16.mxu0 0
  %5582 = vmatmul.mubr.bf16.gmra.mrb[0].mxu0 %v5046
  %v5583 = vpop.f32.mrb[0].mxu0
  %v5584 = vadd.f32 %v5435, %v5583
  %v5585 = vpop.f32.mrb[0].mxu0
  %v5586 = vpop.f32.mrb[0].mxu0
  %v5587 = vadd.f32 %v5438, %v5586
  %v5588 = vpop.f32.mrb[0].mxu0
  %5589 = vmatprep.mubr.bf16.mxu0 0
  %5590 = vmatmul.mubr.bf16.gmra.mrb[0].mxu0 %v5049
  %v5591 = vpop.f32.mrb[0].mxu0
  %v5592 = vadd.f32 %v5443, %v5591
  %v5593 = vpop.f32.mrb[0].mxu0
  %v5594 = vpop.f32.mrb[0].mxu0
  %v5595 = vadd.f32 %v5446, %v5594
  %v5596 = vpop.f32.mrb[0].mxu0
  %5597 = vmatprep.mubr.bf16.mxu0 0
  %5598 = vmatmul.mubr.bf16.gmra.mrb[0].mxu0 %v5052
  %v5599 = vpop.f32.mrb[0].mxu0
  %v5600 = vadd.f32 %v5451, %v5599
  %v5601 = vpop.f32.mrb[0].mxu0
  %v5602 = vpop.f32.mrb[0].mxu0
  %v5603 = vadd.f32 %v5454, %v5602
  %v5604 = vpop.f32.mrb[0].mxu0
  %5605 = vmatprep.mubr.bf16.mxu0 0
  %5606 = vmatmul.mubr.bf16.gmra.mrb[0].mxu0 %v5055
  %v5607 = vpop.f32.mrb[0].mxu0
  %v5608 = vadd.f32 %v5459, %v5607
  %v5609 = vpop.f32.mrb[0].mxu0
  %v5610 = vpop.f32.mrb[0].mxu0
  %v5611 = vadd.f32 %v5462, %v5610
  %v5612 = vpop.f32.mrb[0].mxu0
  %5613 = vmatprep.mubr.bf16.mxu0 0
  %5614 = vmatmul.mubr.bf16.gmra.mrb[0].mxu0 %v5058
  %v5615 = vpop.f32.mrb[0].mxu0
  %v5616 = vadd.f32 %v5467, %v5615
  %v5617 = vpop.f32.mrb[0].mxu0
  %v5618 = vpop.f32.mrb[0].mxu0
  %v5619 = vadd.f32 %v5470, %v5618
  %v5620 = vpop.f32.mrb[0].mxu0
  %5621 = vmatprep.mubr.bf16.mxu0 0
  %5622 = vmatmul.mubr.bf16.gmra.mrb[0].mxu0 %v5061
  %v5623 = vpop.f32.mrb[0].mxu0
  %v5624 = vadd.f32 %v5475, %v5623
  %v5625 = vpop.f32.mrb[0].mxu0
  %v5626 = vpop.f32.mrb[0].mxu0
  %v5627 = vadd.f32 %v5478, %v5626
  %v5628 = vpop.f32.mrb[0].mxu0
  %5629 = vmatprep.mubr.bf16.mxu0 0
  %5630 = vmatmul.mubr.bf16.gmra.mrb[0].mxu0 %v5064
  %v5631 = vpop.f32.mrb[0].mxu0
  %v5632 = vadd.f32 %v5483, %v5631
  %v5633 = vpop.f32.mrb[0].mxu0
  %v5634 = vpop.f32.mrb[0].mxu0
  %v5635 = vadd.f32 %v5486, %v5634
  %v5636 = vpop.f32.mrb[0].mxu0
  %5637 = vmatprep.mubr.bf16.mxu0 0
  %5638 = vmatmul.mubr.bf16.gmra.mrb[0].mxu0 %v5067
  %v5639 = vpop.f32.mrb[0].mxu0
  %v5640 = vadd.f32 %v5491, %v5639
  %v5641 = vpop.f32.mrb[0].mxu0
  %v5642 = vpop.f32.mrb[0].mxu0
  %v5643 = vadd.f32 %v5494, %v5642
  %v5644 = vpop.f32.mrb[0].mxu0
  %5645 = vmatprep.mubr.bf16.mxu0 0
  %5646 = vmatmul.mubr.bf16.gmra.mrb[0].mxu0 %v5070
  %v5647 = vpop.f32.mrb[0].mxu0
  %v5648 = vadd.f32 %v5499, %v5647
  %v5649 = vpop.f32.mrb[0].mxu0
  %v5650 = vpop.f32.mrb[0].mxu0
  %v5651 = vadd.f32 %v5502, %v5650
  %v5652 = vpop.f32.mrb[0].mxu0
  %5653 = vdwg.mxu0
  %s5654 = scalar_lea.vmem %s4, 88
  %v5655 = vld [vmem:[%s5654] sm:$0xf]
  %v5656 = vld [vmem:[%s5654 + $0x4] sm:$0xf]
  %v5657 = vld [vmem:[%s5654 + $0x8] sm:$0xf]
  %v5658 = vld [vmem:[%s5654 + $0xc] sm:$0xf]
  %v5659 = vld [vmem:[%s5654 + $0x10] sm:$0xf]
  %v5660 = vld [vmem:[%s5654 + $0x14] sm:$0xf]
  %v5661 = vld [vmem:[%s5654 + $0x18] sm:$0xf]
  %v5662 = vld [vmem:[%s5654 + $0x1c] sm:$0xf]
  %v5663 = vld [vmem:[%s5654 + $0x20] sm:$0xf]
  %v5664 = vld [vmem:[%s5654 + $0x24] sm:$0xf]
  %v5665 = vld [vmem:[%s5654 + $0x28] sm:$0x3]
  %v5677 = vunpack.c.l.b16 %v5655
  %v5678 = vunpack.c.l.b16 %v5656
  %v5679 = vunpack.c.l.b16 %v5657
  %v5680 = vunpack.c.l.b16 %v5658
  %v5681 = vunpack.c.l.b16 %v5659
  %v5682 = vunpack.c.l.b16 %v5660
  %v5683 = vunpack.c.l.b16 %v5661
  %v5684 = vunpack.c.l.b16 %v5662
  %v5685 = vunpack.c.l.b16 %v5663
  %v5686 = vunpack.c.l.b16 %v5664
  %v5687 = vunpack.c.l.b16 %v5665
  %v5688 = vpack.c.b16 %v5678, %v5677
  %v5689 = vpack.c.b16 %v5680, %v5679
  %v5690 = vpack.c.b16 %v5682, %v5681
  %v5691 = vpack.c.b16 %v5684, %v5683
  %v5692 = vpack.c.b16 %v5686, %v5685
  %v5693 = vpack.c.b16 %v5687, %v5687
  %v5700 = vsel %vm5044, %v4974, 0
  %v5703 = vsel %vm5075, %v5693, 0
  %5705 = vmatprep.subr.bf16.mxu0 0
  %5706 = vmatpush1.bf16.msra.mxu0 %v5688
  %5707 = vmatprep.subr.bf16.mxu0 0
  %5708 = vmatpush1.bf16.msra.mxu0 %v5689
  %5709 = vmatprep.subr.bf16.mxu0 0
  %5710 = vmatpush1.bf16.msra.mxu0 %v5690
  %5711 = vmatprep.subr.bf16.mxu0 0
  %5712 = vmatpush1.bf16.msra.mxu0 %v5691
  %5713 = vmatprep.subr.bf16.mxu0 0
  %5714 = vmatpush1.bf16.msra.mxu0 %v5692
  %5715 = vmatprep.subr.bf16.mxu0 0
  %5716 = vmatpush1.bf16.msra.mxu0 %v5703
  %5717 = vmatprep.subr.bf16.mxu0 0
  %5718 = vmatpush1.bf16.msra.mxu0 0
  %5719 = vmatprep.subr.bf16.mxu0 0
  %5720 = vmatpush1.bf16.msra.mxu0 0
  %5721 = vmatprep.subr.bf16.mxu0 0
  %5722 = vmatpush1.bf16.msra.mxu0 0
  %5723 = vmatprep.subr.bf16.mxu0 0
  %5724 = vmatpush1.bf16.msra.mxu0 0
  %5725 = vmatprep.subr.bf16.mxu0 0
  %5726 = vmatpush1.bf16.msra.mxu0 0
  %5727 = vmatprep.subr.bf16.mxu0 0
  %5728 = vmatpush1.bf16.msra.mxu0 0
  %5729 = vmatprep.subr.bf16.mxu0 0
  %5730 = vmatpush1.bf16.msra.mxu0 0
  %5731 = vmatprep.subr.bf16.mxu0 0
  %5732 = vmatpush1.bf16.msra.mxu0 0
  %5733 = vmatprep.subr.bf16.mxu0 0
  %5734 = vmatpush1.bf16.msra.mxu0 0
  %5735 = vmatprep.subr.bf16.mxu0 0
  %5736 = vmatpush1.bf16.msra.mxu0 0
  %5737 = vmatprep.mubr.bf16.mxu0 0
  %5738 = vmatmul.mubr.bf16.gmra.mrb[0].mxu0 %v5049
  %v5739 = vpop.f32.mrb[0].mxu0
  %v5740 = vadd.f32 0.0, %v5739
  %v5741 = vpop.f32.mrb[0].mxu0
  %v5742 = vpop.f32.mrb[0].mxu0
  %v5743 = vadd.f32 0.0, %v5742
  %v5744 = vpop.f32.mrb[0].mxu0
  %5745 = vmatprep.mubr.bf16.mxu0 0
  %5746 = vmatmul.mubr.bf16.gmra.mrb[0].mxu0 %v5052
  %v5747 = vpop.f32.mrb[0].mxu0
  %v5748 = vadd.f32 0.0, %v5747
  %v5749 = vpop.f32.mrb[0].mxu0
  %v5750 = vpop.f32.mrb[0].mxu0
  %v5751 = vadd.f32 0.0, %v5750
  %v5752 = vpop.f32.mrb[0].mxu0
  %5753 = vmatprep.mubr.bf16.mxu0 0
  %5754 = vmatmul.mubr.bf16.gmra.mrb[0].mxu0 %v5055
  %v5755 = vpop.f32.mrb[0].mxu0
  %v5756 = vadd.f32 0.0, %v5755
  %v5757 = vpop.f32.mrb[0].mxu0
  %v5758 = vpop.f32.mrb[0].mxu0
  %v5759 = vadd.f32 0.0, %v5758
  %v5760 = vpop.f32.mrb[0].mxu0
  %5761 = vmatprep.mubr.bf16.mxu0 0
  %5762 = vmatmul.mubr.bf16.gmra.mrb[0].mxu0 %v5058
  %v5763 = vpop.f32.mrb[0].mxu0
  %v5764 = vadd.f32 0.0, %v5763
  %v5765 = vpop.f32.mrb[0].mxu0
  %v5766 = vpop.f32.mrb[0].mxu0
  %v5767 = vadd.f32 0.0, %v5766
  %v5768 = vpop.f32.mrb[0].mxu0
  %5769 = vmatprep.mubr.bf16.mxu0 0
  %5770 = vmatmul.mubr.bf16.gmra.mrb[0].mxu0 %v5061
  %v5771 = vpop.f32.mrb[0].mxu0
  %v5772 = vadd.f32 0.0, %v5771
  %v5773 = vpop.f32.mrb[0].mxu0
  %v5774 = vpop.f32.mrb[0].mxu0
  %v5775 = vadd.f32 0.0, %v5774
  %v5776 = vpop.f32.mrb[0].mxu0
  %5777 = vmatprep.mubr.bf16.mxu0 0
  %5778 = vmatmul.mubr.bf16.gmra.mrb[0].mxu0 %v5064
  %v5779 = vpop.f32.mrb[0].mxu0
  %v5780 = vadd.f32 0.0, %v5779
  %v5781 = vpop.f32.mrb[0].mxu0
  %v5782 = vpop.f32.mrb[0].mxu0
  %v5783 = vadd.f32 0.0, %v5782
  %v5784 = vpop.f32.mrb[0].mxu0
  %5785 = vmatprep.mubr.bf16.mxu0 0
  %5786 = vmatmul.mubr.bf16.gmra.mrb[0].mxu0 %v5067
  %v5787 = vpop.f32.mrb[0].mxu0
  %v5788 = vadd.f32 0.0, %v5787
  %v5789 = vpop.f32.mrb[0].mxu0
  %v5790 = vpop.f32.mrb[0].mxu0
  %v5791 = vadd.f32 0.0, %v5790
  %v5792 = vpop.f32.mrb[0].mxu0
  %5793 = vmatprep.mubr.bf16.mxu0 0
  %5794 = vmatmul.mubr.bf16.gmra.mrb[0].mxu0 %v5070
  %v5795 = vpop.f32.mrb[0].mxu0
  %v5796 = vadd.f32 0.0, %v5795
  %v5797 = vpop.f32.mrb[0].mxu0
  %v5798 = vpop.f32.mrb[0].mxu0
  %v5799 = vadd.f32 0.0, %v5798
  %v5800 = vpop.f32.mrb[0].mxu0
  %5801 = vmatprep.mubr.bf16.mxu0 0
  %5802 = vmatmul.mubr.bf16.gmra.mrb[0].mxu0 %v5073
  %v5803 = vpop.f32.mrb[0].mxu0
  %v5804 = vadd.f32 0.0, %v5803
  %v5805 = vpop.f32.mrb[0].mxu0
  %v5806 = vpop.f32.mrb[0].mxu0
  %v5807 = vadd.f32 0.0, %v5806
  %v5808 = vpop.f32.mrb[0].mxu0
  %5809 = vmatprep.mubr.bf16.mxu0 0
  %5810 = vmatmul.mubr.bf16.gmra.mrb[0].mxu0 %v5700
  %v5811 = vpop.f32.mrb[0].mxu0
  %v5812 = vadd.f32 0.0, %v5811
  %v5813 = vpop.f32.mrb[0].mxu0
  %v5814 = vpop.f32.mrb[0].mxu0
  %v5815 = vadd.f32 0.0, %v5814
  %v5816 = vpop.f32.mrb[0].mxu0
  %5817 = vdwg.mxu0
  %v5818 = vadd.f32 %v5266, %v5740
  %v5819 = vadd.f32 %v5269, %v5743
  %v5820 = vadd.f32 %v5274, %v5748
  %v5821 = vadd.f32 %v5277, %v5751
  %v5822 = vadd.f32 %v5282, %v5756
  %v5823 = vadd.f32 %v5285, %v5759
  %v5824 = vadd.f32 %v5290, %v5764
  %v5825 = vadd.f32 %v5293, %v5767
  %v5826 = vadd.f32 %v5298, %v5772
  %v5827 = vadd.f32 %v5301, %v5775
  %v5828 = vadd.f32 %v5306, %v5780
  %v5829 = vadd.f32 %v5309, %v5783
  %v5830 = vadd.f32 %v5314, %v5788
  %v5831 = vadd.f32 %v5317, %v5791
  %v5832 = vadd.f32 %v5322, %v5796
  %v5833 = vadd.f32 %v5325, %v5799
  %v5834 = vadd.f32 %v5330, %v5804
  %v5835 = vadd.f32 %v5333, %v5807
  %v5836 = vadd.f32 %v5338, %v5812
  %v5837 = vadd.f32 %v5341, %v5815
  %s5838 = scalar_lea.vmem %s5, 88
  %v5839 = vld [vmem:[%s5838] sm:$0xf]
  %v5840 = vld [vmem:[%s5838 + $0x4] sm:$0xf]
  %v5841 = vld [vmem:[%s5838 + $0x8] sm:$0xf]
  %v5842 = vld [vmem:[%s5838 + $0xc] sm:$0xf]
  %v5843 = vld [vmem:[%s5838 + $0x10] sm:$0xf]
  %v5844 = vld [vmem:[%s5838 + $0x14] sm:$0xf]
  %v5845 = vld [vmem:[%s5838 + $0x18] sm:$0xf]
  %v5846 = vld [vmem:[%s5838 + $0x1c] sm:$0xf]
  %v5847 = vld [vmem:[%s5838 + $0x20] sm:$0xf]
  %v5848 = vld [vmem:[%s5838 + $0x24] sm:$0xf]
  %v5849 = vld [vmem:[%s5838 + $0x28] sm:$0x3]
  %v5861 = vunpack.c.l.b16 %v5839
  %v5862 = vunpack.c.l.b16 %v5840
  %v5863 = vunpack.c.l.b16 %v5841
  %v5864 = vunpack.c.l.b16 %v5842
  %v5865 = vunpack.c.l.b16 %v5843
  %v5866 = vunpack.c.l.b16 %v5844
  %v5867 = vunpack.c.l.b16 %v5845
  %v5868 = vunpack.c.l.b16 %v5846
  %v5869 = vunpack.c.l.b16 %v5847
  %v5870 = vunpack.c.l.b16 %v5848
  %v5871 = vunpack.c.l.b16 %v5849
  %v5872 = vpack.c.b16 %v5862, %v5861
  %v5873 = vpack.c.b16 %v5864, %v5863
  %v5874 = vpack.c.b16 %v5866, %v5865
  %v5875 = vpack.c.b16 %v5868, %v5867
  %v5876 = vpack.c.b16 %v5870, %v5869
  %v5877 = vpack.c.b16 %v5871, %v5871
  %v5884 = vsel %vm5075, %v5877, 0
  %5886 = vmatprep.subr.bf16.mxu0 0
  %5887 = vmatpush1.bf16.msra.mxu0 %v5872
  %5888 = vmatprep.subr.bf16.mxu0 0
  %5889 = vmatpush1.bf16.msra.mxu0 %v5873
  %5890 = vmatprep.subr.bf16.mxu0 0
  %5891 = vmatpush1.bf16.msra.mxu0 %v5874
  %5892 = vmatprep.subr.bf16.mxu0 0
  %5893 = vmatpush1.bf16.msra.mxu0 %v5875
  %5894 = vmatprep.subr.bf16.mxu0 0
  %5895 = vmatpush1.bf16.msra.mxu0 %v5876
  %5896 = vmatprep.subr.bf16.mxu0 0
  %5897 = vmatpush1.bf16.msra.mxu0 %v5884
  %5898 = vmatprep.subr.bf16.mxu0 0
  %5899 = vmatpush1.bf16.msra.mxu0 0
  %5900 = vmatprep.subr.bf16.mxu0 0
  %5901 = vmatpush1.bf16.msra.mxu0 0
  %5902 = vmatprep.subr.bf16.mxu0 0
  %5903 = vmatpush1.bf16.msra.mxu0 0
  %5904 = vmatprep.subr.bf16.mxu0 0
  %5905 = vmatpush1.bf16.msra.mxu0 0
  %5906 = vmatprep.subr.bf16.mxu0 0
  %5907 = vmatpush1.bf16.msra.mxu0 0
  %5908 = vmatprep.subr.bf16.mxu0 0
  %5909 = vmatpush1.bf16.msra.mxu0 0
  %5910 = vmatprep.subr.bf16.mxu0 0
  %5911 = vmatpush1.bf16.msra.mxu0 0
  %5912 = vmatprep.subr.bf16.mxu0 0
  %5913 = vmatpush1.bf16.msra.mxu0 0
  %5914 = vmatprep.subr.bf16.mxu0 0
  %5915 = vmatpush1.bf16.msra.mxu0 0
  %5916 = vmatprep.subr.bf16.mxu0 0
  %5917 = vmatpush1.bf16.msra.mxu0 0
  %5918 = vmatprep.mubr.bf16.mxu0 0
  %5919 = vmatmul.mubr.bf16.gmra.mrb[0].mxu0 %v5049
  %v5920 = vpop.f32.mrb[0].mxu0
  %v5921 = vadd.f32 0.0, %v5920
  %v5922 = vpop.f32.mrb[0].mxu0
  %v5923 = vpop.f32.mrb[0].mxu0
  %v5924 = vadd.f32 0.0, %v5923
  %v5925 = vpop.f32.mrb[0].mxu0
  %5926 = vmatprep.mubr.bf16.mxu0 0
  %5927 = vmatmul.mubr.bf16.gmra.mrb[0].mxu0 %v5052
  %v5928 = vpop.f32.mrb[0].mxu0
  %v5929 = vadd.f32 0.0, %v5928
  %v5930 = vpop.f32.mrb[0].mxu0
  %v5931 = vpop.f32.mrb[0].mxu0
  %v5932 = vadd.f32 0.0, %v5931
  %v5933 = vpop.f32.mrb[0].mxu0
  %5934 = vmatprep.mubr.bf16.mxu0 0
  %5935 = vmatmul.mubr.bf16.gmra.mrb[0].mxu0 %v5055
  %v5936 = vpop.f32.mrb[0].mxu0
  %v5937 = vadd.f32 0.0, %v5936
  %v5938 = vpop.f32.mrb[0].mxu0
  %v5939 = vpop.f32.mrb[0].mxu0
  %v5940 = vadd.f32 0.0, %v5939
  %v5941 = vpop.f32.mrb[0].mxu0
  %5942 = vmatprep.mubr.bf16.mxu0 0
  %5943 = vmatmul.mubr.bf16.gmra.mrb[0].mxu0 %v5058
  %v5944 = vpop.f32.mrb[0].mxu0
  %v5945 = vadd.f32 0.0, %v5944
  %v5946 = vpop.f32.mrb[0].mxu0
  %v5947 = vpop.f32.mrb[0].mxu0
  %v5948 = vadd.f32 0.0, %v5947
  %v5949 = vpop.f32.mrb[0].mxu0
  %5950 = vmatprep.mubr.bf16.mxu0 0
  %5951 = vmatmul.mubr.bf16.gmra.mrb[0].mxu0 %v5061
  %v5952 = vpop.f32.mrb[0].mxu0
  %v5953 = vadd.f32 0.0, %v5952
  %v5954 = vpop.f32.mrb[0].mxu0
  %v5955 = vpop.f32.mrb[0].mxu0
  %v5956 = vadd.f32 0.0, %v5955
  %v5957 = vpop.f32.mrb[0].mxu0
  %5958 = vmatprep.mubr.bf16.mxu0 0
  %5959 = vmatmul.mubr.bf16.gmra.mrb[0].mxu0 %v5064
  %v5960 = vpop.f32.mrb[0].mxu0
  %v5961 = vadd.f32 0.0, %v5960
  %v5962 = vpop.f32.mrb[0].mxu0
  %v5963 = vpop.f32.mrb[0].mxu0
  %v5964 = vadd.f32 0.0, %v5963
  %v5965 = vpop.f32.mrb[0].mxu0
  %5966 = vmatprep.mubr.bf16.mxu0 0
  %5967 = vmatmul.mubr.bf16.gmra.mrb[0].mxu0 %v5067
  %v5968 = vpop.f32.mrb[0].mxu0
  %v5969 = vadd.f32 0.0, %v5968
  %v5970 = vpop.f32.mrb[0].mxu0
  %v5971 = vpop.f32.mrb[0].mxu0
  %v5972 = vadd.f32 0.0, %v5971
  %v5973 = vpop.f32.mrb[0].mxu0
  %5974 = vmatprep.mubr.bf16.mxu0 0
  %5975 = vmatmul.mubr.bf16.gmra.mrb[0].mxu0 %v5070
  %v5976 = vpop.f32.mrb[0].mxu0
  %v5977 = vadd.f32 0.0, %v5976
  %v5978 = vpop.f32.mrb[0].mxu0
  %v5979 = vpop.f32.mrb[0].mxu0
  %v5980 = vadd.f32 0.0, %v5979
  %v5981 = vpop.f32.mrb[0].mxu0
  %5982 = vmatprep.mubr.bf16.mxu0 0
  %5983 = vmatmul.mubr.bf16.gmra.mrb[0].mxu0 %v5073
  %v5984 = vpop.f32.mrb[0].mxu0
  %v5985 = vadd.f32 0.0, %v5984
  %v5986 = vpop.f32.mrb[0].mxu0
  %v5987 = vpop.f32.mrb[0].mxu0
  %v5988 = vadd.f32 0.0, %v5987
  %v5989 = vpop.f32.mrb[0].mxu0
  %5990 = vmatprep.mubr.bf16.mxu0 0
  %5991 = vmatmul.mubr.bf16.gmra.mrb[0].mxu0 %v5700
  %v5992 = vpop.f32.mrb[0].mxu0
  %v5993 = vadd.f32 0.0, %v5992
  %v5994 = vpop.f32.mrb[0].mxu0
  %v5995 = vpop.f32.mrb[0].mxu0
  %v5996 = vadd.f32 0.0, %v5995
  %v5997 = vpop.f32.mrb[0].mxu0
  %5998 = vdwg.mxu0
  %v5999 = vadd.f32 %v5576, %v5921
  %v6000 = vadd.f32 %v5579, %v5924
  %v6001 = vadd.f32 %v5584, %v5929
  %v6002 = vadd.f32 %v5587, %v5932
  %v6003 = vadd.f32 %v5592, %v5937
  %v6004 = vadd.f32 %v5595, %v5940
  %v6005 = vadd.f32 %v5600, %v5945
  %v6006 = vadd.f32 %v5603, %v5948
  %v6007 = vadd.f32 %v5608, %v5953
  %v6008 = vadd.f32 %v5611, %v5956
  %v6009 = vadd.f32 %v5616, %v5961
  %v6010 = vadd.f32 %v5619, %v5964
  %v6011 = vadd.f32 %v5624, %v5969
  %v6012 = vadd.f32 %v5627, %v5972
  %v6013 = vadd.f32 %v5632, %v5977
  %v6014 = vadd.f32 %v5635, %v5980
  %v6015 = vadd.f32 %v5640, %v5985
  %v6016 = vadd.f32 %v5643, %v5988
  %v6017 = vadd.f32 %v5648, %v5993
  %v6018 = vadd.f32 %v5651, %v5996
  %s6019 = scalar_lea.vmem %s4, 132
  %v6020 = vld [vmem:[%s6019] sm:$0xf]
  %v6021 = vld [vmem:[%s6019 + $0x4] sm:$0xf]
  %v6022 = vld [vmem:[%s6019 + $0x8] sm:$0xf]
  %v6023 = vld [vmem:[%s6019 + $0xc] sm:$0xf]
  %v6024 = vld [vmem:[%s6019 + $0x10] sm:$0xf]
  %v6025 = vld [vmem:[%s6019 + $0x14] sm:$0xf]
  %v6026 = vld [vmem:[%s6019 + $0x18] sm:$0xf]
  %v6027 = vld [vmem:[%s6019 + $0x1c] sm:$0xf]
  %v6028 = vld [vmem:[%s6019 + $0x20] sm:$0xf]
  %v6029 = vld [vmem:[%s6019 + $0x24] sm:$0xf]
  %v6030 = vld [vmem:[%s6019 + $0x28] sm:$0x3]
  %v6042 = vunpack.c.l.b16 %v6020
  %v6043 = vunpack.c.l.b16 %v6021
  %v6044 = vunpack.c.l.b16 %v6022
  %v6045 = vunpack.c.l.b16 %v6023
  %v6046 = vunpack.c.l.b16 %v6024
  %v6047 = vunpack.c.l.b16 %v6025
  %v6048 = vunpack.c.l.b16 %v6026
  %v6049 = vunpack.c.l.b16 %v6027
  %v6050 = vunpack.c.l.b16 %v6028
  %v6051 = vunpack.c.l.b16 %v6029
  %v6052 = vunpack.c.l.b16 %v6030
  %v6053 = vpack.c.b16 %v6043, %v6042
  %v6054 = vpack.c.b16 %v6045, %v6044
  %v6055 = vpack.c.b16 %v6047, %v6046
  %v6056 = vpack.c.b16 %v6049, %v6048
  %v6057 = vpack.c.b16 %v6051, %v6050
  %v6058 = vpack.c.b16 %v6052, %v6052
  %v6065 = vsel %vm5044, %v4975, 0
  %v6068 = vsel %vm5075, %v6058, 0
  %6070 = vmatprep.subr.bf16.mxu0 0
  %6071 = vmatpush1.bf16.msra.mxu0 %v6053
  %6072 = vmatprep.subr.bf16.mxu0 0
  %6073 = vmatpush1.bf16.msra.mxu0 %v6054
  %6074 = vmatprep.subr.bf16.mxu0 0
  %6075 = vmatpush1.bf16.msra.mxu0 %v6055
  %6076 = vmatprep.subr.bf16.mxu0 0
  %6077 = vmatpush1.bf16.msra.mxu0 %v6056
  %6078 = vmatprep.subr.bf16.mxu0 0
  %6079 = vmatpush1.bf16.msra.mxu0 %v6057
  %6080 = vmatprep.subr.bf16.mxu0 0
  %6081 = vmatpush1.bf16.msra.mxu0 %v6068
  %6082 = vmatprep.subr.bf16.mxu0 0
  %6083 = vmatpush1.bf16.msra.mxu0 0
  %6084 = vmatprep.subr.bf16.mxu0 0
  %6085 = vmatpush1.bf16.msra.mxu0 0
  %6086 = vmatprep.subr.bf16.mxu0 0
  %6087 = vmatpush1.bf16.msra.mxu0 0
  %6088 = vmatprep.subr.bf16.mxu0 0
  %6089 = vmatpush1.bf16.msra.mxu0 0
  %6090 = vmatprep.subr.bf16.mxu0 0
  %6091 = vmatpush1.bf16.msra.mxu0 0
  %6092 = vmatprep.subr.bf16.mxu0 0
  %6093 = vmatpush1.bf16.msra.mxu0 0
  %6094 = vmatprep.subr.bf16.mxu0 0
  %6095 = vmatpush1.bf16.msra.mxu0 0
  %6096 = vmatprep.subr.bf16.mxu0 0
  %6097 = vmatpush1.bf16.msra.mxu0 0
  %6098 = vmatprep.subr.bf16.mxu0 0
  %6099 = vmatpush1.bf16.msra.mxu0 0
  %6100 = vmatprep.subr.bf16.mxu0 0
  %6101 = vmatpush1.bf16.msra.mxu0 0
  %6102 = vmatprep.mubr.bf16.mxu0 0
  %6103 = vmatmul.mubr.bf16.gmra.mrb[0].mxu0 %v5052
  %v6104 = vpop.f32.mrb[0].mxu0
  %v6105 = vadd.f32 0.0, %v6104
  %v6106 = vpop.f32.mrb[0].mxu0
  %v6107 = vpop.f32.mrb[0].mxu0
  %v6108 = vadd.f32 0.0, %v6107
  %v6109 = vpop.f32.mrb[0].mxu0
  %6110 = vmatprep.mubr.bf16.mxu0 0
  %6111 = vmatmul.mubr.bf16.gmra.mrb[0].mxu0 %v5055
  %v6112 = vpop.f32.mrb[0].mxu0
  %v6113 = vadd.f32 0.0, %v6112
  %v6114 = vpop.f32.mrb[0].mxu0
  %v6115 = vpop.f32.mrb[0].mxu0
  %v6116 = vadd.f32 0.0, %v6115
  %v6117 = vpop.f32.mrb[0].mxu0
  %6118 = vmatprep.mubr.bf16.mxu0 0
  %6119 = vmatmul.mubr.bf16.gmra.mrb[0].mxu0 %v5058
  %v6120 = vpop.f32.mrb[0].mxu0
  %v6121 = vadd.f32 0.0, %v6120
  %v6122 = vpop.f32.mrb[0].mxu0
  %v6123 = vpop.f32.mrb[0].mxu0
  %v6124 = vadd.f32 0.0, %v6123
  %v6125 = vpop.f32.mrb[0].mxu0
  %6126 = vmatprep.mubr.bf16.mxu0 0
  %6127 = vmatmul.mubr.bf16.gmra.mrb[0].mxu0 %v5061
  %v6128 = vpop.f32.mrb[0].mxu0
  %v6129 = vadd.f32 0.0, %v6128
  %v6130 = vpop.f32.mrb[0].mxu0
  %v6131 = vpop.f32.mrb[0].mxu0
  %v6132 = vadd.f32 0.0, %v6131
  %v6133 = vpop.f32.mrb[0].mxu0
  %6134 = vmatprep.mubr.bf16.mxu0 0
  %6135 = vmatmul.mubr.bf16.gmra.mrb[0].mxu0 %v5064
  %v6136 = vpop.f32.mrb[0].mxu0
  %v6137 = vadd.f32 0.0, %v6136
  %v6138 = vpop.f32.mrb[0].mxu0
  %v6139 = vpop.f32.mrb[0].mxu0
  %v6140 = vadd.f32 0.0, %v6139
  %v6141 = vpop.f32.mrb[0].mxu0
  %6142 = vmatprep.mubr.bf16.mxu0 0
  %6143 = vmatmul.mubr.bf16.gmra.mrb[0].mxu0 %v5067
  %v6144 = vpop.f32.mrb[0].mxu0
  %v6145 = vadd.f32 0.0, %v6144
  %v6146 = vpop.f32.mrb[0].mxu0
  %v6147 = vpop.f32.mrb[0].mxu0
  %v6148 = vadd.f32 0.0, %v6147
  %v6149 = vpop.f32.mrb[0].mxu0
  %6150 = vmatprep.mubr.bf16.mxu0 0
  %6151 = vmatmul.mubr.bf16.gmra.mrb[0].mxu0 %v5070
  %v6152 = vpop.f32.mrb[0].mxu0
  %v6153 = vadd.f32 0.0, %v6152
  %v6154 = vpop.f32.mrb[0].mxu0
  %v6155 = vpop.f32.mrb[0].mxu0
  %v6156 = vadd.f32 0.0, %v6155
  %v6157 = vpop.f32.mrb[0].mxu0
  %6158 = vmatprep.mubr.bf16.mxu0 0
  %6159 = vmatmul.mubr.bf16.gmra.mrb[0].mxu0 %v5073
  %v6160 = vpop.f32.mrb[0].mxu0
  %v6161 = vadd.f32 0.0, %v6160
  %v6162 = vpop.f32.mrb[0].mxu0
  %v6163 = vpop.f32.mrb[0].mxu0
  %v6164 = vadd.f32 0.0, %v6163
  %v6165 = vpop.f32.mrb[0].mxu0
  %6166 = vmatprep.mubr.bf16.mxu0 0
  %6167 = vmatmul.mubr.bf16.gmra.mrb[0].mxu0 %v5700
  %v6168 = vpop.f32.mrb[0].mxu0
  %v6169 = vadd.f32 0.0, %v6168
  %v6170 = vpop.f32.mrb[0].mxu0
  %v6171 = vpop.f32.mrb[0].mxu0
  %v6172 = vadd.f32 0.0, %v6171
  %v6173 = vpop.f32.mrb[0].mxu0
  %6174 = vmatprep.mubr.bf16.mxu0 0
  %6175 = vmatmul.mubr.bf16.gmra.mrb[0].mxu0 %v6065
  %v6176 = vpop.f32.mrb[0].mxu0
  %v6177 = vadd.f32 0.0, %v6176
  %v6178 = vpop.f32.mrb[0].mxu0
  %v6179 = vpop.f32.mrb[0].mxu0
  %v6180 = vadd.f32 0.0, %v6179
  %v6181 = vpop.f32.mrb[0].mxu0
  %6182 = vdwg.mxu0
  %v6183 = vadd.f32 %v5818, %v6105
  %v6184 = vadd.f32 %v5819, %v6108
  %v6185 = vadd.f32 %v5820, %v6113
  %v6186 = vadd.f32 %v5821, %v6116
  %v6187 = vadd.f32 %v5822, %v6121
  %v6188 = vadd.f32 %v5823, %v6124
  %v6189 = vadd.f32 %v5824, %v6129
  %v6190 = vadd.f32 %v5825, %v6132
  %v6191 = vadd.f32 %v5826, %v6137
  %v6192 = vadd.f32 %v5827, %v6140
  %v6193 = vadd.f32 %v5828, %v6145
  %v6194 = vadd.f32 %v5829, %v6148
  %v6195 = vadd.f32 %v5830, %v6153
  %v6196 = vadd.f32 %v5831, %v6156
  %v6197 = vadd.f32 %v5832, %v6161
  %v6198 = vadd.f32 %v5833, %v6164
  %v6199 = vadd.f32 %v5834, %v6169
  %v6200 = vadd.f32 %v5835, %v6172
  %v6201 = vadd.f32 %v5836, %v6177
  %v6202 = vadd.f32 %v5837, %v6180
  %s6203 = scalar_lea.vmem %s5, 132
  %v6204 = vld [vmem:[%s6203] sm:$0xf]
  %v6205 = vld [vmem:[%s6203 + $0x4] sm:$0xf]
  %v6206 = vld [vmem:[%s6203 + $0x8] sm:$0xf]
  %v6207 = vld [vmem:[%s6203 + $0xc] sm:$0xf]
  %v6208 = vld [vmem:[%s6203 + $0x10] sm:$0xf]
  %v6209 = vld [vmem:[%s6203 + $0x14] sm:$0xf]
  %v6210 = vld [vmem:[%s6203 + $0x18] sm:$0xf]
  %v6211 = vld [vmem:[%s6203 + $0x1c] sm:$0xf]
  %v6212 = vld [vmem:[%s6203 + $0x20] sm:$0xf]
  %v6213 = vld [vmem:[%s6203 + $0x24] sm:$0xf]
  %v6214 = vld [vmem:[%s6203 + $0x28] sm:$0x3]
  %v6226 = vunpack.c.l.b16 %v6204
  %v6227 = vunpack.c.l.b16 %v6205
  %v6228 = vunpack.c.l.b16 %v6206
  %v6229 = vunpack.c.l.b16 %v6207
  %v6230 = vunpack.c.l.b16 %v6208
  %v6231 = vunpack.c.l.b16 %v6209
  %v6232 = vunpack.c.l.b16 %v6210
  %v6233 = vunpack.c.l.b16 %v6211
  %v6234 = vunpack.c.l.b16 %v6212
  %v6235 = vunpack.c.l.b16 %v6213
  %v6236 = vunpack.c.l.b16 %v6214
  %v6237 = vpack.c.b16 %v6227, %v6226
  %v6238 = vpack.c.b16 %v6229, %v6228
  %v6239 = vpack.c.b16 %v6231, %v6230
  %v6240 = vpack.c.b16 %v6233, %v6232
  %v6241 = vpack.c.b16 %v6235, %v6234
  %v6242 = vpack.c.b16 %v6236, %v6236
  %v6249 = vsel %vm5075, %v6242, 0
  %6251 = vmatprep.subr.bf16.mxu0 0
  %6252 = vmatpush1.bf16.msra.mxu0 %v6237
  %6253 = vmatprep.subr.bf16.mxu0 0
  %6254 = vmatpush1.bf16.msra.mxu0 %v6238
  %6255 = vmatprep.subr.bf16.mxu0 0
  %6256 = vmatpush1.bf16.msra.mxu0 %v6239
  %6257 = vmatprep.subr.bf16.mxu0 0
  %6258 = vmatpush1.bf16.msra.mxu0 %v6240
  %6259 = vmatprep.subr.bf16.mxu0 0
  %6260 = vmatpush1.bf16.msra.mxu0 %v6241
  %6261 = vmatprep.subr.bf16.mxu0 0
  %6262 = vmatpush1.bf16.msra.mxu0 %v6249
  %6263 = vmatprep.subr.bf16.mxu0 0
  %6264 = vmatpush1.bf16.msra.mxu0 0
  %6265 = vmatprep.subr.bf16.mxu0 0
  %6266 = vmatpush1.bf16.msra.mxu0 0
  %6267 = vmatprep.subr.bf16.mxu0 0
  %6268 = vmatpush1.bf16.msra.mxu0 0
  %6269 = vmatprep.subr.bf16.mxu0 0
  %6270 = vmatpush1.bf16.msra.mxu0 0
  %6271 = vmatprep.subr.bf16.mxu0 0
  %6272 = vmatpush1.bf16.msra.mxu0 0
  %6273 = vmatprep.subr.bf16.mxu0 0
  %6274 = vmatpush1.bf16.msra.mxu0 0
  %6275 = vmatprep.subr.bf16.mxu0 0
  %6276 = vmatpush1.bf16.msra.mxu0 0
  %6277 = vmatprep.subr.bf16.mxu0 0
  %6278 = vmatpush1.bf16.msra.mxu0 0
  %6279 = vmatprep.subr.bf16.mxu0 0
  %6280 = vmatpush1.bf16.msra.mxu0 0
  %6281 = vmatprep.subr.bf16.mxu0 0
  %6282 = vmatpush1.bf16.msra.mxu0 0
  %6283 = vmatprep.mubr.bf16.mxu0 0
  %6284 = vmatmul.mubr.bf16.gmra.mrb[0].mxu0 %v5052
  %v6285 = vpop.f32.mrb[0].mxu0
  %v6286 = vadd.f32 0.0, %v6285
  %v6287 = vpop.f32.mrb[0].mxu0
  %v6288 = vpop.f32.mrb[0].mxu0
  %v6289 = vadd.f32 0.0, %v6288
  %v6290 = vpop.f32.mrb[0].mxu0
  %6291 = vmatprep.mubr.bf16.mxu0 0
  %6292 = vmatmul.mubr.bf16.gmra.mrb[0].mxu0 %v5055
  %v6293 = vpop.f32.mrb[0].mxu0
  %v6294 = vadd.f32 0.0, %v6293
  %v6295 = vpop.f32.mrb[0].mxu0
  %v6296 = vpop.f32.mrb[0].mxu0
  %v6297 = vadd.f32 0.0, %v6296
  %v6298 = vpop.f32.mrb[0].mxu0
  %6299 = vmatprep.mubr.bf16.mxu0 0
  %6300 = vmatmul.mubr.bf16.gmra.mrb[0].mxu0 %v5058
  %v6301 = vpop.f32.mrb[0].mxu0
  %v6302 = vadd.f32 0.0, %v6301
  %v6303 = vpop.f32.mrb[0].mxu0
  %v6304 = vpop.f32.mrb[0].mxu0
  %v6305 = vadd.f32 0.0, %v6304
  %v6306 = vpop.f32.mrb[0].mxu0
  %6307 = vmatprep.mubr.bf16.mxu0 0
  %6308 = vmatmul.mubr.bf16.gmra.mrb[0].mxu0 %v5061
  %v6309 = vpop.f32.mrb[0].mxu0
  %v6310 = vadd.f32 0.0, %v6309
  %v6311 = vpop.f32.mrb[0].mxu0
  %v6312 = vpop.f32.mrb[0].mxu0
  %v6313 = vadd.f32 0.0, %v6312
  %v6314 = vpop.f32.mrb[0].mxu0
  %6315 = vmatprep.mubr.bf16.mxu0 0
  %6316 = vmatmul.mubr.bf16.gmra.mrb[0].mxu0 %v5064
  %v6317 = vpop.f32.mrb[0].mxu0
  %v6318 = vadd.f32 0.0, %v6317
  %v6319 = vpop.f32.mrb[0].mxu0
  %v6320 = vpop.f32.mrb[0].mxu0
  %v6321 = vadd.f32 0.0, %v6320
  %v6322 = vpop.f32.mrb[0].mxu0
  %6323 = vmatprep.mubr.bf16.mxu0 0
  %6324 = vmatmul.mubr.bf16.gmra.mrb[0].mxu0 %v5067
  %v6325 = vpop.f32.mrb[0].mxu0
  %v6326 = vadd.f32 0.0, %v6325
  %v6327 = vpop.f32.mrb[0].mxu0
  %v6328 = vpop.f32.mrb[0].mxu0
  %v6329 = vadd.f32 0.0, %v6328
  %v6330 = vpop.f32.mrb[0].mxu0
  %6331 = vmatprep.mubr.bf16.mxu0 0
  %6332 = vmatmul.mubr.bf16.gmra.mrb[0].mxu0 %v5070
  %v6333 = vpop.f32.mrb[0].mxu0
  %v6334 = vadd.f32 0.0, %v6333
  %v6335 = vpop.f32.mrb[0].mxu0
  %v6336 = vpop.f32.mrb[0].mxu0
  %v6337 = vadd.f32 0.0, %v6336
  %v6338 = vpop.f32.mrb[0].mxu0
  %6339 = vmatprep.mubr.bf16.mxu0 0
  %6340 = vmatmul.mubr.bf16.gmra.mrb[0].mxu0 %v5073
  %v6341 = vpop.f32.mrb[0].mxu0
  %v6342 = vadd.f32 0.0, %v6341
  %v6343 = vpop.f32.mrb[0].mxu0
  %v6344 = vpop.f32.mrb[0].mxu0
  %v6345 = vadd.f32 0.0, %v6344
  %v6346 = vpop.f32.mrb[0].mxu0
  %6347 = vmatprep.mubr.bf16.mxu0 0
  %6348 = vmatmul.mubr.bf16.gmra.mrb[0].mxu0 %v5700
  %v6349 = vpop.f32.mrb[0].mxu0
  %v6350 = vadd.f32 0.0, %v6349
  %v6351 = vpop.f32.mrb[0].mxu0
  %v6352 = vpop.f32.mrb[0].mxu0
  %v6353 = vadd.f32 0.0, %v6352
  %v6354 = vpop.f32.mrb[0].mxu0
  %6355 = vmatprep.mubr.bf16.mxu0 0
  %6356 = vmatmul.mubr.bf16.gmra.mrb[0].mxu0 %v6065
  %v6357 = vpop.f32.mrb[0].mxu0
  %v6358 = vadd.f32 0.0, %v6357
  %v6359 = vpop.f32.mrb[0].mxu0
  %v6360 = vpop.f32.mrb[0].mxu0
  %v6361 = vadd.f32 0.0, %v6360
  %v6362 = vpop.f32.mrb[0].mxu0
  %6363 = vdwg.mxu0
  %v6364 = vadd.f32 %v5999, %v6286
  %v6365 = vadd.f32 %v6000, %v6289
  %v6366 = vadd.f32 %v6001, %v6294
  %v6367 = vadd.f32 %v6002, %v6297
  %v6368 = vadd.f32 %v6003, %v6302
  %v6369 = vadd.f32 %v6004, %v6305
  %v6370 = vadd.f32 %v6005, %v6310
  %v6371 = vadd.f32 %v6006, %v6313
  %v6372 = vadd.f32 %v6007, %v6318
  %v6373 = vadd.f32 %v6008, %v6321
  %v6374 = vadd.f32 %v6009, %v6326
  %v6375 = vadd.f32 %v6010, %v6329
  %v6376 = vadd.f32 %v6011, %v6334
  %v6377 = vadd.f32 %v6012, %v6337
  %v6378 = vadd.f32 %v6013, %v6342
  %v6379 = vadd.f32 %v6014, %v6345
  %v6380 = vadd.f32 %v6015, %v6350
  %v6381 = vadd.f32 %v6016, %v6353
  %v6382 = vadd.f32 %v6017, %v6358
  %v6383 = vadd.f32 %v6018, %v6361
  %s6384 = scalar_lea.vmem %s4, 176
  %v6385 = vld [vmem:[%s6384] sm:$0xf]
  %v6386 = vld [vmem:[%s6384 + $0x4] sm:$0xf]
  %v6387 = vld [vmem:[%s6384 + $0x8] sm:$0xf]
  %v6388 = vld [vmem:[%s6384 + $0xc] sm:$0xf]
  %v6389 = vld [vmem:[%s6384 + $0x10] sm:$0xf]
  %v6390 = vld [vmem:[%s6384 + $0x14] sm:$0xf]
  %v6391 = vld [vmem:[%s6384 + $0x18] sm:$0xf]
  %v6392 = vld [vmem:[%s6384 + $0x1c] sm:$0xf]
  %v6393 = vld [vmem:[%s6384 + $0x20] sm:$0xf]
  %v6394 = vld [vmem:[%s6384 + $0x24] sm:$0xf]
  %v6395 = vld [vmem:[%s6384 + $0x28] sm:$0x3]
  %v6407 = vunpack.c.l.b16 %v6385
  %v6408 = vunpack.c.l.b16 %v6386
  %v6409 = vunpack.c.l.b16 %v6387
  %v6410 = vunpack.c.l.b16 %v6388
  %v6411 = vunpack.c.l.b16 %v6389
  %v6412 = vunpack.c.l.b16 %v6390
  %v6413 = vunpack.c.l.b16 %v6391
  %v6414 = vunpack.c.l.b16 %v6392
  %v6415 = vunpack.c.l.b16 %v6393
  %v6416 = vunpack.c.l.b16 %v6394
  %v6417 = vunpack.c.l.b16 %v6395
  %v6418 = vpack.c.b16 %v6408, %v6407
  %v6419 = vpack.c.b16 %v6410, %v6409
  %v6420 = vpack.c.b16 %v6412, %v6411
  %v6421 = vpack.c.b16 %v6414, %v6413
  %v6422 = vpack.c.b16 %v6416, %v6415
  %v6423 = vpack.c.b16 %v6417, %v6417
  %v6430 = vsel %vm5044, %v4976, 0
  %v6433 = vsel %vm5075, %v6423, 0
  %6435 = vmatprep.subr.bf16.mxu0 0
  %6436 = vmatpush1.bf16.msra.mxu0 %v6418
  %6437 = vmatprep.subr.bf16.mxu0 0
  %6438 = vmatpush1.bf16.msra.mxu0 %v6419
  %6439 = vmatprep.subr.bf16.mxu0 0
  %6440 = vmatpush1.bf16.msra.mxu0 %v6420
  %6441 = vmatprep.subr.bf16.mxu0 0
  %6442 = vmatpush1.bf16.msra.mxu0 %v6421
  %6443 = vmatprep.subr.bf16.mxu0 0
  %6444 = vmatpush1.bf16.msra.mxu0 %v6422
  %6445 = vmatprep.subr.bf16.mxu0 0
  %6446 = vmatpush1.bf16.msra.mxu0 %v6433
  %6447 = vmatprep.subr.bf16.mxu0 0
  %6448 = vmatpush1.bf16.msra.mxu0 0
  %6449 = vmatprep.subr.bf16.mxu0 0
  %6450 = vmatpush1.bf16.msra.mxu0 0
  %6451 = vmatprep.subr.bf16.mxu0 0
  %6452 = vmatpush1.bf16.msra.mxu0 0
  %6453 = vmatprep.subr.bf16.mxu0 0
  %6454 = vmatpush1.bf16.msra.mxu0 0
  %6455 = vmatprep.subr.bf16.mxu0 0
  %6456 = vmatpush1.bf16.msra.mxu0 0
  %6457 = vmatprep.subr.bf16.mxu0 0
  %6458 = vmatpush1.bf16.msra.mxu0 0
  %6459 = vmatprep.subr.bf16.mxu0 0
  %6460 = vmatpush1.bf16.msra.mxu0 0
  %6461 = vmatprep.subr.bf16.mxu0 0
  %6462 = vmatpush1.bf16.msra.mxu0 0
  %6463 = vmatprep.subr.bf16.mxu0 0
  %6464 = vmatpush1.bf16.msra.mxu0 0
  %6465 = vmatprep.subr.bf16.mxu0 0
  %6466 = vmatpush1.bf16.msra.mxu0 0
  %6467 = vmatprep.mubr.bf16.mxu0 0
  %6468 = vmatmul.mubr.bf16.gmra.mrb[0].mxu0 %v5055
  %v6469 = vpop.f32.mrb[0].mxu0
  %v6470 = vadd.f32 0.0, %v6469
  %v6471 = vpop.f32.mrb[0].mxu0
  %v6472 = vpop.f32.mrb[0].mxu0
  %v6473 = vadd.f32 0.0, %v6472
  %v6474 = vpop.f32.mrb[0].mxu0
  %6475 = vmatprep.mubr.bf16.mxu0 0
  %6476 = vmatmul.mubr.bf16.gmra.mrb[0].mxu0 %v5058
  %v6477 = vpop.f32.mrb[0].mxu0
  %v6478 = vadd.f32 0.0, %v6477
  %v6479 = vpop.f32.mrb[0].mxu0
  %v6480 = vpop.f32.mrb[0].mxu0
  %v6481 = vadd.f32 0.0, %v6480
  %v6482 = vpop.f32.mrb[0].mxu0
  %6483 = vmatprep.mubr.bf16.mxu0 0
  %6484 = vmatmul.mubr.bf16.gmra.mrb[0].mxu0 %v5061
  %v6485 = vpop.f32.mrb[0].mxu0
  %v6486 = vadd.f32 0.0, %v6485
  %v6487 = vpop.f32.mrb[0].mxu0
  %v6488 = vpop.f32.mrb[0].mxu0
  %v6489 = vadd.f32 0.0, %v6488
  %v6490 = vpop.f32.mrb[0].mxu0
  %6491 = vmatprep.mubr.bf16.mxu0 0
  %6492 = vmatmul.mubr.bf16.gmra.mrb[0].mxu0 %v5064
  %v6493 = vpop.f32.mrb[0].mxu0
  %v6494 = vadd.f32 0.0, %v6493
  %v6495 = vpop.f32.mrb[0].mxu0
  %v6496 = vpop.f32.mrb[0].mxu0
  %v6497 = vadd.f32 0.0, %v6496
  %v6498 = vpop.f32.mrb[0].mxu0
  %6499 = vmatprep.mubr.bf16.mxu0 0
  %6500 = vmatmul.mubr.bf16.gmra.mrb[0].mxu0 %v5067
  %v6501 = vpop.f32.mrb[0].mxu0
  %v6502 = vadd.f32 0.0, %v6501
  %v6503 = vpop.f32.mrb[0].mxu0
  %v6504 = vpop.f32.mrb[0].mxu0
  %v6505 = vadd.f32 0.0, %v6504
  %v6506 = vpop.f32.mrb[0].mxu0
  %6507 = vmatprep.mubr.bf16.mxu0 0
  %6508 = vmatmul.mubr.bf16.gmra.mrb[0].mxu0 %v5070
  %v6509 = vpop.f32.mrb[0].mxu0
  %v6510 = vadd.f32 0.0, %v6509
  %v6511 = vpop.f32.mrb[0].mxu0
  %v6512 = vpop.f32.mrb[0].mxu0
  %v6513 = vadd.f32 0.0, %v6512
  %v6514 = vpop.f32.mrb[0].mxu0
  %6515 = vmatprep.mubr.bf16.mxu0 0
  %6516 = vmatmul.mubr.bf16.gmra.mrb[0].mxu0 %v5073
  %v6517 = vpop.f32.mrb[0].mxu0
  %v6518 = vadd.f32 0.0, %v6517
  %v6519 = vpop.f32.mrb[0].mxu0
  %v6520 = vpop.f32.mrb[0].mxu0
  %v6521 = vadd.f32 0.0, %v6520
  %v6522 = vpop.f32.mrb[0].mxu0
  %6523 = vmatprep.mubr.bf16.mxu0 0
  %6524 = vmatmul.mubr.bf16.gmra.mrb[0].mxu0 %v5700
  %v6525 = vpop.f32.mrb[0].mxu0
  %v6526 = vadd.f32 0.0, %v6525
  %v6527 = vpop.f32.mrb[0].mxu0
  %v6528 = vpop.f32.mrb[0].mxu0
  %v6529 = vadd.f32 0.0, %v6528
  %v6530 = vpop.f32.mrb[0].mxu0
  %6531 = vmatprep.mubr.bf16.mxu0 0
  %6532 = vmatmul.mubr.bf16.gmra.mrb[0].mxu0 %v6065
  %v6533 = vpop.f32.mrb[0].mxu0
  %v6534 = vadd.f32 0.0, %v6533
  %v6535 = vpop.f32.mrb[0].mxu0
  %v6536 = vpop.f32.mrb[0].mxu0
  %v6537 = vadd.f32 0.0, %v6536
  %v6538 = vpop.f32.mrb[0].mxu0
  %6539 = vmatprep.mubr.bf16.mxu0 0
  %6540 = vmatmul.mubr.bf16.gmra.mrb[0].mxu0 %v6430
  %v6541 = vpop.f32.mrb[0].mxu0
  %v6542 = vadd.f32 0.0, %v6541
  %v6543 = vpop.f32.mrb[0].mxu0
  %v6544 = vpop.f32.mrb[0].mxu0
  %v6545 = vadd.f32 0.0, %v6544
  %v6546 = vpop.f32.mrb[0].mxu0
  %6547 = vdwg.mxu0
  %v6548 = vadd.f32 %v6183, %v6470
  %v6549 = vadd.f32 %v6184, %v6473
  %v6550 = vadd.f32 %v6185, %v6478
  %v6551 = vadd.f32 %v6186, %v6481
  %v6552 = vadd.f32 %v6187, %v6486
  %v6553 = vadd.f32 %v6188, %v6489
  %v6554 = vadd.f32 %v6189, %v6494
  %v6555 = vadd.f32 %v6190, %v6497
  %v6556 = vadd.f32 %v6191, %v6502
  %v6557 = vadd.f32 %v6192, %v6505
  %v6558 = vadd.f32 %v6193, %v6510
  %v6559 = vadd.f32 %v6194, %v6513
  %v6560 = vadd.f32 %v6195, %v6518
  %v6561 = vadd.f32 %v6196, %v6521
  %v6562 = vadd.f32 %v6197, %v6526
  %v6563 = vadd.f32 %v6198, %v6529
  %v6564 = vadd.f32 %v6199, %v6534
  %v6565 = vadd.f32 %v6200, %v6537
  %v6566 = vadd.f32 %v6201, %v6542
  %v6567 = vadd.f32 %v6202, %v6545
  %s6568 = scalar_lea.vmem %s5, 176
  %v6569 = vld [vmem:[%s6568] sm:$0xf]
  %v6570 = vld [vmem:[%s6568 + $0x4] sm:$0xf]
  %v6571 = vld [vmem:[%s6568 + $0x8] sm:$0xf]
  %v6572 = vld [vmem:[%s6568 + $0xc] sm:$0xf]
  %v6573 = vld [vmem:[%s6568 + $0x10] sm:$0xf]
  %v6574 = vld [vmem:[%s6568 + $0x14] sm:$0xf]
  %v6575 = vld [vmem:[%s6568 + $0x18] sm:$0xf]
  %v6576 = vld [vmem:[%s6568 + $0x1c] sm:$0xf]
  %v6577 = vld [vmem:[%s6568 + $0x20] sm:$0xf]
  %v6578 = vld [vmem:[%s6568 + $0x24] sm:$0xf]
  %v6579 = vld [vmem:[%s6568 + $0x28] sm:$0x3]
  %v6591 = vunpack.c.l.b16 %v6569
  %v6592 = vunpack.c.l.b16 %v6570
  %v6593 = vunpack.c.l.b16 %v6571
  %v6594 = vunpack.c.l.b16 %v6572
  %v6595 = vunpack.c.l.b16 %v6573
  %v6596 = vunpack.c.l.b16 %v6574
  %v6597 = vunpack.c.l.b16 %v6575
  %v6598 = vunpack.c.l.b16 %v6576
  %v6599 = vunpack.c.l.b16 %v6577
  %v6600 = vunpack.c.l.b16 %v6578
  %v6601 = vunpack.c.l.b16 %v6579
  %v6602 = vpack.c.b16 %v6592, %v6591
  %v6603 = vpack.c.b16 %v6594, %v6593
  %v6604 = vpack.c.b16 %v6596, %v6595
  %v6605 = vpack.c.b16 %v6598, %v6597
  %v6606 = vpack.c.b16 %v6600, %v6599
  %v6607 = vpack.c.b16 %v6601, %v6601
  %v6614 = vsel %vm5075, %v6607, 0
  %6616 = vmatprep.subr.bf16.mxu0 0
  %6617 = vmatpush1.bf16.msra.mxu0 %v6602
  %6618 = vmatprep.subr.bf16.mxu0 0
  %6619 = vmatpush1.bf16.msra.mxu0 %v6603
  %6620 = vmatprep.subr.bf16.mxu0 0
  %6621 = vmatpush1.bf16.msra.mxu0 %v6604
  %6622 = vmatprep.subr.bf16.mxu0 0
  %6623 = vmatpush1.bf16.msra.mxu0 %v6605
  %6624 = vmatprep.subr.bf16.mxu0 0
  %6625 = vmatpush1.bf16.msra.mxu0 %v6606
  %6626 = vmatprep.subr.bf16.mxu0 0
  %6627 = vmatpush1.bf16.msra.mxu0 %v6614
  %6628 = vmatprep.subr.bf16.mxu0 0
  %6629 = vmatpush1.bf16.msra.mxu0 0
  %6630 = vmatprep.subr.bf16.mxu0 0
  %6631 = vmatpush1.bf16.msra.mxu0 0
  %6632 = vmatprep.subr.bf16.mxu0 0
  %6633 = vmatpush1.bf16.msra.mxu0 0
  %6634 = vmatprep.subr.bf16.mxu0 0
  %6635 = vmatpush1.bf16.msra.mxu0 0
  %6636 = vmatprep.subr.bf16.mxu0 0
  %6637 = vmatpush1.bf16.msra.mxu0 0
  %6638 = vmatprep.subr.bf16.mxu0 0
  %6639 = vmatpush1.bf16.msra.mxu0 0
  %6640 = vmatprep.subr.bf16.mxu0 0
  %6641 = vmatpush1.bf16.msra.mxu0 0
  %6642 = vmatprep.subr.bf16.mxu0 0
  %6643 = vmatpush1.bf16.msra.mxu0 0
  %6644 = vmatprep.subr.bf16.mxu0 0
  %6645 = vmatpush1.bf16.msra.mxu0 0
  %6646 = vmatprep.subr.bf16.mxu0 0
  %6647 = vmatpush1.bf16.msra.mxu0 0
  %6648 = vmatprep.mubr.bf16.mxu0 0
  %6649 = vmatmul.mubr.bf16.gmra.mrb[0].mxu0 %v5055
  %v6650 = vpop.f32.mrb[0].mxu0
  %v6651 = vadd.f32 0.0, %v6650
  %v6652 = vpop.f32.mrb[0].mxu0
  %v6653 = vpop.f32.mrb[0].mxu0
  %v6654 = vadd.f32 0.0, %v6653
  %v6655 = vpop.f32.mrb[0].mxu0
  %6656 = vmatprep.mubr.bf16.mxu0 0
  %6657 = vmatmul.mubr.bf16.gmra.mrb[0].mxu0 %v5058
  %v6658 = vpop.f32.mrb[0].mxu0
  %v6659 = vadd.f32 0.0, %v6658
  %v6660 = vpop.f32.mrb[0].mxu0
  %v6661 = vpop.f32.mrb[0].mxu0
  %v6662 = vadd.f32 0.0, %v6661
  %v6663 = vpop.f32.mrb[0].mxu0
  %6664 = vmatprep.mubr.bf16.mxu0 0
  %6665 = vmatmul.mubr.bf16.gmra.mrb[0].mxu0 %v5061
  %v6666 = vpop.f32.mrb[0].mxu0
  %v6667 = vadd.f32 0.0, %v6666
  %v6668 = vpop.f32.mrb[0].mxu0
  %v6669 = vpop.f32.mrb[0].mxu0
  %v6670 = vadd.f32 0.0, %v6669
  %v6671 = vpop.f32.mrb[0].mxu0
  %6672 = vmatprep.mubr.bf16.mxu0 0
  %6673 = vmatmul.mubr.bf16.gmra.mrb[0].mxu0 %v5064
  %v6674 = vpop.f32.mrb[0].mxu0
  %v6675 = vadd.f32 0.0, %v6674
  %v6676 = vpop.f32.mrb[0].mxu0
  %v6677 = vpop.f32.mrb[0].mxu0
  %v6678 = vadd.f32 0.0, %v6677
  %v6679 = vpop.f32.mrb[0].mxu0
  %6680 = vmatprep.mubr.bf16.mxu0 0
  %6681 = vmatmul.mubr.bf16.gmra.mrb[0].mxu0 %v5067
  %v6682 = vpop.f32.mrb[0].mxu0
  %v6683 = vadd.f32 0.0, %v6682
  %v6684 = vpop.f32.mrb[0].mxu0
  %v6685 = vpop.f32.mrb[0].mxu0
  %v6686 = vadd.f32 0.0, %v6685
  %v6687 = vpop.f32.mrb[0].mxu0
  %6688 = vmatprep.mubr.bf16.mxu0 0
  %6689 = vmatmul.mubr.bf16.gmra.mrb[0].mxu0 %v5070
  %v6690 = vpop.f32.mrb[0].mxu0
  %v6691 = vadd.f32 0.0, %v6690
  %v6692 = vpop.f32.mrb[0].mxu0
  %v6693 = vpop.f32.mrb[0].mxu0
  %v6694 = vadd.f32 0.0, %v6693
  %v6695 = vpop.f32.mrb[0].mxu0
  %6696 = vmatprep.mubr.bf16.mxu0 0
  %6697 = vmatmul.mubr.bf16.gmra.mrb[0].mxu0 %v5073
  %v6698 = vpop.f32.mrb[0].mxu0
  %v6699 = vadd.f32 0.0, %v6698
  %v6700 = vpop.f32.mrb[0].mxu0
  %v6701 = vpop.f32.mrb[0].mxu0
  %v6702 = vadd.f32 0.0, %v6701
  %v6703 = vpop.f32.mrb[0].mxu0
  %6704 = vmatprep.mubr.bf16.mxu0 0
  %6705 = vmatmul.mubr.bf16.gmra.mrb[0].mxu0 %v5700
  %v6706 = vpop.f32.mrb[0].mxu0
  %v6707 = vadd.f32 0.0, %v6706
  %v6708 = vpop.f32.mrb[0].mxu0
  %v6709 = vpop.f32.mrb[0].mxu0
  %v6710 = vadd.f32 0.0, %v6709
  %v6711 = vpop.f32.mrb[0].mxu0
  %6712 = vmatprep.mubr.bf16.mxu0 0
  %6713 = vmatmul.mubr.bf16.gmra.mrb[0].mxu0 %v6065
  %v6714 = vpop.f32.mrb[0].mxu0
  %v6715 = vadd.f32 0.0, %v6714
  %v6716 = vpop.f32.mrb[0].mxu0
  %v6717 = vpop.f32.mrb[0].mxu0
  %v6718 = vadd.f32 0.0, %v6717
  %v6719 = vpop.f32.mrb[0].mxu0
  %6720 = vmatprep.mubr.bf16.mxu0 0
  %6721 = vmatmul.mubr.bf16.gmra.mrb[0].mxu0 %v6430
  %v6722 = vpop.f32.mrb[0].mxu0
  %v6723 = vadd.f32 0.0, %v6722
  %v6724 = vpop.f32.mrb[0].mxu0
  %v6725 = vpop.f32.mrb[0].mxu0
  %v6726 = vadd.f32 0.0, %v6725
  %v6727 = vpop.f32.mrb[0].mxu0
  %6728 = vdwg.mxu0
  %v6729 = vadd.f32 %v6364, %v6651
  %v6730 = vadd.f32 %v6365, %v6654
  %v6731 = vadd.f32 %v6366, %v6659
  %v6732 = vadd.f32 %v6367, %v6662
  %v6733 = vadd.f32 %v6368, %v6667
  %v6734 = vadd.f32 %v6369, %v6670
  %v6735 = vadd.f32 %v6370, %v6675
  %v6736 = vadd.f32 %v6371, %v6678
  %v6737 = vadd.f32 %v6372, %v6683
  %v6738 = vadd.f32 %v6373, %v6686
  %v6739 = vadd.f32 %v6374, %v6691
  %v6740 = vadd.f32 %v6375, %v6694
  %v6741 = vadd.f32 %v6376, %v6699
  %v6742 = vadd.f32 %v6377, %v6702
  %v6743 = vadd.f32 %v6378, %v6707
  %v6744 = vadd.f32 %v6379, %v6710
  %v6745 = vadd.f32 %v6380, %v6715
  %v6746 = vadd.f32 %v6381, %v6718
  %v6747 = vadd.f32 %v6382, %v6723
  %v6748 = vadd.f32 %v6383, %v6726
  %v6749 = vmax.f32 %v6548, %v6550
  %v6750 = vmax.f32 %v6549, %v6551
  %v6751 = vmax.f32 %v6552, %v6554
  %v6752 = vmax.f32 %v6553, %v6555
  %v6753 = vmax.f32 %v6556, %v6558
  %v6754 = vmax.f32 %v6557, %v6559
  %v6755 = vmax.f32 %v6560, %v6562
  %v6756 = vmax.f32 %v6561, %v6563
  %v6757 = vmax.f32 %v6564, %v6566
  %v6758 = vmax.f32 %v6565, %v6567
  %v6759 = vmax.f32 %v6729, %v6731
  %v6760 = vmax.f32 %v6730, %v6732
  %v6761 = vmax.f32 %v6733, %v6735
  %v6762 = vmax.f32 %v6734, %v6736
  %v6763 = vmax.f32 %v6737, %v6739
  %v6764 = vmax.f32 %v6738, %v6740
  %v6765 = vmax.f32 %v6741, %v6743
  %v6766 = vmax.f32 %v6742, %v6744
  %v6767 = vmax.f32 %v6745, %v6747
  %v6768 = vmax.f32 %v6746, %v6748
  %v6769 = vmax.f32 %v6749, %v6759
  %v6770 = vmax.f32 %v6750, %v6760
  %v6771 = vmax.f32 %v6751, %v6761
  %v6772 = vmax.f32 %v6752, %v6762
  %v6773 = vmax.f32 %v6753, %v6763
  %v6774 = vmax.f32 %v6754, %v6764
  %v6775 = vmax.f32 %v6755, %v6765
  %v6776 = vmax.f32 %v6756, %v6766
  %v6777 = vmax.f32 %v6757, %v6767
  %v6778 = vmax.f32 %v6758, %v6768
  %v6779 = vld [vmem:[%s6] sm:$0x1]
  %v6781 = vlaneseq
  %v6782 = vshrl.u32 %v6781, 7
  %v6783 = vsub.s32 0, %v6782
  %v6784 = vrot.slane %v6779, %v6783
  %v6786 = vadd.f32 %v6769, %v6784
  %v6787 = vadd.f32 %v6770, %v6784
  %v6788 = vadd.f32 %v6771, %v6784
  %v6789 = vadd.f32 %v6772, %v6784
  %v6790 = vadd.f32 %v6773, %v6784
  %v6791 = vadd.f32 %v6774, %v6784
  %v6792 = vadd.f32 %v6775, %v6784
  %v6793 = vadd.f32 %v6776, %v6784
  %v6794 = vadd.f32 %v6777, %v6784
  %v6795 = vadd.f32 %v6778, %v6784
  %v6796 = vpack.c.bf16 %v6787, %v6786
  %v6797 = vpack.c.bf16 %v6789, %v6788
  %v6798 = vpack.c.bf16 %v6791, %v6790
  %v6799 = vpack.c.bf16 %v6793, %v6792
  %v6800 = vpack.c.bf16 %v6795, %v6794
  %v6801 = vld [vmem:[%s7] sm:$0xf]
  %v6802 = vld [vmem:[%s7 + $0x4] sm:$0xf]
  %v6803 = vld [vmem:[%s7 + $0x8] sm:$0xf]
  %v6804 = vld [vmem:[%s7 + $0xc] sm:$0xf]
  %v6805 = vld [vmem:[%s7 + $0x10] sm:$0xf]
  %v6806 = vld [vmem:[%s7 + $0x14] sm:$0xf]
  %v6807 = vld [vmem:[%s7 + $0x18] sm:$0xf]
  %v6808 = vld [vmem:[%s7 + $0x1c] sm:$0xf]
  %v6809 = vld [vmem:[%s7 + $0x20] sm:$0xf]
  %v6810 = vld [vmem:[%s7 + $0x24] sm:$0xf]
  %s6811 = scalar_lea.vmem %s7, 40
  %v6812 = vld [vmem:[%s6811] sm:$0xf]
  %v6813 = vld [vmem:[%s6811 + $0x4] sm:$0xf]
  %v6814 = vld [vmem:[%s6811 + $0x8] sm:$0xf]
  %v6815 = vld [vmem:[%s6811 + $0xc] sm:$0xf]
  %v6816 = vld [vmem:[%s6811 + $0x10] sm:$0xf]
  %v6817 = vld [vmem:[%s6811 + $0x14] sm:$0xf]
  %v6818 = vld [vmem:[%s6811 + $0x18] sm:$0xf]
  %v6819 = vld [vmem:[%s6811 + $0x1c] sm:$0xf]
  %v6820 = vld [vmem:[%s6811 + $0x20] sm:$0xf]
  %v6821 = vld [vmem:[%s6811 + $0x24] sm:$0xf]
  %v6832 = vunpack.c.l.b16 %v6812
  %v6833 = vunpack.c.l.b16 %v6813
  %v6834 = vunpack.c.l.b16 %v6814
  %v6835 = vunpack.c.l.b16 %v6815
  %v6836 = vunpack.c.l.b16 %v6816
  %v6837 = vunpack.c.l.b16 %v6817
  %v6838 = vunpack.c.l.b16 %v6818
  %v6839 = vunpack.c.l.b16 %v6819
  %v6840 = vunpack.c.l.b16 %v6820
  %v6841 = vunpack.c.l.b16 %v6821
  %v6842 = vpack.c.b16 %v6833, %v6832
  %v6843 = vpack.c.b16 %v6835, %v6834
  %v6844 = vpack.c.b16 %v6837, %v6836
  %v6845 = vpack.c.b16 %v6839, %v6838
  %v6846 = vpack.c.b16 %v6841, %v6840
  %vm6852 = vcmask 654336
  %v6854 = vsel %vm6852, %v6797, 0
  %6856 = vmatprep.subr.bf16.mxu0 0
  %6857 = vmatpush1.bf16.msra.mxu0 %v6842
  %6858 = vmatprep.subr.bf16.mxu0 0
  %6859 = vmatpush1.bf16.msra.mxu0 %v6843
  %6860 = vmatprep.subr.bf16.mxu0 0
  %6861 = vmatpush1.bf16.msra.mxu0 %v6844
  %6862 = vmatprep.subr.bf16.mxu0 0
  %6863 = vmatpush1.bf16.msra.mxu0 %v6845
  %6864 = vmatprep.subr.bf16.mxu0 0
  %6865 = vmatpush1.bf16.msra.mxu0 %v6846
  %6866 = vmatprep.subr.bf16.mxu0 0
  %6867 = vmatpush1.bf16.msra.mxu0 0
  %6868 = vmatprep.subr.bf16.mxu0 0
  %6869 = vmatpush1.bf16.msra.mxu0 0
  %6870 = vmatprep.subr.bf16.mxu0 0
  %6871 = vmatpush1.bf16.msra.mxu0 0
  %6872 = vmatprep.subr.bf16.mxu0 0
  %6873 = vmatpush1.bf16.msra.mxu0 0
  %6874 = vmatprep.subr.bf16.mxu0 0
  %6875 = vmatpush1.bf16.msra.mxu0 0
  %6876 = vmatprep.subr.bf16.mxu0 0
  %6877 = vmatpush1.bf16.msra.mxu0 0
  %6878 = vmatprep.subr.bf16.mxu0 0
  %6879 = vmatpush1.bf16.msra.mxu0 0
  %6880 = vmatprep.subr.bf16.mxu0 0
  %6881 = vmatpush1.bf16.msra.mxu0 0
  %6882 = vmatprep.subr.bf16.mxu0 0
  %6883 = vmatpush1.bf16.msra.mxu0 0
  %6884 = vmatprep.subr.bf16.mxu0 0
  %6885 = vmatpush1.bf16.msra.mxu0 0
  %6886 = vmatprep.subr.bf16.mxu0 0
  %6887 = vmatpush1.bf16.msra.mxu0 0
  %6888 = vmatprep.mubr.bf16.mxu0 0
  %6889 = vmatmul.mubr.bf16.gmra.mrb[0].mxu0 %v6854
  %v6890 = vpop.f32.mrb[0].mxu0
  %v6891 = vadd.f32 0.0, %v6890
  %v6892 = vpop.f32.mrb[0].mxu0
  %v6893 = vpop.f32.mrb[0].mxu0
  %v6894 = vadd.f32 0.0, %v6893
  %v6895 = vpop.f32.mrb[0].mxu0
  %6896 = vdwg.mxu0
  %v6907 = vunpack.c.l.b16 %v6801
  %v6908 = vunpack.c.l.b16 %v6802
  %v6909 = vunpack.c.l.b16 %v6803
  %v6910 = vunpack.c.l.b16 %v6804
  %v6911 = vunpack.c.l.b16 %v6805
  %v6912 = vunpack.c.l.b16 %v6806
  %v6913 = vunpack.c.l.b16 %v6807
  %v6914 = vunpack.c.l.b16 %v6808
  %v6915 = vunpack.c.l.b16 %v6809
  %v6916 = vunpack.c.l.b16 %v6810
  %v6917 = vpack.c.b16 %v6908, %v6907
  %v6918 = vpack.c.b16 %v6910, %v6909
  %v6919 = vpack.c.b16 %v6912, %v6911
  %v6920 = vpack.c.b16 %v6914, %v6913
  %v6921 = vpack.c.b16 %v6916, %v6915
  %v6928 = vsel %vm6852, %v6796, 0
  %6930 = vmatprep.subr.bf16.mxu0 0
  %6931 = vmatpush1.bf16.msra.mxu0 %v6917
  %6932 = vmatprep.subr.bf16.mxu0 0
  %6933 = vmatpush1.bf16.msra.mxu0 %v6918
  %6934 = vmatprep.subr.bf16.mxu0 0
  %6935 = vmatpush1.bf16.msra.mxu0 %v6919
  %6936 = vmatprep.subr.bf16.mxu0 0
  %6937 = vmatpush1.bf16.msra.mxu0 %v6920
  %6938 = vmatprep.subr.bf16.mxu0 0
  %6939 = vmatpush1.bf16.msra.mxu0 %v6921
  %6940 = vmatprep.subr.bf16.mxu0 0
  %6941 = vmatpush1.bf16.msra.mxu0 0
  %6942 = vmatprep.subr.bf16.mxu0 0
  %6943 = vmatpush1.bf16.msra.mxu0 0
  %6944 = vmatprep.subr.bf16.mxu0 0
  %6945 = vmatpush1.bf16.msra.mxu0 0
  %6946 = vmatprep.subr.bf16.mxu0 0
  %6947 = vmatpush1.bf16.msra.mxu0 0
  %6948 = vmatprep.subr.bf16.mxu0 0
  %6949 = vmatpush1.bf16.msra.mxu0 0
  %6950 = vmatprep.subr.bf16.mxu0 0
  %6951 = vmatpush1.bf16.msra.mxu0 0
  %6952 = vmatprep.subr.bf16.mxu0 0
  %6953 = vmatpush1.bf16.msra.mxu0 0
  %6954 = vmatprep.subr.bf16.mxu0 0
  %6955 = vmatpush1.bf16.msra.mxu0 0
  %6956 = vmatprep.subr.bf16.mxu0 0
  %6957 = vmatpush1.bf16.msra.mxu0 0
  %6958 = vmatprep.subr.bf16.mxu0 0
  %6959 = vmatpush1.bf16.msra.mxu0 0
  %6960 = vmatprep.subr.bf16.mxu0 0
  %6961 = vmatpush1.bf16.msra.mxu0 0
  %6962 = vmatprep.mubr.bf16.mxu0 0
  %6963 = vmatmul.mubr.bf16.gmra.mrb[0].mxu0 %v6928
  %v6964 = vpop.f32.mrb[0].mxu0
  %v6965 = vadd.f32 %v6891, %v6964
  %v6966 = vpop.f32.mrb[0].mxu0
  %v6967 = vpop.f32.mrb[0].mxu0
  %v6968 = vadd.f32 %v6894, %v6967
  %v6969 = vpop.f32.mrb[0].mxu0
  %6970 = vdwg.mxu0
  %s6971 = scalar_lea.vmem %s7, 80
  %v6972 = vld [vmem:[%s6971] sm:$0xf]
  %v6973 = vld [vmem:[%s6971 + $0x4] sm:$0xf]
  %v6974 = vld [vmem:[%s6971 + $0x8] sm:$0xf]
  %v6975 = vld [vmem:[%s6971 + $0xc] sm:$0xf]
  %v6976 = vld [vmem:[%s6971 + $0x10] sm:$0xf]
  %v6977 = vld [vmem:[%s6971 + $0x14] sm:$0xf]
  %v6978 = vld [vmem:[%s6971 + $0x18] sm:$0xf]
  %v6979 = vld [vmem:[%s6971 + $0x1c] sm:$0xf]
  %v6980 = vld [vmem:[%s6971 + $0x20] sm:$0xf]
  %v6981 = vld [vmem:[%s6971 + $0x24] sm:$0xf]
  %v6992 = vunpack.c.l.b16 %v6972
  %v6993 = vunpack.c.l.b16 %v6973
  %v6994 = vunpack.c.l.b16 %v6974
  %v6995 = vunpack.c.l.b16 %v6975
  %v6996 = vunpack.c.l.b16 %v6976
  %v6997 = vunpack.c.l.b16 %v6977
  %v6998 = vunpack.c.l.b16 %v6978
  %v6999 = vunpack.c.l.b16 %v6979
  %v7000 = vunpack.c.l.b16 %v6980
  %v7001 = vunpack.c.l.b16 %v6981
  %v7002 = vpack.c.b16 %v6993, %v6992
  %v7003 = vpack.c.b16 %v6995, %v6994
  %v7004 = vpack.c.b16 %v6997, %v6996
  %v7005 = vpack.c.b16 %v6999, %v6998
  %v7006 = vpack.c.b16 %v7001, %v7000
  %v7013 = vsel %vm6852, %v6798, 0
  %7015 = vmatprep.subr.bf16.mxu0 0
  %7016 = vmatpush1.bf16.msra.mxu0 %v7002
  %7017 = vmatprep.subr.bf16.mxu0 0
  %7018 = vmatpush1.bf16.msra.mxu0 %v7003
  %7019 = vmatprep.subr.bf16.mxu0 0
  %7020 = vmatpush1.bf16.msra.mxu0 %v7004
  %7021 = vmatprep.subr.bf16.mxu0 0
  %7022 = vmatpush1.bf16.msra.mxu0 %v7005
  %7023 = vmatprep.subr.bf16.mxu0 0
  %7024 = vmatpush1.bf16.msra.mxu0 %v7006
  %7025 = vmatprep.subr.bf16.mxu0 0
  %7026 = vmatpush1.bf16.msra.mxu0 0
  %7027 = vmatprep.subr.bf16.mxu0 0
  %7028 = vmatpush1.bf16.msra.mxu0 0
  %7029 = vmatprep.subr.bf16.mxu0 0
  %7030 = vmatpush1.bf16.msra.mxu0 0
  %7031 = vmatprep.subr.bf16.mxu0 0
  %7032 = vmatpush1.bf16.msra.mxu0 0
  %7033 = vmatprep.subr.bf16.mxu0 0
  %7034 = vmatpush1.bf16.msra.mxu0 0
  %7035 = vmatprep.subr.bf16.mxu0 0
  %7036 = vmatpush1.bf16.msra.mxu0 0
  %7037 = vmatprep.subr.bf16.mxu0 0
  %7038 = vmatpush1.bf16.msra.mxu0 0
  %7039 = vmatprep.subr.bf16.mxu0 0
  %7040 = vmatpush1.bf16.msra.mxu0 0
  %7041 = vmatprep.subr.bf16.mxu0 0
  %7042 = vmatpush1.bf16.msra.mxu0 0
  %7043 = vmatprep.subr.bf16.mxu0 0
  %7044 = vmatpush1.bf16.msra.mxu0 0
  %7045 = vmatprep.subr.bf16.mxu0 0
  %7046 = vmatpush1.bf16.msra.mxu0 0
  %7047 = vmatprep.mubr.bf16.mxu0 0
  %7048 = vmatmul.mubr.bf16.gmra.mrb[0].mxu0 %v7013
  %v7049 = vpop.f32.mrb[0].mxu0
  %v7050 = vadd.f32 0.0, %v7049
  %v7051 = vpop.f32.mrb[0].mxu0
  %v7052 = vpop.f32.mrb[0].mxu0
  %v7053 = vadd.f32 0.0, %v7052
  %v7054 = vpop.f32.mrb[0].mxu0
  %7055 = vdwg.mxu0
  %v7056 = vadd.f32 %v6965, %v7050
  %v7057 = vadd.f32 %v6968, %v7053
  %s7058 = scalar_lea.vmem %s7, 120
  %v7059 = vld [vmem:[%s7058] sm:$0xf]
  %v7060 = vld [vmem:[%s7058 + $0x4] sm:$0xf]
  %v7061 = vld [vmem:[%s7058 + $0x8] sm:$0xf]
  %v7062 = vld [vmem:[%s7058 + $0xc] sm:$0xf]
  %v7063 = vld [vmem:[%s7058 + $0x10] sm:$0xf]
  %v7064 = vld [vmem:[%s7058 + $0x14] sm:$0xf]
  %v7065 = vld [vmem:[%s7058 + $0x18] sm:$0xf]
  %v7066 = vld [vmem:[%s7058 + $0x1c] sm:$0xf]
  %v7067 = vld [vmem:[%s7058 + $0x20] sm:$0xf]
  %v7068 = vld [vmem:[%s7058 + $0x24] sm:$0xf]
  %v7079 = vunpack.c.l.b16 %v7059
  %v7080 = vunpack.c.l.b16 %v7060
  %v7081 = vunpack.c.l.b16 %v7061
  %v7082 = vunpack.c.l.b16 %v7062
  %v7083 = vunpack.c.l.b16 %v7063
  %v7084 = vunpack.c.l.b16 %v7064
  %v7085 = vunpack.c.l.b16 %v7065
  %v7086 = vunpack.c.l.b16 %v7066
  %v7087 = vunpack.c.l.b16 %v7067
  %v7088 = vunpack.c.l.b16 %v7068
  %v7089 = vpack.c.b16 %v7080, %v7079
  %v7090 = vpack.c.b16 %v7082, %v7081
  %v7091 = vpack.c.b16 %v7084, %v7083
  %v7092 = vpack.c.b16 %v7086, %v7085
  %v7093 = vpack.c.b16 %v7088, %v7087
  %v7100 = vsel %vm6852, %v6799, 0
  %7102 = vmatprep.subr.bf16.mxu0 0
  %7103 = vmatpush1.bf16.msra.mxu0 %v7089
  %7104 = vmatprep.subr.bf16.mxu0 0
  %7105 = vmatpush1.bf16.msra.mxu0 %v7090
  %7106 = vmatprep.subr.bf16.mxu0 0
  %7107 = vmatpush1.bf16.msra.mxu0 %v7091
  %7108 = vmatprep.subr.bf16.mxu0 0
  %7109 = vmatpush1.bf16.msra.mxu0 %v7092
  %7110 = vmatprep.subr.bf16.mxu0 0
  %7111 = vmatpush1.bf16.msra.mxu0 %v7093
  %7112 = vmatprep.subr.bf16.mxu0 0
  %7113 = vmatpush1.bf16.msra.mxu0 0
  %7114 = vmatprep.subr.bf16.mxu0 0
  %7115 = vmatpush1.bf16.msra.mxu0 0
  %7116 = vmatprep.subr.bf16.mxu0 0
  %7117 = vmatpush1.bf16.msra.mxu0 0
  %7118 = vmatprep.subr.bf16.mxu0 0
  %7119 = vmatpush1.bf16.msra.mxu0 0
  %7120 = vmatprep.subr.bf16.mxu0 0
  %7121 = vmatpush1.bf16.msra.mxu0 0
  %7122 = vmatprep.subr.bf16.mxu0 0
  %7123 = vmatpush1.bf16.msra.mxu0 0
  %7124 = vmatprep.subr.bf16.mxu0 0
  %7125 = vmatpush1.bf16.msra.mxu0 0
  %7126 = vmatprep.subr.bf16.mxu0 0
  %7127 = vmatpush1.bf16.msra.mxu0 0
  %7128 = vmatprep.subr.bf16.mxu0 0
  %7129 = vmatpush1.bf16.msra.mxu0 0
  %7130 = vmatprep.subr.bf16.mxu0 0
  %7131 = vmatpush1.bf16.msra.mxu0 0
  %7132 = vmatprep.subr.bf16.mxu0 0
  %7133 = vmatpush1.bf16.msra.mxu0 0
  %7134 = vmatprep.mubr.bf16.mxu0 0
  %7135 = vmatmul.mubr.bf16.gmra.mrb[0].mxu0 %v7100
  %v7136 = vpop.f32.mrb[0].mxu0
  %v7137 = vadd.f32 0.0, %v7136
  %v7138 = vpop.f32.mrb[0].mxu0
  %v7139 = vpop.f32.mrb[0].mxu0
  %v7140 = vadd.f32 0.0, %v7139
  %v7141 = vpop.f32.mrb[0].mxu0
  %7142 = vdwg.mxu0
  %v7143 = vadd.f32 %v7056, %v7137
  %v7144 = vadd.f32 %v7057, %v7140
  %s7145 = scalar_lea.vmem %s7, 160
  %v7146 = vld [vmem:[%s7145] sm:$0xf]
  %v7147 = vld [vmem:[%s7145 + $0x4] sm:$0xf]
  %v7148 = vld [vmem:[%s7145 + $0x8] sm:$0xf]
  %v7149 = vld [vmem:[%s7145 + $0xc] sm:$0xf]
  %v7150 = vld [vmem:[%s7145 + $0x10] sm:$0xf]
  %v7151 = vld [vmem:[%s7145 + $0x14] sm:$0xf]
  %v7152 = vld [vmem:[%s7145 + $0x18] sm:$0xf]
  %v7153 = vld [vmem:[%s7145 + $0x1c] sm:$0xf]
  %v7154 = vld [vmem:[%s7145 + $0x20] sm:$0xf]
  %v7155 = vld [vmem:[%s7145 + $0x24] sm:$0xf]
  %v7166 = vunpack.c.l.b16 %v7146
  %v7167 = vunpack.c.l.b16 %v7147
  %v7168 = vunpack.c.l.b16 %v7148
  %v7169 = vunpack.c.l.b16 %v7149
  %v7170 = vunpack.c.l.b16 %v7150
  %v7171 = vunpack.c.l.b16 %v7151
  %v7172 = vunpack.c.l.b16 %v7152
  %v7173 = vunpack.c.l.b16 %v7153
  %v7174 = vunpack.c.l.b16 %v7154
  %v7175 = vunpack.c.l.b16 %v7155
  %v7176 = vpack.c.b16 %v7167, %v7166
  %v7177 = vpack.c.b16 %v7169, %v7168
  %v7178 = vpack.c.b16 %v7171, %v7170
  %v7179 = vpack.c.b16 %v7173, %v7172
  %v7180 = vpack.c.b16 %v7175, %v7174
  %v7187 = vsel %vm6852, %v6800, 0
  %7189 = vmatprep.subr.bf16.mxu0 0
  %7190 = vmatpush1.bf16.msra.mxu0 %v7176
  %7191 = vmatprep.subr.bf16.mxu0 0
  %7192 = vmatpush1.bf16.msra.mxu0 %v7177
  %7193 = vmatprep.subr.bf16.mxu0 0
  %7194 = vmatpush1.bf16.msra.mxu0 %v7178
  %7195 = vmatprep.subr.bf16.mxu0 0
  %7196 = vmatpush1.bf16.msra.mxu0 %v7179
  %7197 = vmatprep.subr.bf16.mxu0 0
  %7198 = vmatpush1.bf16.msra.mxu0 %v7180
  %7199 = vmatprep.subr.bf16.mxu0 0
  %7200 = vmatpush1.bf16.msra.mxu0 0
  %7201 = vmatprep.subr.bf16.mxu0 0
  %7202 = vmatpush1.bf16.msra.mxu0 0
  %7203 = vmatprep.subr.bf16.mxu0 0
  %7204 = vmatpush1.bf16.msra.mxu0 0
  %7205 = vmatprep.subr.bf16.mxu0 0
  %7206 = vmatpush1.bf16.msra.mxu0 0
  %7207 = vmatprep.subr.bf16.mxu0 0
  %7208 = vmatpush1.bf16.msra.mxu0 0
  %7209 = vmatprep.subr.bf16.mxu0 0
  %7210 = vmatpush1.bf16.msra.mxu0 0
  %7211 = vmatprep.subr.bf16.mxu0 0
  %7212 = vmatpush1.bf16.msra.mxu0 0
  %7213 = vmatprep.subr.bf16.mxu0 0
  %7214 = vmatpush1.bf16.msra.mxu0 0
  %7215 = vmatprep.subr.bf16.mxu0 0
  %7216 = vmatpush1.bf16.msra.mxu0 0
  %7217 = vmatprep.subr.bf16.mxu0 0
  %7218 = vmatpush1.bf16.msra.mxu0 0
  %7219 = vmatprep.subr.bf16.mxu0 0
  %7220 = vmatpush1.bf16.msra.mxu0 0
  %7221 = vmatprep.mubr.bf16.mxu0 0
  %7222 = vmatmul.mubr.bf16.gmra.mrb[0].mxu0 %v7187
  %v7223 = vpop.f32.mrb[0].mxu0
  %v7224 = vadd.f32 0.0, %v7223
  %v7225 = vpop.f32.mrb[0].mxu0
  %v7226 = vpop.f32.mrb[0].mxu0
  %v7227 = vadd.f32 0.0, %v7226
  %v7228 = vpop.f32.mrb[0].mxu0
  %7229 = vdwg.mxu0
  %v7230 = vadd.f32 %v7143, %v7224
  %v7231 = vadd.f32 %v7144, %v7227
  %v7232 = vld [vmem:[%s8] sm:$0x1]
  %v7234 = vlaneseq
  %v7235 = vshrl.u32 %v7234, 7
  %v7236 = vsub.s32 0, %v7235
  %v7237 = vrot.slane %v7232, %v7236
  %v7239 = vadd.f32 %v7230, %v7237
  %v7240 = vadd.f32 %v7231, %v7237
  %v7241 = vmax.f32 %v7239, 0.0
  %v7242 = vmax.f32 %v7240, 0.0
  %v7243 = vpack.c.bf16 %v7242, %v7241
  %v7244 = vld [vmem:[%s9] sm:$0xf]
  %v7245 = vld [vmem:[%s9 + $0x4] sm:$0xf]
  %v7246 = vld [vmem:[%s9 + $0x8] sm:$0xf]
  %v7247 = vld [vmem:[%s9 + $0xc] sm:$0xf]
  %v7248 = vld [vmem:[%s9 + $0x10] sm:$0xf]
  %v7249 = vld [vmem:[%s9 + $0x14] sm:$0xf]
  %v7250 = vld [vmem:[%s9 + $0x18] sm:$0xf]
  %v7251 = vld [vmem:[%s9 + $0x1c] sm:$0xf]
  %v7252 = vld [vmem:[%s9 + $0x20] sm:$0xf]
  %v7253 = vld [vmem:[%s9 + $0x24] sm:$0xf]
  %v7254 = vld [vmem:[%s9 + $0x28] sm:$0xf]
  %v7255 = vld [vmem:[%s9 + $0x2c] sm:$0xf]
  %v7256 = vld [vmem:[%s9 + $0x30] sm:$0xf]
  %v7257 = vld [vmem:[%s9 + $0x34] sm:$0xf]
  %v7258 = vld [vmem:[%s9 + $0x38] sm:$0xf]
  %v7259 = vld [vmem:[%s10] sm:$0x1]
  %v7261 = vlaneseq
  %v7262 = vshrl.u32 %v7261, 7
  %v7263 = vsub.s32 0, %v7262
  %v7264 = vrot.slane %v7259, %v7263
  %v7281 = vunpack.c.l.b16 %v7244
  %v7282 = vunpack.c.l.b16 %v7245
  %v7283 = vunpack.c.l.b16 %v7246
  %v7284 = vunpack.c.l.b16 %v7247
  %v7285 = vunpack.c.l.b16 %v7248
  %v7286 = vunpack.c.l.b16 %v7249
  %v7287 = vunpack.c.l.b16 %v7250
  %v7288 = vunpack.c.l.b16 %v7251
  %v7289 = vunpack.c.l.b16 %v7252
  %v7290 = vunpack.c.l.b16 %v7253
  %v7291 = vunpack.c.l.b16 %v7254
  %v7292 = vunpack.c.l.b16 %v7255
  %v7293 = vunpack.c.l.b16 %v7256
  %v7294 = vunpack.c.l.b16 %v7257
  %v7295 = vunpack.c.l.b16 %v7258
  %v7296 = vpack.c.b16 %v7282, %v7281
  %v7297 = vpack.c.b16 %v7284, %v7283
  %v7298 = vpack.c.b16 %v7286, %v7285
  %v7299 = vpack.c.b16 %v7288, %v7287
  %v7300 = vpack.c.b16 %v7290, %v7289
  %v7301 = vpack.c.b16 %v7292, %v7291
  %v7302 = vpack.c.b16 %v7294, %v7293
  %v7303 = vpack.c.b16 %v7295, %v7295
  %vm7311 = vcmask 982016
  %v7313 = vsel %vm7311, %v7243, 0
  %vm7315 = vcmask 1043456
  %v7317 = vsel %vm7315, %v7303, 0
  %7319 = vmatprep.subr.bf16.mxu0 0
  %7320 = vmatpush1.bf16.msra.mxu0 %v7296
  %7321 = vmatprep.subr.bf16.mxu0 0
  %7322 = vmatpush1.bf16.msra.mxu0 %v7297
  %7323 = vmatprep.subr.bf16.mxu0 0
  %7324 = vmatpush1.bf16.msra.mxu0 %v7298
  %7325 = vmatprep.subr.bf16.mxu0 0
  %7326 = vmatpush1.bf16.msra.mxu0 %v7299
  %7327 = vmatprep.subr.bf16.mxu0 0
  %7328 = vmatpush1.bf16.msra.mxu0 %v7300
  %7329 = vmatprep.subr.bf16.mxu0 0
  %7330 = vmatpush1.bf16.msra.mxu0 %v7301
  %7331 = vmatprep.subr.bf16.mxu0 0
  %7332 = vmatpush1.bf16.msra.mxu0 %v7302
  %7333 = vmatprep.subr.bf16.mxu0 0
  %7334 = vmatpush1.bf16.msra.mxu0 %v7317
  %7335 = vmatprep.subr.bf16.mxu0 0
  %7336 = vmatpush1.bf16.msra.mxu0 0
  %7337 = vmatprep.subr.bf16.mxu0 0
  %7338 = vmatpush1.bf16.msra.mxu0 0
  %7339 = vmatprep.subr.bf16.mxu0 0
  %7340 = vmatpush1.bf16.msra.mxu0 0
  %7341 = vmatprep.subr.bf16.mxu0 0
  %7342 = vmatpush1.bf16.msra.mxu0 0
  %7343 = vmatprep.subr.bf16.mxu0 0
  %7344 = vmatpush1.bf16.msra.mxu0 0
  %7345 = vmatprep.subr.bf16.mxu0 0
  %7346 = vmatpush1.bf16.msra.mxu0 0
  %7347 = vmatprep.subr.bf16.mxu0 0
  %7348 = vmatpush1.bf16.msra.mxu0 0
  %7349 = vmatprep.subr.bf16.mxu0 0
  %7350 = vmatpush1.bf16.msra.mxu0 0
  %7351 = vmatprep.mubr.bf16.mxu0 0
  %7352 = vmatmul.mubr.bf16.gmra.mrb[0].mxu0 %v7313
  %v7353 = vpop.f32.mrb[0].mxu0
  %v7354 = vadd.f32 %v7264, %v7353
  %v7355 = vpop.f32.mrb[0].mxu0
  %v7356 = vpop.f32.mrb[0].mxu0
  %v7357 = vadd.f32 %v7264, %v7356
  %v7358 = vpop.f32.mrb[0].mxu0
  %7359 = vdwg.mxu0
  %v7360 = vmax.f32 %v7354, 0.0
  %v7361 = vmax.f32 %v7357, 0.0
  %v7362 = vpack.c.bf16 %v7361, %v7360
  %v7363 = vld [vmem:[%s11] sm:$0xf]
  %v7364 = vld [vmem:[%s11 + $0x4] sm:$0xf]
  %v7365 = vld [vmem:[%s11 + $0x8] sm:$0xf]
  %v7366 = vld [vmem:[%s11 + $0xc] sm:$0xf]
  %v7367 = vld [vmem:[%s11 + $0x10] sm:$0xf]
  %v7368 = vld [vmem:[%s11 + $0x14] sm:$0xf]
  %v7369 = vld [vmem:[%s11 + $0x18] sm:$0xf]
  %v7370 = vld [vmem:[%s11 + $0x1c] sm:$0xf]
  %v7371 = vld [vmem:[%s11 + $0x20] sm:$0xf]
  %v7372 = vld [vmem:[%s11 + $0x24] sm:$0xf]
  %v7373 = vld [vmem:[%s11 + $0x28] sm:$0x3]
  %v7374 = vld [vmem:[%s12] sm:$0x1]
  %v7376 = vlaneseq
  %v7377 = vshrl.u32 %v7376, 7
  %v7378 = vsub.s32 0, %v7377
  %v7379 = vrot.slane %v7374, %v7378
  %v7392 = vunpack.c.l.b16 %v7363
  %v7393 = vunpack.c.l.b16 %v7364
  %v7394 = vunpack.c.l.b16 %v7365
  %v7395 = vunpack.c.l.b16 %v7366
  %v7396 = vunpack.c.l.b16 %v7367
  %v7397 = vunpack.c.l.b16 %v7368
  %v7398 = vunpack.c.l.b16 %v7369
  %v7399 = vunpack.c.l.b16 %v7370
  %v7400 = vunpack.c.l.b16 %v7371
  %v7401 = vunpack.c.l.b16 %v7372
  %v7402 = vunpack.c.l.b16 %v7373
  %v7403 = vpack.c.b16 %v7393, %v7392
  %v7404 = vpack.c.b16 %v7395, %v7394
  %v7405 = vpack.c.b16 %v7397, %v7396
  %v7406 = vpack.c.b16 %v7399, %v7398
  %v7407 = vpack.c.b16 %v7401, %v7400
  %v7408 = vpack.c.b16 %v7402, %v7402
  %v7415 = vsel %vm5044, %v7362, 0
  %v7418 = vsel %vm5075, %v7408, 0
  %7420 = vmatprep.subr.bf16.mxu0 0
  %7421 = vmatpush1.bf16.msra.mxu0 %v7403
  %7422 = vmatprep.subr.bf16.mxu0 0
  %7423 = vmatpush1.bf16.msra.mxu0 %v7404
  %7424 = vmatprep.subr.bf16.mxu0 0
  %7425 = vmatpush1.bf16.msra.mxu0 %v7405
  %7426 = vmatprep.subr.bf16.mxu0 0
  %7427 = vmatpush1.bf16.msra.mxu0 %v7406
  %7428 = vmatprep.subr.bf16.mxu0 0
  %7429 = vmatpush1.bf16.msra.mxu0 %v7407
  %7430 = vmatprep.subr.bf16.mxu0 0
  %7431 = vmatpush1.bf16.msra.mxu0 %v7418
  %7432 = vmatprep.subr.bf16.mxu0 0
  %7433 = vmatpush1.bf16.msra.mxu0 0
  %7434 = vmatprep.subr.bf16.mxu0 0
  %7435 = vmatpush1.bf16.msra.mxu0 0
  %7436 = vmatprep.subr.bf16.mxu0 0
  %7437 = vmatpush1.bf16.msra.mxu0 0
  %7438 = vmatprep.subr.bf16.mxu0 0
  %7439 = vmatpush1.bf16.msra.mxu0 0
  %7440 = vmatprep.subr.bf16.mxu0 0
  %7441 = vmatpush1.bf16.msra.mxu0 0
  %7442 = vmatprep.subr.bf16.mxu0 0
  %7443 = vmatpush1.bf16.msra.mxu0 0
  %7444 = vmatprep.subr.bf16.mxu0 0
  %7445 = vmatpush1.bf16.msra.mxu0 0
  %7446 = vmatprep.subr.bf16.mxu0 0
  %7447 = vmatpush1.bf16.msra.mxu0 0
  %7448 = vmatprep.subr.bf16.mxu0 0
  %7449 = vmatpush1.bf16.msra.mxu0 0
  %7450 = vmatprep.subr.bf16.mxu0 0
  %7451 = vmatpush1.bf16.msra.mxu0 0
  %7452 = vmatprep.mubr.bf16.mxu0 0
  %7453 = vmatmul.mubr.bf16.gmra.mrb[0].mxu0 %v7415
  %v7454 = vpop.f32.mrb[0].mxu0
  %v7455 = vadd.f32 %v7379, %v7454
  %v7456 = vpop.f32.mrb[0].mxu0
  %v7457 = vpop.f32.mrb[0].mxu0
  %v7458 = vadd.f32 %v7379, %v7457
  %v7459 = vpop.f32.mrb[0].mxu0
  %7460 = vdwg.mxu0
  %7461 = vst [vmem:[%s13] sm:$0xff] %v7455
  %7462 = vst [vmem:[%s13 + $0x8] sm:$0xff] %v7458
  // Predicated region
  $region54: #{lenet_forward.1} parent=0 // pred_check
    _
  $region55: #{lenet_forward.1} parent=0 // pred_check_branch
    %7464 = sbr.rel (0) target = $region57
  $region56: #{lenet_forward.1} parent=0 // pred_region
    _
  $region57: #{lenet_forward.1} parent=0 // pred_fallthru
    _
  // Predicated region
  $region58: #{lenet_forward.1} parent=0 // pred_check
    _
  $region59: #{lenet_forward.1} parent=0 // pred_check_branch
    %7466 = sbr.rel (0) target = $region61
  $region60: #{lenet_forward.1} parent=0 // pred_region
    _
  $region61: #{lenet_forward.1} parent=0 // pred_fallthru
    _

</llo_original>
